<compile_context>
chip_gen: v7x
topology: tpu7x:2x2x1
jax: 0.10.0
libtpu: 0.0.40
codegen_flags: <defaults>
</compile_context>

<pallas_src>
import jax
import jax.numpy as jnp
from jax import lax
from jax.experimental import pallas as pl
from jax.experimental.pallas import tpu as pltpu


# MXU operand dtype.  bf16 operands give ~2-3x matmul throughput on v5e/v6e/v7x (the MXU
# is bf16-native on all three); accumulation stays f32 via preferred_element_type and the
# residual stream / biases stay f32 so multi-resblock error does not accumulate.
COMPUTE_DTYPE = jnp.bfloat16

# Use the lane-packed (K = 3*C) conv path whenever the conv's input-channel count is
# below this; once C >= 128 the plain 9-tap path already fills the MXU depth.
_CONCAT_K_THRESHOLD = 128

# Lane width of each deconv output slab (multiples of 128 keep stores unmasked;
# bounds the in-flight f32 accumulator on v7x).
_OUT_CHUNK = 256


def _round_up(x, m):
    return (x + m - 1) // m * m


def _make_kernel(W, Ch, num_resblocks, NF_PAD, PAD, concat0, concat_h,
                 Cout4, out_chunk, compute_dtype):
    Wp = W + 2
    L = 2 * PAD + NF_PAD
    # rows of the gathered (K-packed) conv-input buffer that are filled / read
    GLO, GHI = PAD - 8, PAD + NF_PAD + 8
    # rows of the plain conv-input buffer actually read by the 9 shifted taps
    lo = max(0, ((PAD - (Wp + 1)) // 8) * 8)
    hi = min(L, _round_up(PAD + NF_PAD + (Wp + 1), 8))

    def conv_taps(src_ref, w_ref, concat, osl=slice(None)):
        """3x3 'same' conv over the whole padded, flattened image.

        concat=True : src_ref lanes already hold the 3 row-shifted (dh) tap windows side
                      by side (width 3*C) and w_ref is (3, 3*C, Cout'); 3 matmuls of
                      depth 3*C (fills the MXU when C < 128).
        concat=False: src_ref width C, w_ref is (3, 3, C, Cout'); 9 matmuls of depth C.
        Rows whose 2-D coords fall on the image padding ring / alignment tail read
        neighbouring or zeroed margin rows and are garbage; callers mask them.
        """
        acc = None
        if concat:
            for dw in range(3):
                lhs = src_ref[PAD + (dw - 1): PAD + (dw - 1) + NF_PAD, :]
                part = jnp.dot(lhs, w_ref[dw, :, osl],
                               preferred_element_type=jnp.float32)
                acc = part if acc is None else acc + part
        else:
            for dh in range(3):
                for dw in range(3):
                    s = (dh - 1) * Wp + (dw - 1)
                    win = src_ref[PAD + s: PAD + s + NF_PAD, :]
                    part = jnp.dot(win, w_ref[dh, dw, :, osl],
                                   preferred_element_type=jnp.float32)
                    acc = part if acc is None else acc + part
        return acc

    def kernel(*refs):
        # ---- unpack refs ----
        mask_ref, x_ref, w0, b0 = refs[0], refs[1], refs[2], refs[3]
        off = 4
        res = []
        for _ in range(num_resblocks):
            res.append((refs[off], refs[off + 1], refs[off + 2], refs[off + 3]))
            off += 4                          # conv3 w/b, conv1x1 w/b
        wtc, btc = refs[off], refs[off + 1]   # parity-packed deconv weights/bias
        out_ref = refs[off + 2]               # (NF_PAD, 4*Cout), lane-dense
        act, tmp = refs[off + 3], refs[off + 4]   # f32 residual stream / bf16 conv input

        # Zero the margins of the residual stream once per image.  All later stores touch
        # only [PAD, PAD+NF_PAD), so the margins stay exactly zero, every shifted tap read
        # sees true "same" padding, and the cheap multiply-mask below can never leak NaNs
        # from stale VMEM.
        zmargin = jnp.zeros((PAD, Ch), jnp.float32)
        act[0:PAD, :] = zmargin
        act[PAD + NF_PAD:PAD + NF_PAD + PAD, :] = zmargin

        # interior-of-image mask (1.0 = real pixel, 0.0 = padding ring / alignment tail);
        # lane-broadcast multiply replaces the old whole-image boolean select.
        mask = mask_ref[...]                                    # (NF_PAD, 1) f32

        def relu_into_tmp():
            """Materialize bf16 ReLU(act) once, in the layout conv_taps expects."""
            if concat_h:
                # pack the 3 row-shifted windows along lanes (K = 3*Ch matmuls)
                for dh in range(3):
                    src_lo = GLO + (dh - 1) * Wp
                    tmp[GLO:GHI, dh * Ch:(dh + 1) * Ch] = jnp.maximum(
                        act[src_lo:src_lo + (GHI - GLO), :], 0.0).astype(compute_dtype)
            else:
                # plain layout, restricted to the rows the 9 taps actually read
                tmp[lo:hi, :] = jnp.maximum(act[lo:hi, :], 0.0).astype(compute_dtype)

        # ---- layer 0: Conv2d(Cin -> Ch, 3x3, pad 1) ----
        h = conv_taps(x_ref, w0, concat0) + b0[...]
        act[PAD:PAD + NF_PAD, :] = h * mask

        # ---- residual blocks: x + Conv1x1(ReLU(Conv3x3(ReLU(x)))) ----
        for (w1, b1, w2, b2) in res:
            relu_into_tmp()
            t = conv_taps(tmp, w1, concat_h) + b1[...]           # 3x3, Ch -> Cr
            t = jnp.maximum(t, 0.0).astype(compute_dtype)
            t = jnp.dot(t, w2[...],                              # 1x1 as one big matmul
                        preferred_element_type=jnp.float32) + b2[...]
            act[PAD:PAD + NF_PAD, :] = (act[PAD:PAD + NF_PAD, :] + t) * mask

        # ---- final ReLU + ConvTranspose2d(Ch->Cout, 4x4, s=2, p=1) ----
        # parity-decomposed (wtc packs the 4 output parities along lanes); computed and
        # stored in lane slabs to bound the f32 accumulator footprint.
        relu_into_tmp()
        for c0 in range(0, Cout4, out_chunk):
            c1 = min(Cout4, c0 + out_chunk)
            osl = slice(c0, c1)
            y = conv_taps(tmp, wtc, concat_h, osl) + btc[:, osl]
            # ring / alignment-tail rows are garbage here; the wrapper slices them away.
            out_ref[:, osl] = y

    return kernel


def _build_deconv_cat(wt, bt):
    """Pack ConvTranspose2d(4x4, s=2, p=1) as a 3x3-offset conv with the 4 output
    parities concatenated along output channels.

    wt: (4, 4, Ch, Cout) with wt[kh, kw, ci, co] == torch_Wt[ci, co, kh, kw].
    For output row parity rh: taps (kh, dh) are {(3,0),(1,1)} if rh==0 else {(2,1),(0,2)}
    (dh = padded-input row offset), and identically for columns.
    """
    Ch, Cout = wt.shape[2], wt.shape[3]
    row_map = ({0: 3, 1: 1}, {1: 2, 2: 0})   # parity -> {offset d: kernel index k}
    wcat = jnp.zeros((3, 3, Ch, 4 * Cout), wt.dtype)
    for rh in (0, 1):
        for rw in (0, 1):
            p = 2 * rh + rw
            for dh, kh in row_map[rh].items():
                for dw, kw in row_map[rw].items():
                    wcat = wcat.at[dh, dw, :, p * Cout:(p + 1) * Cout].set(wt[kh, kw])
    bcat = jnp.tile(bt, (1, 4))
    return wcat, bcat


def _reshape_conv_w(w, concat):
    """(3,3,C,Cout)[dh,dw,c,o] -> (3, 3*C, Cout)[dw, dh*C+c, o] for the K-packed path."""
    if not concat:
        return w
    _, _, C, Cout = w.shape
    return jnp.transpose(w, (1, 0, 2, 3)).reshape(3, 3 * C, Cout)


def init_params(key, Cin, Ch, Cr, Cout, num_resblocks, scale=0.1):
    ks = jax.random.split(key, 4 + 4 * num_resblocks)
    r = lambda k, shape: scale * jax.random.normal(k, shape, jnp.float32)
    i = 0
    w0 = r(ks[i], (3, 3, Cin, Ch)); i += 1
    b0 = r(ks[i], (1, Ch)); i += 1
    res = []
    for _ in range(num_resblocks):
        w1 = r(ks[i], (3, 3, Ch, Cr)); i += 1
        b1 = r(ks[i], (1, Cr)); i += 1
        w2 = r(ks[i], (Cr, Ch)); i += 1
        b2 = r(ks[i], (1, Ch)); i += 1
        res.append((w1, b1, w2, b2))
    wt = r(ks[i], (4, 4, Ch, Cout)); i += 1
    bt = r(ks[i], (1, Cout))
    return w0, b0, tuple(res), wt, bt


def top_decoder_forward(x_nchw, params):
    """Pallas forward.  x_nchw: (N, Cin, H, W) -> (N, Cout, 2H, 2W)."""
    w0, b0, res, wt, bt = params
    N, Cin, H, W = x_nchw.shape
    Ch = w0.shape[-1]
    Cout = wt.shape[-1]
    nr = len(res)
    cd = COMPUTE_DTYPE

    Hp, Wp = H + 2, W + 2
    NF = Hp * Wp                              # flat padded-image rows
    NF_PAD = _round_up(NF, 8)                 # sublane-aligned row count for stores
    PAD = _round_up(W + 10, 8)                # margin >= Wp+8 (K-pack reach), 8-aligned
    L = 2 * PAD + NF_PAD                      # scratch / input length

    concat0 = Cin < _CONCAT_K_THRESHOLD       # K-pack layer 0 (K = 3*Cin)
    concat_h = Ch < _CONCAT_K_THRESHOLD       # K-pack resblock / deconv convs (K = 3*Ch)
    Cout4 = 4 * Cout
    out_chunk = min(Cout4, _OUT_CHUNK)

    # NHWC, zero-pad spatially, flatten to padded-flat rows, add zero margins, cast once
    # to the MXU operand dtype (halves the input DMA bytes for bf16).
    x = jnp.transpose(x_nchw, (0, 2, 3, 1)).astype(jnp.float32)
    xp = jnp.pad(x, ((0, 0), (1, 1), (1, 1), (0, 0)))
    xflat = jnp.pad(xp.reshape(N, NF, Cin),
                    ((0, 0), (PAD, L - PAD - NF), (0, 0))).astype(cd)      # (N, L, Cin)
    if concat0:
        # pre-gather the 3 row-shifted (dh) windows along channels so layer 0 is
        # 3 matmuls of depth 3*Cin inside the kernel.
        z = jnp.zeros((N, Wp, Cin), cd)
        sh_up = jnp.concatenate([z, xflat[:, :L - Wp]], axis=1)    # row r -> xflat[r-Wp]
        sh_dn = jnp.concatenate([xflat[:, Wp:], z], axis=1)        # row r -> xflat[r+Wp]
        x_in = jnp.concatenate([sh_up, xflat, sh_dn], axis=-1)     # (N, L, 3*Cin)
    else:
        x_in = xflat
    Cin_eff = x_in.shape[-1]

    # interior mask (precomputed host-side to avoid in-kernel div/mod by Wp).
    q = jnp.arange(NF_PAD)
    qi, qj = q // Wp, q % Wp
    interior = (q < NF) & (qi >= 1) & (qi <= H) & (qj >= 1) & (qj <= W)
    mask = interior.astype(jnp.float32)[:, None]                   # (NF_PAD, 1)

    wt_cat, bt_cat = _build_deconv_cat(wt, bt)

    # weights cast to the MXU operand dtype; biases stay f32 (added to f32 accumulators).
    flat_w = [_reshape_conv_w(w0, concat0).astype(cd), b0]
    for (w1, b1, w2, b2) in res:
        flat_w += [_reshape_conv_w(w1, concat_h).astype(cd), b1, w2.astype(cd), b2]
    flat_w += [_reshape_conv_w(wt_cat, concat_h).astype(cd), bt_cat]

    def full_spec(a):
        return pl.BlockSpec(a.shape, lambda n, _nd=a.ndim: (0,) * _nd)

    in_specs = [pl.BlockSpec((NF_PAD, 1), lambda n: (0, 0)),
                pl.BlockSpec((None, L, Cin_eff), lambda n: (n, 0, 0))]
    in_specs += [full_spec(a) for a in flat_w]

    kernel = _make_kernel(W, Ch, nr, NF_PAD, PAD, concat0, concat_h,
                          Cout4, out_chunk, cd)

    # Explicit scoped-VMEM budget: scratch + double-buffered I/O blocks + weights, with
    # headroom (defaults are only 16 MiB on v5e / 32 MiB on v6e & v7x).
    itemsz = jnp.dtype(cd).itemsize
    tmp_w = 3 * Ch if concat_h else Ch
    weight_bytes = sum(int(a.size) * a.dtype.itemsize for a in flat_w)
    est = (L * Ch * 4                       # act scratch (f32)
           + L * tmp_w * itemsz             # tmp scratch (compute dtype)
           + 2 * NF_PAD * Cout4 * 4         # double-buffered output block
           + 2 * L * Cin_eff * itemsz       # double-buffered input block
           + 2 * weight_bytes               # double-buffered weights / biases
           + 2 * NF_PAD * 128 * 4           # lane-padded mask blocks
           + 4 * NF_PAD * out_chunk * 4)    # in-flight f32 accumulators / temporaries
    vmem_limit = int(max(32 << 20, min(2 * int(est) + (8 << 20), 96 << 20)))

    out = pl.pallas_call(
        kernel,
        out_shape=jax.ShapeDtypeStruct((N, NF_PAD, Cout4), jnp.float32),
        grid=(N,),
        in_specs=in_specs,
        out_specs=pl.BlockSpec((None, NF_PAD, Cout4), lambda n: (n, 0, 0)),
        scratch_shapes=[pltpu.VMEM((L, Ch), jnp.float32),   # residual stream (f32)
                        pltpu.VMEM((L, tmp_w), cd)],        # ReLU'd conv input (bf16)
        compiler_params=pltpu.CompilerParams(
            dimension_semantics=("parallel",),
            vmem_limit_bytes=vmem_limit),
    )(mask, x_in, *flat_w)

    # De-pad + de-interleave parities:
    #   out[n, (m+1)*Wp + (k+1), (2*rh+rw)*Cout + c]  ==  y[n, 2*m+rh, 2*k+rw, c]
    o = out[:, :NF, :].reshape(N, Hp, Wp, 2, 2, Cout)[:, 1:H + 1, 1:W + 1]
    o = o.transpose(0, 1, 3, 2, 4, 5).reshape(N, 2 * H, 2 * W, Cout)
    return jnp.transpose(o, (0, 3, 1, 2))                            # back to NCHW


def ref_forward(x_nchw, params, mxu_dtype=COMPUTE_DTYPE):
    """Pure-JAX reference (lax convs) mimicking the kernel's MXU numerics:
    operands cast to `mxu_dtype`, accumulation and elementwise math in f32."""
    w0, b0, res, wt, bt = params
    x = jnp.transpose(x_nchw, (0, 2, 3, 1)).astype(jnp.float32)
    dn = ('NHWC', 'HWIO', 'NHWC')

    def conv3(h, w, b):
        return lax.conv_general_dilated(
            h.astype(mxu_dtype), w.astype(mxu_dtype), (1, 1), [(1, 1), (1, 1)],
            dimension_numbers=dn,
            preferred_element_type=jnp.float32) + b.reshape(1, 1, 1, -1)

    h = conv3(x, w0, b0)
    for (w1, b1, w2, b2) in res:
        t = jax.nn.relu(h)
        t = conv3(t, w1, b1)
        t = jax.nn.relu(t)
        t = jnp.einsum('nhwc,co->nhwo', t.astype(mxu_dtype), w2.astype(mxu_dtype),
                       preferred_element_type=jnp.float32) + b2.reshape(1, 1, 1, -1)
        h = h + t
    h = jax.nn.relu(h)
    # ConvTranspose2d(k=4, s=2, p=1) == lhs-dilated conv with spatially flipped kernel.
    w_eq = jnp.flip(wt, axis=(0, 1))
    y = lax.conv_general_dilated(
        h.astype(mxu_dtype), w_eq.astype(mxu_dtype), (1, 1), [(2, 2), (2, 2)],
        lhs_dilation=(2, 2), dimension_numbers=dn,
        preferred_element_type=jnp.float32) + bt.reshape(1, 1, 1, -1)
    return jnp.transpose(y, (0, 3, 1, 2))


if __name__ == "__main__":
    N, Cin, H, W = 2, 4, 16, 16
    Ch, Cr, Cout, NUM_RES = 32, 16, 32, 2     # 4*Cout = 128 -> lane-dense output stores

    key = jax.random.PRNGKey(0)
    kx, kp = jax.random.split(key)
    x = jax.random.normal(kx, (N, Cin, H, W), jnp.float32)
    params = init_params(kp, Cin, Ch, Cr, Cout, NUM_RES)

    y = top_decoder_forward(x, params)
    y = jax.block_until_ready(y)
    assert y.shape == (N, Cout, 2 * H, 2 * W), y.shape

    y_ref = ref_forward(x, params)
    err = float(jnp.max(jnp.abs(y - y_ref)))
    # both kernel and reference use bf16 MXU operands with f32 accumulation; remaining
    # difference is summation-order / occasional 1-ulp bf16 rounding only.
    assert err < 1e-2, f"max abs err {err}"
    print("KERNEL_OK")
</pallas_src>

<mosaic_0001>
module attributes {stable_mosaic.version = 11 : i64} {
  func.func @kernel(%arg0: i32, %arg1: memref<328x1xf32, #tpu.memory_space<vmem>>, %arg2: memref<1x392x12xbf16, #tpu.memory_space<vmem>>, %arg3: memref<3x12x32xbf16, #tpu.memory_space<vmem>>, %arg4: memref<1x32xf32, #tpu.memory_space<vmem>>, %arg5: memref<3x96x16xbf16, #tpu.memory_space<vmem>>, %arg6: memref<1x16xf32, #tpu.memory_space<vmem>>, %arg7: memref<16x32xbf16, #tpu.memory_space<vmem>>, %arg8: memref<1x32xf32, #tpu.memory_space<vmem>>, %arg9: memref<3x96x16xbf16, #tpu.memory_space<vmem>>, %arg10: memref<1x16xf32, #tpu.memory_space<vmem>>, %arg11: memref<16x32xbf16, #tpu.memory_space<vmem>>, %arg12: memref<1x32xf32, #tpu.memory_space<vmem>>, %arg13: memref<3x96x128xbf16, #tpu.memory_space<vmem>>, %arg14: memref<1x128xf32, #tpu.memory_space<vmem>>, %arg15: memref<1x328x128xf32, #tpu.memory_space<vmem>>, %arg16: memref<392x32xf32, #tpu.memory_space<vmem>>, %arg17: memref<392x96xbf16, #tpu.memory_space<vmem>>) attributes {dimension_semantics = [#tpu.dimension_semantics<parallel>], iteration_bounds = array<i64: 2>, scalar_prefetch = 0 : i64, scratch_operands = 2 : i64, tpu.core_type = #tpu.core_type<tc>, window_params = [{pipeline_mode = #tpu.pipeline_mode<synchronous>, transform_indices = @transform_0, window_bounds = array<i64: 328, 1>}, {transform_indices = @transform_1, window_bounds = array<i64: 1, 392, 12>}, {pipeline_mode = #tpu.pipeline_mode<synchronous>, transform_indices = @transform_2, window_bounds = array<i64: 3, 12, 32>}, {pipeline_mode = #tpu.pipeline_mode<synchronous>, transform_indices = @transform_3, window_bounds = array<i64: 1, 32>}, {pipeline_mode = #tpu.pipeline_mode<synchronous>, transform_indices = @transform_4, window_bounds = array<i64: 3, 96, 16>}, {pipeline_mode = #tpu.pipeline_mode<synchronous>, transform_indices = @transform_5, window_bounds = array<i64: 1, 16>}, {pipeline_mode = #tpu.pipeline_mode<synchronous>, transform_indices = @transform_6, window_bounds = array<i64: 16, 32>}, {pipeline_mode = #tpu.pipeline_mode<synchronous>, transform_indices = @transform_7, window_bounds = array<i64: 1, 32>}, {pipeline_mode = #tpu.pipeline_mode<synchronous>, transform_indices = @transform_8, window_bounds = array<i64: 3, 96, 16>}, {pipeline_mode = #tpu.pipeline_mode<synchronous>, transform_indices = @transform_9, window_bounds = array<i64: 1, 16>}, {pipeline_mode = #tpu.pipeline_mode<synchronous>, transform_indices = @transform_10, window_bounds = array<i64: 16, 32>}, {pipeline_mode = #tpu.pipeline_mode<synchronous>, transform_indices = @transform_11, window_bounds = array<i64: 1, 32>}, {pipeline_mode = #tpu.pipeline_mode<synchronous>, transform_indices = @transform_12, window_bounds = array<i64: 3, 96, 128>}, {pipeline_mode = #tpu.pipeline_mode<synchronous>, transform_indices = @transform_13, window_bounds = array<i64: 1, 128>}, {transform_indices = @transform_14, window_bounds = array<i64: 1, 328, 128>}]} {
    %cst = arith.constant 0.000000e+00 : f32
    %0 = vector.broadcast %cst : f32 to vector<32x32xf32>
    %c0 = arith.constant 0 : index
    %c0_0 = arith.constant 0 : index
    %1 = vector.load %arg16[%c0, %c0_0] : memref<392x32xf32, #tpu.memory_space<vmem>>, vector<32x32xf32>
    tpu.vector_store %arg16[%c0, %c0_0], %0 {strides = array<i32>} : memref<392x32xf32, #tpu.memory_space<vmem>>, vector<32x32xf32>,
    %c360 = arith.constant 360 : index
    %c0_1 = arith.constant 0 : index
    %2 = vector.load %arg16[%c360, %c0_1] : memref<392x32xf32, #tpu.memory_space<vmem>>, vector<32x32xf32>
    tpu.vector_store %arg16[%c360, %c0_1], %0 {strides = array<i32>} : memref<392x32xf32, #tpu.memory_space<vmem>>, vector<32x32xf32>,
    %c0_2 = arith.constant 0 : index
    %c0_3 = arith.constant 0 : index
    %3 = vector.load %arg1[%c0_2, %c0_3] : memref<328x1xf32, #tpu.memory_space<vmem>>, vector<328x1xf32>
    %c0_4 = arith.constant 0 : index
    %c31 = arith.constant 31 : index
    %c0_5 = arith.constant 0 : index
    %4 = vector.load %arg2[%c0_4, %c31, %c0_5] : memref<1x392x12xbf16, #tpu.memory_space<vmem>>, vector<1x328x12xbf16>
    %5 = vector.shape_cast %4 : vector<1x328x12xbf16> to vector<328x12xbf16>
    %c0_6 = arith.constant 0 : index
    %c0_7 = arith.constant 0 : index
    %c0_8 = arith.constant 0 : index
    %6 = vector.load %arg3[%c0_6, %c0_7, %c0_8] : memref<3x12x32xbf16, #tpu.memory_space<vmem>>, vector<1x12x32xbf16>
    %7 = vector.shape_cast %6 : vector<1x12x32xbf16> to vector<12x32xbf16>
    %cst_9 = arith.constant dense<0.000000e+00> : vector<328x32xf32>
    %8 = tpu.matmul %5, %7, %cst_9 {dimension_numbers = #tpu.dot_dimension_numbers<[1], [0], [0], [1], [0, 0, 1, 1], [], []>} : vector<328x12xbf16>, vector<12x32xbf16>, vector<328x32xf32> -> vector<328x32xf32>
    %c0_10 = arith.constant 0 : index
    %c32 = arith.constant 32 : index
    %c0_11 = arith.constant 0 : index
    %9 = vector.load %arg2[%c0_10, %c32, %c0_11] : memref<1x392x12xbf16, #tpu.memory_space<vmem>>, vector<1x328x12xbf16>
    %10 = vector.shape_cast %9 : vector<1x328x12xbf16> to vector<328x12xbf16>
    %c1 = arith.constant 1 : index
    %c0_12 = arith.constant 0 : index
    %c0_13 = arith.constant 0 : index
    %11 = vector.load %arg3[%c1, %c0_12, %c0_13] : memref<3x12x32xbf16, #tpu.memory_space<vmem>>, vector<1x12x32xbf16>
    %12 = vector.shape_cast %11 : vector<1x12x32xbf16> to vector<12x32xbf16>
    %cst_14 = arith.constant dense<0.000000e+00> : vector<328x32xf32>
    %13 = tpu.matmul %10, %12, %cst_14 {dimension_numbers = #tpu.dot_dimension_numbers<[1], [0], [0], [1], [0, 0, 1, 1], [], []>} : vector<328x12xbf16>, vector<12x32xbf16>, vector<328x32xf32> -> vector<328x32xf32>
    %14 = arith.addf %8, %13 : vector<328x32xf32>
    %c0_15 = arith.constant 0 : index
    %c33 = arith.constant 33 : index
    %c0_16 = arith.constant 0 : index
    %15 = vector.load %arg2[%c0_15, %c33, %c0_16] : memref<1x392x12xbf16, #tpu.memory_space<vmem>>, vector<1x328x12xbf16>
    %16 = vector.shape_cast %15 : vector<1x328x12xbf16> to vector<328x12xbf16>
    %c2 = arith.constant 2 : index
    %c0_17 = arith.constant 0 : index
    %c0_18 = arith.constant 0 : index
    %17 = vector.load %arg3[%c2, %c0_17, %c0_18] : memref<3x12x32xbf16, #tpu.memory_space<vmem>>, vector<1x12x32xbf16>
    %18 = vector.shape_cast %17 : vector<1x12x32xbf16> to vector<12x32xbf16>
    %cst_19 = arith.constant dense<0.000000e+00> : vector<328x32xf32>
    %19 = tpu.matmul %16, %18, %cst_19 {dimension_numbers = #tpu.dot_dimension_numbers<[1], [0], [0], [1], [0, 0, 1, 1], [], []>} : vector<328x12xbf16>, vector<12x32xbf16>, vector<328x32xf32> -> vector<328x32xf32>
    %20 = arith.addf %14, %19 : vector<328x32xf32>
    %c0_20 = arith.constant 0 : index
    %c0_21 = arith.constant 0 : index
    %21 = vector.load %arg4[%c0_20, %c0_21] : memref<1x32xf32, #tpu.memory_space<vmem>>, vector<1x32xf32>
    %22 = vector.broadcast %21 : vector<1x32xf32> to vector<328x32xf32>
    %23 = arith.addf %20, %22 : vector<328x32xf32>
    %24 = vector.broadcast %3 : vector<328x1xf32> to vector<328x32xf32>
    %25 = arith.mulf %23, %24 : vector<328x32xf32>
    %c32_22 = arith.constant 32 : index
    %c0_23 = arith.constant 0 : index
    %26 = vector.load %arg16[%c32_22, %c0_23] : memref<392x32xf32, #tpu.memory_space<vmem>>, vector<328x32xf32>
    tpu.vector_store %arg16[%c32_22, %c0_23], %25 {strides = array<i32>} : memref<392x32xf32, #tpu.memory_space<vmem>>, vector<328x32xf32>,
    %c6 = arith.constant 6 : index
    %c0_24 = arith.constant 0 : index
    %27 = vector.load %arg16[%c6, %c0_24] : memref<392x32xf32, #tpu.memory_space<vmem>>, vector<344x32xf32>
    %cst_25 = arith.constant 0.000000e+00 : f32
    %28 = vector.broadcast %cst_25 : f32 to vector<344x32xf32>
    %29 = arith.maximumf %27, %28 : vector<344x32xf32>
    %30 = arith.truncf %29 : vector<344x32xf32> to vector<344x32xbf16>
    %c24 = arith.constant 24 : index
    %c0_26 = arith.constant 0 : index
    %31 = vector.load %arg17[%c24, %c0_26] : memref<392x96xbf16, #tpu.memory_space<vmem>>, vector<344x32xbf16>
    tpu.vector_store %arg17[%c24, %c0_26], %30 {strides = array<i32>} : memref<392x96xbf16, #tpu.memory_space<vmem>>, vector<344x32xbf16>,
    %c24_27 = arith.constant 24 : index
    %c0_28 = arith.constant 0 : index
    %32 = vector.load %arg16[%c24_27, %c0_28] : memref<392x32xf32, #tpu.memory_space<vmem>>, vector<344x32xf32>
    %cst_29 = arith.constant 0.000000e+00 : f32
    %33 = vector.broadcast %cst_29 : f32 to vector<344x32xf32>
    %34 = arith.maximumf %32, %33 : vector<344x32xf32>
    %35 = arith.truncf %34 : vector<344x32xf32> to vector<344x32xbf16>
    %c24_30 = arith.constant 24 : index
    %c32_31 = arith.constant 32 : index
    %36 = vector.load %arg17[%c24_30, %c32_31] : memref<392x96xbf16, #tpu.memory_space<vmem>>, vector<344x32xbf16>
    tpu.vector_store %arg17[%c24_30, %c32_31], %35 {strides = array<i32>} : memref<392x96xbf16, #tpu.memory_space<vmem>>, vector<344x32xbf16>,
    %c42 = arith.constant 42 : index
    %c0_32 = arith.constant 0 : index
    %37 = vector.load %arg16[%c42, %c0_32] : memref<392x32xf32, #tpu.memory_space<vmem>>, vector<344x32xf32>
    %cst_33 = arith.constant 0.000000e+00 : f32
    %38 = vector.broadcast %cst_33 : f32 to vector<344x32xf32>
    %39 = arith.maximumf %37, %38 : vector<344x32xf32>
    %40 = arith.truncf %39 : vector<344x32xf32> to vector<344x32xbf16>
    %c24_34 = arith.constant 24 : index
    %c64 = arith.constant 64 : index
    %41 = vector.load %arg17[%c24_34, %c64] : memref<392x96xbf16, #tpu.memory_space<vmem>>, vector<344x32xbf16>
    tpu.vector_store %arg17[%c24_34, %c64], %40 {strides = array<i32>} : memref<392x96xbf16, #tpu.memory_space<vmem>>, vector<344x32xbf16>,
    %c31_35 = arith.constant 31 : index
    %c0_36 = arith.constant 0 : index
    %42 = vector.load %arg17[%c31_35, %c0_36] : memref<392x96xbf16, #tpu.memory_space<vmem>>, vector<328x96xbf16>
    %c0_37 = arith.constant 0 : index
    %c0_38 = arith.constant 0 : index
    %c0_39 = arith.constant 0 : index
    %43 = vector.load %arg5[%c0_37, %c0_38, %c0_39] : memref<3x96x16xbf16, #tpu.memory_space<vmem>>, vector<1x96x16xbf16>
    %44 = vector.shape_cast %43 : vector<1x96x16xbf16> to vector<96x16xbf16>
    %cst_40 = arith.constant dense<0.000000e+00> : vector<328x16xf32>
    %45 = tpu.matmul %42, %44, %cst_40 {dimension_numbers = #tpu.dot_dimension_numbers<[1], [0], [0], [1], [0, 0, 1, 1], [], []>} : vector<328x96xbf16>, vector<96x16xbf16>, vector<328x16xf32> -> vector<328x16xf32>
    %c32_41 = arith.constant 32 : index
    %c0_42 = arith.constant 0 : index
    %46 = vector.load %arg17[%c32_41, %c0_42] : memref<392x96xbf16, #tpu.memory_space<vmem>>, vector<328x96xbf16>
    %c1_43 = arith.constant 1 : index
    %c0_44 = arith.constant 0 : index
    %c0_45 = arith.constant 0 : index
    %47 = vector.load %arg5[%c1_43, %c0_44, %c0_45] : memref<3x96x16xbf16, #tpu.memory_space<vmem>>, vector<1x96x16xbf16>
    %48 = vector.shape_cast %47 : vector<1x96x16xbf16> to vector<96x16xbf16>
    %cst_46 = arith.constant dense<0.000000e+00> : vector<328x16xf32>
    %49 = tpu.matmul %46, %48, %cst_46 {dimension_numbers = #tpu.dot_dimension_numbers<[1], [0], [0], [1], [0, 0, 1, 1], [], []>} : vector<328x96xbf16>, vector<96x16xbf16>, vector<328x16xf32> -> vector<328x16xf32>
    %50 = arith.addf %45, %49 : vector<328x16xf32>
    %c33_47 = arith.constant 33 : index
    %c0_48 = arith.constant 0 : index
    %51 = vector.load %arg17[%c33_47, %c0_48] : memref<392x96xbf16, #tpu.memory_space<vmem>>, vector<328x96xbf16>
    %c2_49 = arith.constant 2 : index
    %c0_50 = arith.constant 0 : index
    %c0_51 = arith.constant 0 : index
    %52 = vector.load %arg5[%c2_49, %c0_50, %c0_51] : memref<3x96x16xbf16, #tpu.memory_space<vmem>>, vector<1x96x16xbf16>
    %53 = vector.shape_cast %52 : vector<1x96x16xbf16> to vector<96x16xbf16>
    %cst_52 = arith.constant dense<0.000000e+00> : vector<328x16xf32>
    %54 = tpu.matmul %51, %53, %cst_52 {dimension_numbers = #tpu.dot_dimension_numbers<[1], [0], [0], [1], [0, 0, 1, 1], [], []>} : vector<328x96xbf16>, vector<96x16xbf16>, vector<328x16xf32> -> vector<328x16xf32>
    %55 = arith.addf %50, %54 : vector<328x16xf32>
    %c0_53 = arith.constant 0 : index
    %c0_54 = arith.constant 0 : index
    %56 = vector.load %arg6[%c0_53, %c0_54] : memref<1x16xf32, #tpu.memory_space<vmem>>, vector<1x16xf32>
    %57 = vector.broadcast %56 : vector<1x16xf32> to vector<328x16xf32>
    %58 = arith.addf %55, %57 : vector<328x16xf32>
    %cst_55 = arith.constant 0.000000e+00 : f32
    %59 = vector.broadcast %cst_55 : f32 to vector<328x16xf32>
    %60 = arith.maximumf %58, %59 : vector<328x16xf32>
    %61 = arith.truncf %60 : vector<328x16xf32> to vector<328x16xbf16>
    %c0_56 = arith.constant 0 : index
    %c0_57 = arith.constant 0 : index
    %62 = vector.load %arg7[%c0_56, %c0_57] : memref<16x32xbf16, #tpu.memory_space<vmem>>, vector<16x32xbf16>
    %cst_58 = arith.constant dense<0.000000e+00> : vector<328x32xf32>
    %63 = tpu.matmul %61, %62, %cst_58 {dimension_numbers = #tpu.dot_dimension_numbers<[1], [0], [0], [1], [0, 0, 1, 1], [], []>} : vector<328x16xbf16>, vector<16x32xbf16>, vector<328x32xf32> -> vector<328x32xf32>
    %c0_59 = arith.constant 0 : index
    %c0_60 = arith.constant 0 : index
    %64 = vector.load %arg8[%c0_59, %c0_60] : memref<1x32xf32, #tpu.memory_space<vmem>>, vector<1x32xf32>
    %65 = vector.broadcast %64 : vector<1x32xf32> to vector<328x32xf32>
    %66 = arith.addf %63, %65 : vector<328x32xf32>
    %c32_61 = arith.constant 32 : index
    %c0_62 = arith.constant 0 : index
    %67 = vector.load %arg16[%c32_61, %c0_62] : memref<392x32xf32, #tpu.memory_space<vmem>>, vector<328x32xf32>
    %68 = arith.addf %67, %66 : vector<328x32xf32>
    %69 = vector.broadcast %3 : vector<328x1xf32> to vector<328x32xf32>
    %70 = arith.mulf %68, %69 : vector<328x32xf32>
    %c32_63 = arith.constant 32 : index
    %c0_64 = arith.constant 0 : index
    %71 = vector.load %arg16[%c32_63, %c0_64] : memref<392x32xf32, #tpu.memory_space<vmem>>, vector<328x32xf32>
    tpu.vector_store %arg16[%c32_63, %c0_64], %70 {strides = array<i32>} : memref<392x32xf32, #tpu.memory_space<vmem>>, vector<328x32xf32>,
    %c6_65 = arith.constant 6 : index
    %c0_66 = arith.constant 0 : index
    %72 = vector.load %arg16[%c6_65, %c0_66] : memref<392x32xf32, #tpu.memory_space<vmem>>, vector<344x32xf32>
    %cst_67 = arith.constant 0.000000e+00 : f32
    %73 = vector.broadcast %cst_67 : f32 to vector<344x32xf32>
    %74 = arith.maximumf %72, %73 : vector<344x32xf32>
    %75 = arith.truncf %74 : vector<344x32xf32> to vector<344x32xbf16>
    %c24_68 = arith.constant 24 : index
    %c0_69 = arith.constant 0 : index
    %76 = vector.load %arg17[%c24_68, %c0_69] : memref<392x96xbf16, #tpu.memory_space<vmem>>, vector<344x32xbf16>
    tpu.vector_store %arg17[%c24_68, %c0_69], %75 {strides = array<i32>} : memref<392x96xbf16, #tpu.memory_space<vmem>>, vector<344x32xbf16>,
    %c24_70 = arith.constant 24 : index
    %c0_71 = arith.constant 0 : index
    %77 = vector.load %arg16[%c24_70, %c0_71] : memref<392x32xf32, #tpu.memory_space<vmem>>, vector<344x32xf32>
    %cst_72 = arith.constant 0.000000e+00 : f32
    %78 = vector.broadcast %cst_72 : f32 to vector<344x32xf32>
    %79 = arith.maximumf %77, %78 : vector<344x32xf32>
    %80 = arith.truncf %79 : vector<344x32xf32> to vector<344x32xbf16>
    %c24_73 = arith.constant 24 : index
    %c32_74 = arith.constant 32 : index
    %81 = vector.load %arg17[%c24_73, %c32_74] : memref<392x96xbf16, #tpu.memory_space<vmem>>, vector<344x32xbf16>
    tpu.vector_store %arg17[%c24_73, %c32_74], %80 {strides = array<i32>} : memref<392x96xbf16, #tpu.memory_space<vmem>>, vector<344x32xbf16>,
    %c42_75 = arith.constant 42 : index
    %c0_76 = arith.constant 0 : index
    %82 = vector.load %arg16[%c42_75, %c0_76] : memref<392x32xf32, #tpu.memory_space<vmem>>, vector<344x32xf32>
    %cst_77 = arith.constant 0.000000e+00 : f32
    %83 = vector.broadcast %cst_77 : f32 to vector<344x32xf32>
    %84 = arith.maximumf %82, %83 : vector<344x32xf32>
    %85 = arith.truncf %84 : vector<344x32xf32> to vector<344x32xbf16>
    %c24_78 = arith.constant 24 : index
    %c64_79 = arith.constant 64 : index
    %86 = vector.load %arg17[%c24_78, %c64_79] : memref<392x96xbf16, #tpu.memory_space<vmem>>, vector<344x32xbf16>
    tpu.vector_store %arg17[%c24_78, %c64_79], %85 {strides = array<i32>} : memref<392x96xbf16, #tpu.memory_space<vmem>>, vector<344x32xbf16>,
    %c31_80 = arith.constant 31 : index
    %c0_81 = arith.constant 0 : index
    %87 = vector.load %arg17[%c31_80, %c0_81] : memref<392x96xbf16, #tpu.memory_space<vmem>>, vector<328x96xbf16>
    %c0_82 = arith.constant 0 : index
    %c0_83 = arith.constant 0 : index
    %c0_84 = arith.constant 0 : index
    %88 = vector.load %arg9[%c0_82, %c0_83, %c0_84] : memref<3x96x16xbf16, #tpu.memory_space<vmem>>, vector<1x96x16xbf16>
    %89 = vector.shape_cast %88 : vector<1x96x16xbf16> to vector<96x16xbf16>
    %cst_85 = arith.constant dense<0.000000e+00> : vector<328x16xf32>
    %90 = tpu.matmul %87, %89, %cst_85 {dimension_numbers = #tpu.dot_dimension_numbers<[1], [0], [0], [1], [0, 0, 1, 1], [], []>} : vector<328x96xbf16>, vector<96x16xbf16>, vector<328x16xf32> -> vector<328x16xf32>
    %c32_86 = arith.constant 32 : index
    %c0_87 = arith.constant 0 : index
    %91 = vector.load %arg17[%c32_86, %c0_87] : memref<392x96xbf16, #tpu.memory_space<vmem>>, vector<328x96xbf16>
    %c1_88 = arith.constant 1 : index
    %c0_89 = arith.constant 0 : index
    %c0_90 = arith.constant 0 : index
    %92 = vector.load %arg9[%c1_88, %c0_89, %c0_90] : memref<3x96x16xbf16, #tpu.memory_space<vmem>>, vector<1x96x16xbf16>
    %93 = vector.shape_cast %92 : vector<1x96x16xbf16> to vector<96x16xbf16>
    %cst_91 = arith.constant dense<0.000000e+00> : vector<328x16xf32>
    %94 = tpu.matmul %91, %93, %cst_91 {dimension_numbers = #tpu.dot_dimension_numbers<[1], [0], [0], [1], [0, 0, 1, 1], [], []>} : vector<328x96xbf16>, vector<96x16xbf16>, vector<328x16xf32> -> vector<328x16xf32>
    %95 = arith.addf %90, %94 : vector<328x16xf32>
    %c33_92 = arith.constant 33 : index
    %c0_93 = arith.constant 0 : index
    %96 = vector.load %arg17[%c33_92, %c0_93] : memref<392x96xbf16, #tpu.memory_space<vmem>>, vector<328x96xbf16>
    %c2_94 = arith.constant 2 : index
    %c0_95 = arith.constant 0 : index
    %c0_96 = arith.constant 0 : index
    %97 = vector.load %arg9[%c2_94, %c0_95, %c0_96] : memref<3x96x16xbf16, #tpu.memory_space<vmem>>, vector<1x96x16xbf16>
    %98 = vector.shape_cast %97 : vector<1x96x16xbf16> to vector<96x16xbf16>
    %cst_97 = arith.constant dense<0.000000e+00> : vector<328x16xf32>
    %99 = tpu.matmul %96, %98, %cst_97 {dimension_numbers = #tpu.dot_dimension_numbers<[1], [0], [0], [1], [0, 0, 1, 1], [], []>} : vector<328x96xbf16>, vector<96x16xbf16>, vector<328x16xf32> -> vector<328x16xf32>
    %100 = arith.addf %95, %99 : vector<328x16xf32>
    %c0_98 = arith.constant 0 : index
    %c0_99 = arith.constant 0 : index
    %101 = vector.load %arg10[%c0_98, %c0_99] : memref<1x16xf32, #tpu.memory_space<vmem>>, vector<1x16xf32>
    %102 = vector.broadcast %101 : vector<1x16xf32> to vector<328x16xf32>
    %103 = arith.addf %100, %102 : vector<328x16xf32>
    %cst_100 = arith.constant 0.000000e+00 : f32
    %104 = vector.broadcast %cst_100 : f32 to vector<328x16xf32>
    %105 = arith.maximumf %103, %104 : vector<328x16xf32>
    %106 = arith.truncf %105 : vector<328x16xf32> to vector<328x16xbf16>
    %c0_101 = arith.constant 0 : index
    %c0_102 = arith.constant 0 : index
    %107 = vector.load %arg11[%c0_101, %c0_102] : memref<16x32xbf16, #tpu.memory_space<vmem>>, vector<16x32xbf16>
    %cst_103 = arith.constant dense<0.000000e+00> : vector<328x32xf32>
    %108 = tpu.matmul %106, %107, %cst_103 {dimension_numbers = #tpu.dot_dimension_numbers<[1], [0], [0], [1], [0, 0, 1, 1], [], []>} : vector<328x16xbf16>, vector<16x32xbf16>, vector<328x32xf32> -> vector<328x32xf32>
    %c0_104 = arith.constant 0 : index
    %c0_105 = arith.constant 0 : index
    %109 = vector.load %arg12[%c0_104, %c0_105] : memref<1x32xf32, #tpu.memory_space<vmem>>, vector<1x32xf32>
    %110 = vector.broadcast %109 : vector<1x32xf32> to vector<328x32xf32>
    %111 = arith.addf %108, %110 : vector<328x32xf32>
    %c32_106 = arith.constant 32 : index
    %c0_107 = arith.constant 0 : index
    %112 = vector.load %arg16[%c32_106, %c0_107] : memref<392x32xf32, #tpu.memory_space<vmem>>, vector<328x32xf32>
    %113 = arith.addf %112, %111 : vector<328x32xf32>
    %114 = vector.broadcast %3 : vector<328x1xf32> to vector<328x32xf32>
    %115 = arith.mulf %113, %114 : vector<328x32xf32>
    %c32_108 = arith.constant 32 : index
    %c0_109 = arith.constant 0 : index
    %116 = vector.load %arg16[%c32_108, %c0_109] : memref<392x32xf32, #tpu.memory_space<vmem>>, vector<328x32xf32>
    tpu.vector_store %arg16[%c32_108, %c0_109], %115 {strides = array<i32>} : memref<392x32xf32, #tpu.memory_space<vmem>>, vector<328x32xf32>,
    %c6_110 = arith.constant 6 : index
    %c0_111 = arith.constant 0 : index
    %117 = vector.load %arg16[%c6_110, %c0_111] : memref<392x32xf32, #tpu.memory_space<vmem>>, vector<344x32xf32>
    %cst_112 = arith.constant 0.000000e+00 : f32
    %118 = vector.broadcast %cst_112 : f32 to vector<344x32xf32>
    %119 = arith.maximumf %117, %118 : vector<344x32xf32>
    %120 = arith.truncf %119 : vector<344x32xf32> to vector<344x32xbf16>
    %c24_113 = arith.constant 24 : index
    %c0_114 = arith.constant 0 : index
    %121 = vector.load %arg17[%c24_113, %c0_114] : memref<392x96xbf16, #tpu.memory_space<vmem>>, vector<344x32xbf16>
    tpu.vector_store %arg17[%c24_113, %c0_114], %120 {strides = array<i32>} : memref<392x96xbf16, #tpu.memory_space<vmem>>, vector<344x32xbf16>,
    %c24_115 = arith.constant 24 : index
    %c0_116 = arith.constant 0 : index
    %122 = vector.load %arg16[%c24_115, %c0_116] : memref<392x32xf32, #tpu.memory_space<vmem>>, vector<344x32xf32>
    %cst_117 = arith.constant 0.000000e+00 : f32
    %123 = vector.broadcast %cst_117 : f32 to vector<344x32xf32>
    %124 = arith.maximumf %122, %123 : vector<344x32xf32>
    %125 = arith.truncf %124 : vector<344x32xf32> to vector<344x32xbf16>
    %c24_118 = arith.constant 24 : index
    %c32_119 = arith.constant 32 : index
    %126 = vector.load %arg17[%c24_118, %c32_119] : memref<392x96xbf16, #tpu.memory_space<vmem>>, vector<344x32xbf16>
    tpu.vector_store %arg17[%c24_118, %c32_119], %125 {strides = array<i32>} : memref<392x96xbf16, #tpu.memory_space<vmem>>, vector<344x32xbf16>,
    %c42_120 = arith.constant 42 : index
    %c0_121 = arith.constant 0 : index
    %127 = vector.load %arg16[%c42_120, %c0_121] : memref<392x32xf32, #tpu.memory_space<vmem>>, vector<344x32xf32>
    %cst_122 = arith.constant 0.000000e+00 : f32
    %128 = vector.broadcast %cst_122 : f32 to vector<344x32xf32>
    %129 = arith.maximumf %127, %128 : vector<344x32xf32>
    %130 = arith.truncf %129 : vector<344x32xf32> to vector<344x32xbf16>
    %c24_123 = arith.constant 24 : index
    %c64_124 = arith.constant 64 : index
    %131 = vector.load %arg17[%c24_123, %c64_124] : memref<392x96xbf16, #tpu.memory_space<vmem>>, vector<344x32xbf16>
    tpu.vector_store %arg17[%c24_123, %c64_124], %130 {strides = array<i32>} : memref<392x96xbf16, #tpu.memory_space<vmem>>, vector<344x32xbf16>,
    %c31_125 = arith.constant 31 : index
    %c0_126 = arith.constant 0 : index
    %132 = vector.load %arg17[%c31_125, %c0_126] : memref<392x96xbf16, #tpu.memory_space<vmem>>, vector<328x96xbf16>
    %c0_127 = arith.constant 0 : index
    %c0_128 = arith.constant 0 : index
    %c0_129 = arith.constant 0 : index
    %133 = vector.load %arg13[%c0_127, %c0_128, %c0_129] : memref<3x96x128xbf16, #tpu.memory_space<vmem>>, vector<1x96x128xbf16>
    %134 = vector.shape_cast %133 : vector<1x96x128xbf16> to vector<96x128xbf16>
    %cst_130 = arith.constant dense<0.000000e+00> : vector<328x128xf32>
    %135 = tpu.matmul %132, %134, %cst_130 {dimension_numbers = #tpu.dot_dimension_numbers<[1], [0], [0], [1], [0, 0, 1, 1], [], []>} : vector<328x96xbf16>, vector<96x128xbf16>, vector<328x128xf32> -> vector<328x128xf32>
    %c32_131 = arith.constant 32 : index
    %c0_132 = arith.constant 0 : index
    %136 = vector.load %arg17[%c32_131, %c0_132] : memref<392x96xbf16, #tpu.memory_space<vmem>>, vector<328x96xbf16>
    %c1_133 = arith.constant 1 : index
    %c0_134 = arith.constant 0 : index
    %c0_135 = arith.constant 0 : index
    %137 = vector.load %arg13[%c1_133, %c0_134, %c0_135] : memref<3x96x128xbf16, #tpu.memory_space<vmem>>, vector<1x96x128xbf16>
    %138 = vector.shape_cast %137 : vector<1x96x128xbf16> to vector<96x128xbf16>
    %cst_136 = arith.constant dense<0.000000e+00> : vector<328x128xf32>
    %139 = tpu.matmul %136, %138, %cst_136 {dimension_numbers = #tpu.dot_dimension_numbers<[1], [0], [0], [1], [0, 0, 1, 1], [], []>} : vector<328x96xbf16>, vector<96x128xbf16>, vector<328x128xf32> -> vector<328x128xf32>
    %140 = arith.addf %135, %139 : vector<328x128xf32>
    %c33_137 = arith.constant 33 : index
    %c0_138 = arith.constant 0 : index
    %141 = vector.load %arg17[%c33_137, %c0_138] : memref<392x96xbf16, #tpu.memory_space<vmem>>, vector<328x96xbf16>
    %c2_139 = arith.constant 2 : index
    %c0_140 = arith.constant 0 : index
    %c0_141 = arith.constant 0 : index
    %142 = vector.load %arg13[%c2_139, %c0_140, %c0_141] : memref<3x96x128xbf16, #tpu.memory_space<vmem>>, vector<1x96x128xbf16>
    %143 = vector.shape_cast %142 : vector<1x96x128xbf16> to vector<96x128xbf16>
    %cst_142 = arith.constant dense<0.000000e+00> : vector<328x128xf32>
    %144 = tpu.matmul %141, %143, %cst_142 {dimension_numbers = #tpu.dot_dimension_numbers<[1], [0], [0], [1], [0, 0, 1, 1], [], []>} : vector<328x96xbf16>, vector<96x128xbf16>, vector<328x128xf32> -> vector<328x128xf32>
    %145 = arith.addf %140, %144 : vector<328x128xf32>
    %c0_143 = arith.constant 0 : index
    %c0_144 = arith.constant 0 : index
    %146 = vector.load %arg14[%c0_143, %c0_144] : memref<1x128xf32, #tpu.memory_space<vmem>>, vector<1x128xf32>
    %147 = vector.broadcast %146 : vector<1x128xf32> to vector<328x128xf32>
    %148 = arith.addf %145, %147 : vector<328x128xf32>
    %c0_145 = arith.constant 0 : index
    %c0_146 = arith.constant 0 : index
    %c0_147 = arith.constant 0 : index
    %149 = vector.load %arg15[%c0_145, %c0_146, %c0_147] : memref<1x328x128xf32, #tpu.memory_space<vmem>>, vector<1x328x128xf32>
    %150 = vector.shape_cast %149 : vector<1x328x128xf32> to vector<328x128xf32>
    %151 = vector.shape_cast %148 : vector<328x128xf32> to vector<1x328x128xf32>
    tpu.vector_store %arg15[%c0_145, %c0_146, %c0_147], %151 {strides = array<i32>} : memref<1x328x128xf32, #tpu.memory_space<vmem>>, vector<1x328x128xf32>,
    return
  }
  func.func @transform_0(%arg0: i32) -> (i32, i32) {
    %c0_i32 = arith.constant 0 : i32
    %c0_i32_0 = arith.constant 0 : i32
    %c0_i32_1 = arith.constant 0 : i32
    return %c0_i32, %c0_i32_0 : i32, i32
  }
  func.func @transform_1(%arg0: i32) -> (i32, i32, i32) {
    %c0_i32 = arith.constant 0 : i32
    %c0_i32_0 = arith.constant 0 : i32
    %c0_i32_1 = arith.constant 0 : i32
    return %arg0, %c0_i32, %c0_i32_0 : i32, i32, i32
  }
  func.func @transform_2(%arg0: i32) -> (i32, i32, i32) {
    %c0_i32 = arith.constant 0 : i32
    %c0_i32_0 = arith.constant 0 : i32
    %c0_i32_1 = arith.constant 0 : i32
    %c0_i32_2 = arith.constant 0 : i32
    return %c0_i32, %c0_i32_0, %c0_i32_1 : i32, i32, i32
  }
  func.func @transform_3(%arg0: i32) -> (i32, i32) {
    %c0_i32 = arith.constant 0 : i32
    %c0_i32_0 = arith.constant 0 : i32
    %c0_i32_1 = arith.constant 0 : i32
    return %c0_i32, %c0_i32_0 : i32, i32
  }
  func.func @transform_4(%arg0: i32) -> (i32, i32, i32) {
    %c0_i32 = arith.constant 0 : i32
    %c0_i32_0 = arith.constant 0 : i32
    %c0_i32_1 = arith.constant 0 : i32
    %c0_i32_2 = arith.constant 0 : i32
    return %c0_i32, %c0_i32_0, %c0_i32_1 : i32, i32, i32
  }
  func.func @transform_5(%arg0: i32) -> (i32, i32) {
    %c0_i32 = arith.constant 0 : i32
    %c0_i32_0 = arith.constant 0 : i32
    %c0_i32_1 = arith.constant 0 : i32
    return %c0_i32, %c0_i32_0 : i32, i32
  }
  func.func @transform_6(%arg0: i32) -> (i32, i32) {
    %c0_i32 = arith.constant 0 : i32
    %c0_i32_0 = arith.constant 0 : i32
    %c0_i32_1 = arith.constant 0 : i32
    return %c0_i32, %c0_i32_0 : i32, i32
  }
  func.func @transform_7(%arg0: i32) -> (i32, i32) {
    %c0_i32 = arith.constant 0 : i32
    %c0_i32_0 = arith.constant 0 : i32
    %c0_i32_1 = arith.constant 0 : i32
    return %c0_i32, %c0_i32_0 : i32, i32
  }
  func.func @transform_8(%arg0: i32) -> (i32, i32, i32) {
    %c0_i32 = arith.constant 0 : i32
    %c0_i32_0 = arith.constant 0 : i32
    %c0_i32_1 = arith.constant 0 : i32
    %c0_i32_2 = arith.constant 0 : i32
    return %c0_i32, %c0_i32_0, %c0_i32_1 : i32, i32, i32
  }
  func.func @transform_9(%arg0: i32) -> (i32, i32) {
    %c0_i32 = arith.constant 0 : i32
    %c0_i32_0 = arith.constant 0 : i32
    %c0_i32_1 = arith.constant 0 : i32
    return %c0_i32, %c0_i32_0 : i32, i32
  }
  func.func @transform_10(%arg0: i32) -> (i32, i32) {
    %c0_i32 = arith.constant 0 : i32
    %c0_i32_0 = arith.constant 0 : i32
    %c0_i32_1 = arith.constant 0 : i32
    return %c0_i32, %c0_i32_0 : i32, i32
  }
  func.func @transform_11(%arg0: i32) -> (i32, i32) {
    %c0_i32 = arith.constant 0 : i32
    %c0_i32_0 = arith.constant 0 : i32
    %c0_i32_1 = arith.constant 0 : i32
    return %c0_i32, %c0_i32_0 : i32, i32
  }
  func.func @transform_12(%arg0: i32) -> (i32, i32, i32) {
    %c0_i32 = arith.constant 0 : i32
    %c0_i32_0 = arith.constant 0 : i32
    %c0_i32_1 = arith.constant 0 : i32
    %c0_i32_2 = arith.constant 0 : i32
    return %c0_i32, %c0_i32_0, %c0_i32_1 : i32, i32, i32
  }
  func.func @transform_13(%arg0: i32) -> (i32, i32) {
    %c0_i32 = arith.constant 0 : i32
    %c0_i32_0 = arith.constant 0 : i32
    %c0_i32_1 = arith.constant 0 : i32
    return %c0_i32, %c0_i32_0 : i32, i32
  }
  func.func @transform_14(%arg0: i32) -> (i32, i32, i32) {
    %c0_i32 = arith.constant 0 : i32
    %c0_i32_0 = arith.constant 0 : i32
    %c0_i32_1 = arith.constant 0 : i32
    return %arg0, %c0_i32, %c0_i32_0 : i32, i32, i32
  }
}

</mosaic_0001>

<llo_original>
// kernel: tpu_custom_call.1
$region0: #{tpu_custom_call.1}
  #allocation0 [shape = 'u32[]', space=smem, size = 0x4, offset = 0x4, fixed_abs, tag = 'smem constant byte address 0x4 - core index']
  #allocation1 [shape = 'u32[144,128]{1,0:T(1,128)}', space=vmem, size = 0x12000, scoped, tag = 'internal scratch']
  #allocation2 [shape = 'f32[392,32]{1,0:T(8,128)}', space=vmem, size = 0x31000, scoped, tag = 'scratch operand']
  #allocation3 [shape = 'bf16[392,96]{1,0:T(8,128)(2,1)}', space=vmem, size = 0x18800, scoped, tag = 'scratch operand']
  %s0 = inlined_call_operand.vmem [shape: f32[328,1], index: 0, kind: input, shape index: {}]
  %s1 = inlined_call_operand.vmem [shape: bf16[2,392,12], index: 1, kind: input, shape index: {}]
  %s2 = inlined_call_operand.vmem [shape: bf16[3,12,32], index: 2, kind: input, shape index: {}]
  %s3 = inlined_call_operand.vmem [shape: f32[1,32], index: 3, kind: input, shape index: {}]
  %s4 = inlined_call_operand.vmem [shape: bf16[3,96,16], index: 4, kind: input, shape index: {}]
  %s5 = inlined_call_operand.vmem [shape: f32[1,16], index: 5, kind: input, shape index: {}]
  %s6 = inlined_call_operand.vmem [shape: bf16[16,32], index: 6, kind: input, shape index: {}]
  %s7 = inlined_call_operand.vmem [shape: f32[1,32], index: 7, kind: input, shape index: {}]
  %s8 = inlined_call_operand.vmem [shape: bf16[3,96,16], index: 8, kind: input, shape index: {}]
  %s9 = inlined_call_operand.vmem [shape: f32[1,16], index: 9, kind: input, shape index: {}]
  %s10 = inlined_call_operand.vmem [shape: bf16[16,32], index: 10, kind: input, shape index: {}]
  %s11 = inlined_call_operand.vmem [shape: f32[1,32], index: 11, kind: input, shape index: {}]
  %s12 = inlined_call_operand.vmem [shape: bf16[3,96,128], index: 12, kind: input, shape index: {}]
  %s13 = inlined_call_operand.vmem [shape: f32[1,128], index: 13, kind: input, shape index: {}]
  %s14 = inlined_call_operand.hbm [shape: f32[2,328,128], index: 14, kind: output, shape index: {}]
  %s15 = sld [smem:[#allocation0]]
  $region89: #{tpu_custom_call.1} parent=0
    _
  %s17 = ssub.s32 1, %s15
  %s18 = scalar_select 0, %s17, %s15
  $region1: #{tpu_custom_call.1} parent=0
    #allocation4 [shape = 'u8[335872]{0}', space=vmem, size = 0x52000, scoped, tag = 'output window, operand 0']
    #allocation5 [shape = 's32[2]{0}', space=sflag, size = 0x8, scoped, tag = 'scoped memory for tpu_custom_call.1']
    %19 = vsyncpa [#allocation5], 0
    %s20 = scalar_lea.sflag [#allocation5], 1
    %21 = vsyncpa %s20, 0
    loop: start=0, step=1, limit=4
    $region2: #{tpu_custom_call.1} parent=1 // loop_pre_header
      _
    $region3: #{tpu_custom_call.1} parent=1 // loop_header
      %s23 = sphi 0, %s27
      %p24 = scmp.ge.s32.totalorder %s23, 4
      %s31 = sphi 0, %s31
      %s33 = sphi 0, %s31
      %s34 = sphi 0, %s33
      %s48 = sphi 0, %s34
      %s54 = sphi 0, %s56
      %s57 = sphi 0, %s54
      %s58 = sphi 0, %s57
      %s74 = sphi 0, %s58
      %s78 = sphi 0, %s78
      %s80 = sphi 0, %s78
      %s81 = sphi 0, %s80
      %s95 = sphi 0, %s81
      %s99 = sphi 0, %s99
      %s101 = sphi 0, %s99
      %s102 = sphi 0, %s101
      %s116 = sphi 0, %s102
      %s120 = sphi 0, %s120
      %s122 = sphi 0, %s120
      %s123 = sphi 0, %s122
      %s137 = sphi 0, %s123
      %s141 = sphi 0, %s141
      %s143 = sphi 0, %s141
      %s144 = sphi 0, %s143
      %s158 = sphi 0, %s144
      %s162 = sphi 0, %s162
      %s164 = sphi 0, %s162
      %s165 = sphi 0, %s164
      %s179 = sphi 0, %s165
      %s183 = sphi 0, %s183
      %s185 = sphi 0, %s183
      %s186 = sphi 0, %s185
      %s200 = sphi 0, %s186
      %s204 = sphi 0, %s204
      %s206 = sphi 0, %s204
      %s207 = sphi 0, %s206
      %s221 = sphi 0, %s207
      %s225 = sphi 0, %s225
      %s227 = sphi 0, %s225
      %s228 = sphi 0, %s227
      %s242 = sphi 0, %s228
      %s246 = sphi 0, %s246
      %s248 = sphi 0, %s246
      %s249 = sphi 0, %s248
      %s263 = sphi 0, %s249
      %s267 = sphi 0, %s267
      %s269 = sphi 0, %s267
      %s270 = sphi 0, %s269
      %s284 = sphi 0, %s270
      %s288 = sphi 0, %s288
      %s290 = sphi 0, %s288
      %s291 = sphi 0, %s290
      %s305 = sphi 0, %s291
      %s309 = sphi 0, %s309
      %s311 = sphi 0, %s309
      %s312 = sphi 0, %s311
      %s326 = sphi 0, %s312
      %s332 = sphi 0, %s334
      %s335 = sphi 0, %s332
      %s336 = sphi 0, %s335
      %s352 = sphi 0, %s336
    $region4: #{tpu_custom_call.1} parent=1 // loop_header_branch
      %26 = sbr.rel (%p24) target = $region8
    $region5: #{tpu_custom_call.1} parent=1 // loop_body
      %s28 = ssub.s32 %s23, 1
      %s29 = ssub.s32 %s23, 2
      %s30 = sadd.s32 %s23, 1
      %s32 = sadd.s32 %s31, 1
      %p35 = scmp.eq.s32.totalorder %s23, 1
      %p36 = scmp.ne.s32.totalorder %s31, %s33
      %p37 = scmp.eq.s32.totalorder %s23, 0
      %p38 = por %p36, %p37
      %p39 = scmp.ne.s32.totalorder %s31, %s33
      %p40 = scmp.eq.s32.totalorder %s28, 1
      %p41 = por %p39, %p40
      %p42 = scmp.ne.s32.totalorder %s33, %s34
      %p43 = scmp.eq.s32.totalorder %s28, 0
      %p44 = por %p42, %p43
      %p45 = scmp.ne.s32.totalorder %s33, %s34
      %p46 = scmp.eq.s32.totalorder %s29, 1
      %p47 = por %p45, %p46
      %p49 = scmp.ne.s32.totalorder %s34, %s48
      %p50 = scmp.eq.s32.totalorder %s29, 0
      %p51 = por %p49, %p50
      %s52 = ssub.s32 %s23, %s30
      %p53 = scmp.eq.s32.totalorder %s52, 0
      %s55 = sadd.s32 %s54, 1
      %s56 = scalar_select %p53, %s54, %s55
      %p59 = pneg %p53
      %p60 = scmp.eq.s32.totalorder %s23, 1
      %p61 = por %p59, %p60
      %p62 = scmp.ne.s32.totalorder %s54, %s57
      %p63 = scmp.eq.s32.totalorder %s23, 0
      %p64 = por %p62, %p63
      %p65 = scmp.ne.s32.totalorder %s54, %s57
      %p66 = scmp.eq.s32.totalorder %s28, 1
      %p67 = por %p65, %p66
      %p68 = scmp.ne.s32.totalorder %s57, %s58
      %p69 = scmp.eq.s32.totalorder %s28, 0
      %p70 = por %p68, %p69
      %p71 = scmp.ne.s32.totalorder %s57, %s58
      %p72 = scmp.eq.s32.totalorder %s29, 1
      %p73 = por %p71, %p72
      %p75 = scmp.ne.s32.totalorder %s58, %s74
      %p76 = scmp.eq.s32.totalorder %s29, 0
      %p77 = por %p75, %p76
      %s79 = sadd.s32 %s78, 1
      %p82 = scmp.eq.s32.totalorder %s23, 1
      %p83 = scmp.ne.s32.totalorder %s78, %s80
      %p84 = scmp.eq.s32.totalorder %s23, 0
      %p85 = por %p83, %p84
      %p86 = scmp.ne.s32.totalorder %s78, %s80
      %p87 = scmp.eq.s32.totalorder %s28, 1
      %p88 = por %p86, %p87
      %p89 = scmp.ne.s32.totalorder %s80, %s81
      %p90 = scmp.eq.s32.totalorder %s28, 0
      %p91 = por %p89, %p90
      %p92 = scmp.ne.s32.totalorder %s80, %s81
      %p93 = scmp.eq.s32.totalorder %s29, 1
      %p94 = por %p92, %p93
      %p96 = scmp.ne.s32.totalorder %s81, %s95
      %p97 = scmp.eq.s32.totalorder %s29, 0
      %p98 = por %p96, %p97
      %s100 = sadd.s32 %s99, 1
      %p103 = scmp.eq.s32.totalorder %s23, 1
      %p104 = scmp.ne.s32.totalorder %s99, %s101
      %p105 = scmp.eq.s32.totalorder %s23, 0
      %p106 = por %p104, %p105
      %p107 = scmp.ne.s32.totalorder %s99, %s101
      %p108 = scmp.eq.s32.totalorder %s28, 1
      %p109 = por %p107, %p108
      %p110 = scmp.ne.s32.totalorder %s101, %s102
      %p111 = scmp.eq.s32.totalorder %s28, 0
      %p112 = por %p110, %p111
      %p113 = scmp.ne.s32.totalorder %s101, %s102
      %p114 = scmp.eq.s32.totalorder %s29, 1
      %p115 = por %p113, %p114
      %p117 = scmp.ne.s32.totalorder %s102, %s116
      %p118 = scmp.eq.s32.totalorder %s29, 0
      %p119 = por %p117, %p118
      %s121 = sadd.s32 %s120, 1
      %p124 = scmp.eq.s32.totalorder %s23, 1
      %p125 = scmp.ne.s32.totalorder %s120, %s122
      %p126 = scmp.eq.s32.totalorder %s23, 0
      %p127 = por %p125, %p126
      %p128 = scmp.ne.s32.totalorder %s120, %s122
      %p129 = scmp.eq.s32.totalorder %s28, 1
      %p130 = por %p128, %p129
      %p131 = scmp.ne.s32.totalorder %s122, %s123
      %p132 = scmp.eq.s32.totalorder %s28, 0
      %p133 = por %p131, %p132
      %p134 = scmp.ne.s32.totalorder %s122, %s123
      %p135 = scmp.eq.s32.totalorder %s29, 1
      %p136 = por %p134, %p135
      %p138 = scmp.ne.s32.totalorder %s123, %s137
      %p139 = scmp.eq.s32.totalorder %s29, 0
      %p140 = por %p138, %p139
      %s142 = sadd.s32 %s141, 1
      %p145 = scmp.eq.s32.totalorder %s23, 1
      %p146 = scmp.ne.s32.totalorder %s141, %s143
      %p147 = scmp.eq.s32.totalorder %s23, 0
      %p148 = por %p146, %p147
      %p149 = scmp.ne.s32.totalorder %s141, %s143
      %p150 = scmp.eq.s32.totalorder %s28, 1
      %p151 = por %p149, %p150
      %p152 = scmp.ne.s32.totalorder %s143, %s144
      %p153 = scmp.eq.s32.totalorder %s28, 0
      %p154 = por %p152, %p153
      %p155 = scmp.ne.s32.totalorder %s143, %s144
      %p156 = scmp.eq.s32.totalorder %s29, 1
      %p157 = por %p155, %p156
      %p159 = scmp.ne.s32.totalorder %s144, %s158
      %p160 = scmp.eq.s32.totalorder %s29, 0
      %p161 = por %p159, %p160
      %s163 = sadd.s32 %s162, 1
      %p166 = scmp.eq.s32.totalorder %s23, 1
      %p167 = scmp.ne.s32.totalorder %s162, %s164
      %p168 = scmp.eq.s32.totalorder %s23, 0
      %p169 = por %p167, %p168
      %p170 = scmp.ne.s32.totalorder %s162, %s164
      %p171 = scmp.eq.s32.totalorder %s28, 1
      %p172 = por %p170, %p171
      %p173 = scmp.ne.s32.totalorder %s164, %s165
      %p174 = scmp.eq.s32.totalorder %s28, 0
      %p175 = por %p173, %p174
      %p176 = scmp.ne.s32.totalorder %s164, %s165
      %p177 = scmp.eq.s32.totalorder %s29, 1
      %p178 = por %p176, %p177
      %p180 = scmp.ne.s32.totalorder %s165, %s179
      %p181 = scmp.eq.s32.totalorder %s29, 0
      %p182 = por %p180, %p181
      %s184 = sadd.s32 %s183, 1
      %p187 = scmp.eq.s32.totalorder %s23, 1
      %p188 = scmp.ne.s32.totalorder %s183, %s185
      %p189 = scmp.eq.s32.totalorder %s23, 0
      %p190 = por %p188, %p189
      %p191 = scmp.ne.s32.totalorder %s183, %s185
      %p192 = scmp.eq.s32.totalorder %s28, 1
      %p193 = por %p191, %p192
      %p194 = scmp.ne.s32.totalorder %s185, %s186
      %p195 = scmp.eq.s32.totalorder %s28, 0
      %p196 = por %p194, %p195
      %p197 = scmp.ne.s32.totalorder %s185, %s186
      %p198 = scmp.eq.s32.totalorder %s29, 1
      %p199 = por %p197, %p198
      %p201 = scmp.ne.s32.totalorder %s186, %s200
      %p202 = scmp.eq.s32.totalorder %s29, 0
      %p203 = por %p201, %p202
      %s205 = sadd.s32 %s204, 1
      %p208 = scmp.eq.s32.totalorder %s23, 1
      %p209 = scmp.ne.s32.totalorder %s204, %s206
      %p210 = scmp.eq.s32.totalorder %s23, 0
      %p211 = por %p209, %p210
      %p212 = scmp.ne.s32.totalorder %s204, %s206
      %p213 = scmp.eq.s32.totalorder %s28, 1
      %p214 = por %p212, %p213
      %p215 = scmp.ne.s32.totalorder %s206, %s207
      %p216 = scmp.eq.s32.totalorder %s28, 0
      %p217 = por %p215, %p216
      %p218 = scmp.ne.s32.totalorder %s206, %s207
      %p219 = scmp.eq.s32.totalorder %s29, 1
      %p220 = por %p218, %p219
      %p222 = scmp.ne.s32.totalorder %s207, %s221
      %p223 = scmp.eq.s32.totalorder %s29, 0
      %p224 = por %p222, %p223
      %s226 = sadd.s32 %s225, 1
      %p229 = scmp.eq.s32.totalorder %s23, 1
      %p230 = scmp.ne.s32.totalorder %s225, %s227
      %p231 = scmp.eq.s32.totalorder %s23, 0
      %p232 = por %p230, %p231
      %p233 = scmp.ne.s32.totalorder %s225, %s227
      %p234 = scmp.eq.s32.totalorder %s28, 1
      %p235 = por %p233, %p234
      %p236 = scmp.ne.s32.totalorder %s227, %s228
      %p237 = scmp.eq.s32.totalorder %s28, 0
      %p238 = por %p236, %p237
      %p239 = scmp.ne.s32.totalorder %s227, %s228
      %p240 = scmp.eq.s32.totalorder %s29, 1
      %p241 = por %p239, %p240
      %p243 = scmp.ne.s32.totalorder %s228, %s242
      %p244 = scmp.eq.s32.totalorder %s29, 0
      %p245 = por %p243, %p244
      %s247 = sadd.s32 %s246, 1
      %p250 = scmp.eq.s32.totalorder %s23, 1
      %p251 = scmp.ne.s32.totalorder %s246, %s248
      %p252 = scmp.eq.s32.totalorder %s23, 0
      %p253 = por %p251, %p252
      %p254 = scmp.ne.s32.totalorder %s246, %s248
      %p255 = scmp.eq.s32.totalorder %s28, 1
      %p256 = por %p254, %p255
      %p257 = scmp.ne.s32.totalorder %s248, %s249
      %p258 = scmp.eq.s32.totalorder %s28, 0
      %p259 = por %p257, %p258
      %p260 = scmp.ne.s32.totalorder %s248, %s249
      %p261 = scmp.eq.s32.totalorder %s29, 1
      %p262 = por %p260, %p261
      %p264 = scmp.ne.s32.totalorder %s249, %s263
      %p265 = scmp.eq.s32.totalorder %s29, 0
      %p266 = por %p264, %p265
      %s268 = sadd.s32 %s267, 1
      %p271 = scmp.eq.s32.totalorder %s23, 1
      %p272 = scmp.ne.s32.totalorder %s267, %s269
      %p273 = scmp.eq.s32.totalorder %s23, 0
      %p274 = por %p272, %p273
      %p275 = scmp.ne.s32.totalorder %s267, %s269
      %p276 = scmp.eq.s32.totalorder %s28, 1
      %p277 = por %p275, %p276
      %p278 = scmp.ne.s32.totalorder %s269, %s270
      %p279 = scmp.eq.s32.totalorder %s28, 0
      %p280 = por %p278, %p279
      %p281 = scmp.ne.s32.totalorder %s269, %s270
      %p282 = scmp.eq.s32.totalorder %s29, 1
      %p283 = por %p281, %p282
      %p285 = scmp.ne.s32.totalorder %s270, %s284
      %p286 = scmp.eq.s32.totalorder %s29, 0
      %p287 = por %p285, %p286
      %s289 = sadd.s32 %s288, 1
      %p292 = scmp.eq.s32.totalorder %s23, 1
      %p293 = scmp.ne.s32.totalorder %s288, %s290
      %p294 = scmp.eq.s32.totalorder %s23, 0
      %p295 = por %p293, %p294
      %p296 = scmp.ne.s32.totalorder %s288, %s290
      %p297 = scmp.eq.s32.totalorder %s28, 1
      %p298 = por %p296, %p297
      %p299 = scmp.ne.s32.totalorder %s290, %s291
      %p300 = scmp.eq.s32.totalorder %s28, 0
      %p301 = por %p299, %p300
      %p302 = scmp.ne.s32.totalorder %s290, %s291
      %p303 = scmp.eq.s32.totalorder %s29, 1
      %p304 = por %p302, %p303
      %p306 = scmp.ne.s32.totalorder %s291, %s305
      %p307 = scmp.eq.s32.totalorder %s29, 0
      %p308 = por %p306, %p307
      %s310 = sadd.s32 %s309, 1
      %p313 = scmp.eq.s32.totalorder %s23, 1
      %p314 = scmp.ne.s32.totalorder %s309, %s311
      %p315 = scmp.eq.s32.totalorder %s23, 0
      %p316 = por %p314, %p315
      %p317 = scmp.ne.s32.totalorder %s309, %s311
      %p318 = scmp.eq.s32.totalorder %s28, 1
      %p319 = por %p317, %p318
      %p320 = scmp.ne.s32.totalorder %s311, %s312
      %p321 = scmp.eq.s32.totalorder %s28, 0
      %p322 = por %p320, %p321
      %p323 = scmp.ne.s32.totalorder %s311, %s312
      %p324 = scmp.eq.s32.totalorder %s29, 1
      %p325 = por %p323, %p324
      %p327 = scmp.ne.s32.totalorder %s312, %s326
      %p328 = scmp.eq.s32.totalorder %s29, 0
      %p329 = por %p327, %p328
      %s330 = ssub.s32 %s23, %s30
      %p331 = scmp.eq.s32.totalorder %s330, 0
      %s333 = sadd.s32 %s332, 1
      %s334 = scalar_select %p331, %s332, %s333
      %p337 = pneg %p331
      %p338 = scmp.eq.s32.totalorder %s23, 1
      %p339 = por %p337, %p338
      %p340 = scmp.ne.s32.totalorder %s332, %s335
      %p341 = scmp.eq.s32.totalorder %s23, 0
      %p342 = por %p340, %p341
      %p343 = scmp.ne.s32.totalorder %s332, %s335
      %p344 = scmp.eq.s32.totalorder %s28, 1
      %p345 = por %p343, %p344
      %p346 = scmp.ne.s32.totalorder %s335, %s336
      %p347 = scmp.eq.s32.totalorder %s28, 0
      %p348 = por %p346, %p347
      %p349 = scmp.ne.s32.totalorder %s335, %s336
      %p350 = scmp.eq.s32.totalorder %s29, 1
      %p351 = por %p349, %p350
      %p353 = scmp.ne.s32.totalorder %s336, %s352
      %p354 = scmp.eq.s32.totalorder %s29, 0
      %p355 = por %p353, %p354
      %p356 = scmp.le.s32.totalorder 1, %s23
      %p357 = scmp.lt.s32.totalorder %s23, 3
      %p358 = pnand %p356, %p357
      %p359 = pneg %p358
      // Predicated region
      $region9: #{tpu_custom_call.1} parent=5 // pred_check
        _
      $region10: #{tpu_custom_call.1} parent=5 // pred_check_branch
        %361 = sbr.rel (%p358) target = $region12
      $region11: #{tpu_custom_call.1} parent=5 // pred_region
        %s362 = ssub.s32 %s23, 1
        // Predicated region
        $region13: #{tpu_custom_call.1} parent=11 // pred_check
          %p363 = pneg %p44
        $region14: #{tpu_custom_call.1} parent=11 // pred_check_branch
          %365 = sbr.rel (%p363) target = $region16
        $region15: #{tpu_custom_call.1} parent=11 // pred_region
          _
        $region16: #{tpu_custom_call.1} parent=11 // pred_fallthru
          _
        // Predicated region
        $region17: #{tpu_custom_call.1} parent=11 // pred_check
          %p366 = pneg %p91
        $region18: #{tpu_custom_call.1} parent=11 // pred_check_branch
          %368 = sbr.rel (%p366) target = $region20
        $region19: #{tpu_custom_call.1} parent=11 // pred_region
          _
        $region20: #{tpu_custom_call.1} parent=11 // pred_fallthru
          _
        // Predicated region
        $region21: #{tpu_custom_call.1} parent=11 // pred_check
          %p369 = pneg %p112
        $region22: #{tpu_custom_call.1} parent=11 // pred_check_branch
          %371 = sbr.rel (%p369) target = $region24
        $region23: #{tpu_custom_call.1} parent=11 // pred_region
          _
        $region24: #{tpu_custom_call.1} parent=11 // pred_fallthru
          _
        // Predicated region
        $region25: #{tpu_custom_call.1} parent=11 // pred_check
          %p372 = pneg %p133
        $region26: #{tpu_custom_call.1} parent=11 // pred_check_branch
          %374 = sbr.rel (%p372) target = $region28
        $region27: #{tpu_custom_call.1} parent=11 // pred_region
          _
        $region28: #{tpu_custom_call.1} parent=11 // pred_fallthru
          _
        // Predicated region
        $region29: #{tpu_custom_call.1} parent=11 // pred_check
          %p375 = pneg %p154
        $region30: #{tpu_custom_call.1} parent=11 // pred_check_branch
          %377 = sbr.rel (%p375) target = $region32
        $region31: #{tpu_custom_call.1} parent=11 // pred_region
          _
        $region32: #{tpu_custom_call.1} parent=11 // pred_fallthru
          _
        // Predicated region
        $region33: #{tpu_custom_call.1} parent=11 // pred_check
          %p378 = pneg %p175
        $region34: #{tpu_custom_call.1} parent=11 // pred_check_branch
          %380 = sbr.rel (%p378) target = $region36
        $region35: #{tpu_custom_call.1} parent=11 // pred_region
          _
        $region36: #{tpu_custom_call.1} parent=11 // pred_fallthru
          _
        // Predicated region
        $region37: #{tpu_custom_call.1} parent=11 // pred_check
          %p381 = pneg %p196
        $region38: #{tpu_custom_call.1} parent=11 // pred_check_branch
          %383 = sbr.rel (%p381) target = $region40
        $region39: #{tpu_custom_call.1} parent=11 // pred_region
          _
        $region40: #{tpu_custom_call.1} parent=11 // pred_fallthru
          _
        // Predicated region
        $region41: #{tpu_custom_call.1} parent=11 // pred_check
          %p384 = pneg %p217
        $region42: #{tpu_custom_call.1} parent=11 // pred_check_branch
          %386 = sbr.rel (%p384) target = $region44
        $region43: #{tpu_custom_call.1} parent=11 // pred_region
          _
        $region44: #{tpu_custom_call.1} parent=11 // pred_fallthru
          _
        // Predicated region
        $region45: #{tpu_custom_call.1} parent=11 // pred_check
          %p387 = pneg %p238
        $region46: #{tpu_custom_call.1} parent=11 // pred_check_branch
          %389 = sbr.rel (%p387) target = $region48
        $region47: #{tpu_custom_call.1} parent=11 // pred_region
          _
        $region48: #{tpu_custom_call.1} parent=11 // pred_fallthru
          _
        // Predicated region
        $region49: #{tpu_custom_call.1} parent=11 // pred_check
          %p390 = pneg %p259
        $region50: #{tpu_custom_call.1} parent=11 // pred_check_branch
          %392 = sbr.rel (%p390) target = $region52
        $region51: #{tpu_custom_call.1} parent=11 // pred_region
          _
        $region52: #{tpu_custom_call.1} parent=11 // pred_fallthru
          _
        // Predicated region
        $region53: #{tpu_custom_call.1} parent=11 // pred_check
          %p393 = pneg %p280
        $region54: #{tpu_custom_call.1} parent=11 // pred_check_branch
          %395 = sbr.rel (%p393) target = $region56
        $region55: #{tpu_custom_call.1} parent=11 // pred_region
          _
        $region56: #{tpu_custom_call.1} parent=11 // pred_fallthru
          _
        // Predicated region
        $region57: #{tpu_custom_call.1} parent=11 // pred_check
          %p396 = pneg %p301
        $region58: #{tpu_custom_call.1} parent=11 // pred_check_branch
          %398 = sbr.rel (%p396) target = $region60
        $region59: #{tpu_custom_call.1} parent=11 // pred_region
          _
        $region60: #{tpu_custom_call.1} parent=11 // pred_fallthru
          _
        // Predicated region
        $region61: #{tpu_custom_call.1} parent=11 // pred_check
          %p399 = pneg %p322
        $region62: #{tpu_custom_call.1} parent=11 // pred_check_branch
          %401 = sbr.rel (%p399) target = $region64
        $region63: #{tpu_custom_call.1} parent=11 // pred_region
          _
        $region64: #{tpu_custom_call.1} parent=11 // pred_fallthru
          _
      $region12: #{tpu_custom_call.1} parent=5 // pred_fallthru
        _
      %p402 = scmp.lt.s32.totalorder %s23, 2
      // Predicated region
      $region65: #{tpu_custom_call.1} parent=5 // pred_check
        %p403 = pneg %p402
      $region66: #{tpu_custom_call.1} parent=5 // pred_check_branch
        %405 = sbr.rel (%p403) target = $region68
      $region67: #{tpu_custom_call.1} parent=5 // pred_region
        // Predicated region
        $region69: #{tpu_custom_call.1} parent=67 // pred_check
          %p406 = pneg %p64
        $region70: #{tpu_custom_call.1} parent=67 // pred_check_branch
          %408 = sbr.rel (%p406) target = $region72
        $region71: #{tpu_custom_call.1} parent=67 // pred_region
          %p409 = scmp.lt.s32.totalorder %s23, 1
          %s410 = scalar_select %p409, %s23, 1
          %s411 = smul.addr %s410, 49
          %s412 = smul.addr %s411, 4
          %s413 = scalar_lea.vmem %s1, %s412
        $region72: #{tpu_custom_call.1} parent=67 // pred_fallthru
          _
      $region68: #{tpu_custom_call.1} parent=5 // pred_fallthru
        _
      %p414 = scmp.le.s32.totalorder 1, %s23
      %p415 = scmp.lt.s32.totalorder %s23, 3
      %p416 = pnand %p414, %p415
      %p417 = pneg %p416
      // Predicated region
      $region73: #{tpu_custom_call.1} parent=5 // pred_check
        _
      $region74: #{tpu_custom_call.1} parent=5 // pred_check_branch
        %419 = sbr.rel (%p416) target = $region76
      $region75: #{tpu_custom_call.1} parent=5 // pred_region
        %s420 = ssub.s32 %s23, 1
        %p421 = pneg %p44
        %p422 = pneg %p41
        %p423 = scmp.lt.s32.totalorder %s28, 1
        %s424 = scalar_select %p423, %s28, 1
        %s425 = smul.addr %s424, 49
        %s426 = smul.addr %s425, 4
        %s427 = scalar_lea.vmem %s1, %s426
        %p428 = pneg %p70
        %p429 = pneg %p67
        %p430 = pneg %p91
        %p431 = pneg %p88
        %p432 = pneg %p112
        %p433 = pneg %p109
        %p434 = pneg %p133
        %p435 = pneg %p130
        %p436 = pneg %p154
        %p437 = pneg %p151
        %p438 = pneg %p175
        %p439 = pneg %p172
        %p440 = pneg %p196
        %p441 = pneg %p193
        %p442 = pneg %p217
        %p443 = pneg %p214
        %p444 = pneg %p238
        %p445 = pneg %p235
        %p446 = pneg %p259
        %p447 = pneg %p256
        %p448 = pneg %p280
        %p449 = pneg %p277
        %p450 = pneg %p301
        %p451 = pneg %p298
        %p452 = pneg %p322
        %p453 = pneg %p319
        %p454 = pneg %p348
        %p455 = pneg %p345
        %s456 = sand.u32 %s335, 1
        %s457 = scalar_lea.sflag [#allocation5], %s456
        %s458 = sand.u32 %s335, 1
        %s459 = smul.addr %s458, 328
        %s460 = scalar_lea.vmem [#allocation4], %s459
        %p461 = scmp.lt.s32.totalorder %s28, 1
        %s462 = scalar_select %p461, %s28, 1
        %s463 = smul.addr %s462, 49
        %s464 = smul.addr %s463, 4
        %s465 = scalar_lea.vmem %s1, %s464
        %vm467 = vcmask 261120
        %468 = vst.msk [vmem:[#allocation2] sm:$0xff] %vm467, 0.0
        %469 = vst.msk [vmem:[#allocation2 + $0x8] sm:$0xff] %vm467, 0.0
        %470 = vst.msk [vmem:[#allocation2 + $0x10] sm:$0xff] %vm467, 0.0
        %471 = vst.msk [vmem:[#allocation2 + $0x18] sm:$0xff] %vm467, 0.0
        %472 = vst.msk [vmem:[#allocation2 + $0x168] sm:$0xff] %vm467, 0.0
        %473 = vst.msk [vmem:[#allocation2 + $0x170] sm:$0xff] %vm467, 0.0
        %474 = vst.msk [vmem:[#allocation2 + $0x178] sm:$0xff] %vm467, 0.0
        %475 = vst.msk [vmem:[#allocation2 + $0x180] sm:$0xff] %vm467, 0.0
        %v476 = vld [vmem:[%s0] sm:$0xff]
        %v477 = vld [vmem:[%s0 + $0x8] sm:$0xff]
        %v478 = vld [vmem:[%s0 + $0x10] sm:$0xff]
        %v479 = vld [vmem:[%s0 + $0x18] sm:$0xff]
        %v480 = vld [vmem:[%s0 + $0x20] sm:$0xff]
        %v481 = vld [vmem:[%s0 + $0x28] sm:$0xff]
        %v482 = vld [vmem:[%s0 + $0x30] sm:$0xff]
        %v483 = vld [vmem:[%s0 + $0x38] sm:$0xff]
        %v484 = vld [vmem:[%s0 + $0x40] sm:$0xff]
        %v485 = vld [vmem:[%s0 + $0x48] sm:$0xff]
        %v486 = vld [vmem:[%s0 + $0x50] sm:$0xff]
        %v487 = vld [vmem:[%s0 + $0x58] sm:$0xff]
        %v488 = vld [vmem:[%s0 + $0x60] sm:$0xff]
        %v489 = vld [vmem:[%s0 + $0x68] sm:$0xff]
        %v490 = vld [vmem:[%s0 + $0x70] sm:$0xff]
        %v491 = vld [vmem:[%s0 + $0x78] sm:$0xff]
        %v492 = vld [vmem:[%s0 + $0x80] sm:$0xff]
        %v493 = vld [vmem:[%s0 + $0x88] sm:$0xff]
        %v494 = vld [vmem:[%s0 + $0x90] sm:$0xff]
        %v495 = vld [vmem:[%s0 + $0x98] sm:$0xff]
        %v496 = vld [vmem:[%s0 + $0xa0] sm:$0xff]
        %v497 = vld [vmem:[%s0 + $0xa8] sm:$0xff]
        %v498 = vld [vmem:[%s0 + $0xb0] sm:$0xff]
        %v499 = vld [vmem:[%s0 + $0xb8] sm:$0xff]
        %v500 = vld [vmem:[%s0 + $0xc0] sm:$0xff]
        %v501 = vld [vmem:[%s0 + $0xc8] sm:$0xff]
        %v502 = vld [vmem:[%s0 + $0xd0] sm:$0xff]
        %v503 = vld [vmem:[%s0 + $0xd8] sm:$0xff]
        %v504 = vld [vmem:[%s0 + $0xe0] sm:$0xff]
        %v505 = vld [vmem:[%s0 + $0xe8] sm:$0xff]
        %v506 = vld [vmem:[%s0 + $0xf0] sm:$0xff]
        %v507 = vld [vmem:[%s0 + $0xf8] sm:$0xff]
        %v508 = vld [vmem:[%s0 + $0x100] sm:$0xff]
        %v509 = vld [vmem:[%s0 + $0x108] sm:$0xff]
        %v510 = vld [vmem:[%s0 + $0x110] sm:$0xff]
        %v511 = vld [vmem:[%s0 + $0x118] sm:$0xff]
        %v512 = vld [vmem:[%s0 + $0x120] sm:$0xff]
        %v513 = vld [vmem:[%s0 + $0x128] sm:$0xff]
        %v514 = vld [vmem:[%s0 + $0x130] sm:$0xff]
        %v515 = vld [vmem:[%s0 + $0x138] sm:$0xff]
        %v516 = vld [vmem:[%s0 + $0x140] sm:$0xff]
        %v517 = vld [vmem:[%s465 + $0xc] sm:$0x8]
        %v518 = vld [vmem:[%s465 + $0x10] sm:$0xf]
        %v519 = vld [vmem:[%s465 + $0x14] sm:$0xf]
        %v520 = vld [vmem:[%s465 + $0x18] sm:$0xf]
        %v521 = vld [vmem:[%s465 + $0x1c] sm:$0xf]
        %v522 = vld [vmem:[%s465 + $0x20] sm:$0xf]
        %v523 = vld [vmem:[%s465 + $0x24] sm:$0xf]
        %v524 = vld [vmem:[%s465 + $0x28] sm:$0xf]
        %v525 = vld [vmem:[%s465 + $0x2c] sm:$0xf]
        %v526 = vld [vmem:[%s465 + $0x30] sm:$0xf]
        %v527 = vld [vmem:[%s465 + $0x34] sm:$0xf]
        %v528 = vld [vmem:[%s465 + $0x38] sm:$0xf]
        %v529 = vld [vmem:[%s465 + $0x3c] sm:$0xf]
        %v530 = vld [vmem:[%s465 + $0x40] sm:$0xf]
        %v531 = vld [vmem:[%s465 + $0x44] sm:$0xf]
        %v532 = vld [vmem:[%s465 + $0x48] sm:$0xf]
        %v533 = vld [vmem:[%s465 + $0x4c] sm:$0xf]
        %v534 = vld [vmem:[%s465 + $0x50] sm:$0xf]
        %v535 = vld [vmem:[%s465 + $0x54] sm:$0xf]
        %v536 = vld [vmem:[%s465 + $0x58] sm:$0xf]
        %v537 = vld [vmem:[%s465 + $0x5c] sm:$0xf]
        %v538 = vld [vmem:[%s465 + $0x60] sm:$0xf]
        %v539 = vld [vmem:[%s465 + $0x64] sm:$0xf]
        %v540 = vld [vmem:[%s465 + $0x68] sm:$0xf]
        %v541 = vld [vmem:[%s465 + $0x6c] sm:$0xf]
        %v542 = vld [vmem:[%s465 + $0x70] sm:$0xf]
        %v543 = vld [vmem:[%s465 + $0x74] sm:$0xf]
        %v544 = vld [vmem:[%s465 + $0x78] sm:$0xf]
        %v545 = vld [vmem:[%s465 + $0x7c] sm:$0xf]
        %v546 = vld [vmem:[%s465 + $0x80] sm:$0xf]
        %v547 = vld [vmem:[%s465 + $0x84] sm:$0xf]
        %v548 = vld [vmem:[%s465 + $0x88] sm:$0xf]
        %v549 = vld [vmem:[%s465 + $0x8c] sm:$0xf]
        %v550 = vld [vmem:[%s465 + $0x90] sm:$0xf]
        %v551 = vld [vmem:[%s465 + $0x94] sm:$0xf]
        %v552 = vld [vmem:[%s465 + $0x98] sm:$0xf]
        %v553 = vld [vmem:[%s465 + $0x9c] sm:$0xf]
        %v554 = vld [vmem:[%s465 + $0xa0] sm:$0xf]
        %v555 = vld [vmem:[%s465 + $0xa4] sm:$0xf]
        %v556 = vld [vmem:[%s465 + $0xa8] sm:$0xf]
        %v557 = vld [vmem:[%s465 + $0xac] sm:$0xf]
        %v558 = vld [vmem:[%s465 + $0xb0] sm:$0xf]
        %v559 = vld [vmem:[%s2] sm:$0xf]
        %v560 = vld [vmem:[%s2 + $0x4] sm:$0x3]
        %s561 = scalar_lea.vmem %s2, 8
        %v562 = vld [vmem:[%s561] sm:$0xf]
        %v563 = vld [vmem:[%s561 + $0x4] sm:$0x3]
        %v605 = vunpack.c.l.b16 %v518
        %v606 = vunpack.c.l.b16 %v519
        %v607 = vunpack.c.l.b16 %v520
        %v608 = vunpack.c.l.b16 %v521
        %v609 = vunpack.c.l.b16 %v522
        %v610 = vunpack.c.l.b16 %v523
        %v611 = vunpack.c.l.b16 %v524
        %v612 = vunpack.c.l.b16 %v525
        %v613 = vunpack.c.l.b16 %v526
        %v614 = vunpack.c.l.b16 %v527
        %v615 = vunpack.c.l.b16 %v528
        %v616 = vunpack.c.l.b16 %v529
        %v617 = vunpack.c.l.b16 %v530
        %v618 = vunpack.c.l.b16 %v531
        %v619 = vunpack.c.l.b16 %v532
        %v620 = vunpack.c.l.b16 %v533
        %v621 = vunpack.c.l.b16 %v534
        %v622 = vunpack.c.l.b16 %v535
        %v623 = vunpack.c.l.b16 %v536
        %v624 = vunpack.c.l.b16 %v537
        %v625 = vunpack.c.l.b16 %v538
        %v626 = vunpack.c.l.b16 %v539
        %v627 = vunpack.c.l.b16 %v540
        %v628 = vunpack.c.l.b16 %v541
        %v629 = vunpack.c.l.b16 %v542
        %v630 = vunpack.c.l.b16 %v543
        %v631 = vunpack.c.l.b16 %v544
        %v632 = vunpack.c.l.b16 %v545
        %v633 = vunpack.c.l.b16 %v546
        %v634 = vunpack.c.l.b16 %v547
        %v635 = vunpack.c.l.b16 %v548
        %v636 = vunpack.c.l.b16 %v549
        %v637 = vunpack.c.l.b16 %v550
        %v638 = vunpack.c.l.b16 %v551
        %v639 = vunpack.c.l.b16 %v552
        %v640 = vunpack.c.l.b16 %v553
        %v641 = vunpack.c.l.b16 %v554
        %v642 = vunpack.c.l.b16 %v555
        %v643 = vunpack.c.l.b16 %v556
        %v644 = vunpack.c.l.b16 %v557
        %v645 = vunpack.c.l.b16 %v558
        %v646 = vpack.c.b16 %v606, %v605
        %v647 = vpack.c.b16 %v608, %v607
        %v648 = vpack.c.b16 %v610, %v609
        %v649 = vpack.c.b16 %v612, %v611
        %v650 = vpack.c.b16 %v614, %v613
        %v651 = vpack.c.b16 %v616, %v615
        %v652 = vpack.c.b16 %v618, %v617
        %v653 = vpack.c.b16 %v620, %v619
        %v654 = vpack.c.b16 %v622, %v621
        %v655 = vpack.c.b16 %v624, %v623
        %v656 = vpack.c.b16 %v626, %v625
        %v657 = vpack.c.b16 %v628, %v627
        %v658 = vpack.c.b16 %v630, %v629
        %v659 = vpack.c.b16 %v632, %v631
        %v660 = vpack.c.b16 %v634, %v633
        %v661 = vpack.c.b16 %v636, %v635
        %v662 = vpack.c.b16 %v638, %v637
        %v663 = vpack.c.b16 %v640, %v639
        %v664 = vpack.c.b16 %v642, %v641
        %v665 = vpack.c.b16 %v644, %v643
        %v666 = vpack.c.b16 %v645, %v645
        %v669 = vunpack.c.l.b16 %v562
        %v670 = vunpack.c.l.b16 %v563
        %v671 = vpack.c.b16 %v670, %v669
        %vm672 = vcmask 97280
        %v674 = vsel %vm672, %v646, 0
        %v677 = vsel %vm672, %v647, 0
        %v680 = vsel %vm672, %v648, 0
        %v683 = vsel %vm672, %v649, 0
        %v686 = vsel %vm672, %v650, 0
        %v689 = vsel %vm672, %v651, 0
        %v692 = vsel %vm672, %v652, 0
        %v695 = vsel %vm672, %v653, 0
        %v698 = vsel %vm672, %v654, 0
        %v701 = vsel %vm672, %v655, 0
        %v704 = vsel %vm672, %v656, 0
        %v707 = vsel %vm672, %v657, 0
        %v710 = vsel %vm672, %v658, 0
        %v713 = vsel %vm672, %v659, 0
        %v716 = vsel %vm672, %v660, 0
        %v719 = vsel %vm672, %v661, 0
        %v722 = vsel %vm672, %v662, 0
        %v725 = vsel %vm672, %v663, 0
        %v728 = vsel %vm672, %v664, 0
        %v731 = vsel %vm672, %v665, 0
        %v734 = vsel %vm672, %v666, 0
        %vm736 = vcmask 1045504
        %v738 = vsel %vm736, %v671, 0
        %740 = vmatprep.subr.bf16.mxu0 0
        %741 = vmatpush1.bf16.msra.mxu0 %v738
        %742 = vmatprep.subr.bf16.mxu0 0
        %743 = vmatpush1.bf16.msra.mxu0 0
        %744 = vmatprep.subr.bf16.mxu0 0
        %745 = vmatpush1.bf16.msra.mxu0 0
        %746 = vmatprep.subr.bf16.mxu0 0
        %747 = vmatpush1.bf16.msra.mxu0 0
        %748 = vmatprep.subr.bf16.mxu0 0
        %749 = vmatpush1.bf16.msra.mxu0 0
        %750 = vmatprep.subr.bf16.mxu0 0
        %751 = vmatpush1.bf16.msra.mxu0 0
        %752 = vmatprep.subr.bf16.mxu0 0
        %753 = vmatpush1.bf16.msra.mxu0 0
        %754 = vmatprep.subr.bf16.mxu0 0
        %755 = vmatpush1.bf16.msra.mxu0 0
        %756 = vmatprep.subr.bf16.mxu0 0
        %757 = vmatpush1.bf16.msra.mxu0 0
        %758 = vmatprep.subr.bf16.mxu0 0
        %759 = vmatpush1.bf16.msra.mxu0 0
        %760 = vmatprep.subr.bf16.mxu0 0
        %761 = vmatpush1.bf16.msra.mxu0 0
        %762 = vmatprep.subr.bf16.mxu0 0
        %763 = vmatpush1.bf16.msra.mxu0 0
        %764 = vmatprep.subr.bf16.mxu0 0
        %765 = vmatpush1.bf16.msra.mxu0 0
        %766 = vmatprep.subr.bf16.mxu0 0
        %767 = vmatpush1.bf16.msra.mxu0 0
        %768 = vmatprep.subr.bf16.mxu0 0
        %769 = vmatpush1.bf16.msra.mxu0 0
        %770 = vmatprep.subr.bf16.mxu0 0
        %771 = vmatpush1.bf16.msra.mxu0 0
        %772 = vmatprep.mubr.bf16.mxu0 0
        %773 = vmatmul.mubr.bf16.gmra.mrb[0].mxu0 %v674
        %v774 = vpop.f32.mrb[0].mxu0
        %v775 = vadd.f32 0.0, %v774
        %v776 = vpop.f32.mrb[0].mxu0
        %v777 = vpop.f32.mrb[0].mxu0
        %v778 = vadd.f32 0.0, %v777
        %v779 = vpop.f32.mrb[0].mxu0
        %780 = vmatprep.mubr.bf16.mxu0 0
        %781 = vmatmul.mubr.bf16.gmra.mrb[0].mxu0 %v677
        %v782 = vpop.f32.mrb[0].mxu0
        %v783 = vadd.f32 0.0, %v782
        %v784 = vpop.f32.mrb[0].mxu0
        %v785 = vpop.f32.mrb[0].mxu0
        %v786 = vadd.f32 0.0, %v785
        %v787 = vpop.f32.mrb[0].mxu0
        %788 = vmatprep.mubr.bf16.mxu0 0
        %789 = vmatmul.mubr.bf16.gmra.mrb[0].mxu0 %v680
        %v790 = vpop.f32.mrb[0].mxu0
        %v791 = vadd.f32 0.0, %v790
        %v792 = vpop.f32.mrb[0].mxu0
        %v793 = vpop.f32.mrb[0].mxu0
        %v794 = vadd.f32 0.0, %v793
        %v795 = vpop.f32.mrb[0].mxu0
        %796 = vmatprep.mubr.bf16.mxu0 0
        %797 = vmatmul.mubr.bf16.gmra.mrb[0].mxu0 %v683
        %v798 = vpop.f32.mrb[0].mxu0
        %v799 = vadd.f32 0.0, %v798
        %v800 = vpop.f32.mrb[0].mxu0
        %v801 = vpop.f32.mrb[0].mxu0
        %v802 = vadd.f32 0.0, %v801
        %v803 = vpop.f32.mrb[0].mxu0
        %804 = vmatprep.mubr.bf16.mxu0 0
        %805 = vmatmul.mubr.bf16.gmra.mrb[0].mxu0 %v686
        %v806 = vpop.f32.mrb[0].mxu0
        %v807 = vadd.f32 0.0, %v806
        %v808 = vpop.f32.mrb[0].mxu0
        %v809 = vpop.f32.mrb[0].mxu0
        %v810 = vadd.f32 0.0, %v809
        %v811 = vpop.f32.mrb[0].mxu0
        %812 = vmatprep.mubr.bf16.mxu0 0
        %813 = vmatmul.mubr.bf16.gmra.mrb[0].mxu0 %v689
        %v814 = vpop.f32.mrb[0].mxu0
        %v815 = vadd.f32 0.0, %v814
        %v816 = vpop.f32.mrb[0].mxu0
        %v817 = vpop.f32.mrb[0].mxu0
        %v818 = vadd.f32 0.0, %v817
        %v819 = vpop.f32.mrb[0].mxu0
        %820 = vmatprep.mubr.bf16.mxu0 0
        %821 = vmatmul.mubr.bf16.gmra.mrb[0].mxu0 %v692
        %v822 = vpop.f32.mrb[0].mxu0
        %v823 = vadd.f32 0.0, %v822
        %v824 = vpop.f32.mrb[0].mxu0
        %v825 = vpop.f32.mrb[0].mxu0
        %v826 = vadd.f32 0.0, %v825
        %v827 = vpop.f32.mrb[0].mxu0
        %828 = vmatprep.mubr.bf16.mxu0 0
        %829 = vmatmul.mubr.bf16.gmra.mrb[0].mxu0 %v695
        %v830 = vpop.f32.mrb[0].mxu0
        %v831 = vadd.f32 0.0, %v830
        %v832 = vpop.f32.mrb[0].mxu0
        %v833 = vpop.f32.mrb[0].mxu0
        %v834 = vadd.f32 0.0, %v833
        %v835 = vpop.f32.mrb[0].mxu0
        %836 = vmatprep.mubr.bf16.mxu0 0
        %837 = vmatmul.mubr.bf16.gmra.mrb[0].mxu0 %v698
        %v838 = vpop.f32.mrb[0].mxu0
        %v839 = vadd.f32 0.0, %v838
        %v840 = vpop.f32.mrb[0].mxu0
        %v841 = vpop.f32.mrb[0].mxu0
        %v842 = vadd.f32 0.0, %v841
        %v843 = vpop.f32.mrb[0].mxu0
        %844 = vmatprep.mubr.bf16.mxu0 0
        %845 = vmatmul.mubr.bf16.gmra.mrb[0].mxu0 %v701
        %v846 = vpop.f32.mrb[0].mxu0
        %v847 = vadd.f32 0.0, %v846
        %v848 = vpop.f32.mrb[0].mxu0
        %v849 = vpop.f32.mrb[0].mxu0
        %v850 = vadd.f32 0.0, %v849
        %v851 = vpop.f32.mrb[0].mxu0
        %852 = vmatprep.mubr.bf16.mxu0 0
        %853 = vmatmul.mubr.bf16.gmra.mrb[0].mxu0 %v704
        %v854 = vpop.f32.mrb[0].mxu0
        %v855 = vadd.f32 0.0, %v854
        %v856 = vpop.f32.mrb[0].mxu0
        %v857 = vpop.f32.mrb[0].mxu0
        %v858 = vadd.f32 0.0, %v857
        %v859 = vpop.f32.mrb[0].mxu0
        %860 = vmatprep.mubr.bf16.mxu0 0
        %861 = vmatmul.mubr.bf16.gmra.mrb[0].mxu0 %v707
        %v862 = vpop.f32.mrb[0].mxu0
        %v863 = vadd.f32 0.0, %v862
        %v864 = vpop.f32.mrb[0].mxu0
        %v865 = vpop.f32.mrb[0].mxu0
        %v866 = vadd.f32 0.0, %v865
        %v867 = vpop.f32.mrb[0].mxu0
        %868 = vmatprep.mubr.bf16.mxu0 0
        %869 = vmatmul.mubr.bf16.gmra.mrb[0].mxu0 %v710
        %v870 = vpop.f32.mrb[0].mxu0
        %v871 = vadd.f32 0.0, %v870
        %v872 = vpop.f32.mrb[0].mxu0
        %v873 = vpop.f32.mrb[0].mxu0
        %v874 = vadd.f32 0.0, %v873
        %v875 = vpop.f32.mrb[0].mxu0
        %876 = vmatprep.mubr.bf16.mxu0 0
        %877 = vmatmul.mubr.bf16.gmra.mrb[0].mxu0 %v713
        %v878 = vpop.f32.mrb[0].mxu0
        %v879 = vadd.f32 0.0, %v878
        %v880 = vpop.f32.mrb[0].mxu0
        %v881 = vpop.f32.mrb[0].mxu0
        %v882 = vadd.f32 0.0, %v881
        %v883 = vpop.f32.mrb[0].mxu0
        %884 = vmatprep.mubr.bf16.mxu0 0
        %885 = vmatmul.mubr.bf16.gmra.mrb[0].mxu0 %v716
        %v886 = vpop.f32.mrb[0].mxu0
        %v887 = vadd.f32 0.0, %v886
        %v888 = vpop.f32.mrb[0].mxu0
        %v889 = vpop.f32.mrb[0].mxu0
        %v890 = vadd.f32 0.0, %v889
        %v891 = vpop.f32.mrb[0].mxu0
        %892 = vmatprep.mubr.bf16.mxu0 0
        %893 = vmatmul.mubr.bf16.gmra.mrb[0].mxu0 %v719
        %v894 = vpop.f32.mrb[0].mxu0
        %v895 = vadd.f32 0.0, %v894
        %v896 = vpop.f32.mrb[0].mxu0
        %v897 = vpop.f32.mrb[0].mxu0
        %v898 = vadd.f32 0.0, %v897
        %v899 = vpop.f32.mrb[0].mxu0
        %900 = vmatprep.mubr.bf16.mxu0 0
        %901 = vmatmul.mubr.bf16.gmra.mrb[0].mxu0 %v722
        %v902 = vpop.f32.mrb[0].mxu0
        %v903 = vadd.f32 0.0, %v902
        %v904 = vpop.f32.mrb[0].mxu0
        %v905 = vpop.f32.mrb[0].mxu0
        %v906 = vadd.f32 0.0, %v905
        %v907 = vpop.f32.mrb[0].mxu0
        %908 = vmatprep.mubr.bf16.mxu0 0
        %909 = vmatmul.mubr.bf16.gmra.mrb[0].mxu0 %v725
        %v910 = vpop.f32.mrb[0].mxu0
        %v911 = vadd.f32 0.0, %v910
        %v912 = vpop.f32.mrb[0].mxu0
        %v913 = vpop.f32.mrb[0].mxu0
        %v914 = vadd.f32 0.0, %v913
        %v915 = vpop.f32.mrb[0].mxu0
        %916 = vmatprep.mubr.bf16.mxu0 0
        %917 = vmatmul.mubr.bf16.gmra.mrb[0].mxu0 %v728
        %v918 = vpop.f32.mrb[0].mxu0
        %v919 = vadd.f32 0.0, %v918
        %v920 = vpop.f32.mrb[0].mxu0
        %v921 = vpop.f32.mrb[0].mxu0
        %v922 = vadd.f32 0.0, %v921
        %v923 = vpop.f32.mrb[0].mxu0
        %924 = vmatprep.mubr.bf16.mxu0 0
        %925 = vmatmul.mubr.bf16.gmra.mrb[0].mxu0 %v731
        %v926 = vpop.f32.mrb[0].mxu0
        %v927 = vadd.f32 0.0, %v926
        %v928 = vpop.f32.mrb[0].mxu0
        %v929 = vpop.f32.mrb[0].mxu0
        %v930 = vadd.f32 0.0, %v929
        %v931 = vpop.f32.mrb[0].mxu0
        %932 = vmatprep.mubr.bf16.mxu0 0
        %933 = vmatmul.mubr.bf16.gmra.mrb[0].mxu0 %v734
        %v934 = vpop.f32.mrb[0].mxu0
        %v935 = vadd.f32 0.0, %v934
        %v936 = vpop.f32.mrb[0].mxu0
        %v937 = vpop.f32.mrb[0].mxu0
        %v938 = vpop.f32.mrb[0].mxu0
        %939 = vdwg.mxu0
        %v941 = vunpack.c.l.b16 %v517
        %v942 = vpack.c.b16 %v605, %v941
        %v943 = vpack.c.b16 %v607, %v606
        %v944 = vpack.c.b16 %v609, %v608
        %v945 = vpack.c.b16 %v611, %v610
        %v946 = vpack.c.b16 %v613, %v612
        %v947 = vpack.c.b16 %v615, %v614
        %v948 = vpack.c.b16 %v617, %v616
        %v949 = vpack.c.b16 %v619, %v618
        %v950 = vpack.c.b16 %v621, %v620
        %v951 = vpack.c.b16 %v623, %v622
        %v952 = vpack.c.b16 %v625, %v624
        %v953 = vpack.c.b16 %v627, %v626
        %v954 = vpack.c.b16 %v629, %v628
        %v955 = vpack.c.b16 %v631, %v630
        %v956 = vpack.c.b16 %v633, %v632
        %v957 = vpack.c.b16 %v635, %v634
        %v958 = vpack.c.b16 %v637, %v636
        %v959 = vpack.c.b16 %v639, %v638
        %v960 = vpack.c.b16 %v641, %v640
        %v961 = vpack.c.b16 %v643, %v642
        %v962 = vpack.c.b16 %v645, %v644
        %vm963 = vsmask.f32 4352
        %v965 = vshrl.u32 %v942, 16
        %v967 = vrot.slane %v965, 3
        %v968 = vshll.u32 %v942, 16
        %v970 = vrot.slane %v968, 4
        %v971 = vor.u32 %v967, %v970
        %v973 = vshrl.u32 %v943, 16
        %v975 = vrot.slane %v973, 3
        %v976 = vshll.u32 %v943, 16
        %v978 = vrot.slane %v976, 4
        %v979 = vor.u32 %v975, %v978
        %v980 = vsel %vm963, %v971, %v979
        %v982 = vshrl.u32 %v944, 16
        %v984 = vrot.slane %v982, 3
        %v985 = vshll.u32 %v944, 16
        %v987 = vrot.slane %v985, 4
        %v988 = vor.u32 %v984, %v987
        %v989 = vsel %vm963, %v979, %v988
        %v991 = vshrl.u32 %v945, 16
        %v993 = vrot.slane %v991, 3
        %v994 = vshll.u32 %v945, 16
        %v996 = vrot.slane %v994, 4
        %v997 = vor.u32 %v993, %v996
        %v998 = vsel %vm963, %v988, %v997
        %v1000 = vshrl.u32 %v946, 16
        %v1002 = vrot.slane %v1000, 3
        %v1003 = vshll.u32 %v946, 16
        %v1005 = vrot.slane %v1003, 4
        %v1006 = vor.u32 %v1002, %v1005
        %v1007 = vsel %vm963, %v997, %v1006
        %v1009 = vshrl.u32 %v947, 16
        %v1011 = vrot.slane %v1009, 3
        %v1012 = vshll.u32 %v947, 16
        %v1014 = vrot.slane %v1012, 4
        %v1015 = vor.u32 %v1011, %v1014
        %v1016 = vsel %vm963, %v1006, %v1015
        %v1018 = vshrl.u32 %v948, 16
        %v1020 = vrot.slane %v1018, 3
        %v1021 = vshll.u32 %v948, 16
        %v1023 = vrot.slane %v1021, 4
        %v1024 = vor.u32 %v1020, %v1023
        %v1025 = vsel %vm963, %v1015, %v1024
        %v1027 = vshrl.u32 %v949, 16
        %v1029 = vrot.slane %v1027, 3
        %v1030 = vshll.u32 %v949, 16
        %v1032 = vrot.slane %v1030, 4
        %v1033 = vor.u32 %v1029, %v1032
        %v1034 = vsel %vm963, %v1024, %v1033
        %v1036 = vshrl.u32 %v950, 16
        %v1038 = vrot.slane %v1036, 3
        %v1039 = vshll.u32 %v950, 16
        %v1041 = vrot.slane %v1039, 4
        %v1042 = vor.u32 %v1038, %v1041
        %v1043 = vsel %vm963, %v1033, %v1042
        %v1045 = vshrl.u32 %v951, 16
        %v1047 = vrot.slane %v1045, 3
        %v1048 = vshll.u32 %v951, 16
        %v1050 = vrot.slane %v1048, 4
        %v1051 = vor.u32 %v1047, %v1050
        %v1052 = vsel %vm963, %v1042, %v1051
        %v1054 = vshrl.u32 %v952, 16
        %v1056 = vrot.slane %v1054, 3
        %v1057 = vshll.u32 %v952, 16
        %v1059 = vrot.slane %v1057, 4
        %v1060 = vor.u32 %v1056, %v1059
        %v1061 = vsel %vm963, %v1051, %v1060
        %v1063 = vshrl.u32 %v953, 16
        %v1065 = vrot.slane %v1063, 3
        %v1066 = vshll.u32 %v953, 16
        %v1068 = vrot.slane %v1066, 4
        %v1069 = vor.u32 %v1065, %v1068
        %v1070 = vsel %vm963, %v1060, %v1069
        %v1072 = vshrl.u32 %v954, 16
        %v1074 = vrot.slane %v1072, 3
        %v1075 = vshll.u32 %v954, 16
        %v1077 = vrot.slane %v1075, 4
        %v1078 = vor.u32 %v1074, %v1077
        %v1079 = vsel %vm963, %v1069, %v1078
        %v1081 = vshrl.u32 %v955, 16
        %v1083 = vrot.slane %v1081, 3
        %v1084 = vshll.u32 %v955, 16
        %v1086 = vrot.slane %v1084, 4
        %v1087 = vor.u32 %v1083, %v1086
        %v1088 = vsel %vm963, %v1078, %v1087
        %v1090 = vshrl.u32 %v956, 16
        %v1092 = vrot.slane %v1090, 3
        %v1093 = vshll.u32 %v956, 16
        %v1095 = vrot.slane %v1093, 4
        %v1096 = vor.u32 %v1092, %v1095
        %v1097 = vsel %vm963, %v1087, %v1096
        %v1099 = vshrl.u32 %v957, 16
        %v1101 = vrot.slane %v1099, 3
        %v1102 = vshll.u32 %v957, 16
        %v1104 = vrot.slane %v1102, 4
        %v1105 = vor.u32 %v1101, %v1104
        %v1106 = vsel %vm963, %v1096, %v1105
        %v1108 = vshrl.u32 %v958, 16
        %v1110 = vrot.slane %v1108, 3
        %v1111 = vshll.u32 %v958, 16
        %v1113 = vrot.slane %v1111, 4
        %v1114 = vor.u32 %v1110, %v1113
        %v1115 = vsel %vm963, %v1105, %v1114
        %v1117 = vshrl.u32 %v959, 16
        %v1119 = vrot.slane %v1117, 3
        %v1120 = vshll.u32 %v959, 16
        %v1122 = vrot.slane %v1120, 4
        %v1123 = vor.u32 %v1119, %v1122
        %v1124 = vsel %vm963, %v1114, %v1123
        %v1126 = vshrl.u32 %v960, 16
        %v1128 = vrot.slane %v1126, 3
        %v1129 = vshll.u32 %v960, 16
        %v1131 = vrot.slane %v1129, 4
        %v1132 = vor.u32 %v1128, %v1131
        %v1133 = vsel %vm963, %v1123, %v1132
        %v1135 = vshrl.u32 %v961, 16
        %v1137 = vrot.slane %v1135, 3
        %v1138 = vshll.u32 %v961, 16
        %v1140 = vrot.slane %v1138, 4
        %v1141 = vor.u32 %v1137, %v1140
        %v1142 = vsel %vm963, %v1132, %v1141
        %v1144 = vshrl.u32 %v962, 16
        %v1146 = vrot.slane %v1144, 3
        %v1147 = vshll.u32 %v962, 16
        %v1149 = vrot.slane %v1147, 4
        %v1150 = vor.u32 %v1146, %v1149
        %v1151 = vsel %vm963, %v1141, %v1150
        %v1154 = vunpack.c.l.b16 %v559
        %v1155 = vunpack.c.l.b16 %v560
        %v1156 = vpack.c.b16 %v1155, %v1154
        %v1158 = vsel %vm672, %v980, 0
        %v1161 = vsel %vm672, %v989, 0
        %v1164 = vsel %vm672, %v998, 0
        %v1167 = vsel %vm672, %v1007, 0
        %v1170 = vsel %vm672, %v1016, 0
        %v1173 = vsel %vm672, %v1025, 0
        %v1176 = vsel %vm672, %v1034, 0
        %v1179 = vsel %vm672, %v1043, 0
        %v1182 = vsel %vm672, %v1052, 0
        %v1185 = vsel %vm672, %v1061, 0
        %v1188 = vsel %vm672, %v1070, 0
        %v1191 = vsel %vm672, %v1079, 0
        %v1194 = vsel %vm672, %v1088, 0
        %v1197 = vsel %vm672, %v1097, 0
        %v1200 = vsel %vm672, %v1106, 0
        %v1203 = vsel %vm672, %v1115, 0
        %v1206 = vsel %vm672, %v1124, 0
        %v1209 = vsel %vm672, %v1133, 0
        %v1212 = vsel %vm672, %v1142, 0
        %v1215 = vsel %vm672, %v1151, 0
        %v1218 = vsel %vm672, %v1150, 0
        %v1221 = vsel %vm736, %v1156, 0
        %1223 = vmatprep.subr.bf16.mxu0 0
        %1224 = vmatpush1.bf16.msra.mxu0 %v1221
        %1225 = vmatprep.subr.bf16.mxu0 0
        %1226 = vmatpush1.bf16.msra.mxu0 0
        %1227 = vmatprep.subr.bf16.mxu0 0
        %1228 = vmatpush1.bf16.msra.mxu0 0
        %1229 = vmatprep.subr.bf16.mxu0 0
        %1230 = vmatpush1.bf16.msra.mxu0 0
        %1231 = vmatprep.subr.bf16.mxu0 0
        %1232 = vmatpush1.bf16.msra.mxu0 0
        %1233 = vmatprep.subr.bf16.mxu0 0
        %1234 = vmatpush1.bf16.msra.mxu0 0
        %1235 = vmatprep.subr.bf16.mxu0 0
        %1236 = vmatpush1.bf16.msra.mxu0 0
        %1237 = vmatprep.subr.bf16.mxu0 0
        %1238 = vmatpush1.bf16.msra.mxu0 0
        %1239 = vmatprep.subr.bf16.mxu0 0
        %1240 = vmatpush1.bf16.msra.mxu0 0
        %1241 = vmatprep.subr.bf16.mxu0 0
        %1242 = vmatpush1.bf16.msra.mxu0 0
        %1243 = vmatprep.subr.bf16.mxu0 0
        %1244 = vmatpush1.bf16.msra.mxu0 0
        %1245 = vmatprep.subr.bf16.mxu0 0
        %1246 = vmatpush1.bf16.msra.mxu0 0
        %1247 = vmatprep.subr.bf16.mxu0 0
        %1248 = vmatpush1.bf16.msra.mxu0 0
        %1249 = vmatprep.subr.bf16.mxu0 0
        %1250 = vmatpush1.bf16.msra.mxu0 0
        %1251 = vmatprep.subr.bf16.mxu0 0
        %1252 = vmatpush1.bf16.msra.mxu0 0
        %1253 = vmatprep.subr.bf16.mxu0 0
        %1254 = vmatpush1.bf16.msra.mxu0 0
        %1255 = vmatprep.mubr.bf16.mxu0 0
        %1256 = vmatmul.mubr.bf16.gmra.mrb[0].mxu0 %v1158
        %v1257 = vpop.f32.mrb[0].mxu0
        %v1258 = vadd.f32 %v775, %v1257
        %v1259 = vpop.f32.mrb[0].mxu0
        %v1260 = vpop.f32.mrb[0].mxu0
        %v1261 = vadd.f32 %v778, %v1260
        %v1262 = vpop.f32.mrb[0].mxu0
        %1263 = vmatprep.mubr.bf16.mxu0 0
        %1264 = vmatmul.mubr.bf16.gmra.mrb[0].mxu0 %v1161
        %v1265 = vpop.f32.mrb[0].mxu0
        %v1266 = vadd.f32 %v783, %v1265
        %v1267 = vpop.f32.mrb[0].mxu0
        %v1268 = vpop.f32.mrb[0].mxu0
        %v1269 = vadd.f32 %v786, %v1268
        %v1270 = vpop.f32.mrb[0].mxu0
        %1271 = vmatprep.mubr.bf16.mxu0 0
        %1272 = vmatmul.mubr.bf16.gmra.mrb[0].mxu0 %v1164
        %v1273 = vpop.f32.mrb[0].mxu0
        %v1274 = vadd.f32 %v791, %v1273
        %v1275 = vpop.f32.mrb[0].mxu0
        %v1276 = vpop.f32.mrb[0].mxu0
        %v1277 = vadd.f32 %v794, %v1276
        %v1278 = vpop.f32.mrb[0].mxu0
        %1279 = vmatprep.mubr.bf16.mxu0 0
        %1280 = vmatmul.mubr.bf16.gmra.mrb[0].mxu0 %v1167
        %v1281 = vpop.f32.mrb[0].mxu0
        %v1282 = vadd.f32 %v799, %v1281
        %v1283 = vpop.f32.mrb[0].mxu0
        %v1284 = vpop.f32.mrb[0].mxu0
        %v1285 = vadd.f32 %v802, %v1284
        %v1286 = vpop.f32.mrb[0].mxu0
        %1287 = vmatprep.mubr.bf16.mxu0 0
        %1288 = vmatmul.mubr.bf16.gmra.mrb[0].mxu0 %v1170
        %v1289 = vpop.f32.mrb[0].mxu0
        %v1290 = vadd.f32 %v807, %v1289
        %v1291 = vpop.f32.mrb[0].mxu0
        %v1292 = vpop.f32.mrb[0].mxu0
        %v1293 = vadd.f32 %v810, %v1292
        %v1294 = vpop.f32.mrb[0].mxu0
        %1295 = vmatprep.mubr.bf16.mxu0 0
        %1296 = vmatmul.mubr.bf16.gmra.mrb[0].mxu0 %v1173
        %v1297 = vpop.f32.mrb[0].mxu0
        %v1298 = vadd.f32 %v815, %v1297
        %v1299 = vpop.f32.mrb[0].mxu0
        %v1300 = vpop.f32.mrb[0].mxu0
        %v1301 = vadd.f32 %v818, %v1300
        %v1302 = vpop.f32.mrb[0].mxu0
        %1303 = vmatprep.mubr.bf16.mxu0 0
        %1304 = vmatmul.mubr.bf16.gmra.mrb[0].mxu0 %v1176
        %v1305 = vpop.f32.mrb[0].mxu0
        %v1306 = vadd.f32 %v823, %v1305
        %v1307 = vpop.f32.mrb[0].mxu0
        %v1308 = vpop.f32.mrb[0].mxu0
        %v1309 = vadd.f32 %v826, %v1308
        %v1310 = vpop.f32.mrb[0].mxu0
        %1311 = vmatprep.mubr.bf16.mxu0 0
        %1312 = vmatmul.mubr.bf16.gmra.mrb[0].mxu0 %v1179
        %v1313 = vpop.f32.mrb[0].mxu0
        %v1314 = vadd.f32 %v831, %v1313
        %v1315 = vpop.f32.mrb[0].mxu0
        %v1316 = vpop.f32.mrb[0].mxu0
        %v1317 = vadd.f32 %v834, %v1316
        %v1318 = vpop.f32.mrb[0].mxu0
        %1319 = vmatprep.mubr.bf16.mxu0 0
        %1320 = vmatmul.mubr.bf16.gmra.mrb[0].mxu0 %v1182
        %v1321 = vpop.f32.mrb[0].mxu0
        %v1322 = vadd.f32 %v839, %v1321
        %v1323 = vpop.f32.mrb[0].mxu0
        %v1324 = vpop.f32.mrb[0].mxu0
        %v1325 = vadd.f32 %v842, %v1324
        %v1326 = vpop.f32.mrb[0].mxu0
        %1327 = vmatprep.mubr.bf16.mxu0 0
        %1328 = vmatmul.mubr.bf16.gmra.mrb[0].mxu0 %v1185
        %v1329 = vpop.f32.mrb[0].mxu0
        %v1330 = vadd.f32 %v847, %v1329
        %v1331 = vpop.f32.mrb[0].mxu0
        %v1332 = vpop.f32.mrb[0].mxu0
        %v1333 = vadd.f32 %v850, %v1332
        %v1334 = vpop.f32.mrb[0].mxu0
        %1335 = vmatprep.mubr.bf16.mxu0 0
        %1336 = vmatmul.mubr.bf16.gmra.mrb[0].mxu0 %v1188
        %v1337 = vpop.f32.mrb[0].mxu0
        %v1338 = vadd.f32 %v855, %v1337
        %v1339 = vpop.f32.mrb[0].mxu0
        %v1340 = vpop.f32.mrb[0].mxu0
        %v1341 = vadd.f32 %v858, %v1340
        %v1342 = vpop.f32.mrb[0].mxu0
        %1343 = vmatprep.mubr.bf16.mxu0 0
        %1344 = vmatmul.mubr.bf16.gmra.mrb[0].mxu0 %v1191
        %v1345 = vpop.f32.mrb[0].mxu0
        %v1346 = vadd.f32 %v863, %v1345
        %v1347 = vpop.f32.mrb[0].mxu0
        %v1348 = vpop.f32.mrb[0].mxu0
        %v1349 = vadd.f32 %v866, %v1348
        %v1350 = vpop.f32.mrb[0].mxu0
        %1351 = vmatprep.mubr.bf16.mxu0 0
        %1352 = vmatmul.mubr.bf16.gmra.mrb[0].mxu0 %v1194
        %v1353 = vpop.f32.mrb[0].mxu0
        %v1354 = vadd.f32 %v871, %v1353
        %v1355 = vpop.f32.mrb[0].mxu0
        %v1356 = vpop.f32.mrb[0].mxu0
        %v1357 = vadd.f32 %v874, %v1356
        %v1358 = vpop.f32.mrb[0].mxu0
        %1359 = vmatprep.mubr.bf16.mxu0 0
        %1360 = vmatmul.mubr.bf16.gmra.mrb[0].mxu0 %v1197
        %v1361 = vpop.f32.mrb[0].mxu0
        %v1362 = vadd.f32 %v879, %v1361
        %v1363 = vpop.f32.mrb[0].mxu0
        %v1364 = vpop.f32.mrb[0].mxu0
        %v1365 = vadd.f32 %v882, %v1364
        %v1366 = vpop.f32.mrb[0].mxu0
        %1367 = vmatprep.mubr.bf16.mxu0 0
        %1368 = vmatmul.mubr.bf16.gmra.mrb[0].mxu0 %v1200
        %v1369 = vpop.f32.mrb[0].mxu0
        %v1370 = vadd.f32 %v887, %v1369
        %v1371 = vpop.f32.mrb[0].mxu0
        %v1372 = vpop.f32.mrb[0].mxu0
        %v1373 = vadd.f32 %v890, %v1372
        %v1374 = vpop.f32.mrb[0].mxu0
        %1375 = vmatprep.mubr.bf16.mxu0 0
        %1376 = vmatmul.mubr.bf16.gmra.mrb[0].mxu0 %v1203
        %v1377 = vpop.f32.mrb[0].mxu0
        %v1378 = vadd.f32 %v895, %v1377
        %v1379 = vpop.f32.mrb[0].mxu0
        %v1380 = vpop.f32.mrb[0].mxu0
        %v1381 = vadd.f32 %v898, %v1380
        %v1382 = vpop.f32.mrb[0].mxu0
        %1383 = vmatprep.mubr.bf16.mxu0 0
        %1384 = vmatmul.mubr.bf16.gmra.mrb[0].mxu0 %v1206
        %v1385 = vpop.f32.mrb[0].mxu0
        %v1386 = vadd.f32 %v903, %v1385
        %v1387 = vpop.f32.mrb[0].mxu0
        %v1388 = vpop.f32.mrb[0].mxu0
        %v1389 = vadd.f32 %v906, %v1388
        %v1390 = vpop.f32.mrb[0].mxu0
        %1391 = vmatprep.mubr.bf16.mxu0 0
        %1392 = vmatmul.mubr.bf16.gmra.mrb[0].mxu0 %v1209
        %v1393 = vpop.f32.mrb[0].mxu0
        %v1394 = vadd.f32 %v911, %v1393
        %v1395 = vpop.f32.mrb[0].mxu0
        %v1396 = vpop.f32.mrb[0].mxu0
        %v1397 = vadd.f32 %v914, %v1396
        %v1398 = vpop.f32.mrb[0].mxu0
        %1399 = vmatprep.mubr.bf16.mxu0 0
        %1400 = vmatmul.mubr.bf16.gmra.mrb[0].mxu0 %v1212
        %v1401 = vpop.f32.mrb[0].mxu0
        %v1402 = vadd.f32 %v919, %v1401
        %v1403 = vpop.f32.mrb[0].mxu0
        %v1404 = vpop.f32.mrb[0].mxu0
        %v1405 = vadd.f32 %v922, %v1404
        %v1406 = vpop.f32.mrb[0].mxu0
        %1407 = vmatprep.mubr.bf16.mxu0 0
        %1408 = vmatmul.mubr.bf16.gmra.mrb[0].mxu0 %v1215
        %v1409 = vpop.f32.mrb[0].mxu0
        %v1410 = vadd.f32 %v927, %v1409
        %v1411 = vpop.f32.mrb[0].mxu0
        %v1412 = vpop.f32.mrb[0].mxu0
        %v1413 = vadd.f32 %v930, %v1412
        %v1414 = vpop.f32.mrb[0].mxu0
        %1415 = vmatprep.mubr.bf16.mxu0 0
        %1416 = vmatmul.mubr.bf16.gmra.mrb[0].mxu0 %v1218
        %v1417 = vpop.f32.mrb[0].mxu0
        %v1418 = vadd.f32 %v935, %v1417
        %v1419 = vpop.f32.mrb[0].mxu0
        %v1420 = vpop.f32.mrb[0].mxu0
        %v1421 = vpop.f32.mrb[0].mxu0
        %1422 = vdwg.mxu0
        %v1423 = vld [vmem:[%s465 + $0x10] sm:$0xf]
        %v1424 = vld [vmem:[%s465 + $0x14] sm:$0xf]
        %v1425 = vld [vmem:[%s465 + $0x18] sm:$0xf]
        %v1426 = vld [vmem:[%s465 + $0x1c] sm:$0xf]
        %v1427 = vld [vmem:[%s465 + $0x20] sm:$0xf]
        %v1428 = vld [vmem:[%s465 + $0x24] sm:$0xf]
        %v1429 = vld [vmem:[%s465 + $0x28] sm:$0xf]
        %v1430 = vld [vmem:[%s465 + $0x2c] sm:$0xf]
        %v1431 = vld [vmem:[%s465 + $0x30] sm:$0xf]
        %v1432 = vld [vmem:[%s465 + $0x34] sm:$0xf]
        %v1433 = vld [vmem:[%s465 + $0x38] sm:$0xf]
        %v1434 = vld [vmem:[%s465 + $0x3c] sm:$0xf]
        %v1435 = vld [vmem:[%s465 + $0x40] sm:$0xf]
        %v1436 = vld [vmem:[%s465 + $0x44] sm:$0xf]
        %v1437 = vld [vmem:[%s465 + $0x48] sm:$0xf]
        %v1438 = vld [vmem:[%s465 + $0x4c] sm:$0xf]
        %v1439 = vld [vmem:[%s465 + $0x50] sm:$0xf]
        %v1440 = vld [vmem:[%s465 + $0x54] sm:$0xf]
        %v1441 = vld [vmem:[%s465 + $0x58] sm:$0xf]
        %v1442 = vld [vmem:[%s465 + $0x5c] sm:$0xf]
        %v1443 = vld [vmem:[%s465 + $0x60] sm:$0xf]
        %v1444 = vld [vmem:[%s465 + $0x64] sm:$0xf]
        %v1445 = vld [vmem:[%s465 + $0x68] sm:$0xf]
        %v1446 = vld [vmem:[%s465 + $0x6c] sm:$0xf]
        %v1447 = vld [vmem:[%s465 + $0x70] sm:$0xf]
        %v1448 = vld [vmem:[%s465 + $0x74] sm:$0xf]
        %v1449 = vld [vmem:[%s465 + $0x78] sm:$0xf]
        %v1450 = vld [vmem:[%s465 + $0x7c] sm:$0xf]
        %v1451 = vld [vmem:[%s465 + $0x80] sm:$0xf]
        %v1452 = vld [vmem:[%s465 + $0x84] sm:$0xf]
        %v1453 = vld [vmem:[%s465 + $0x88] sm:$0xf]
        %v1454 = vld [vmem:[%s465 + $0x8c] sm:$0xf]
        %v1455 = vld [vmem:[%s465 + $0x90] sm:$0xf]
        %v1456 = vld [vmem:[%s465 + $0x94] sm:$0xf]
        %v1457 = vld [vmem:[%s465 + $0x98] sm:$0xf]
        %v1458 = vld [vmem:[%s465 + $0x9c] sm:$0xf]
        %v1459 = vld [vmem:[%s465 + $0xa0] sm:$0xf]
        %v1460 = vld [vmem:[%s465 + $0xa4] sm:$0xf]
        %v1461 = vld [vmem:[%s465 + $0xa8] sm:$0xf]
        %v1462 = vld [vmem:[%s465 + $0xac] sm:$0xf]
        %v1463 = vld [vmem:[%s465 + $0xb0] sm:$0xf]
        %v1464 = vld [vmem:[%s465 + $0xb4] sm:$0x1]
        %s1465 = scalar_lea.vmem %s2, 16
        %v1466 = vld [vmem:[%s1465] sm:$0xf]
        %v1467 = vld [vmem:[%s1465 + $0x4] sm:$0x3]
        %v1510 = vunpack.c.l.b16 %v1423
        %v1511 = vunpack.c.l.b16 %v1424
        %v1512 = vunpack.c.l.b16 %v1425
        %v1513 = vunpack.c.l.b16 %v1426
        %v1514 = vunpack.c.l.b16 %v1427
        %v1515 = vunpack.c.l.b16 %v1428
        %v1516 = vunpack.c.l.b16 %v1429
        %v1517 = vunpack.c.l.b16 %v1430
        %v1518 = vunpack.c.l.b16 %v1431
        %v1519 = vunpack.c.l.b16 %v1432
        %v1520 = vunpack.c.l.b16 %v1433
        %v1521 = vunpack.c.l.b16 %v1434
        %v1522 = vunpack.c.l.b16 %v1435
        %v1523 = vunpack.c.l.b16 %v1436
        %v1524 = vunpack.c.l.b16 %v1437
        %v1525 = vunpack.c.l.b16 %v1438
        %v1526 = vunpack.c.l.b16 %v1439
        %v1527 = vunpack.c.l.b16 %v1440
        %v1528 = vunpack.c.l.b16 %v1441
        %v1529 = vunpack.c.l.b16 %v1442
        %v1530 = vunpack.c.l.b16 %v1443
        %v1531 = vunpack.c.l.b16 %v1444
        %v1532 = vunpack.c.l.b16 %v1445
        %v1533 = vunpack.c.l.b16 %v1446
        %v1534 = vunpack.c.l.b16 %v1447
        %v1535 = vunpack.c.l.b16 %v1448
        %v1536 = vunpack.c.l.b16 %v1449
        %v1537 = vunpack.c.l.b16 %v1450
        %v1538 = vunpack.c.l.b16 %v1451
        %v1539 = vunpack.c.l.b16 %v1452
        %v1540 = vunpack.c.l.b16 %v1453
        %v1541 = vunpack.c.l.b16 %v1454
        %v1542 = vunpack.c.l.b16 %v1455
        %v1543 = vunpack.c.l.b16 %v1456
        %v1544 = vunpack.c.l.b16 %v1457
        %v1545 = vunpack.c.l.b16 %v1458
        %v1546 = vunpack.c.l.b16 %v1459
        %v1547 = vunpack.c.l.b16 %v1460
        %v1548 = vunpack.c.l.b16 %v1461
        %v1549 = vunpack.c.l.b16 %v1462
        %v1550 = vunpack.c.l.b16 %v1463
        %v1551 = vunpack.c.l.b16 %v1464
        %v1552 = vpack.c.b16 %v1511, %v1510
        %v1553 = vpack.c.b16 %v1513, %v1512
        %v1554 = vpack.c.b16 %v1515, %v1514
        %v1555 = vpack.c.b16 %v1517, %v1516
        %v1556 = vpack.c.b16 %v1519, %v1518
        %v1557 = vpack.c.b16 %v1521, %v1520
        %v1558 = vpack.c.b16 %v1523, %v1522
        %v1559 = vpack.c.b16 %v1525, %v1524
        %v1560 = vpack.c.b16 %v1527, %v1526
        %v1561 = vpack.c.b16 %v1529, %v1528
        %v1562 = vpack.c.b16 %v1531, %v1530
        %v1563 = vpack.c.b16 %v1533, %v1532
        %v1564 = vpack.c.b16 %v1535, %v1534
        %v1565 = vpack.c.b16 %v1537, %v1536
        %v1566 = vpack.c.b16 %v1539, %v1538
        %v1567 = vpack.c.b16 %v1541, %v1540
        %v1568 = vpack.c.b16 %v1543, %v1542
        %v1569 = vpack.c.b16 %v1545, %v1544
        %v1570 = vpack.c.b16 %v1547, %v1546
        %v1571 = vpack.c.b16 %v1549, %v1548
        %v1572 = vpack.c.b16 %v1551, %v1550
        %vm1573 = vsmask.f32 7424
        %v1575 = vshrl.u32 %v1552, 16
        %v1577 = vshll.u32 %v1552, 16
        %v1579 = vrot.slane %v1577, 1
        %v1580 = vor.u32 %v1575, %v1579
        %v1582 = vshll.u32 %v1553, 16
        %v1584 = vrot.slane %v1582, 1
        %v1585 = vsel %vm1573, %v1580, %v1584
        %v1586 = vshrl.u32 %v1553, 16
        %v1588 = vor.u32 %v1586, %v1584
        %v1590 = vshll.u32 %v1554, 16
        %v1592 = vrot.slane %v1590, 1
        %v1593 = vsel %vm1573, %v1588, %v1592
        %v1594 = vshrl.u32 %v1554, 16
        %v1596 = vor.u32 %v1594, %v1592
        %v1598 = vshll.u32 %v1555, 16
        %v1600 = vrot.slane %v1598, 1
        %v1601 = vsel %vm1573, %v1596, %v1600
        %v1602 = vshrl.u32 %v1555, 16
        %v1604 = vor.u32 %v1602, %v1600
        %v1606 = vshll.u32 %v1556, 16
        %v1608 = vrot.slane %v1606, 1
        %v1609 = vsel %vm1573, %v1604, %v1608
        %v1610 = vshrl.u32 %v1556, 16
        %v1612 = vor.u32 %v1610, %v1608
        %v1614 = vshll.u32 %v1557, 16
        %v1616 = vrot.slane %v1614, 1
        %v1617 = vsel %vm1573, %v1612, %v1616
        %v1618 = vshrl.u32 %v1557, 16
        %v1620 = vor.u32 %v1618, %v1616
        %v1622 = vshll.u32 %v1558, 16
        %v1624 = vrot.slane %v1622, 1
        %v1625 = vsel %vm1573, %v1620, %v1624
        %v1626 = vshrl.u32 %v1558, 16
        %v1628 = vor.u32 %v1626, %v1624
        %v1630 = vshll.u32 %v1559, 16
        %v1632 = vrot.slane %v1630, 1
        %v1633 = vsel %vm1573, %v1628, %v1632
        %v1634 = vshrl.u32 %v1559, 16
        %v1636 = vor.u32 %v1634, %v1632
        %v1638 = vshll.u32 %v1560, 16
        %v1640 = vrot.slane %v1638, 1
        %v1641 = vsel %vm1573, %v1636, %v1640
        %v1642 = vshrl.u32 %v1560, 16
        %v1644 = vor.u32 %v1642, %v1640
        %v1646 = vshll.u32 %v1561, 16
        %v1648 = vrot.slane %v1646, 1
        %v1649 = vsel %vm1573, %v1644, %v1648
        %v1650 = vshrl.u32 %v1561, 16
        %v1652 = vor.u32 %v1650, %v1648
        %v1654 = vshll.u32 %v1562, 16
        %v1656 = vrot.slane %v1654, 1
        %v1657 = vsel %vm1573, %v1652, %v1656
        %v1658 = vshrl.u32 %v1562, 16
        %v1660 = vor.u32 %v1658, %v1656
        %v1662 = vshll.u32 %v1563, 16
        %v1664 = vrot.slane %v1662, 1
        %v1665 = vsel %vm1573, %v1660, %v1664
        %v1666 = vshrl.u32 %v1563, 16
        %v1668 = vor.u32 %v1666, %v1664
        %v1670 = vshll.u32 %v1564, 16
        %v1672 = vrot.slane %v1670, 1
        %v1673 = vsel %vm1573, %v1668, %v1672
        %v1674 = vshrl.u32 %v1564, 16
        %v1676 = vor.u32 %v1674, %v1672
        %v1678 = vshll.u32 %v1565, 16
        %v1680 = vrot.slane %v1678, 1
        %v1681 = vsel %vm1573, %v1676, %v1680
        %v1682 = vshrl.u32 %v1565, 16
        %v1684 = vor.u32 %v1682, %v1680
        %v1686 = vshll.u32 %v1566, 16
        %v1688 = vrot.slane %v1686, 1
        %v1689 = vsel %vm1573, %v1684, %v1688
        %v1690 = vshrl.u32 %v1566, 16
        %v1692 = vor.u32 %v1690, %v1688
        %v1694 = vshll.u32 %v1567, 16
        %v1696 = vrot.slane %v1694, 1
        %v1697 = vsel %vm1573, %v1692, %v1696
        %v1698 = vshrl.u32 %v1567, 16
        %v1700 = vor.u32 %v1698, %v1696
        %v1702 = vshll.u32 %v1568, 16
        %v1704 = vrot.slane %v1702, 1
        %v1705 = vsel %vm1573, %v1700, %v1704
        %v1706 = vshrl.u32 %v1568, 16
        %v1708 = vor.u32 %v1706, %v1704
        %v1710 = vshll.u32 %v1569, 16
        %v1712 = vrot.slane %v1710, 1
        %v1713 = vsel %vm1573, %v1708, %v1712
        %v1714 = vshrl.u32 %v1569, 16
        %v1716 = vor.u32 %v1714, %v1712
        %v1718 = vshll.u32 %v1570, 16
        %v1720 = vrot.slane %v1718, 1
        %v1721 = vsel %vm1573, %v1716, %v1720
        %v1722 = vshrl.u32 %v1570, 16
        %v1724 = vor.u32 %v1722, %v1720
        %v1726 = vshll.u32 %v1571, 16
        %v1728 = vrot.slane %v1726, 1
        %v1729 = vsel %vm1573, %v1724, %v1728
        %v1730 = vshrl.u32 %v1571, 16
        %v1732 = vor.u32 %v1730, %v1728
        %v1734 = vshll.u32 %v1572, 16
        %v1736 = vrot.slane %v1734, 1
        %v1737 = vsel %vm1573, %v1732, %v1736
        %v1738 = vshrl.u32 %v1572, 16
        %v1740 = vor.u32 %v1738, %v1736
        %v1743 = vunpack.c.l.b16 %v1466
        %v1744 = vunpack.c.l.b16 %v1467
        %v1745 = vpack.c.b16 %v1744, %v1743
        %v1747 = vsel %vm672, %v1585, 0
        %v1750 = vsel %vm672, %v1593, 0
        %v1753 = vsel %vm672, %v1601, 0
        %v1756 = vsel %vm672, %v1609, 0
        %v1759 = vsel %vm672, %v1617, 0
        %v1762 = vsel %vm672, %v1625, 0
        %v1765 = vsel %vm672, %v1633, 0
        %v1768 = vsel %vm672, %v1641, 0
        %v1771 = vsel %vm672, %v1649, 0
        %v1774 = vsel %vm672, %v1657, 0
        %v1777 = vsel %vm672, %v1665, 0
        %v1780 = vsel %vm672, %v1673, 0
        %v1783 = vsel %vm672, %v1681, 0
        %v1786 = vsel %vm672, %v1689, 0
        %v1789 = vsel %vm672, %v1697, 0
        %v1792 = vsel %vm672, %v1705, 0
        %v1795 = vsel %vm672, %v1713, 0
        %v1798 = vsel %vm672, %v1721, 0
        %v1801 = vsel %vm672, %v1729, 0
        %v1804 = vsel %vm672, %v1737, 0
        %v1807 = vsel %vm672, %v1740, 0
        %v1810 = vsel %vm736, %v1745, 0
        %1812 = vmatprep.subr.bf16.mxu0 0
        %1813 = vmatpush1.bf16.msra.mxu0 %v1810
        %1814 = vmatprep.subr.bf16.mxu0 0
        %1815 = vmatpush1.bf16.msra.mxu0 0
        %1816 = vmatprep.subr.bf16.mxu0 0
        %1817 = vmatpush1.bf16.msra.mxu0 0
        %1818 = vmatprep.subr.bf16.mxu0 0
        %1819 = vmatpush1.bf16.msra.mxu0 0
        %1820 = vmatprep.subr.bf16.mxu0 0
        %1821 = vmatpush1.bf16.msra.mxu0 0
        %1822 = vmatprep.subr.bf16.mxu0 0
        %1823 = vmatpush1.bf16.msra.mxu0 0
        %1824 = vmatprep.subr.bf16.mxu0 0
        %1825 = vmatpush1.bf16.msra.mxu0 0
        %1826 = vmatprep.subr.bf16.mxu0 0
        %1827 = vmatpush1.bf16.msra.mxu0 0
        %1828 = vmatprep.subr.bf16.mxu0 0
        %1829 = vmatpush1.bf16.msra.mxu0 0
        %1830 = vmatprep.subr.bf16.mxu0 0
        %1831 = vmatpush1.bf16.msra.mxu0 0
        %1832 = vmatprep.subr.bf16.mxu0 0
        %1833 = vmatpush1.bf16.msra.mxu0 0
        %1834 = vmatprep.subr.bf16.mxu0 0
        %1835 = vmatpush1.bf16.msra.mxu0 0
        %1836 = vmatprep.subr.bf16.mxu0 0
        %1837 = vmatpush1.bf16.msra.mxu0 0
        %1838 = vmatprep.subr.bf16.mxu0 0
        %1839 = vmatpush1.bf16.msra.mxu0 0
        %1840 = vmatprep.subr.bf16.mxu0 0
        %1841 = vmatpush1.bf16.msra.mxu0 0
        %1842 = vmatprep.subr.bf16.mxu0 0
        %1843 = vmatpush1.bf16.msra.mxu0 0
        %1844 = vmatprep.mubr.bf16.mxu0 0
        %1845 = vmatmul.mubr.bf16.gmra.mrb[0].mxu0 %v1747
        %v1846 = vpop.f32.mrb[0].mxu0
        %v1847 = vadd.f32 0.0, %v1846
        %v1848 = vpop.f32.mrb[0].mxu0
        %v1849 = vpop.f32.mrb[0].mxu0
        %v1850 = vadd.f32 0.0, %v1849
        %v1851 = vpop.f32.mrb[0].mxu0
        %1852 = vmatprep.mubr.bf16.mxu0 0
        %1853 = vmatmul.mubr.bf16.gmra.mrb[0].mxu0 %v1750
        %v1854 = vpop.f32.mrb[0].mxu0
        %v1855 = vadd.f32 0.0, %v1854
        %v1856 = vpop.f32.mrb[0].mxu0
        %v1857 = vpop.f32.mrb[0].mxu0
        %v1858 = vadd.f32 0.0, %v1857
        %v1859 = vpop.f32.mrb[0].mxu0
        %1860 = vmatprep.mubr.bf16.mxu0 0
        %1861 = vmatmul.mubr.bf16.gmra.mrb[0].mxu0 %v1753
        %v1862 = vpop.f32.mrb[0].mxu0
        %v1863 = vadd.f32 0.0, %v1862
        %v1864 = vpop.f32.mrb[0].mxu0
        %v1865 = vpop.f32.mrb[0].mxu0
        %v1866 = vadd.f32 0.0, %v1865
        %v1867 = vpop.f32.mrb[0].mxu0
        %1868 = vmatprep.mubr.bf16.mxu0 0
        %1869 = vmatmul.mubr.bf16.gmra.mrb[0].mxu0 %v1756
        %v1870 = vpop.f32.mrb[0].mxu0
        %v1871 = vadd.f32 0.0, %v1870
        %v1872 = vpop.f32.mrb[0].mxu0
        %v1873 = vpop.f32.mrb[0].mxu0
        %v1874 = vadd.f32 0.0, %v1873
        %v1875 = vpop.f32.mrb[0].mxu0
        %1876 = vmatprep.mubr.bf16.mxu0 0
        %1877 = vmatmul.mubr.bf16.gmra.mrb[0].mxu0 %v1759
        %v1878 = vpop.f32.mrb[0].mxu0
        %v1879 = vadd.f32 0.0, %v1878
        %v1880 = vpop.f32.mrb[0].mxu0
        %v1881 = vpop.f32.mrb[0].mxu0
        %v1882 = vadd.f32 0.0, %v1881
        %v1883 = vpop.f32.mrb[0].mxu0
        %1884 = vmatprep.mubr.bf16.mxu0 0
        %1885 = vmatmul.mubr.bf16.gmra.mrb[0].mxu0 %v1762
        %v1886 = vpop.f32.mrb[0].mxu0
        %v1887 = vadd.f32 0.0, %v1886
        %v1888 = vpop.f32.mrb[0].mxu0
        %v1889 = vpop.f32.mrb[0].mxu0
        %v1890 = vadd.f32 0.0, %v1889
        %v1891 = vpop.f32.mrb[0].mxu0
        %1892 = vmatprep.mubr.bf16.mxu0 0
        %1893 = vmatmul.mubr.bf16.gmra.mrb[0].mxu0 %v1765
        %v1894 = vpop.f32.mrb[0].mxu0
        %v1895 = vadd.f32 0.0, %v1894
        %v1896 = vpop.f32.mrb[0].mxu0
        %v1897 = vpop.f32.mrb[0].mxu0
        %v1898 = vadd.f32 0.0, %v1897
        %v1899 = vpop.f32.mrb[0].mxu0
        %1900 = vmatprep.mubr.bf16.mxu0 0
        %1901 = vmatmul.mubr.bf16.gmra.mrb[0].mxu0 %v1768
        %v1902 = vpop.f32.mrb[0].mxu0
        %v1903 = vadd.f32 0.0, %v1902
        %v1904 = vpop.f32.mrb[0].mxu0
        %v1905 = vpop.f32.mrb[0].mxu0
        %v1906 = vadd.f32 0.0, %v1905
        %v1907 = vpop.f32.mrb[0].mxu0
        %1908 = vmatprep.mubr.bf16.mxu0 0
        %1909 = vmatmul.mubr.bf16.gmra.mrb[0].mxu0 %v1771
        %v1910 = vpop.f32.mrb[0].mxu0
        %v1911 = vadd.f32 0.0, %v1910
        %v1912 = vpop.f32.mrb[0].mxu0
        %v1913 = vpop.f32.mrb[0].mxu0
        %v1914 = vadd.f32 0.0, %v1913
        %v1915 = vpop.f32.mrb[0].mxu0
        %1916 = vmatprep.mubr.bf16.mxu0 0
        %1917 = vmatmul.mubr.bf16.gmra.mrb[0].mxu0 %v1774
        %v1918 = vpop.f32.mrb[0].mxu0
        %v1919 = vadd.f32 0.0, %v1918
        %v1920 = vpop.f32.mrb[0].mxu0
        %v1921 = vpop.f32.mrb[0].mxu0
        %v1922 = vadd.f32 0.0, %v1921
        %v1923 = vpop.f32.mrb[0].mxu0
        %1924 = vmatprep.mubr.bf16.mxu0 0
        %1925 = vmatmul.mubr.bf16.gmra.mrb[0].mxu0 %v1777
        %v1926 = vpop.f32.mrb[0].mxu0
        %v1927 = vadd.f32 0.0, %v1926
        %v1928 = vpop.f32.mrb[0].mxu0
        %v1929 = vpop.f32.mrb[0].mxu0
        %v1930 = vadd.f32 0.0, %v1929
        %v1931 = vpop.f32.mrb[0].mxu0
        %1932 = vmatprep.mubr.bf16.mxu0 0
        %1933 = vmatmul.mubr.bf16.gmra.mrb[0].mxu0 %v1780
        %v1934 = vpop.f32.mrb[0].mxu0
        %v1935 = vadd.f32 0.0, %v1934
        %v1936 = vpop.f32.mrb[0].mxu0
        %v1937 = vpop.f32.mrb[0].mxu0
        %v1938 = vadd.f32 0.0, %v1937
        %v1939 = vpop.f32.mrb[0].mxu0
        %1940 = vmatprep.mubr.bf16.mxu0 0
        %1941 = vmatmul.mubr.bf16.gmra.mrb[0].mxu0 %v1783
        %v1942 = vpop.f32.mrb[0].mxu0
        %v1943 = vadd.f32 0.0, %v1942
        %v1944 = vpop.f32.mrb[0].mxu0
        %v1945 = vpop.f32.mrb[0].mxu0
        %v1946 = vadd.f32 0.0, %v1945
        %v1947 = vpop.f32.mrb[0].mxu0
        %1948 = vmatprep.mubr.bf16.mxu0 0
        %1949 = vmatmul.mubr.bf16.gmra.mrb[0].mxu0 %v1786
        %v1950 = vpop.f32.mrb[0].mxu0
        %v1951 = vadd.f32 0.0, %v1950
        %v1952 = vpop.f32.mrb[0].mxu0
        %v1953 = vpop.f32.mrb[0].mxu0
        %v1954 = vadd.f32 0.0, %v1953
        %v1955 = vpop.f32.mrb[0].mxu0
        %1956 = vmatprep.mubr.bf16.mxu0 0
        %1957 = vmatmul.mubr.bf16.gmra.mrb[0].mxu0 %v1789
        %v1958 = vpop.f32.mrb[0].mxu0
        %v1959 = vadd.f32 0.0, %v1958
        %v1960 = vpop.f32.mrb[0].mxu0
        %v1961 = vpop.f32.mrb[0].mxu0
        %v1962 = vadd.f32 0.0, %v1961
        %v1963 = vpop.f32.mrb[0].mxu0
        %1964 = vmatprep.mubr.bf16.mxu0 0
        %1965 = vmatmul.mubr.bf16.gmra.mrb[0].mxu0 %v1792
        %v1966 = vpop.f32.mrb[0].mxu0
        %v1967 = vadd.f32 0.0, %v1966
        %v1968 = vpop.f32.mrb[0].mxu0
        %v1969 = vpop.f32.mrb[0].mxu0
        %v1970 = vadd.f32 0.0, %v1969
        %v1971 = vpop.f32.mrb[0].mxu0
        %1972 = vmatprep.mubr.bf16.mxu0 0
        %1973 = vmatmul.mubr.bf16.gmra.mrb[0].mxu0 %v1795
        %v1974 = vpop.f32.mrb[0].mxu0
        %v1975 = vadd.f32 0.0, %v1974
        %v1976 = vpop.f32.mrb[0].mxu0
        %v1977 = vpop.f32.mrb[0].mxu0
        %v1978 = vadd.f32 0.0, %v1977
        %v1979 = vpop.f32.mrb[0].mxu0
        %1980 = vmatprep.mubr.bf16.mxu0 0
        %1981 = vmatmul.mubr.bf16.gmra.mrb[0].mxu0 %v1798
        %v1982 = vpop.f32.mrb[0].mxu0
        %v1983 = vadd.f32 0.0, %v1982
        %v1984 = vpop.f32.mrb[0].mxu0
        %v1985 = vpop.f32.mrb[0].mxu0
        %v1986 = vadd.f32 0.0, %v1985
        %v1987 = vpop.f32.mrb[0].mxu0
        %1988 = vmatprep.mubr.bf16.mxu0 0
        %1989 = vmatmul.mubr.bf16.gmra.mrb[0].mxu0 %v1801
        %v1990 = vpop.f32.mrb[0].mxu0
        %v1991 = vadd.f32 0.0, %v1990
        %v1992 = vpop.f32.mrb[0].mxu0
        %v1993 = vpop.f32.mrb[0].mxu0
        %v1994 = vadd.f32 0.0, %v1993
        %v1995 = vpop.f32.mrb[0].mxu0
        %1996 = vmatprep.mubr.bf16.mxu0 0
        %1997 = vmatmul.mubr.bf16.gmra.mrb[0].mxu0 %v1804
        %v1998 = vpop.f32.mrb[0].mxu0
        %v1999 = vadd.f32 0.0, %v1998
        %v2000 = vpop.f32.mrb[0].mxu0
        %v2001 = vpop.f32.mrb[0].mxu0
        %v2002 = vadd.f32 0.0, %v2001
        %v2003 = vpop.f32.mrb[0].mxu0
        %2004 = vmatprep.mubr.bf16.mxu0 0
        %2005 = vmatmul.mubr.bf16.gmra.mrb[0].mxu0 %v1807
        %v2006 = vpop.f32.mrb[0].mxu0
        %v2007 = vadd.f32 0.0, %v2006
        %v2008 = vpop.f32.mrb[0].mxu0
        %v2009 = vpop.f32.mrb[0].mxu0
        %v2010 = vpop.f32.mrb[0].mxu0
        %2011 = vdwg.mxu0
        %v2012 = vadd.f32 %v1258, %v1847
        %v2013 = vadd.f32 %v1261, %v1850
        %v2014 = vadd.f32 %v1266, %v1855
        %v2015 = vadd.f32 %v1269, %v1858
        %v2016 = vadd.f32 %v1274, %v1863
        %v2017 = vadd.f32 %v1277, %v1866
        %v2018 = vadd.f32 %v1282, %v1871
        %v2019 = vadd.f32 %v1285, %v1874
        %v2020 = vadd.f32 %v1290, %v1879
        %v2021 = vadd.f32 %v1293, %v1882
        %v2022 = vadd.f32 %v1298, %v1887
        %v2023 = vadd.f32 %v1301, %v1890
        %v2024 = vadd.f32 %v1306, %v1895
        %v2025 = vadd.f32 %v1309, %v1898
        %v2026 = vadd.f32 %v1314, %v1903
        %v2027 = vadd.f32 %v1317, %v1906
        %v2028 = vadd.f32 %v1322, %v1911
        %v2029 = vadd.f32 %v1325, %v1914
        %v2030 = vadd.f32 %v1330, %v1919
        %v2031 = vadd.f32 %v1333, %v1922
        %v2032 = vadd.f32 %v1338, %v1927
        %v2033 = vadd.f32 %v1341, %v1930
        %v2034 = vadd.f32 %v1346, %v1935
        %v2035 = vadd.f32 %v1349, %v1938
        %v2036 = vadd.f32 %v1354, %v1943
        %v2037 = vadd.f32 %v1357, %v1946
        %v2038 = vadd.f32 %v1362, %v1951
        %v2039 = vadd.f32 %v1365, %v1954
        %v2040 = vadd.f32 %v1370, %v1959
        %v2041 = vadd.f32 %v1373, %v1962
        %v2042 = vadd.f32 %v1378, %v1967
        %v2043 = vadd.f32 %v1381, %v1970
        %v2044 = vadd.f32 %v1386, %v1975
        %v2045 = vadd.f32 %v1389, %v1978
        %v2046 = vadd.f32 %v1394, %v1983
        %v2047 = vadd.f32 %v1397, %v1986
        %v2048 = vadd.f32 %v1402, %v1991
        %v2049 = vadd.f32 %v1405, %v1994
        %v2050 = vadd.f32 %v1410, %v1999
        %v2051 = vadd.f32 %v1413, %v2002
        %v2052 = vadd.f32 %v1418, %v2007
        %v2053 = vld [vmem:[%s3] sm:$0x1]
        %v2055 = vlaneseq
        %v2056 = vshrl.u32 %v2055, 7
        %v2057 = vsub.s32 0, %v2056
        %v2058 = vrot.slane %v2053, %v2057
        %v2060 = vadd.f32 %v2012, %v2058
        %v2061 = vadd.f32 %v2013, %v2058
        %v2062 = vadd.f32 %v2014, %v2058
        %v2063 = vadd.f32 %v2015, %v2058
        %v2064 = vadd.f32 %v2016, %v2058
        %v2065 = vadd.f32 %v2017, %v2058
        %v2066 = vadd.f32 %v2018, %v2058
        %v2067 = vadd.f32 %v2019, %v2058
        %v2068 = vadd.f32 %v2020, %v2058
        %v2069 = vadd.f32 %v2021, %v2058
        %v2070 = vadd.f32 %v2022, %v2058
        %v2071 = vadd.f32 %v2023, %v2058
        %v2072 = vadd.f32 %v2024, %v2058
        %v2073 = vadd.f32 %v2025, %v2058
        %v2074 = vadd.f32 %v2026, %v2058
        %v2075 = vadd.f32 %v2027, %v2058
        %v2076 = vadd.f32 %v2028, %v2058
        %v2077 = vadd.f32 %v2029, %v2058
        %v2078 = vadd.f32 %v2030, %v2058
        %v2079 = vadd.f32 %v2031, %v2058
        %v2080 = vadd.f32 %v2032, %v2058
        %v2081 = vadd.f32 %v2033, %v2058
        %v2082 = vadd.f32 %v2034, %v2058
        %v2083 = vadd.f32 %v2035, %v2058
        %v2084 = vadd.f32 %v2036, %v2058
        %v2085 = vadd.f32 %v2037, %v2058
        %v2086 = vadd.f32 %v2038, %v2058
        %v2087 = vadd.f32 %v2039, %v2058
        %v2088 = vadd.f32 %v2040, %v2058
        %v2089 = vadd.f32 %v2041, %v2058
        %v2090 = vadd.f32 %v2042, %v2058
        %v2091 = vadd.f32 %v2043, %v2058
        %v2092 = vadd.f32 %v2044, %v2058
        %v2093 = vadd.f32 %v2045, %v2058
        %v2094 = vadd.f32 %v2046, %v2058
        %v2095 = vadd.f32 %v2047, %v2058
        %v2096 = vadd.f32 %v2048, %v2058
        %v2097 = vadd.f32 %v2049, %v2058
        %v2098 = vadd.f32 %v2050, %v2058
        %v2099 = vadd.f32 %v2051, %v2058
        %v2100 = vadd.f32 %v2052, %v2058
        %2102 = vset.pattern.permute.xlu0 0
        %2103 = vperm.xlu0 %2102, %v476
        %v2104 = vpop.permute.xlu0 %2103
        %2107 = vset.pattern.permute.xlu0 0
        %2108 = vperm.xlu0 %2107, %v477
        %v2109 = vpop.permute.xlu0 %2108
        %2112 = vset.pattern.permute.xlu0 0
        %2113 = vperm.xlu0 %2112, %v478
        %v2114 = vpop.permute.xlu0 %2113
        %2117 = vset.pattern.permute.xlu0 0
        %2118 = vperm.xlu0 %2117, %v479
        %v2119 = vpop.permute.xlu0 %2118
        %2122 = vset.pattern.permute.xlu0 0
        %2123 = vperm.xlu0 %2122, %v480
        %v2124 = vpop.permute.xlu0 %2123
        %2127 = vset.pattern.permute.xlu0 0
        %2128 = vperm.xlu0 %2127, %v481
        %v2129 = vpop.permute.xlu0 %2128
        %2132 = vset.pattern.permute.xlu0 0
        %2133 = vperm.xlu0 %2132, %v482
        %v2134 = vpop.permute.xlu0 %2133
        %2137 = vset.pattern.permute.xlu0 0
        %2138 = vperm.xlu0 %2137, %v483
        %v2139 = vpop.permute.xlu0 %2138
        %2142 = vset.pattern.permute.xlu0 0
        %2143 = vperm.xlu0 %2142, %v484
        %v2144 = vpop.permute.xlu0 %2143
        %2147 = vset.pattern.permute.xlu0 0
        %2148 = vperm.xlu0 %2147, %v485
        %v2149 = vpop.permute.xlu0 %2148
        %2152 = vset.pattern.permute.xlu0 0
        %2153 = vperm.xlu0 %2152, %v486
        %v2154 = vpop.permute.xlu0 %2153
        %2157 = vset.pattern.permute.xlu0 0
        %2158 = vperm.xlu0 %2157, %v487
        %v2159 = vpop.permute.xlu0 %2158
        %2162 = vset.pattern.permute.xlu0 0
        %2163 = vperm.xlu0 %2162, %v488
        %v2164 = vpop.permute.xlu0 %2163
        %2167 = vset.pattern.permute.xlu0 0
        %2168 = vperm.xlu0 %2167, %v489
        %v2169 = vpop.permute.xlu0 %2168
        %2172 = vset.pattern.permute.xlu0 0
        %2173 = vperm.xlu0 %2172, %v490
        %v2174 = vpop.permute.xlu0 %2173
        %2177 = vset.pattern.permute.xlu0 0
        %2178 = vperm.xlu0 %2177, %v491
        %v2179 = vpop.permute.xlu0 %2178
        %2182 = vset.pattern.permute.xlu0 0
        %2183 = vperm.xlu0 %2182, %v492
        %v2184 = vpop.permute.xlu0 %2183
        %2187 = vset.pattern.permute.xlu0 0
        %2188 = vperm.xlu0 %2187, %v493
        %v2189 = vpop.permute.xlu0 %2188
        %2192 = vset.pattern.permute.xlu0 0
        %2193 = vperm.xlu0 %2192, %v494
        %v2194 = vpop.permute.xlu0 %2193
        %2197 = vset.pattern.permute.xlu0 0
        %2198 = vperm.xlu0 %2197, %v495
        %v2199 = vpop.permute.xlu0 %2198
        %2202 = vset.pattern.permute.xlu0 0
        %2203 = vperm.xlu0 %2202, %v496
        %v2204 = vpop.permute.xlu0 %2203
        %2207 = vset.pattern.permute.xlu0 0
        %2208 = vperm.xlu0 %2207, %v497
        %v2209 = vpop.permute.xlu0 %2208
        %2212 = vset.pattern.permute.xlu0 0
        %2213 = vperm.xlu0 %2212, %v498
        %v2214 = vpop.permute.xlu0 %2213
        %2217 = vset.pattern.permute.xlu0 0
        %2218 = vperm.xlu0 %2217, %v499
        %v2219 = vpop.permute.xlu0 %2218
        %2222 = vset.pattern.permute.xlu0 0
        %2223 = vperm.xlu0 %2222, %v500
        %v2224 = vpop.permute.xlu0 %2223
        %2227 = vset.pattern.permute.xlu0 0
        %2228 = vperm.xlu0 %2227, %v501
        %v2229 = vpop.permute.xlu0 %2228
        %2232 = vset.pattern.permute.xlu0 0
        %2233 = vperm.xlu0 %2232, %v502
        %v2234 = vpop.permute.xlu0 %2233
        %2237 = vset.pattern.permute.xlu0 0
        %2238 = vperm.xlu0 %2237, %v503
        %v2239 = vpop.permute.xlu0 %2238
        %2242 = vset.pattern.permute.xlu0 0
        %2243 = vperm.xlu0 %2242, %v504
        %v2244 = vpop.permute.xlu0 %2243
        %2247 = vset.pattern.permute.xlu0 0
        %2248 = vperm.xlu0 %2247, %v505
        %v2249 = vpop.permute.xlu0 %2248
        %2252 = vset.pattern.permute.xlu0 0
        %2253 = vperm.xlu0 %2252, %v506
        %v2254 = vpop.permute.xlu0 %2253
        %2257 = vset.pattern.permute.xlu0 0
        %2258 = vperm.xlu0 %2257, %v507
        %v2259 = vpop.permute.xlu0 %2258
        %2262 = vset.pattern.permute.xlu0 0
        %2263 = vperm.xlu0 %2262, %v508
        %v2264 = vpop.permute.xlu0 %2263
        %2267 = vset.pattern.permute.xlu0 0
        %2268 = vperm.xlu0 %2267, %v509
        %v2269 = vpop.permute.xlu0 %2268
        %2272 = vset.pattern.permute.xlu0 0
        %2273 = vperm.xlu0 %2272, %v510
        %v2274 = vpop.permute.xlu0 %2273
        %2277 = vset.pattern.permute.xlu0 0
        %2278 = vperm.xlu0 %2277, %v511
        %v2279 = vpop.permute.xlu0 %2278
        %2282 = vset.pattern.permute.xlu0 0
        %2283 = vperm.xlu0 %2282, %v512
        %v2284 = vpop.permute.xlu0 %2283
        %2287 = vset.pattern.permute.xlu0 0
        %2288 = vperm.xlu0 %2287, %v513
        %v2289 = vpop.permute.xlu0 %2288
        %2292 = vset.pattern.permute.xlu0 0
        %2293 = vperm.xlu0 %2292, %v514
        %v2294 = vpop.permute.xlu0 %2293
        %2297 = vset.pattern.permute.xlu0 0
        %2298 = vperm.xlu0 %2297, %v515
        %v2299 = vpop.permute.xlu0 %2298
        %2302 = vset.pattern.permute.xlu0 0
        %2303 = vperm.xlu0 %2302, %v516
        %v2304 = vpop.permute.xlu0 %2303
        %v2306 = vmul.f32 %v2060, %v2104
        %v2307 = vmul.f32 %v2061, %v2109
        %v2308 = vmul.f32 %v2062, %v2114
        %v2309 = vmul.f32 %v2063, %v2119
        %v2310 = vmul.f32 %v2064, %v2124
        %v2311 = vmul.f32 %v2065, %v2129
        %v2312 = vmul.f32 %v2066, %v2134
        %v2313 = vmul.f32 %v2067, %v2139
        %v2314 = vmul.f32 %v2068, %v2144
        %v2315 = vmul.f32 %v2069, %v2149
        %v2316 = vmul.f32 %v2070, %v2154
        %v2317 = vmul.f32 %v2071, %v2159
        %v2318 = vmul.f32 %v2072, %v2164
        %v2319 = vmul.f32 %v2073, %v2169
        %v2320 = vmul.f32 %v2074, %v2174
        %v2321 = vmul.f32 %v2075, %v2179
        %v2322 = vmul.f32 %v2076, %v2184
        %v2323 = vmul.f32 %v2077, %v2189
        %v2324 = vmul.f32 %v2078, %v2194
        %v2325 = vmul.f32 %v2079, %v2199
        %v2326 = vmul.f32 %v2080, %v2204
        %v2327 = vmul.f32 %v2081, %v2209
        %v2328 = vmul.f32 %v2082, %v2214
        %v2329 = vmul.f32 %v2083, %v2219
        %v2330 = vmul.f32 %v2084, %v2224
        %v2331 = vmul.f32 %v2085, %v2229
        %v2332 = vmul.f32 %v2086, %v2234
        %v2333 = vmul.f32 %v2087, %v2239
        %v2334 = vmul.f32 %v2088, %v2244
        %v2335 = vmul.f32 %v2089, %v2249
        %v2336 = vmul.f32 %v2090, %v2254
        %v2337 = vmul.f32 %v2091, %v2259
        %v2338 = vmul.f32 %v2092, %v2264
        %v2339 = vmul.f32 %v2093, %v2269
        %v2340 = vmul.f32 %v2094, %v2274
        %v2341 = vmul.f32 %v2095, %v2279
        %v2342 = vmul.f32 %v2096, %v2284
        %v2343 = vmul.f32 %v2097, %v2289
        %v2344 = vmul.f32 %v2098, %v2294
        %v2345 = vmul.f32 %v2099, %v2299
        %v2346 = vmul.f32 %v2100, %v2304
        %2347 = vst.msk [vmem:[#allocation2 + $0x20] sm:$0xff] %vm467, %v2306
        %2348 = vst.msk [vmem:[#allocation2 + $0x28] sm:$0xff] %vm467, %v2307
        %2349 = vst.msk [vmem:[#allocation2 + $0x30] sm:$0xff] %vm467, %v2308
        %2350 = vst.msk [vmem:[#allocation2 + $0x38] sm:$0xff] %vm467, %v2309
        %2351 = vst.msk [vmem:[#allocation2 + $0x40] sm:$0xff] %vm467, %v2310
        %2352 = vst.msk [vmem:[#allocation2 + $0x48] sm:$0xff] %vm467, %v2311
        %2353 = vst.msk [vmem:[#allocation2 + $0x50] sm:$0xff] %vm467, %v2312
        %2354 = vst.msk [vmem:[#allocation2 + $0x58] sm:$0xff] %vm467, %v2313
        %2355 = vst.msk [vmem:[#allocation2 + $0x60] sm:$0xff] %vm467, %v2314
        %2356 = vst.msk [vmem:[#allocation2 + $0x68] sm:$0xff] %vm467, %v2315
        %2357 = vst.msk [vmem:[#allocation2 + $0x70] sm:$0xff] %vm467, %v2316
        %2358 = vst.msk [vmem:[#allocation2 + $0x78] sm:$0xff] %vm467, %v2317
        %2359 = vst.msk [vmem:[#allocation2 + $0x80] sm:$0xff] %vm467, %v2318
        %2360 = vst.msk [vmem:[#allocation2 + $0x88] sm:$0xff] %vm467, %v2319
        %2361 = vst.msk [vmem:[#allocation2 + $0x90] sm:$0xff] %vm467, %v2320
        %2362 = vst.msk [vmem:[#allocation2 + $0x98] sm:$0xff] %vm467, %v2321
        %2363 = vst.msk [vmem:[#allocation2 + $0xa0] sm:$0xff] %vm467, %v2322
        %2364 = vst.msk [vmem:[#allocation2 + $0xa8] sm:$0xff] %vm467, %v2323
        %2365 = vst.msk [vmem:[#allocation2 + $0xb0] sm:$0xff] %vm467, %v2324
        %2366 = vst.msk [vmem:[#allocation2 + $0xb8] sm:$0xff] %vm467, %v2325
        %2367 = vst.msk [vmem:[#allocation2 + $0xc0] sm:$0xff] %vm467, %v2326
        %2368 = vst.msk [vmem:[#allocation2 + $0xc8] sm:$0xff] %vm467, %v2327
        %2369 = vst.msk [vmem:[#allocation2 + $0xd0] sm:$0xff] %vm467, %v2328
        %2370 = vst.msk [vmem:[#allocation2 + $0xd8] sm:$0xff] %vm467, %v2329
        %2371 = vst.msk [vmem:[#allocation2 + $0xe0] sm:$0xff] %vm467, %v2330
        %2372 = vst.msk [vmem:[#allocation2 + $0xe8] sm:$0xff] %vm467, %v2331
        %2373 = vst.msk [vmem:[#allocation2 + $0xf0] sm:$0xff] %vm467, %v2332
        %2374 = vst.msk [vmem:[#allocation2 + $0xf8] sm:$0xff] %vm467, %v2333
        %2375 = vst.msk [vmem:[#allocation2 + $0x100] sm:$0xff] %vm467, %v2334
        %2376 = vst.msk [vmem:[#allocation2 + $0x108] sm:$0xff] %vm467, %v2335
        %2377 = vst.msk [vmem:[#allocation2 + $0x110] sm:$0xff] %vm467, %v2336
        %2378 = vst.msk [vmem:[#allocation2 + $0x118] sm:$0xff] %vm467, %v2337
        %2379 = vst.msk [vmem:[#allocation2 + $0x120] sm:$0xff] %vm467, %v2338
        %2380 = vst.msk [vmem:[#allocation2 + $0x128] sm:$0xff] %vm467, %v2339
        %2381 = vst.msk [vmem:[#allocation2 + $0x130] sm:$0xff] %vm467, %v2340
        %2382 = vst.msk [vmem:[#allocation2 + $0x138] sm:$0xff] %vm467, %v2341
        %2383 = vst.msk [vmem:[#allocation2 + $0x140] sm:$0xff] %vm467, %v2342
        %2384 = vst.msk [vmem:[#allocation2 + $0x148] sm:$0xff] %vm467, %v2343
        %2385 = vst.msk [vmem:[#allocation2 + $0x150] sm:$0xff] %vm467, %v2344
        %2386 = vst.msk [vmem:[#allocation2 + $0x158] sm:$0xff] %vm467, %v2345
        %2387 = vst.msk [vmem:[#allocation2 + $0x160] sm:$0xff] %vm467, %v2346
        %v2388 = vld [vmem:[#allocation2 + $0x6] sm:$0xff]
        %v2389 = vld [vmem:[#allocation2 + $0xe] sm:$0xff]
        %v2390 = vld [vmem:[#allocation2 + $0x16] sm:$0xff]
        %v2391 = vld [vmem:[#allocation2 + $0x1e] sm:$0xff]
        %v2392 = vld [vmem:[#allocation2 + $0x26] sm:$0xff]
        %v2393 = vld [vmem:[#allocation2 + $0x2e] sm:$0xff]
        %v2394 = vld [vmem:[#allocation2 + $0x36] sm:$0xff]
        %v2395 = vld [vmem:[#allocation2 + $0x3e] sm:$0xff]
        %v2396 = vld [vmem:[#allocation2 + $0x46] sm:$0xff]
        %v2397 = vld [vmem:[#allocation2 + $0x4e] sm:$0xff]
        %v2398 = vld [vmem:[#allocation2 + $0x56] sm:$0xff]
        %v2399 = vld [vmem:[#allocation2 + $0x5e] sm:$0xff]
        %v2400 = vld [vmem:[#allocation2 + $0x66] sm:$0xff]
        %v2401 = vld [vmem:[#allocation2 + $0x6e] sm:$0xff]
        %v2402 = vld [vmem:[#allocation2 + $0x76] sm:$0xff]
        %v2403 = vld [vmem:[#allocation2 + $0x7e] sm:$0xff]
        %v2404 = vld [vmem:[#allocation2 + $0x86] sm:$0xff]
        %v2405 = vld [vmem:[#allocation2 + $0x8e] sm:$0xff]
        %v2406 = vld [vmem:[#allocation2 + $0x96] sm:$0xff]
        %v2407 = vld [vmem:[#allocation2 + $0x9e] sm:$0xff]
        %v2408 = vld [vmem:[#allocation2 + $0xa6] sm:$0xff]
        %v2409 = vld [vmem:[#allocation2 + $0xae] sm:$0xff]
        %v2410 = vld [vmem:[#allocation2 + $0xb6] sm:$0xff]
        %v2411 = vld [vmem:[#allocation2 + $0xbe] sm:$0xff]
        %v2412 = vld [vmem:[#allocation2 + $0xc6] sm:$0xff]
        %v2413 = vld [vmem:[#allocation2 + $0xce] sm:$0xff]
        %v2414 = vld [vmem:[#allocation2 + $0xd6] sm:$0xff]
        %v2415 = vld [vmem:[#allocation2 + $0xde] sm:$0xff]
        %v2416 = vld [vmem:[#allocation2 + $0xe6] sm:$0xff]
        %v2417 = vld [vmem:[#allocation2 + $0xee] sm:$0xff]
        %v2418 = vld [vmem:[#allocation2 + $0xf6] sm:$0xff]
        %v2419 = vld [vmem:[#allocation2 + $0xfe] sm:$0xff]
        %v2420 = vld [vmem:[#allocation2 + $0x106] sm:$0xff]
        %v2421 = vld [vmem:[#allocation2 + $0x10e] sm:$0xff]
        %v2422 = vld [vmem:[#allocation2 + $0x116] sm:$0xff]
        %v2423 = vld [vmem:[#allocation2 + $0x11e] sm:$0xff]
        %v2424 = vld [vmem:[#allocation2 + $0x126] sm:$0xff]
        %v2425 = vld [vmem:[#allocation2 + $0x12e] sm:$0xff]
        %v2426 = vld [vmem:[#allocation2 + $0x136] sm:$0xff]
        %v2427 = vld [vmem:[#allocation2 + $0x13e] sm:$0xff]
        %v2428 = vld [vmem:[#allocation2 + $0x146] sm:$0xff]
        %v2429 = vld [vmem:[#allocation2 + $0x14e] sm:$0xff]
        %v2430 = vld [vmem:[#allocation2 + $0x156] sm:$0xff]
        %v2431 = vmax.f32 %v2388, 0.0
        %v2432 = vmax.f32 %v2389, 0.0
        %v2433 = vmax.f32 %v2390, 0.0
        %v2434 = vmax.f32 %v2391, 0.0
        %v2435 = vmax.f32 %v2392, 0.0
        %v2436 = vmax.f32 %v2393, 0.0
        %v2437 = vmax.f32 %v2394, 0.0
        %v2438 = vmax.f32 %v2395, 0.0
        %v2439 = vmax.f32 %v2396, 0.0
        %v2440 = vmax.f32 %v2397, 0.0
        %v2441 = vmax.f32 %v2398, 0.0
        %v2442 = vmax.f32 %v2399, 0.0
        %v2443 = vmax.f32 %v2400, 0.0
        %v2444 = vmax.f32 %v2401, 0.0
        %v2445 = vmax.f32 %v2402, 0.0
        %v2446 = vmax.f32 %v2403, 0.0
        %v2447 = vmax.f32 %v2404, 0.0
        %v2448 = vmax.f32 %v2405, 0.0
        %v2449 = vmax.f32 %v2406, 0.0
        %v2450 = vmax.f32 %v2407, 0.0
        %v2451 = vmax.f32 %v2408, 0.0
        %v2452 = vmax.f32 %v2409, 0.0
        %v2453 = vmax.f32 %v2410, 0.0
        %v2454 = vmax.f32 %v2411, 0.0
        %v2455 = vmax.f32 %v2412, 0.0
        %v2456 = vmax.f32 %v2413, 0.0
        %v2457 = vmax.f32 %v2414, 0.0
        %v2458 = vmax.f32 %v2415, 0.0
        %v2459 = vmax.f32 %v2416, 0.0
        %v2460 = vmax.f32 %v2417, 0.0
        %v2461 = vmax.f32 %v2418, 0.0
        %v2462 = vmax.f32 %v2419, 0.0
        %v2463 = vmax.f32 %v2420, 0.0
        %v2464 = vmax.f32 %v2421, 0.0
        %v2465 = vmax.f32 %v2422, 0.0
        %v2466 = vmax.f32 %v2423, 0.0
        %v2467 = vmax.f32 %v2424, 0.0
        %v2468 = vmax.f32 %v2425, 0.0
        %v2469 = vmax.f32 %v2426, 0.0
        %v2470 = vmax.f32 %v2427, 0.0
        %v2471 = vmax.f32 %v2428, 0.0
        %v2472 = vmax.f32 %v2429, 0.0
        %v2473 = vmax.f32 %v2430, 0.0
        %v2474 = vpack.c.bf16 %v2432, %v2431
        %v2475 = vpack.c.bf16 %v2434, %v2433
        %v2476 = vpack.c.bf16 %v2436, %v2435
        %v2477 = vpack.c.bf16 %v2438, %v2437
        %v2478 = vpack.c.bf16 %v2440, %v2439
        %v2479 = vpack.c.bf16 %v2442, %v2441
        %v2480 = vpack.c.bf16 %v2444, %v2443
        %v2481 = vpack.c.bf16 %v2446, %v2445
        %v2482 = vpack.c.bf16 %v2448, %v2447
        %v2483 = vpack.c.bf16 %v2450, %v2449
        %v2484 = vpack.c.bf16 %v2452, %v2451
        %v2485 = vpack.c.bf16 %v2454, %v2453
        %v2486 = vpack.c.bf16 %v2456, %v2455
        %v2487 = vpack.c.bf16 %v2458, %v2457
        %v2488 = vpack.c.bf16 %v2460, %v2459
        %v2489 = vpack.c.bf16 %v2462, %v2461
        %v2490 = vpack.c.bf16 %v2464, %v2463
        %v2491 = vpack.c.bf16 %v2466, %v2465
        %v2492 = vpack.c.bf16 %v2468, %v2467
        %v2493 = vpack.c.bf16 %v2470, %v2469
        %v2494 = vpack.c.bf16 %v2472, %v2471
        %v2495 = vpack.c.bf16 %v2473, %v2473
        %v2518 = vunpack.c.l.b16 %v2474
        %v2519 = vunpack.c.h.b16 %v2474
        %v2520 = vunpack.c.l.b16 %v2475
        %v2521 = vunpack.c.h.b16 %v2475
        %v2522 = vunpack.c.l.b16 %v2476
        %v2523 = vunpack.c.h.b16 %v2476
        %v2524 = vunpack.c.l.b16 %v2477
        %v2525 = vunpack.c.h.b16 %v2477
        %v2526 = vunpack.c.l.b16 %v2478
        %v2527 = vunpack.c.h.b16 %v2478
        %v2528 = vunpack.c.l.b16 %v2479
        %v2529 = vunpack.c.h.b16 %v2479
        %v2530 = vunpack.c.l.b16 %v2480
        %v2531 = vunpack.c.h.b16 %v2480
        %v2532 = vunpack.c.l.b16 %v2481
        %v2533 = vunpack.c.h.b16 %v2481
        %v2534 = vunpack.c.l.b16 %v2482
        %v2535 = vunpack.c.h.b16 %v2482
        %v2536 = vunpack.c.l.b16 %v2483
        %v2537 = vunpack.c.h.b16 %v2483
        %v2538 = vunpack.c.l.b16 %v2484
        %v2539 = vunpack.c.h.b16 %v2484
        %v2540 = vunpack.c.l.b16 %v2485
        %v2541 = vunpack.c.h.b16 %v2485
        %v2542 = vunpack.c.l.b16 %v2486
        %v2543 = vunpack.c.h.b16 %v2486
        %v2544 = vunpack.c.l.b16 %v2487
        %v2545 = vunpack.c.h.b16 %v2487
        %v2546 = vunpack.c.l.b16 %v2488
        %v2547 = vunpack.c.h.b16 %v2488
        %v2548 = vunpack.c.l.b16 %v2489
        %v2549 = vunpack.c.h.b16 %v2489
        %v2550 = vunpack.c.l.b16 %v2490
        %v2551 = vunpack.c.h.b16 %v2490
        %v2552 = vunpack.c.l.b16 %v2491
        %v2553 = vunpack.c.h.b16 %v2491
        %v2554 = vunpack.c.l.b16 %v2492
        %v2555 = vunpack.c.h.b16 %v2492
        %v2556 = vunpack.c.l.b16 %v2493
        %v2557 = vunpack.c.h.b16 %v2493
        %v2558 = vunpack.c.l.b16 %v2494
        %v2559 = vunpack.c.h.b16 %v2494
        %v2560 = vunpack.c.l.b16 %v2495
        %v2561 = vpack.c.b16 %v2518, %v2518
        %v2562 = vpack.c.b16 %v2519, %v2519
        %v2563 = vpack.c.b16 %v2520, %v2520
        %v2564 = vpack.c.b16 %v2521, %v2521
        %v2565 = vpack.c.b16 %v2522, %v2522
        %v2566 = vpack.c.b16 %v2523, %v2523
        %v2567 = vpack.c.b16 %v2524, %v2524
        %v2568 = vpack.c.b16 %v2525, %v2525
        %v2569 = vpack.c.b16 %v2526, %v2526
        %v2570 = vpack.c.b16 %v2527, %v2527
        %v2571 = vpack.c.b16 %v2528, %v2528
        %v2572 = vpack.c.b16 %v2529, %v2529
        %v2573 = vpack.c.b16 %v2530, %v2530
        %v2574 = vpack.c.b16 %v2531, %v2531
        %v2575 = vpack.c.b16 %v2532, %v2532
        %v2576 = vpack.c.b16 %v2533, %v2533
        %v2577 = vpack.c.b16 %v2534, %v2534
        %v2578 = vpack.c.b16 %v2535, %v2535
        %v2579 = vpack.c.b16 %v2536, %v2536
        %v2580 = vpack.c.b16 %v2537, %v2537
        %v2581 = vpack.c.b16 %v2538, %v2538
        %v2582 = vpack.c.b16 %v2539, %v2539
        %v2583 = vpack.c.b16 %v2540, %v2540
        %v2584 = vpack.c.b16 %v2541, %v2541
        %v2585 = vpack.c.b16 %v2542, %v2542
        %v2586 = vpack.c.b16 %v2543, %v2543
        %v2587 = vpack.c.b16 %v2544, %v2544
        %v2588 = vpack.c.b16 %v2545, %v2545
        %v2589 = vpack.c.b16 %v2546, %v2546
        %v2590 = vpack.c.b16 %v2547, %v2547
        %v2591 = vpack.c.b16 %v2548, %v2548
        %v2592 = vpack.c.b16 %v2549, %v2549
        %v2593 = vpack.c.b16 %v2550, %v2550
        %v2594 = vpack.c.b16 %v2551, %v2551
        %v2595 = vpack.c.b16 %v2552, %v2552
        %v2596 = vpack.c.b16 %v2553, %v2553
        %v2597 = vpack.c.b16 %v2554, %v2554
        %v2598 = vpack.c.b16 %v2555, %v2555
        %v2599 = vpack.c.b16 %v2556, %v2556
        %v2600 = vpack.c.b16 %v2557, %v2557
        %v2601 = vpack.c.b16 %v2558, %v2558
        %v2602 = vpack.c.b16 %v2559, %v2559
        %v2603 = vpack.c.b16 %v2560, %v2560
        %vm2647 = vcmask 257024
        %2648 = vst.msk [vmem:[#allocation3 + $0xc] sm:$0xf] %vm2647, %v2561
        %2649 = vst.msk [vmem:[#allocation3 + $0x10] sm:$0xf] %vm2647, %v2562
        %2650 = vst.msk [vmem:[#allocation3 + $0x14] sm:$0xf] %vm2647, %v2563
        %2651 = vst.msk [vmem:[#allocation3 + $0x18] sm:$0xf] %vm2647, %v2564
        %2652 = vst.msk [vmem:[#allocation3 + $0x1c] sm:$0xf] %vm2647, %v2565
        %2653 = vst.msk [vmem:[#allocation3 + $0x20] sm:$0xf] %vm2647, %v2566
        %2654 = vst.msk [vmem:[#allocation3 + $0x24] sm:$0xf] %vm2647, %v2567
        %2655 = vst.msk [vmem:[#allocation3 + $0x28] sm:$0xf] %vm2647, %v2568
        %2656 = vst.msk [vmem:[#allocation3 + $0x2c] sm:$0xf] %vm2647, %v2569
        %2657 = vst.msk [vmem:[#allocation3 + $0x30] sm:$0xf] %vm2647, %v2570
        %2658 = vst.msk [vmem:[#allocation3 + $0x34] sm:$0xf] %vm2647, %v2571
        %2659 = vst.msk [vmem:[#allocation3 + $0x38] sm:$0xf] %vm2647, %v2572
        %2660 = vst.msk [vmem:[#allocation3 + $0x3c] sm:$0xf] %vm2647, %v2573
        %2661 = vst.msk [vmem:[#allocation3 + $0x40] sm:$0xf] %vm2647, %v2574
        %2662 = vst.msk [vmem:[#allocation3 + $0x44] sm:$0xf] %vm2647, %v2575
        %2663 = vst.msk [vmem:[#allocation3 + $0x48] sm:$0xf] %vm2647, %v2576
        %2664 = vst.msk [vmem:[#allocation3 + $0x4c] sm:$0xf] %vm2647, %v2577
        %2665 = vst.msk [vmem:[#allocation3 + $0x50] sm:$0xf] %vm2647, %v2578
        %2666 = vst.msk [vmem:[#allocation3 + $0x54] sm:$0xf] %vm2647, %v2579
        %2667 = vst.msk [vmem:[#allocation3 + $0x58] sm:$0xf] %vm2647, %v2580
        %2668 = vst.msk [vmem:[#allocation3 + $0x5c] sm:$0xf] %vm2647, %v2581
        %2669 = vst.msk [vmem:[#allocation3 + $0x60] sm:$0xf] %vm2647, %v2582
        %2670 = vst.msk [vmem:[#allocation3 + $0x64] sm:$0xf] %vm2647, %v2583
        %2671 = vst.msk [vmem:[#allocation3 + $0x68] sm:$0xf] %vm2647, %v2584
        %2672 = vst.msk [vmem:[#allocation3 + $0x6c] sm:$0xf] %vm2647, %v2585
        %2673 = vst.msk [vmem:[#allocation3 + $0x70] sm:$0xf] %vm2647, %v2586
        %2674 = vst.msk [vmem:[#allocation3 + $0x74] sm:$0xf] %vm2647, %v2587
        %2675 = vst.msk [vmem:[#allocation3 + $0x78] sm:$0xf] %vm2647, %v2588
        %2676 = vst.msk [vmem:[#allocation3 + $0x7c] sm:$0xf] %vm2647, %v2589
        %2677 = vst.msk [vmem:[#allocation3 + $0x80] sm:$0xf] %vm2647, %v2590
        %2678 = vst.msk [vmem:[#allocation3 + $0x84] sm:$0xf] %vm2647, %v2591
        %2679 = vst.msk [vmem:[#allocation3 + $0x88] sm:$0xf] %vm2647, %v2592
        %2680 = vst.msk [vmem:[#allocation3 + $0x8c] sm:$0xf] %vm2647, %v2593
        %2681 = vst.msk [vmem:[#allocation3 + $0x90] sm:$0xf] %vm2647, %v2594
        %2682 = vst.msk [vmem:[#allocation3 + $0x94] sm:$0xf] %vm2647, %v2595
        %2683 = vst.msk [vmem:[#allocation3 + $0x98] sm:$0xf] %vm2647, %v2596
        %2684 = vst.msk [vmem:[#allocation3 + $0x9c] sm:$0xf] %vm2647, %v2597
        %2685 = vst.msk [vmem:[#allocation3 + $0xa0] sm:$0xf] %vm2647, %v2598
        %2686 = vst.msk [vmem:[#allocation3 + $0xa4] sm:$0xf] %vm2647, %v2599
        %2687 = vst.msk [vmem:[#allocation3 + $0xa8] sm:$0xf] %vm2647, %v2600
        %2688 = vst.msk [vmem:[#allocation3 + $0xac] sm:$0xf] %vm2647, %v2601
        %2689 = vst.msk [vmem:[#allocation3 + $0xb0] sm:$0xf] %vm2647, %v2602
        %2690 = vst.msk [vmem:[#allocation3 + $0xb4] sm:$0xf] %vm2647, %v2603
        %v2691 = vld [vmem:[#allocation2 + $0x18] sm:$0xff]
        %v2692 = vld [vmem:[#allocation2 + $0x20] sm:$0xff]
        %v2693 = vld [vmem:[#allocation2 + $0x28] sm:$0xff]
        %v2694 = vld [vmem:[#allocation2 + $0x30] sm:$0xff]
        %v2695 = vld [vmem:[#allocation2 + $0x38] sm:$0xff]
        %v2696 = vld [vmem:[#allocation2 + $0x40] sm:$0xff]
        %v2697 = vld [vmem:[#allocation2 + $0x48] sm:$0xff]
        %v2698 = vld [vmem:[#allocation2 + $0x50] sm:$0xff]
        %v2699 = vld [vmem:[#allocation2 + $0x58] sm:$0xff]
        %v2700 = vld [vmem:[#allocation2 + $0x60] sm:$0xff]
        %v2701 = vld [vmem:[#allocation2 + $0x68] sm:$0xff]
        %v2702 = vld [vmem:[#allocation2 + $0x70] sm:$0xff]
        %v2703 = vld [vmem:[#allocation2 + $0x78] sm:$0xff]
        %v2704 = vld [vmem:[#allocation2 + $0x80] sm:$0xff]
        %v2705 = vld [vmem:[#allocation2 + $0x88] sm:$0xff]
        %v2706 = vld [vmem:[#allocation2 + $0x90] sm:$0xff]
        %v2707 = vld [vmem:[#allocation2 + $0x98] sm:$0xff]
        %v2708 = vld [vmem:[#allocation2 + $0xa0] sm:$0xff]
        %v2709 = vld [vmem:[#allocation2 + $0xa8] sm:$0xff]
        %v2710 = vld [vmem:[#allocation2 + $0xb0] sm:$0xff]
        %v2711 = vld [vmem:[#allocation2 + $0xb8] sm:$0xff]
        %v2712 = vld [vmem:[#allocation2 + $0xc0] sm:$0xff]
        %v2713 = vld [vmem:[#allocation2 + $0xc8] sm:$0xff]
        %v2714 = vld [vmem:[#allocation2 + $0xd0] sm:$0xff]
        %v2715 = vld [vmem:[#allocation2 + $0xd8] sm:$0xff]
        %v2716 = vld [vmem:[#allocation2 + $0xe0] sm:$0xff]
        %v2717 = vld [vmem:[#allocation2 + $0xe8] sm:$0xff]
        %v2718 = vld [vmem:[#allocation2 + $0xf0] sm:$0xff]
        %v2719 = vld [vmem:[#allocation2 + $0xf8] sm:$0xff]
        %v2720 = vld [vmem:[#allocation2 + $0x100] sm:$0xff]
        %v2721 = vld [vmem:[#allocation2 + $0x108] sm:$0xff]
        %v2722 = vld [vmem:[#allocation2 + $0x110] sm:$0xff]
        %v2723 = vld [vmem:[#allocation2 + $0x118] sm:$0xff]
        %v2724 = vld [vmem:[#allocation2 + $0x120] sm:$0xff]
        %v2725 = vld [vmem:[#allocation2 + $0x128] sm:$0xff]
        %v2726 = vld [vmem:[#allocation2 + $0x130] sm:$0xff]
        %v2727 = vld [vmem:[#allocation2 + $0x138] sm:$0xff]
        %v2728 = vld [vmem:[#allocation2 + $0x140] sm:$0xff]
        %v2729 = vld [vmem:[#allocation2 + $0x148] sm:$0xff]
        %v2730 = vld [vmem:[#allocation2 + $0x150] sm:$0xff]
        %v2731 = vld [vmem:[#allocation2 + $0x158] sm:$0xff]
        %v2732 = vld [vmem:[#allocation2 + $0x160] sm:$0xff]
        %v2733 = vld [vmem:[#allocation2 + $0x168] sm:$0xff]
        %v2734 = vmax.f32 %v2691, 0.0
        %v2735 = vmax.f32 %v2692, 0.0
        %v2736 = vmax.f32 %v2693, 0.0
        %v2737 = vmax.f32 %v2694, 0.0
        %v2738 = vmax.f32 %v2695, 0.0
        %v2739 = vmax.f32 %v2696, 0.0
        %v2740 = vmax.f32 %v2697, 0.0
        %v2741 = vmax.f32 %v2698, 0.0
        %v2742 = vmax.f32 %v2699, 0.0
        %v2743 = vmax.f32 %v2700, 0.0
        %v2744 = vmax.f32 %v2701, 0.0
        %v2745 = vmax.f32 %v2702, 0.0
        %v2746 = vmax.f32 %v2703, 0.0
        %v2747 = vmax.f32 %v2704, 0.0
        %v2748 = vmax.f32 %v2705, 0.0
        %v2749 = vmax.f32 %v2706, 0.0
        %v2750 = vmax.f32 %v2707, 0.0
        %v2751 = vmax.f32 %v2708, 0.0
        %v2752 = vmax.f32 %v2709, 0.0
        %v2753 = vmax.f32 %v2710, 0.0
        %v2754 = vmax.f32 %v2711, 0.0
        %v2755 = vmax.f32 %v2712, 0.0
        %v2756 = vmax.f32 %v2713, 0.0
        %v2757 = vmax.f32 %v2714, 0.0
        %v2758 = vmax.f32 %v2715, 0.0
        %v2759 = vmax.f32 %v2716, 0.0
        %v2760 = vmax.f32 %v2717, 0.0
        %v2761 = vmax.f32 %v2718, 0.0
        %v2762 = vmax.f32 %v2719, 0.0
        %v2763 = vmax.f32 %v2720, 0.0
        %v2764 = vmax.f32 %v2721, 0.0
        %v2765 = vmax.f32 %v2722, 0.0
        %v2766 = vmax.f32 %v2723, 0.0
        %v2767 = vmax.f32 %v2724, 0.0
        %v2768 = vmax.f32 %v2725, 0.0
        %v2769 = vmax.f32 %v2726, 0.0
        %v2770 = vmax.f32 %v2727, 0.0
        %v2771 = vmax.f32 %v2728, 0.0
        %v2772 = vmax.f32 %v2729, 0.0
        %v2773 = vmax.f32 %v2730, 0.0
        %v2774 = vmax.f32 %v2731, 0.0
        %v2775 = vmax.f32 %v2732, 0.0
        %v2776 = vmax.f32 %v2733, 0.0
        %v2777 = vpack.c.bf16 %v2735, %v2734
        %v2778 = vpack.c.bf16 %v2737, %v2736
        %v2779 = vpack.c.bf16 %v2739, %v2738
        %v2780 = vpack.c.bf16 %v2741, %v2740
        %v2781 = vpack.c.bf16 %v2743, %v2742
        %v2782 = vpack.c.bf16 %v2745, %v2744
        %v2783 = vpack.c.bf16 %v2747, %v2746
        %v2784 = vpack.c.bf16 %v2749, %v2748
        %v2785 = vpack.c.bf16 %v2751, %v2750
        %v2786 = vpack.c.bf16 %v2753, %v2752
        %v2787 = vpack.c.bf16 %v2755, %v2754
        %v2788 = vpack.c.bf16 %v2757, %v2756
        %v2789 = vpack.c.bf16 %v2759, %v2758
        %v2790 = vpack.c.bf16 %v2761, %v2760
        %v2791 = vpack.c.bf16 %v2763, %v2762
        %v2792 = vpack.c.bf16 %v2765, %v2764
        %v2793 = vpack.c.bf16 %v2767, %v2766
        %v2794 = vpack.c.bf16 %v2769, %v2768
        %v2795 = vpack.c.bf16 %v2771, %v2770
        %v2796 = vpack.c.bf16 %v2773, %v2772
        %v2797 = vpack.c.bf16 %v2775, %v2774
        %v2798 = vpack.c.bf16 %v2776, %v2776
        %v2821 = vunpack.c.l.b16 %v2777
        %v2822 = vunpack.c.h.b16 %v2777
        %v2823 = vunpack.c.l.b16 %v2778
        %v2824 = vunpack.c.h.b16 %v2778
        %v2825 = vunpack.c.l.b16 %v2779
        %v2826 = vunpack.c.h.b16 %v2779
        %v2827 = vunpack.c.l.b16 %v2780
        %v2828 = vunpack.c.h.b16 %v2780
        %v2829 = vunpack.c.l.b16 %v2781
        %v2830 = vunpack.c.h.b16 %v2781
        %v2831 = vunpack.c.l.b16 %v2782
        %v2832 = vunpack.c.h.b16 %v2782
        %v2833 = vunpack.c.l.b16 %v2783
        %v2834 = vunpack.c.h.b16 %v2783
        %v2835 = vunpack.c.l.b16 %v2784
        %v2836 = vunpack.c.h.b16 %v2784
        %v2837 = vunpack.c.l.b16 %v2785
        %v2838 = vunpack.c.h.b16 %v2785
        %v2839 = vunpack.c.l.b16 %v2786
        %v2840 = vunpack.c.h.b16 %v2786
        %v2841 = vunpack.c.l.b16 %v2787
        %v2842 = vunpack.c.h.b16 %v2787
        %v2843 = vunpack.c.l.b16 %v2788
        %v2844 = vunpack.c.h.b16 %v2788
        %v2845 = vunpack.c.l.b16 %v2789
        %v2846 = vunpack.c.h.b16 %v2789
        %v2847 = vunpack.c.l.b16 %v2790
        %v2848 = vunpack.c.h.b16 %v2790
        %v2849 = vunpack.c.l.b16 %v2791
        %v2850 = vunpack.c.h.b16 %v2791
        %v2851 = vunpack.c.l.b16 %v2792
        %v2852 = vunpack.c.h.b16 %v2792
        %v2853 = vunpack.c.l.b16 %v2793
        %v2854 = vunpack.c.h.b16 %v2793
        %v2855 = vunpack.c.l.b16 %v2794
        %v2856 = vunpack.c.h.b16 %v2794
        %v2857 = vunpack.c.l.b16 %v2795
        %v2858 = vunpack.c.h.b16 %v2795
        %v2859 = vunpack.c.l.b16 %v2796
        %v2860 = vunpack.c.h.b16 %v2796
        %v2861 = vunpack.c.l.b16 %v2797
        %v2862 = vunpack.c.h.b16 %v2797
        %v2863 = vunpack.c.l.b16 %v2798
        %v2864 = vpack.c.b16 %v2821, %v2821
        %v2865 = vpack.c.b16 %v2822, %v2822
        %v2866 = vpack.c.b16 %v2823, %v2823
        %v2867 = vpack.c.b16 %v2824, %v2824
        %v2868 = vpack.c.b16 %v2825, %v2825
        %v2869 = vpack.c.b16 %v2826, %v2826
        %v2870 = vpack.c.b16 %v2827, %v2827
        %v2871 = vpack.c.b16 %v2828, %v2828
        %v2872 = vpack.c.b16 %v2829, %v2829
        %v2873 = vpack.c.b16 %v2830, %v2830
        %v2874 = vpack.c.b16 %v2831, %v2831
        %v2875 = vpack.c.b16 %v2832, %v2832
        %v2876 = vpack.c.b16 %v2833, %v2833
        %v2877 = vpack.c.b16 %v2834, %v2834
        %v2878 = vpack.c.b16 %v2835, %v2835
        %v2879 = vpack.c.b16 %v2836, %v2836
        %v2880 = vpack.c.b16 %v2837, %v2837
        %v2881 = vpack.c.b16 %v2838, %v2838
        %v2882 = vpack.c.b16 %v2839, %v2839
        %v2883 = vpack.c.b16 %v2840, %v2840
        %v2884 = vpack.c.b16 %v2841, %v2841
        %v2885 = vpack.c.b16 %v2842, %v2842
        %v2886 = vpack.c.b16 %v2843, %v2843
        %v2887 = vpack.c.b16 %v2844, %v2844
        %v2888 = vpack.c.b16 %v2845, %v2845
        %v2889 = vpack.c.b16 %v2846, %v2846
        %v2890 = vpack.c.b16 %v2847, %v2847
        %v2891 = vpack.c.b16 %v2848, %v2848
        %v2892 = vpack.c.b16 %v2849, %v2849
        %v2893 = vpack.c.b16 %v2850, %v2850
        %v2894 = vpack.c.b16 %v2851, %v2851
        %v2895 = vpack.c.b16 %v2852, %v2852
        %v2896 = vpack.c.b16 %v2853, %v2853
        %v2897 = vpack.c.b16 %v2854, %v2854
        %v2898 = vpack.c.b16 %v2855, %v2855
        %v2899 = vpack.c.b16 %v2856, %v2856
        %v2900 = vpack.c.b16 %v2857, %v2857
        %v2901 = vpack.c.b16 %v2858, %v2858
        %v2902 = vpack.c.b16 %v2859, %v2859
        %v2903 = vpack.c.b16 %v2860, %v2860
        %v2904 = vpack.c.b16 %v2861, %v2861
        %v2905 = vpack.c.b16 %v2862, %v2862
        %v2906 = vpack.c.b16 %v2863, %v2863
        %2907 = vrot.lane.b32.xlu0 %v2864, 32
        %v2908 = vpop.permute.xlu0 %2907
        %2909 = vrot.lane.b32.xlu0 %v2865, 32
        %v2910 = vpop.permute.xlu0 %2909
        %2911 = vrot.lane.b32.xlu0 %v2866, 32
        %v2912 = vpop.permute.xlu0 %2911
        %2913 = vrot.lane.b32.xlu0 %v2867, 32
        %v2914 = vpop.permute.xlu0 %2913
        %2915 = vrot.lane.b32.xlu0 %v2868, 32
        %v2916 = vpop.permute.xlu0 %2915
        %2917 = vrot.lane.b32.xlu0 %v2869, 32
        %v2918 = vpop.permute.xlu0 %2917
        %2919 = vrot.lane.b32.xlu0 %v2870, 32
        %v2920 = vpop.permute.xlu0 %2919
        %2921 = vrot.lane.b32.xlu0 %v2871, 32
        %v2922 = vpop.permute.xlu0 %2921
        %2923 = vrot.lane.b32.xlu0 %v2872, 32
        %v2924 = vpop.permute.xlu0 %2923
        %2925 = vrot.lane.b32.xlu0 %v2873, 32
        %v2926 = vpop.permute.xlu0 %2925
        %2927 = vrot.lane.b32.xlu0 %v2874, 32
        %v2928 = vpop.permute.xlu0 %2927
        %2929 = vrot.lane.b32.xlu0 %v2875, 32
        %v2930 = vpop.permute.xlu0 %2929
        %2931 = vrot.lane.b32.xlu0 %v2876, 32
        %v2932 = vpop.permute.xlu0 %2931
        %2933 = vrot.lane.b32.xlu0 %v2877, 32
        %v2934 = vpop.permute.xlu0 %2933
        %2935 = vrot.lane.b32.xlu0 %v2878, 32
        %v2936 = vpop.permute.xlu0 %2935
        %2937 = vrot.lane.b32.xlu0 %v2879, 32
        %v2938 = vpop.permute.xlu0 %2937
        %2939 = vrot.lane.b32.xlu0 %v2880, 32
        %v2940 = vpop.permute.xlu0 %2939
        %2941 = vrot.lane.b32.xlu0 %v2881, 32
        %v2942 = vpop.permute.xlu0 %2941
        %2943 = vrot.lane.b32.xlu0 %v2882, 32
        %v2944 = vpop.permute.xlu0 %2943
        %2945 = vrot.lane.b32.xlu0 %v2883, 32
        %v2946 = vpop.permute.xlu0 %2945
        %2947 = vrot.lane.b32.xlu0 %v2884, 32
        %v2948 = vpop.permute.xlu0 %2947
        %2949 = vrot.lane.b32.xlu0 %v2885, 32
        %v2950 = vpop.permute.xlu0 %2949
        %2951 = vrot.lane.b32.xlu0 %v2886, 32
        %v2952 = vpop.permute.xlu0 %2951
        %2953 = vrot.lane.b32.xlu0 %v2887, 32
        %v2954 = vpop.permute.xlu0 %2953
        %2955 = vrot.lane.b32.xlu0 %v2888, 32
        %v2956 = vpop.permute.xlu0 %2955
        %2957 = vrot.lane.b32.xlu0 %v2889, 32
        %v2958 = vpop.permute.xlu0 %2957
        %2959 = vrot.lane.b32.xlu0 %v2890, 32
        %v2960 = vpop.permute.xlu0 %2959
        %2961 = vrot.lane.b32.xlu0 %v2891, 32
        %v2962 = vpop.permute.xlu0 %2961
        %2963 = vrot.lane.b32.xlu0 %v2892, 32
        %v2964 = vpop.permute.xlu0 %2963
        %2965 = vrot.lane.b32.xlu0 %v2893, 32
        %v2966 = vpop.permute.xlu0 %2965
        %2967 = vrot.lane.b32.xlu0 %v2894, 32
        %v2968 = vpop.permute.xlu0 %2967
        %2969 = vrot.lane.b32.xlu0 %v2895, 32
        %v2970 = vpop.permute.xlu0 %2969
        %2971 = vrot.lane.b32.xlu0 %v2896, 32
        %v2972 = vpop.permute.xlu0 %2971
        %2973 = vrot.lane.b32.xlu0 %v2897, 32
        %v2974 = vpop.permute.xlu0 %2973
        %2975 = vrot.lane.b32.xlu0 %v2898, 32
        %v2976 = vpop.permute.xlu0 %2975
        %2977 = vrot.lane.b32.xlu0 %v2899, 32
        %v2978 = vpop.permute.xlu0 %2977
        %2979 = vrot.lane.b32.xlu0 %v2900, 32
        %v2980 = vpop.permute.xlu0 %2979
        %2981 = vrot.lane.b32.xlu0 %v2901, 32
        %v2982 = vpop.permute.xlu0 %2981
        %2983 = vrot.lane.b32.xlu0 %v2902, 32
        %v2984 = vpop.permute.xlu0 %2983
        %2985 = vrot.lane.b32.xlu0 %v2903, 32
        %v2986 = vpop.permute.xlu0 %2985
        %2987 = vrot.lane.b32.xlu0 %v2904, 32
        %v2988 = vpop.permute.xlu0 %2987
        %2989 = vrot.lane.b32.xlu0 %v2905, 32
        %v2990 = vpop.permute.xlu0 %2989
        %2991 = vrot.lane.b32.xlu0 %v2906, 32
        %v2992 = vpop.permute.xlu0 %2991
        %vm3036 = vcmask 519424
        %3037 = vst.msk [vmem:[#allocation3 + $0xc] sm:$0xf] %vm3036, %v2908
        %3038 = vst.msk [vmem:[#allocation3 + $0x10] sm:$0xf] %vm3036, %v2910
        %3039 = vst.msk [vmem:[#allocation3 + $0x14] sm:$0xf] %vm3036, %v2912
        %3040 = vst.msk [vmem:[#allocation3 + $0x18] sm:$0xf] %vm3036, %v2914
        %3041 = vst.msk [vmem:[#allocation3 + $0x1c] sm:$0xf] %vm3036, %v2916
        %3042 = vst.msk [vmem:[#allocation3 + $0x20] sm:$0xf] %vm3036, %v2918
        %3043 = vst.msk [vmem:[#allocation3 + $0x24] sm:$0xf] %vm3036, %v2920
        %3044 = vst.msk [vmem:[#allocation3 + $0x28] sm:$0xf] %vm3036, %v2922
        %3045 = vst.msk [vmem:[#allocation3 + $0x2c] sm:$0xf] %vm3036, %v2924
        %3046 = vst.msk [vmem:[#allocation3 + $0x30] sm:$0xf] %vm3036, %v2926
        %3047 = vst.msk [vmem:[#allocation3 + $0x34] sm:$0xf] %vm3036, %v2928
        %3048 = vst.msk [vmem:[#allocation3 + $0x38] sm:$0xf] %vm3036, %v2930
        %3049 = vst.msk [vmem:[#allocation3 + $0x3c] sm:$0xf] %vm3036, %v2932
        %3050 = vst.msk [vmem:[#allocation3 + $0x40] sm:$0xf] %vm3036, %v2934
        %3051 = vst.msk [vmem:[#allocation3 + $0x44] sm:$0xf] %vm3036, %v2936
        %3052 = vst.msk [vmem:[#allocation3 + $0x48] sm:$0xf] %vm3036, %v2938
        %3053 = vst.msk [vmem:[#allocation3 + $0x4c] sm:$0xf] %vm3036, %v2940
        %3054 = vst.msk [vmem:[#allocation3 + $0x50] sm:$0xf] %vm3036, %v2942
        %3055 = vst.msk [vmem:[#allocation3 + $0x54] sm:$0xf] %vm3036, %v2944
        %3056 = vst.msk [vmem:[#allocation3 + $0x58] sm:$0xf] %vm3036, %v2946
        %3057 = vst.msk [vmem:[#allocation3 + $0x5c] sm:$0xf] %vm3036, %v2948
        %3058 = vst.msk [vmem:[#allocation3 + $0x60] sm:$0xf] %vm3036, %v2950
        %3059 = vst.msk [vmem:[#allocation3 + $0x64] sm:$0xf] %vm3036, %v2952
        %3060 = vst.msk [vmem:[#allocation3 + $0x68] sm:$0xf] %vm3036, %v2954
        %3061 = vst.msk [vmem:[#allocation3 + $0x6c] sm:$0xf] %vm3036, %v2956
        %3062 = vst.msk [vmem:[#allocation3 + $0x70] sm:$0xf] %vm3036, %v2958
        %3063 = vst.msk [vmem:[#allocation3 + $0x74] sm:$0xf] %vm3036, %v2960
        %3064 = vst.msk [vmem:[#allocation3 + $0x78] sm:$0xf] %vm3036, %v2962
        %3065 = vst.msk [vmem:[#allocation3 + $0x7c] sm:$0xf] %vm3036, %v2964
        %3066 = vst.msk [vmem:[#allocation3 + $0x80] sm:$0xf] %vm3036, %v2966
        %3067 = vst.msk [vmem:[#allocation3 + $0x84] sm:$0xf] %vm3036, %v2968
        %3068 = vst.msk [vmem:[#allocation3 + $0x88] sm:$0xf] %vm3036, %v2970
        %3069 = vst.msk [vmem:[#allocation3 + $0x8c] sm:$0xf] %vm3036, %v2972
        %3070 = vst.msk [vmem:[#allocation3 + $0x90] sm:$0xf] %vm3036, %v2974
        %3071 = vst.msk [vmem:[#allocation3 + $0x94] sm:$0xf] %vm3036, %v2976
        %3072 = vst.msk [vmem:[#allocation3 + $0x98] sm:$0xf] %vm3036, %v2978
        %3073 = vst.msk [vmem:[#allocation3 + $0x9c] sm:$0xf] %vm3036, %v2980
        %3074 = vst.msk [vmem:[#allocation3 + $0xa0] sm:$0xf] %vm3036, %v2982
        %3075 = vst.msk [vmem:[#allocation3 + $0xa4] sm:$0xf] %vm3036, %v2984
        %3076 = vst.msk [vmem:[#allocation3 + $0xa8] sm:$0xf] %vm3036, %v2986
        %3077 = vst.msk [vmem:[#allocation3 + $0xac] sm:$0xf] %vm3036, %v2988
        %3078 = vst.msk [vmem:[#allocation3 + $0xb0] sm:$0xf] %vm3036, %v2990
        %3079 = vst.msk [vmem:[#allocation3 + $0xb4] sm:$0xf] %vm3036, %v2992
        %v3080 = vld [vmem:[#allocation2 + $0x2a] sm:$0xff]
        %v3081 = vld [vmem:[#allocation2 + $0x32] sm:$0xff]
        %v3082 = vld [vmem:[#allocation2 + $0x3a] sm:$0xff]
        %v3083 = vld [vmem:[#allocation2 + $0x42] sm:$0xff]
        %v3084 = vld [vmem:[#allocation2 + $0x4a] sm:$0xff]
        %v3085 = vld [vmem:[#allocation2 + $0x52] sm:$0xff]
        %v3086 = vld [vmem:[#allocation2 + $0x5a] sm:$0xff]
        %v3087 = vld [vmem:[#allocation2 + $0x62] sm:$0xff]
        %v3088 = vld [vmem:[#allocation2 + $0x6a] sm:$0xff]
        %v3089 = vld [vmem:[#allocation2 + $0x72] sm:$0xff]
        %v3090 = vld [vmem:[#allocation2 + $0x7a] sm:$0xff]
        %v3091 = vld [vmem:[#allocation2 + $0x82] sm:$0xff]
        %v3092 = vld [vmem:[#allocation2 + $0x8a] sm:$0xff]
        %v3093 = vld [vmem:[#allocation2 + $0x92] sm:$0xff]
        %v3094 = vld [vmem:[#allocation2 + $0x9a] sm:$0xff]
        %v3095 = vld [vmem:[#allocation2 + $0xa2] sm:$0xff]
        %v3096 = vld [vmem:[#allocation2 + $0xaa] sm:$0xff]
        %v3097 = vld [vmem:[#allocation2 + $0xb2] sm:$0xff]
        %v3098 = vld [vmem:[#allocation2 + $0xba] sm:$0xff]
        %v3099 = vld [vmem:[#allocation2 + $0xc2] sm:$0xff]
        %v3100 = vld [vmem:[#allocation2 + $0xca] sm:$0xff]
        %v3101 = vld [vmem:[#allocation2 + $0xd2] sm:$0xff]
        %v3102 = vld [vmem:[#allocation2 + $0xda] sm:$0xff]
        %v3103 = vld [vmem:[#allocation2 + $0xe2] sm:$0xff]
        %v3104 = vld [vmem:[#allocation2 + $0xea] sm:$0xff]
        %v3105 = vld [vmem:[#allocation2 + $0xf2] sm:$0xff]
        %v3106 = vld [vmem:[#allocation2 + $0xfa] sm:$0xff]
        %v3107 = vld [vmem:[#allocation2 + $0x102] sm:$0xff]
        %v3108 = vld [vmem:[#allocation2 + $0x10a] sm:$0xff]
        %v3109 = vld [vmem:[#allocation2 + $0x112] sm:$0xff]
        %v3110 = vld [vmem:[#allocation2 + $0x11a] sm:$0xff]
        %v3111 = vld [vmem:[#allocation2 + $0x122] sm:$0xff]
        %v3112 = vld [vmem:[#allocation2 + $0x12a] sm:$0xff]
        %v3113 = vld [vmem:[#allocation2 + $0x132] sm:$0xff]
        %v3114 = vld [vmem:[#allocation2 + $0x13a] sm:$0xff]
        %v3115 = vld [vmem:[#allocation2 + $0x142] sm:$0xff]
        %v3116 = vld [vmem:[#allocation2 + $0x14a] sm:$0xff]
        %v3117 = vld [vmem:[#allocation2 + $0x152] sm:$0xff]
        %v3118 = vld [vmem:[#allocation2 + $0x15a] sm:$0xff]
        %v3119 = vld [vmem:[#allocation2 + $0x162] sm:$0xff]
        %v3120 = vld [vmem:[#allocation2 + $0x16a] sm:$0xff]
        %v3121 = vld [vmem:[#allocation2 + $0x172] sm:$0xff]
        %v3122 = vld [vmem:[#allocation2 + $0x17a] sm:$0xff]
        %v3123 = vmax.f32 %v3080, 0.0
        %v3124 = vmax.f32 %v3081, 0.0
        %v3125 = vmax.f32 %v3082, 0.0
        %v3126 = vmax.f32 %v3083, 0.0
        %v3127 = vmax.f32 %v3084, 0.0
        %v3128 = vmax.f32 %v3085, 0.0
        %v3129 = vmax.f32 %v3086, 0.0
        %v3130 = vmax.f32 %v3087, 0.0
        %v3131 = vmax.f32 %v3088, 0.0
        %v3132 = vmax.f32 %v3089, 0.0
        %v3133 = vmax.f32 %v3090, 0.0
        %v3134 = vmax.f32 %v3091, 0.0
        %v3135 = vmax.f32 %v3092, 0.0
        %v3136 = vmax.f32 %v3093, 0.0
        %v3137 = vmax.f32 %v3094, 0.0
        %v3138 = vmax.f32 %v3095, 0.0
        %v3139 = vmax.f32 %v3096, 0.0
        %v3140 = vmax.f32 %v3097, 0.0
        %v3141 = vmax.f32 %v3098, 0.0
        %v3142 = vmax.f32 %v3099, 0.0
        %v3143 = vmax.f32 %v3100, 0.0
        %v3144 = vmax.f32 %v3101, 0.0
        %v3145 = vmax.f32 %v3102, 0.0
        %v3146 = vmax.f32 %v3103, 0.0
        %v3147 = vmax.f32 %v3104, 0.0
        %v3148 = vmax.f32 %v3105, 0.0
        %v3149 = vmax.f32 %v3106, 0.0
        %v3150 = vmax.f32 %v3107, 0.0
        %v3151 = vmax.f32 %v3108, 0.0
        %v3152 = vmax.f32 %v3109, 0.0
        %v3153 = vmax.f32 %v3110, 0.0
        %v3154 = vmax.f32 %v3111, 0.0
        %v3155 = vmax.f32 %v3112, 0.0
        %v3156 = vmax.f32 %v3113, 0.0
        %v3157 = vmax.f32 %v3114, 0.0
        %v3158 = vmax.f32 %v3115, 0.0
        %v3159 = vmax.f32 %v3116, 0.0
        %v3160 = vmax.f32 %v3117, 0.0
        %v3161 = vmax.f32 %v3118, 0.0
        %v3162 = vmax.f32 %v3119, 0.0
        %v3163 = vmax.f32 %v3120, 0.0
        %v3164 = vmax.f32 %v3121, 0.0
        %v3165 = vmax.f32 %v3122, 0.0
        %v3166 = vpack.c.bf16 %v3124, %v3123
        %v3167 = vpack.c.bf16 %v3126, %v3125
        %v3168 = vpack.c.bf16 %v3128, %v3127
        %v3169 = vpack.c.bf16 %v3130, %v3129
        %v3170 = vpack.c.bf16 %v3132, %v3131
        %v3171 = vpack.c.bf16 %v3134, %v3133
        %v3172 = vpack.c.bf16 %v3136, %v3135
        %v3173 = vpack.c.bf16 %v3138, %v3137
        %v3174 = vpack.c.bf16 %v3140, %v3139
        %v3175 = vpack.c.bf16 %v3142, %v3141
        %v3176 = vpack.c.bf16 %v3144, %v3143
        %v3177 = vpack.c.bf16 %v3146, %v3145
        %v3178 = vpack.c.bf16 %v3148, %v3147
        %v3179 = vpack.c.bf16 %v3150, %v3149
        %v3180 = vpack.c.bf16 %v3152, %v3151
        %v3181 = vpack.c.bf16 %v3154, %v3153
        %v3182 = vpack.c.bf16 %v3156, %v3155
        %v3183 = vpack.c.bf16 %v3158, %v3157
        %v3184 = vpack.c.bf16 %v3160, %v3159
        %v3185 = vpack.c.bf16 %v3162, %v3161
        %v3186 = vpack.c.bf16 %v3164, %v3163
        %v3187 = vpack.c.bf16 %v3165, %v3165
        %v3210 = vunpack.c.l.b16 %v3166
        %v3211 = vunpack.c.h.b16 %v3166
        %v3212 = vunpack.c.l.b16 %v3167
        %v3213 = vunpack.c.h.b16 %v3167
        %v3214 = vunpack.c.l.b16 %v3168
        %v3215 = vunpack.c.h.b16 %v3168
        %v3216 = vunpack.c.l.b16 %v3169
        %v3217 = vunpack.c.h.b16 %v3169
        %v3218 = vunpack.c.l.b16 %v3170
        %v3219 = vunpack.c.h.b16 %v3170
        %v3220 = vunpack.c.l.b16 %v3171
        %v3221 = vunpack.c.h.b16 %v3171
        %v3222 = vunpack.c.l.b16 %v3172
        %v3223 = vunpack.c.h.b16 %v3172
        %v3224 = vunpack.c.l.b16 %v3173
        %v3225 = vunpack.c.h.b16 %v3173
        %v3226 = vunpack.c.l.b16 %v3174
        %v3227 = vunpack.c.h.b16 %v3174
        %v3228 = vunpack.c.l.b16 %v3175
        %v3229 = vunpack.c.h.b16 %v3175
        %v3230 = vunpack.c.l.b16 %v3176
        %v3231 = vunpack.c.h.b16 %v3176
        %v3232 = vunpack.c.l.b16 %v3177
        %v3233 = vunpack.c.h.b16 %v3177
        %v3234 = vunpack.c.l.b16 %v3178
        %v3235 = vunpack.c.h.b16 %v3178
        %v3236 = vunpack.c.l.b16 %v3179
        %v3237 = vunpack.c.h.b16 %v3179
        %v3238 = vunpack.c.l.b16 %v3180
        %v3239 = vunpack.c.h.b16 %v3180
        %v3240 = vunpack.c.l.b16 %v3181
        %v3241 = vunpack.c.h.b16 %v3181
        %v3242 = vunpack.c.l.b16 %v3182
        %v3243 = vunpack.c.h.b16 %v3182
        %v3244 = vunpack.c.l.b16 %v3183
        %v3245 = vunpack.c.h.b16 %v3183
        %v3246 = vunpack.c.l.b16 %v3184
        %v3247 = vunpack.c.h.b16 %v3184
        %v3248 = vunpack.c.l.b16 %v3185
        %v3249 = vunpack.c.h.b16 %v3185
        %v3250 = vunpack.c.l.b16 %v3186
        %v3251 = vunpack.c.h.b16 %v3186
        %v3252 = vunpack.c.l.b16 %v3187
        %v3253 = vpack.c.b16 %v3210, %v3210
        %v3254 = vpack.c.b16 %v3211, %v3211
        %v3255 = vpack.c.b16 %v3212, %v3212
        %v3256 = vpack.c.b16 %v3213, %v3213
        %v3257 = vpack.c.b16 %v3214, %v3214
        %v3258 = vpack.c.b16 %v3215, %v3215
        %v3259 = vpack.c.b16 %v3216, %v3216
        %v3260 = vpack.c.b16 %v3217, %v3217
        %v3261 = vpack.c.b16 %v3218, %v3218
        %v3262 = vpack.c.b16 %v3219, %v3219
        %v3263 = vpack.c.b16 %v3220, %v3220
        %v3264 = vpack.c.b16 %v3221, %v3221
        %v3265 = vpack.c.b16 %v3222, %v3222
        %v3266 = vpack.c.b16 %v3223, %v3223
        %v3267 = vpack.c.b16 %v3224, %v3224
        %v3268 = vpack.c.b16 %v3225, %v3225
        %v3269 = vpack.c.b16 %v3226, %v3226
        %v3270 = vpack.c.b16 %v3227, %v3227
        %v3271 = vpack.c.b16 %v3228, %v3228
        %v3272 = vpack.c.b16 %v3229, %v3229
        %v3273 = vpack.c.b16 %v3230, %v3230
        %v3274 = vpack.c.b16 %v3231, %v3231
        %v3275 = vpack.c.b16 %v3232, %v3232
        %v3276 = vpack.c.b16 %v3233, %v3233
        %v3277 = vpack.c.b16 %v3234, %v3234
        %v3278 = vpack.c.b16 %v3235, %v3235
        %v3279 = vpack.c.b16 %v3236, %v3236
        %v3280 = vpack.c.b16 %v3237, %v3237
        %v3281 = vpack.c.b16 %v3238, %v3238
        %v3282 = vpack.c.b16 %v3239, %v3239
        %v3283 = vpack.c.b16 %v3240, %v3240
        %v3284 = vpack.c.b16 %v3241, %v3241
        %v3285 = vpack.c.b16 %v3242, %v3242
        %v3286 = vpack.c.b16 %v3243, %v3243
        %v3287 = vpack.c.b16 %v3244, %v3244
        %v3288 = vpack.c.b16 %v3245, %v3245
        %v3289 = vpack.c.b16 %v3246, %v3246
        %v3290 = vpack.c.b16 %v3247, %v3247
        %v3291 = vpack.c.b16 %v3248, %v3248
        %v3292 = vpack.c.b16 %v3249, %v3249
        %v3293 = vpack.c.b16 %v3250, %v3250
        %v3294 = vpack.c.b16 %v3251, %v3251
        %v3295 = vpack.c.b16 %v3252, %v3252
        %3296 = vrot.lane.b32.xlu0 %v3253, 64
        %v3297 = vpop.permute.xlu0 %3296
        %3298 = vrot.lane.b32.xlu0 %v3254, 64
        %v3299 = vpop.permute.xlu0 %3298
        %3300 = vrot.lane.b32.xlu0 %v3255, 64
        %v3301 = vpop.permute.xlu0 %3300
        %3302 = vrot.lane.b32.xlu0 %v3256, 64
        %v3303 = vpop.permute.xlu0 %3302
        %3304 = vrot.lane.b32.xlu0 %v3257, 64
        %v3305 = vpop.permute.xlu0 %3304
        %3306 = vrot.lane.b32.xlu0 %v3258, 64
        %v3307 = vpop.permute.xlu0 %3306
        %3308 = vrot.lane.b32.xlu0 %v3259, 64
        %v3309 = vpop.permute.xlu0 %3308
        %3310 = vrot.lane.b32.xlu0 %v3260, 64
        %v3311 = vpop.permute.xlu0 %3310
        %3312 = vrot.lane.b32.xlu0 %v3261, 64
        %v3313 = vpop.permute.xlu0 %3312
        %3314 = vrot.lane.b32.xlu0 %v3262, 64
        %v3315 = vpop.permute.xlu0 %3314
        %3316 = vrot.lane.b32.xlu0 %v3263, 64
        %v3317 = vpop.permute.xlu0 %3316
        %3318 = vrot.lane.b32.xlu0 %v3264, 64
        %v3319 = vpop.permute.xlu0 %3318
        %3320 = vrot.lane.b32.xlu0 %v3265, 64
        %v3321 = vpop.permute.xlu0 %3320
        %3322 = vrot.lane.b32.xlu0 %v3266, 64
        %v3323 = vpop.permute.xlu0 %3322
        %3324 = vrot.lane.b32.xlu0 %v3267, 64
        %v3325 = vpop.permute.xlu0 %3324
        %3326 = vrot.lane.b32.xlu0 %v3268, 64
        %v3327 = vpop.permute.xlu0 %3326
        %3328 = vrot.lane.b32.xlu0 %v3269, 64
        %v3329 = vpop.permute.xlu0 %3328
        %3330 = vrot.lane.b32.xlu0 %v3270, 64
        %v3331 = vpop.permute.xlu0 %3330
        %3332 = vrot.lane.b32.xlu0 %v3271, 64
        %v3333 = vpop.permute.xlu0 %3332
        %3334 = vrot.lane.b32.xlu0 %v3272, 64
        %v3335 = vpop.permute.xlu0 %3334
        %3336 = vrot.lane.b32.xlu0 %v3273, 64
        %v3337 = vpop.permute.xlu0 %3336
        %3338 = vrot.lane.b32.xlu0 %v3274, 64
        %v3339 = vpop.permute.xlu0 %3338
        %3340 = vrot.lane.b32.xlu0 %v3275, 64
        %v3341 = vpop.permute.xlu0 %3340
        %3342 = vrot.lane.b32.xlu0 %v3276, 64
        %v3343 = vpop.permute.xlu0 %3342
        %3344 = vrot.lane.b32.xlu0 %v3277, 64
        %v3345 = vpop.permute.xlu0 %3344
        %3346 = vrot.lane.b32.xlu0 %v3278, 64
        %v3347 = vpop.permute.xlu0 %3346
        %3348 = vrot.lane.b32.xlu0 %v3279, 64
        %v3349 = vpop.permute.xlu0 %3348
        %3350 = vrot.lane.b32.xlu0 %v3280, 64
        %v3351 = vpop.permute.xlu0 %3350
        %3352 = vrot.lane.b32.xlu0 %v3281, 64
        %v3353 = vpop.permute.xlu0 %3352
        %3354 = vrot.lane.b32.xlu0 %v3282, 64
        %v3355 = vpop.permute.xlu0 %3354
        %3356 = vrot.lane.b32.xlu0 %v3283, 64
        %v3357 = vpop.permute.xlu0 %3356
        %3358 = vrot.lane.b32.xlu0 %v3284, 64
        %v3359 = vpop.permute.xlu0 %3358
        %3360 = vrot.lane.b32.xlu0 %v3285, 64
        %v3361 = vpop.permute.xlu0 %3360
        %3362 = vrot.lane.b32.xlu0 %v3286, 64
        %v3363 = vpop.permute.xlu0 %3362
        %3364 = vrot.lane.b32.xlu0 %v3287, 64
        %v3365 = vpop.permute.xlu0 %3364
        %3366 = vrot.lane.b32.xlu0 %v3288, 64
        %v3367 = vpop.permute.xlu0 %3366
        %3368 = vrot.lane.b32.xlu0 %v3289, 64
        %v3369 = vpop.permute.xlu0 %3368
        %3370 = vrot.lane.b32.xlu0 %v3290, 64
        %v3371 = vpop.permute.xlu0 %3370
        %3372 = vrot.lane.b32.xlu0 %v3291, 64
        %v3373 = vpop.permute.xlu0 %3372
        %3374 = vrot.lane.b32.xlu0 %v3292, 64
        %v3375 = vpop.permute.xlu0 %3374
        %3376 = vrot.lane.b32.xlu0 %v3293, 64
        %v3377 = vpop.permute.xlu0 %3376
        %3378 = vrot.lane.b32.xlu0 %v3294, 64
        %v3379 = vpop.permute.xlu0 %3378
        %3380 = vrot.lane.b32.xlu0 %v3295, 64
        %v3381 = vpop.permute.xlu0 %3380
        %vm3425 = vcmask 781824
        %3426 = vst.msk [vmem:[#allocation3 + $0xc] sm:$0xf] %vm3425, %v3297
        %3427 = vst.msk [vmem:[#allocation3 + $0x10] sm:$0xf] %vm3425, %v3299
        %3428 = vst.msk [vmem:[#allocation3 + $0x14] sm:$0xf] %vm3425, %v3301
        %3429 = vst.msk [vmem:[#allocation3 + $0x18] sm:$0xf] %vm3425, %v3303
        %3430 = vst.msk [vmem:[#allocation3 + $0x1c] sm:$0xf] %vm3425, %v3305
        %3431 = vst.msk [vmem:[#allocation3 + $0x20] sm:$0xf] %vm3425, %v3307
        %3432 = vst.msk [vmem:[#allocation3 + $0x24] sm:$0xf] %vm3425, %v3309
        %3433 = vst.msk [vmem:[#allocation3 + $0x28] sm:$0xf] %vm3425, %v3311
        %3434 = vst.msk [vmem:[#allocation3 + $0x2c] sm:$0xf] %vm3425, %v3313
        %3435 = vst.msk [vmem:[#allocation3 + $0x30] sm:$0xf] %vm3425, %v3315
        %3436 = vst.msk [vmem:[#allocation3 + $0x34] sm:$0xf] %vm3425, %v3317
        %3437 = vst.msk [vmem:[#allocation3 + $0x38] sm:$0xf] %vm3425, %v3319
        %3438 = vst.msk [vmem:[#allocation3 + $0x3c] sm:$0xf] %vm3425, %v3321
        %3439 = vst.msk [vmem:[#allocation3 + $0x40] sm:$0xf] %vm3425, %v3323
        %3440 = vst.msk [vmem:[#allocation3 + $0x44] sm:$0xf] %vm3425, %v3325
        %3441 = vst.msk [vmem:[#allocation3 + $0x48] sm:$0xf] %vm3425, %v3327
        %3442 = vst.msk [vmem:[#allocation3 + $0x4c] sm:$0xf] %vm3425, %v3329
        %3443 = vst.msk [vmem:[#allocation3 + $0x50] sm:$0xf] %vm3425, %v3331
        %3444 = vst.msk [vmem:[#allocation3 + $0x54] sm:$0xf] %vm3425, %v3333
        %3445 = vst.msk [vmem:[#allocation3 + $0x58] sm:$0xf] %vm3425, %v3335
        %3446 = vst.msk [vmem:[#allocation3 + $0x5c] sm:$0xf] %vm3425, %v3337
        %3447 = vst.msk [vmem:[#allocation3 + $0x60] sm:$0xf] %vm3425, %v3339
        %3448 = vst.msk [vmem:[#allocation3 + $0x64] sm:$0xf] %vm3425, %v3341
        %3449 = vst.msk [vmem:[#allocation3 + $0x68] sm:$0xf] %vm3425, %v3343
        %3450 = vst.msk [vmem:[#allocation3 + $0x6c] sm:$0xf] %vm3425, %v3345
        %3451 = vst.msk [vmem:[#allocation3 + $0x70] sm:$0xf] %vm3425, %v3347
        %3452 = vst.msk [vmem:[#allocation3 + $0x74] sm:$0xf] %vm3425, %v3349
        %3453 = vst.msk [vmem:[#allocation3 + $0x78] sm:$0xf] %vm3425, %v3351
        %3454 = vst.msk [vmem:[#allocation3 + $0x7c] sm:$0xf] %vm3425, %v3353
        %3455 = vst.msk [vmem:[#allocation3 + $0x80] sm:$0xf] %vm3425, %v3355
        %3456 = vst.msk [vmem:[#allocation3 + $0x84] sm:$0xf] %vm3425, %v3357
        %3457 = vst.msk [vmem:[#allocation3 + $0x88] sm:$0xf] %vm3425, %v3359
        %3458 = vst.msk [vmem:[#allocation3 + $0x8c] sm:$0xf] %vm3425, %v3361
        %3459 = vst.msk [vmem:[#allocation3 + $0x90] sm:$0xf] %vm3425, %v3363
        %3460 = vst.msk [vmem:[#allocation3 + $0x94] sm:$0xf] %vm3425, %v3365
        %3461 = vst.msk [vmem:[#allocation3 + $0x98] sm:$0xf] %vm3425, %v3367
        %3462 = vst.msk [vmem:[#allocation3 + $0x9c] sm:$0xf] %vm3425, %v3369
        %3463 = vst.msk [vmem:[#allocation3 + $0xa0] sm:$0xf] %vm3425, %v3371
        %3464 = vst.msk [vmem:[#allocation3 + $0xa4] sm:$0xf] %vm3425, %v3373
        %3465 = vst.msk [vmem:[#allocation3 + $0xa8] sm:$0xf] %vm3425, %v3375
        %3466 = vst.msk [vmem:[#allocation3 + $0xac] sm:$0xf] %vm3425, %v3377
        %3467 = vst.msk [vmem:[#allocation3 + $0xb0] sm:$0xf] %vm3425, %v3379
        %3468 = vst.msk [vmem:[#allocation3 + $0xb4] sm:$0xf] %vm3425, %v3381
        %v3469 = vld [vmem:[#allocation3 + $0xc] sm:$0x8]
        %v3470 = vld [vmem:[#allocation3 + $0x10] sm:$0xf]
        %v3471 = vld [vmem:[#allocation3 + $0x14] sm:$0xf]
        %v3472 = vld [vmem:[#allocation3 + $0x18] sm:$0xf]
        %v3473 = vld [vmem:[#allocation3 + $0x1c] sm:$0xf]
        %v3474 = vld [vmem:[#allocation3 + $0x20] sm:$0xf]
        %v3475 = vld [vmem:[#allocation3 + $0x24] sm:$0xf]
        %v3476 = vld [vmem:[#allocation3 + $0x28] sm:$0xf]
        %v3477 = vld [vmem:[#allocation3 + $0x2c] sm:$0xf]
        %v3478 = vld [vmem:[#allocation3 + $0x30] sm:$0xf]
        %v3479 = vld [vmem:[#allocation3 + $0x34] sm:$0xf]
        %v3480 = vld [vmem:[#allocation3 + $0x38] sm:$0xf]
        %v3481 = vld [vmem:[#allocation3 + $0x3c] sm:$0xf]
        %v3482 = vld [vmem:[#allocation3 + $0x40] sm:$0xf]
        %v3483 = vld [vmem:[#allocation3 + $0x44] sm:$0xf]
        %v3484 = vld [vmem:[#allocation3 + $0x48] sm:$0xf]
        %v3485 = vld [vmem:[#allocation3 + $0x4c] sm:$0xf]
        %v3486 = vld [vmem:[#allocation3 + $0x50] sm:$0xf]
        %v3487 = vld [vmem:[#allocation3 + $0x54] sm:$0xf]
        %v3488 = vld [vmem:[#allocation3 + $0x58] sm:$0xf]
        %v3489 = vld [vmem:[#allocation3 + $0x5c] sm:$0xf]
        %v3490 = vld [vmem:[#allocation3 + $0x60] sm:$0xf]
        %v3491 = vld [vmem:[#allocation3 + $0x64] sm:$0xf]
        %v3492 = vld [vmem:[#allocation3 + $0x68] sm:$0xf]
        %v3493 = vld [vmem:[#allocation3 + $0x6c] sm:$0xf]
        %v3494 = vld [vmem:[#allocation3 + $0x70] sm:$0xf]
        %v3495 = vld [vmem:[#allocation3 + $0x74] sm:$0xf]
        %v3496 = vld [vmem:[#allocation3 + $0x78] sm:$0xf]
        %v3497 = vld [vmem:[#allocation3 + $0x7c] sm:$0xf]
        %v3498 = vld [vmem:[#allocation3 + $0x80] sm:$0xf]
        %v3499 = vld [vmem:[#allocation3 + $0x84] sm:$0xf]
        %v3500 = vld [vmem:[#allocation3 + $0x88] sm:$0xf]
        %v3501 = vld [vmem:[#allocation3 + $0x8c] sm:$0xf]
        %v3502 = vld [vmem:[#allocation3 + $0x90] sm:$0xf]
        %v3503 = vld [vmem:[#allocation3 + $0x94] sm:$0xf]
        %v3504 = vld [vmem:[#allocation3 + $0x98] sm:$0xf]
        %v3505 = vld [vmem:[#allocation3 + $0x9c] sm:$0xf]
        %v3506 = vld [vmem:[#allocation3 + $0xa0] sm:$0xf]
        %v3507 = vld [vmem:[#allocation3 + $0xa4] sm:$0xf]
        %v3508 = vld [vmem:[#allocation3 + $0xa8] sm:$0xf]
        %v3509 = vld [vmem:[#allocation3 + $0xac] sm:$0xf]
        %v3510 = vld [vmem:[#allocation3 + $0xb0] sm:$0xf]
        %v3511 = vld [vmem:[%s4] sm:$0xf]
        %v3512 = vld [vmem:[%s4 + $0x4] sm:$0xf]
        %v3513 = vld [vmem:[%s4 + $0x8] sm:$0xf]
        %v3514 = vld [vmem:[%s4 + $0xc] sm:$0xf]
        %v3515 = vld [vmem:[%s4 + $0x10] sm:$0xf]
        %v3516 = vld [vmem:[%s4 + $0x14] sm:$0xf]
        %v3517 = vld [vmem:[%s4 + $0x18] sm:$0xf]
        %v3518 = vld [vmem:[%s4 + $0x1c] sm:$0xf]
        %v3519 = vld [vmem:[%s4 + $0x20] sm:$0xf]
        %v3520 = vld [vmem:[%s4 + $0x24] sm:$0xf]
        %v3521 = vld [vmem:[%s4 + $0x28] sm:$0xf]
        %v3522 = vld [vmem:[%s4 + $0x2c] sm:$0xf]
        %s3523 = scalar_lea.vmem %s4, 48
        %v3524 = vld [vmem:[%s3523] sm:$0xf]
        %v3525 = vld [vmem:[%s3523 + $0x4] sm:$0xf]
        %v3526 = vld [vmem:[%s3523 + $0x8] sm:$0xf]
        %v3527 = vld [vmem:[%s3523 + $0xc] sm:$0xf]
        %v3528 = vld [vmem:[%s3523 + $0x10] sm:$0xf]
        %v3529 = vld [vmem:[%s3523 + $0x14] sm:$0xf]
        %v3530 = vld [vmem:[%s3523 + $0x18] sm:$0xf]
        %v3531 = vld [vmem:[%s3523 + $0x1c] sm:$0xf]
        %v3532 = vld [vmem:[%s3523 + $0x20] sm:$0xf]
        %v3533 = vld [vmem:[%s3523 + $0x24] sm:$0xf]
        %v3534 = vld [vmem:[%s3523 + $0x28] sm:$0xf]
        %v3535 = vld [vmem:[%s3523 + $0x2c] sm:$0xf]
        %v3577 = vunpack.c.l.b16 %v3470
        %v3578 = vunpack.c.l.b16 %v3471
        %v3579 = vunpack.c.l.b16 %v3472
        %v3580 = vunpack.c.l.b16 %v3473
        %v3581 = vunpack.c.l.b16 %v3474
        %v3582 = vunpack.c.l.b16 %v3475
        %v3583 = vunpack.c.l.b16 %v3476
        %v3584 = vunpack.c.l.b16 %v3477
        %v3585 = vunpack.c.l.b16 %v3478
        %v3586 = vunpack.c.l.b16 %v3479
        %v3587 = vunpack.c.l.b16 %v3480
        %v3588 = vunpack.c.l.b16 %v3481
        %v3589 = vunpack.c.l.b16 %v3482
        %v3590 = vunpack.c.l.b16 %v3483
        %v3591 = vunpack.c.l.b16 %v3484
        %v3592 = vunpack.c.l.b16 %v3485
        %v3593 = vunpack.c.l.b16 %v3486
        %v3594 = vunpack.c.l.b16 %v3487
        %v3595 = vunpack.c.l.b16 %v3488
        %v3596 = vunpack.c.l.b16 %v3489
        %v3597 = vunpack.c.l.b16 %v3490
        %v3598 = vunpack.c.l.b16 %v3491
        %v3599 = vunpack.c.l.b16 %v3492
        %v3600 = vunpack.c.l.b16 %v3493
        %v3601 = vunpack.c.l.b16 %v3494
        %v3602 = vunpack.c.l.b16 %v3495
        %v3603 = vunpack.c.l.b16 %v3496
        %v3604 = vunpack.c.l.b16 %v3497
        %v3605 = vunpack.c.l.b16 %v3498
        %v3606 = vunpack.c.l.b16 %v3499
        %v3607 = vunpack.c.l.b16 %v3500
        %v3608 = vunpack.c.l.b16 %v3501
        %v3609 = vunpack.c.l.b16 %v3502
        %v3610 = vunpack.c.l.b16 %v3503
        %v3611 = vunpack.c.l.b16 %v3504
        %v3612 = vunpack.c.l.b16 %v3505
        %v3613 = vunpack.c.l.b16 %v3506
        %v3614 = vunpack.c.l.b16 %v3507
        %v3615 = vunpack.c.l.b16 %v3508
        %v3616 = vunpack.c.l.b16 %v3509
        %v3617 = vunpack.c.l.b16 %v3510
        %v3618 = vpack.c.b16 %v3578, %v3577
        %v3619 = vpack.c.b16 %v3580, %v3579
        %v3620 = vpack.c.b16 %v3582, %v3581
        %v3621 = vpack.c.b16 %v3584, %v3583
        %v3622 = vpack.c.b16 %v3586, %v3585
        %v3623 = vpack.c.b16 %v3588, %v3587
        %v3624 = vpack.c.b16 %v3590, %v3589
        %v3625 = vpack.c.b16 %v3592, %v3591
        %v3626 = vpack.c.b16 %v3594, %v3593
        %v3627 = vpack.c.b16 %v3596, %v3595
        %v3628 = vpack.c.b16 %v3598, %v3597
        %v3629 = vpack.c.b16 %v3600, %v3599
        %v3630 = vpack.c.b16 %v3602, %v3601
        %v3631 = vpack.c.b16 %v3604, %v3603
        %v3632 = vpack.c.b16 %v3606, %v3605
        %v3633 = vpack.c.b16 %v3608, %v3607
        %v3634 = vpack.c.b16 %v3610, %v3609
        %v3635 = vpack.c.b16 %v3612, %v3611
        %v3636 = vpack.c.b16 %v3614, %v3613
        %v3637 = vpack.c.b16 %v3616, %v3615
        %v3638 = vpack.c.b16 %v3617, %v3617
        %v3651 = vunpack.c.l.b16 %v3524
        %v3652 = vunpack.c.l.b16 %v3525
        %v3653 = vunpack.c.l.b16 %v3526
        %v3654 = vunpack.c.l.b16 %v3527
        %v3655 = vunpack.c.l.b16 %v3528
        %v3656 = vunpack.c.l.b16 %v3529
        %v3657 = vunpack.c.l.b16 %v3530
        %v3658 = vunpack.c.l.b16 %v3531
        %v3659 = vunpack.c.l.b16 %v3532
        %v3660 = vunpack.c.l.b16 %v3533
        %v3661 = vunpack.c.l.b16 %v3534
        %v3662 = vunpack.c.l.b16 %v3535
        %v3663 = vpack.c.b16 %v3652, %v3651
        %v3664 = vpack.c.b16 %v3654, %v3653
        %v3665 = vpack.c.b16 %v3656, %v3655
        %v3666 = vpack.c.b16 %v3658, %v3657
        %v3667 = vpack.c.b16 %v3660, %v3659
        %v3668 = vpack.c.b16 %v3662, %v3661
        %vm3675 = vcmask 785408
        %v3677 = vsel %vm3675, %v3618, 0
        %v3680 = vsel %vm3675, %v3619, 0
        %v3683 = vsel %vm3675, %v3620, 0
        %v3686 = vsel %vm3675, %v3621, 0
        %v3689 = vsel %vm3675, %v3622, 0
        %v3692 = vsel %vm3675, %v3623, 0
        %v3695 = vsel %vm3675, %v3624, 0
        %v3698 = vsel %vm3675, %v3625, 0
        %v3701 = vsel %vm3675, %v3626, 0
        %v3704 = vsel %vm3675, %v3627, 0
        %v3707 = vsel %vm3675, %v3628, 0
        %v3710 = vsel %vm3675, %v3629, 0
        %v3713 = vsel %vm3675, %v3630, 0
        %v3716 = vsel %vm3675, %v3631, 0
        %v3719 = vsel %vm3675, %v3632, 0
        %v3722 = vsel %vm3675, %v3633, 0
        %v3725 = vsel %vm3675, %v3634, 0
        %v3728 = vsel %vm3675, %v3635, 0
        %v3731 = vsel %vm3675, %v3636, 0
        %v3734 = vsel %vm3675, %v3637, 0
        %v3737 = vsel %vm3675, %v3638, 0
        %3739 = vmatprep.subr.bf16.mxu0 0
        %3740 = vmatpush1.bf16.msra.mxu0 %v3663
        %3741 = vmatprep.subr.bf16.mxu0 0
        %3742 = vmatpush1.bf16.msra.mxu0 %v3664
        %3743 = vmatprep.subr.bf16.mxu0 0
        %3744 = vmatpush1.bf16.msra.mxu0 %v3665
        %3745 = vmatprep.subr.bf16.mxu0 0
        %3746 = vmatpush1.bf16.msra.mxu0 %v3666
        %3747 = vmatprep.subr.bf16.mxu0 0
        %3748 = vmatpush1.bf16.msra.mxu0 %v3667
        %3749 = vmatprep.subr.bf16.mxu0 0
        %3750 = vmatpush1.bf16.msra.mxu0 %v3668
        %3751 = vmatprep.subr.bf16.mxu0 0
        %3752 = vmatpush1.bf16.msra.mxu0 0
        %3753 = vmatprep.subr.bf16.mxu0 0
        %3754 = vmatpush1.bf16.msra.mxu0 0
        %3755 = vmatprep.subr.bf16.mxu0 0
        %3756 = vmatpush1.bf16.msra.mxu0 0
        %3757 = vmatprep.subr.bf16.mxu0 0
        %3758 = vmatpush1.bf16.msra.mxu0 0
        %3759 = vmatprep.subr.bf16.mxu0 0
        %3760 = vmatpush1.bf16.msra.mxu0 0
        %3761 = vmatprep.subr.bf16.mxu0 0
        %3762 = vmatpush1.bf16.msra.mxu0 0
        %3763 = vmatprep.subr.bf16.mxu0 0
        %3764 = vmatpush1.bf16.msra.mxu0 0
        %3765 = vmatprep.subr.bf16.mxu0 0
        %3766 = vmatpush1.bf16.msra.mxu0 0
        %3767 = vmatprep.subr.bf16.mxu0 0
        %3768 = vmatpush1.bf16.msra.mxu0 0
        %3769 = vmatprep.subr.bf16.mxu0 0
        %3770 = vmatpush1.bf16.msra.mxu0 0
        %3771 = vmatprep.mubr.bf16.mxu0 0
        %3772 = vmatmul.mubr.bf16.gmra.mrb[0].mxu0 %v3677
        %v3773 = vpop.f32.mrb[0].mxu0
        %v3774 = vadd.f32 0.0, %v3773
        %v3775 = vpop.f32.mrb[0].mxu0
        %v3776 = vpop.f32.mrb[0].mxu0
        %v3777 = vadd.f32 0.0, %v3776
        %v3778 = vpop.f32.mrb[0].mxu0
        %3779 = vmatprep.mubr.bf16.mxu0 0
        %3780 = vmatmul.mubr.bf16.gmra.mrb[0].mxu0 %v3680
        %v3781 = vpop.f32.mrb[0].mxu0
        %v3782 = vadd.f32 0.0, %v3781
        %v3783 = vpop.f32.mrb[0].mxu0
        %v3784 = vpop.f32.mrb[0].mxu0
        %v3785 = vadd.f32 0.0, %v3784
        %v3786 = vpop.f32.mrb[0].mxu0
        %3787 = vmatprep.mubr.bf16.mxu0 0
        %3788 = vmatmul.mubr.bf16.gmra.mrb[0].mxu0 %v3683
        %v3789 = vpop.f32.mrb[0].mxu0
        %v3790 = vadd.f32 0.0, %v3789
        %v3791 = vpop.f32.mrb[0].mxu0
        %v3792 = vpop.f32.mrb[0].mxu0
        %v3793 = vadd.f32 0.0, %v3792
        %v3794 = vpop.f32.mrb[0].mxu0
        %3795 = vmatprep.mubr.bf16.mxu0 0
        %3796 = vmatmul.mubr.bf16.gmra.mrb[0].mxu0 %v3686
        %v3797 = vpop.f32.mrb[0].mxu0
        %v3798 = vadd.f32 0.0, %v3797
        %v3799 = vpop.f32.mrb[0].mxu0
        %v3800 = vpop.f32.mrb[0].mxu0
        %v3801 = vadd.f32 0.0, %v3800
        %v3802 = vpop.f32.mrb[0].mxu0
        %3803 = vmatprep.mubr.bf16.mxu0 0
        %3804 = vmatmul.mubr.bf16.gmra.mrb[0].mxu0 %v3689
        %v3805 = vpop.f32.mrb[0].mxu0
        %v3806 = vadd.f32 0.0, %v3805
        %v3807 = vpop.f32.mrb[0].mxu0
        %v3808 = vpop.f32.mrb[0].mxu0
        %v3809 = vadd.f32 0.0, %v3808
        %v3810 = vpop.f32.mrb[0].mxu0
        %3811 = vmatprep.mubr.bf16.mxu0 0
        %3812 = vmatmul.mubr.bf16.gmra.mrb[0].mxu0 %v3692
        %v3813 = vpop.f32.mrb[0].mxu0
        %v3814 = vadd.f32 0.0, %v3813
        %v3815 = vpop.f32.mrb[0].mxu0
        %v3816 = vpop.f32.mrb[0].mxu0
        %v3817 = vadd.f32 0.0, %v3816
        %v3818 = vpop.f32.mrb[0].mxu0
        %3819 = vmatprep.mubr.bf16.mxu0 0
        %3820 = vmatmul.mubr.bf16.gmra.mrb[0].mxu0 %v3695
        %v3821 = vpop.f32.mrb[0].mxu0
        %v3822 = vadd.f32 0.0, %v3821
        %v3823 = vpop.f32.mrb[0].mxu0
        %v3824 = vpop.f32.mrb[0].mxu0
        %v3825 = vadd.f32 0.0, %v3824
        %v3826 = vpop.f32.mrb[0].mxu0
        %3827 = vmatprep.mubr.bf16.mxu0 0
        %3828 = vmatmul.mubr.bf16.gmra.mrb[0].mxu0 %v3698
        %v3829 = vpop.f32.mrb[0].mxu0
        %v3830 = vadd.f32 0.0, %v3829
        %v3831 = vpop.f32.mrb[0].mxu0
        %v3832 = vpop.f32.mrb[0].mxu0
        %v3833 = vadd.f32 0.0, %v3832
        %v3834 = vpop.f32.mrb[0].mxu0
        %3835 = vmatprep.mubr.bf16.mxu0 0
        %3836 = vmatmul.mubr.bf16.gmra.mrb[0].mxu0 %v3701
        %v3837 = vpop.f32.mrb[0].mxu0
        %v3838 = vadd.f32 0.0, %v3837
        %v3839 = vpop.f32.mrb[0].mxu0
        %v3840 = vpop.f32.mrb[0].mxu0
        %v3841 = vadd.f32 0.0, %v3840
        %v3842 = vpop.f32.mrb[0].mxu0
        %3843 = vmatprep.mubr.bf16.mxu0 0
        %3844 = vmatmul.mubr.bf16.gmra.mrb[0].mxu0 %v3704
        %v3845 = vpop.f32.mrb[0].mxu0
        %v3846 = vadd.f32 0.0, %v3845
        %v3847 = vpop.f32.mrb[0].mxu0
        %v3848 = vpop.f32.mrb[0].mxu0
        %v3849 = vadd.f32 0.0, %v3848
        %v3850 = vpop.f32.mrb[0].mxu0
        %3851 = vmatprep.mubr.bf16.mxu0 0
        %3852 = vmatmul.mubr.bf16.gmra.mrb[0].mxu0 %v3707
        %v3853 = vpop.f32.mrb[0].mxu0
        %v3854 = vadd.f32 0.0, %v3853
        %v3855 = vpop.f32.mrb[0].mxu0
        %v3856 = vpop.f32.mrb[0].mxu0
        %v3857 = vadd.f32 0.0, %v3856
        %v3858 = vpop.f32.mrb[0].mxu0
        %3859 = vmatprep.mubr.bf16.mxu0 0
        %3860 = vmatmul.mubr.bf16.gmra.mrb[0].mxu0 %v3710
        %v3861 = vpop.f32.mrb[0].mxu0
        %v3862 = vadd.f32 0.0, %v3861
        %v3863 = vpop.f32.mrb[0].mxu0
        %v3864 = vpop.f32.mrb[0].mxu0
        %v3865 = vadd.f32 0.0, %v3864
        %v3866 = vpop.f32.mrb[0].mxu0
        %3867 = vmatprep.mubr.bf16.mxu0 0
        %3868 = vmatmul.mubr.bf16.gmra.mrb[0].mxu0 %v3713
        %v3869 = vpop.f32.mrb[0].mxu0
        %v3870 = vadd.f32 0.0, %v3869
        %v3871 = vpop.f32.mrb[0].mxu0
        %v3872 = vpop.f32.mrb[0].mxu0
        %v3873 = vadd.f32 0.0, %v3872
        %v3874 = vpop.f32.mrb[0].mxu0
        %3875 = vmatprep.mubr.bf16.mxu0 0
        %3876 = vmatmul.mubr.bf16.gmra.mrb[0].mxu0 %v3716
        %v3877 = vpop.f32.mrb[0].mxu0
        %v3878 = vadd.f32 0.0, %v3877
        %v3879 = vpop.f32.mrb[0].mxu0
        %v3880 = vpop.f32.mrb[0].mxu0
        %v3881 = vadd.f32 0.0, %v3880
        %v3882 = vpop.f32.mrb[0].mxu0
        %3883 = vmatprep.mubr.bf16.mxu0 0
        %3884 = vmatmul.mubr.bf16.gmra.mrb[0].mxu0 %v3719
        %v3885 = vpop.f32.mrb[0].mxu0
        %v3886 = vadd.f32 0.0, %v3885
        %v3887 = vpop.f32.mrb[0].mxu0
        %v3888 = vpop.f32.mrb[0].mxu0
        %v3889 = vadd.f32 0.0, %v3888
        %v3890 = vpop.f32.mrb[0].mxu0
        %3891 = vmatprep.mubr.bf16.mxu0 0
        %3892 = vmatmul.mubr.bf16.gmra.mrb[0].mxu0 %v3722
        %v3893 = vpop.f32.mrb[0].mxu0
        %v3894 = vadd.f32 0.0, %v3893
        %v3895 = vpop.f32.mrb[0].mxu0
        %v3896 = vpop.f32.mrb[0].mxu0
        %v3897 = vadd.f32 0.0, %v3896
        %v3898 = vpop.f32.mrb[0].mxu0
        %3899 = vmatprep.mubr.bf16.mxu0 0
        %3900 = vmatmul.mubr.bf16.gmra.mrb[0].mxu0 %v3725
        %v3901 = vpop.f32.mrb[0].mxu0
        %v3902 = vadd.f32 0.0, %v3901
        %v3903 = vpop.f32.mrb[0].mxu0
        %v3904 = vpop.f32.mrb[0].mxu0
        %v3905 = vadd.f32 0.0, %v3904
        %v3906 = vpop.f32.mrb[0].mxu0
        %3907 = vmatprep.mubr.bf16.mxu0 0
        %3908 = vmatmul.mubr.bf16.gmra.mrb[0].mxu0 %v3728
        %v3909 = vpop.f32.mrb[0].mxu0
        %v3910 = vadd.f32 0.0, %v3909
        %v3911 = vpop.f32.mrb[0].mxu0
        %v3912 = vpop.f32.mrb[0].mxu0
        %v3913 = vadd.f32 0.0, %v3912
        %v3914 = vpop.f32.mrb[0].mxu0
        %3915 = vmatprep.mubr.bf16.mxu0 0
        %3916 = vmatmul.mubr.bf16.gmra.mrb[0].mxu0 %v3731
        %v3917 = vpop.f32.mrb[0].mxu0
        %v3918 = vadd.f32 0.0, %v3917
        %v3919 = vpop.f32.mrb[0].mxu0
        %v3920 = vpop.f32.mrb[0].mxu0
        %v3921 = vadd.f32 0.0, %v3920
        %v3922 = vpop.f32.mrb[0].mxu0
        %3923 = vmatprep.mubr.bf16.mxu0 0
        %3924 = vmatmul.mubr.bf16.gmra.mrb[0].mxu0 %v3734
        %v3925 = vpop.f32.mrb[0].mxu0
        %v3926 = vadd.f32 0.0, %v3925
        %v3927 = vpop.f32.mrb[0].mxu0
        %v3928 = vpop.f32.mrb[0].mxu0
        %v3929 = vadd.f32 0.0, %v3928
        %v3930 = vpop.f32.mrb[0].mxu0
        %3931 = vmatprep.mubr.bf16.mxu0 0
        %3932 = vmatmul.mubr.bf16.gmra.mrb[0].mxu0 %v3737
        %v3933 = vpop.f32.mrb[0].mxu0
        %v3934 = vadd.f32 0.0, %v3933
        %v3935 = vpop.f32.mrb[0].mxu0
        %v3936 = vpop.f32.mrb[0].mxu0
        %v3937 = vpop.f32.mrb[0].mxu0
        %3938 = vdwg.mxu0
        %v3940 = vunpack.c.l.b16 %v3469
        %v3941 = vpack.c.b16 %v3577, %v3940
        %v3942 = vpack.c.b16 %v3579, %v3578
        %v3943 = vpack.c.b16 %v3581, %v3580
        %v3944 = vpack.c.b16 %v3583, %v3582
        %v3945 = vpack.c.b16 %v3585, %v3584
        %v3946 = vpack.c.b16 %v3587, %v3586
        %v3947 = vpack.c.b16 %v3589, %v3588
        %v3948 = vpack.c.b16 %v3591, %v3590
        %v3949 = vpack.c.b16 %v3593, %v3592
        %v3950 = vpack.c.b16 %v3595, %v3594
        %v3951 = vpack.c.b16 %v3597, %v3596
        %v3952 = vpack.c.b16 %v3599, %v3598
        %v3953 = vpack.c.b16 %v3601, %v3600
        %v3954 = vpack.c.b16 %v3603, %v3602
        %v3955 = vpack.c.b16 %v3605, %v3604
        %v3956 = vpack.c.b16 %v3607, %v3606
        %v3957 = vpack.c.b16 %v3609, %v3608
        %v3958 = vpack.c.b16 %v3611, %v3610
        %v3959 = vpack.c.b16 %v3613, %v3612
        %v3960 = vpack.c.b16 %v3615, %v3614
        %v3961 = vpack.c.b16 %v3617, %v3616
        %v3963 = vshrl.u32 %v3941, 16
        %v3965 = vrot.slane %v3963, 3
        %v3966 = vshll.u32 %v3941, 16
        %v3968 = vrot.slane %v3966, 4
        %v3969 = vor.u32 %v3965, %v3968
        %v3971 = vshrl.u32 %v3942, 16
        %v3973 = vrot.slane %v3971, 3
        %v3974 = vshll.u32 %v3942, 16
        %v3976 = vrot.slane %v3974, 4
        %v3977 = vor.u32 %v3973, %v3976
        %v3978 = vsel %vm963, %v3969, %v3977
        %v3980 = vshrl.u32 %v3943, 16
        %v3982 = vrot.slane %v3980, 3
        %v3983 = vshll.u32 %v3943, 16
        %v3985 = vrot.slane %v3983, 4
        %v3986 = vor.u32 %v3982, %v3985
        %v3987 = vsel %vm963, %v3977, %v3986
        %v3989 = vshrl.u32 %v3944, 16
        %v3991 = vrot.slane %v3989, 3
        %v3992 = vshll.u32 %v3944, 16
        %v3994 = vrot.slane %v3992, 4
        %v3995 = vor.u32 %v3991, %v3994
        %v3996 = vsel %vm963, %v3986, %v3995
        %v3998 = vshrl.u32 %v3945, 16
        %v4000 = vrot.slane %v3998, 3
        %v4001 = vshll.u32 %v3945, 16
        %v4003 = vrot.slane %v4001, 4
        %v4004 = vor.u32 %v4000, %v4003
        %v4005 = vsel %vm963, %v3995, %v4004
        %v4007 = vshrl.u32 %v3946, 16
        %v4009 = vrot.slane %v4007, 3
        %v4010 = vshll.u32 %v3946, 16
        %v4012 = vrot.slane %v4010, 4
        %v4013 = vor.u32 %v4009, %v4012
        %v4014 = vsel %vm963, %v4004, %v4013
        %v4016 = vshrl.u32 %v3947, 16
        %v4018 = vrot.slane %v4016, 3
        %v4019 = vshll.u32 %v3947, 16
        %v4021 = vrot.slane %v4019, 4
        %v4022 = vor.u32 %v4018, %v4021
        %v4023 = vsel %vm963, %v4013, %v4022
        %v4025 = vshrl.u32 %v3948, 16
        %v4027 = vrot.slane %v4025, 3
        %v4028 = vshll.u32 %v3948, 16
        %v4030 = vrot.slane %v4028, 4
        %v4031 = vor.u32 %v4027, %v4030
        %v4032 = vsel %vm963, %v4022, %v4031
        %v4034 = vshrl.u32 %v3949, 16
        %v4036 = vrot.slane %v4034, 3
        %v4037 = vshll.u32 %v3949, 16
        %v4039 = vrot.slane %v4037, 4
        %v4040 = vor.u32 %v4036, %v4039
        %v4041 = vsel %vm963, %v4031, %v4040
        %v4043 = vshrl.u32 %v3950, 16
        %v4045 = vrot.slane %v4043, 3
        %v4046 = vshll.u32 %v3950, 16
        %v4048 = vrot.slane %v4046, 4
        %v4049 = vor.u32 %v4045, %v4048
        %v4050 = vsel %vm963, %v4040, %v4049
        %v4052 = vshrl.u32 %v3951, 16
        %v4054 = vrot.slane %v4052, 3
        %v4055 = vshll.u32 %v3951, 16
        %v4057 = vrot.slane %v4055, 4
        %v4058 = vor.u32 %v4054, %v4057
        %v4059 = vsel %vm963, %v4049, %v4058
        %v4061 = vshrl.u32 %v3952, 16
        %v4063 = vrot.slane %v4061, 3
        %v4064 = vshll.u32 %v3952, 16
        %v4066 = vrot.slane %v4064, 4
        %v4067 = vor.u32 %v4063, %v4066
        %v4068 = vsel %vm963, %v4058, %v4067
        %v4070 = vshrl.u32 %v3953, 16
        %v4072 = vrot.slane %v4070, 3
        %v4073 = vshll.u32 %v3953, 16
        %v4075 = vrot.slane %v4073, 4
        %v4076 = vor.u32 %v4072, %v4075
        %v4077 = vsel %vm963, %v4067, %v4076
        %v4079 = vshrl.u32 %v3954, 16
        %v4081 = vrot.slane %v4079, 3
        %v4082 = vshll.u32 %v3954, 16
        %v4084 = vrot.slane %v4082, 4
        %v4085 = vor.u32 %v4081, %v4084
        %v4086 = vsel %vm963, %v4076, %v4085
        %v4088 = vshrl.u32 %v3955, 16
        %v4090 = vrot.slane %v4088, 3
        %v4091 = vshll.u32 %v3955, 16
        %v4093 = vrot.slane %v4091, 4
        %v4094 = vor.u32 %v4090, %v4093
        %v4095 = vsel %vm963, %v4085, %v4094
        %v4097 = vshrl.u32 %v3956, 16
        %v4099 = vrot.slane %v4097, 3
        %v4100 = vshll.u32 %v3956, 16
        %v4102 = vrot.slane %v4100, 4
        %v4103 = vor.u32 %v4099, %v4102
        %v4104 = vsel %vm963, %v4094, %v4103
        %v4106 = vshrl.u32 %v3957, 16
        %v4108 = vrot.slane %v4106, 3
        %v4109 = vshll.u32 %v3957, 16
        %v4111 = vrot.slane %v4109, 4
        %v4112 = vor.u32 %v4108, %v4111
        %v4113 = vsel %vm963, %v4103, %v4112
        %v4115 = vshrl.u32 %v3958, 16
        %v4117 = vrot.slane %v4115, 3
        %v4118 = vshll.u32 %v3958, 16
        %v4120 = vrot.slane %v4118, 4
        %v4121 = vor.u32 %v4117, %v4120
        %v4122 = vsel %vm963, %v4112, %v4121
        %v4124 = vshrl.u32 %v3959, 16
        %v4126 = vrot.slane %v4124, 3
        %v4127 = vshll.u32 %v3959, 16
        %v4129 = vrot.slane %v4127, 4
        %v4130 = vor.u32 %v4126, %v4129
        %v4131 = vsel %vm963, %v4121, %v4130
        %v4133 = vshrl.u32 %v3960, 16
        %v4135 = vrot.slane %v4133, 3
        %v4136 = vshll.u32 %v3960, 16
        %v4138 = vrot.slane %v4136, 4
        %v4139 = vor.u32 %v4135, %v4138
        %v4140 = vsel %vm963, %v4130, %v4139
        %v4142 = vshrl.u32 %v3961, 16
        %v4144 = vrot.slane %v4142, 3
        %v4145 = vshll.u32 %v3961, 16
        %v4147 = vrot.slane %v4145, 4
        %v4148 = vor.u32 %v4144, %v4147
        %v4149 = vsel %vm963, %v4139, %v4148
        %v4162 = vunpack.c.l.b16 %v3511
        %v4163 = vunpack.c.l.b16 %v3512
        %v4164 = vunpack.c.l.b16 %v3513
        %v4165 = vunpack.c.l.b16 %v3514
        %v4166 = vunpack.c.l.b16 %v3515
        %v4167 = vunpack.c.l.b16 %v3516
        %v4168 = vunpack.c.l.b16 %v3517
        %v4169 = vunpack.c.l.b16 %v3518
        %v4170 = vunpack.c.l.b16 %v3519
        %v4171 = vunpack.c.l.b16 %v3520
        %v4172 = vunpack.c.l.b16 %v3521
        %v4173 = vunpack.c.l.b16 %v3522
        %v4174 = vpack.c.b16 %v4163, %v4162
        %v4175 = vpack.c.b16 %v4165, %v4164
        %v4176 = vpack.c.b16 %v4167, %v4166
        %v4177 = vpack.c.b16 %v4169, %v4168
        %v4178 = vpack.c.b16 %v4171, %v4170
        %v4179 = vpack.c.b16 %v4173, %v4172
        %v4187 = vsel %vm3675, %v3978, 0
        %v4190 = vsel %vm3675, %v3987, 0
        %v4193 = vsel %vm3675, %v3996, 0
        %v4196 = vsel %vm3675, %v4005, 0
        %v4199 = vsel %vm3675, %v4014, 0
        %v4202 = vsel %vm3675, %v4023, 0
        %v4205 = vsel %vm3675, %v4032, 0
        %v4208 = vsel %vm3675, %v4041, 0
        %v4211 = vsel %vm3675, %v4050, 0
        %v4214 = vsel %vm3675, %v4059, 0
        %v4217 = vsel %vm3675, %v4068, 0
        %v4220 = vsel %vm3675, %v4077, 0
        %v4223 = vsel %vm3675, %v4086, 0
        %v4226 = vsel %vm3675, %v4095, 0
        %v4229 = vsel %vm3675, %v4104, 0
        %v4232 = vsel %vm3675, %v4113, 0
        %v4235 = vsel %vm3675, %v4122, 0
        %v4238 = vsel %vm3675, %v4131, 0
        %v4241 = vsel %vm3675, %v4140, 0
        %v4244 = vsel %vm3675, %v4149, 0
        %v4247 = vsel %vm3675, %v4148, 0
        %4249 = vmatprep.subr.bf16.mxu0 0
        %4250 = vmatpush1.bf16.msra.mxu0 %v4174
        %4251 = vmatprep.subr.bf16.mxu0 0
        %4252 = vmatpush1.bf16.msra.mxu0 %v4175
        %4253 = vmatprep.subr.bf16.mxu0 0
        %4254 = vmatpush1.bf16.msra.mxu0 %v4176
        %4255 = vmatprep.subr.bf16.mxu0 0
        %4256 = vmatpush1.bf16.msra.mxu0 %v4177
        %4257 = vmatprep.subr.bf16.mxu0 0
        %4258 = vmatpush1.bf16.msra.mxu0 %v4178
        %4259 = vmatprep.subr.bf16.mxu0 0
        %4260 = vmatpush1.bf16.msra.mxu0 %v4179
        %4261 = vmatprep.subr.bf16.mxu0 0
        %4262 = vmatpush1.bf16.msra.mxu0 0
        %4263 = vmatprep.subr.bf16.mxu0 0
        %4264 = vmatpush1.bf16.msra.mxu0 0
        %4265 = vmatprep.subr.bf16.mxu0 0
        %4266 = vmatpush1.bf16.msra.mxu0 0
        %4267 = vmatprep.subr.bf16.mxu0 0
        %4268 = vmatpush1.bf16.msra.mxu0 0
        %4269 = vmatprep.subr.bf16.mxu0 0
        %4270 = vmatpush1.bf16.msra.mxu0 0
        %4271 = vmatprep.subr.bf16.mxu0 0
        %4272 = vmatpush1.bf16.msra.mxu0 0
        %4273 = vmatprep.subr.bf16.mxu0 0
        %4274 = vmatpush1.bf16.msra.mxu0 0
        %4275 = vmatprep.subr.bf16.mxu0 0
        %4276 = vmatpush1.bf16.msra.mxu0 0
        %4277 = vmatprep.subr.bf16.mxu0 0
        %4278 = vmatpush1.bf16.msra.mxu0 0
        %4279 = vmatprep.subr.bf16.mxu0 0
        %4280 = vmatpush1.bf16.msra.mxu0 0
        %4281 = vmatprep.mubr.bf16.mxu0 0
        %4282 = vmatmul.mubr.bf16.gmra.mrb[0].mxu0 %v4187
        %v4283 = vpop.f32.mrb[0].mxu0
        %v4284 = vadd.f32 %v3774, %v4283
        %v4285 = vpop.f32.mrb[0].mxu0
        %v4286 = vpop.f32.mrb[0].mxu0
        %v4287 = vadd.f32 %v3777, %v4286
        %v4288 = vpop.f32.mrb[0].mxu0
        %4289 = vmatprep.mubr.bf16.mxu0 0
        %4290 = vmatmul.mubr.bf16.gmra.mrb[0].mxu0 %v4190
        %v4291 = vpop.f32.mrb[0].mxu0
        %v4292 = vadd.f32 %v3782, %v4291
        %v4293 = vpop.f32.mrb[0].mxu0
        %v4294 = vpop.f32.mrb[0].mxu0
        %v4295 = vadd.f32 %v3785, %v4294
        %v4296 = vpop.f32.mrb[0].mxu0
        %4297 = vmatprep.mubr.bf16.mxu0 0
        %4298 = vmatmul.mubr.bf16.gmra.mrb[0].mxu0 %v4193
        %v4299 = vpop.f32.mrb[0].mxu0
        %v4300 = vadd.f32 %v3790, %v4299
        %v4301 = vpop.f32.mrb[0].mxu0
        %v4302 = vpop.f32.mrb[0].mxu0
        %v4303 = vadd.f32 %v3793, %v4302
        %v4304 = vpop.f32.mrb[0].mxu0
        %4305 = vmatprep.mubr.bf16.mxu0 0
        %4306 = vmatmul.mubr.bf16.gmra.mrb[0].mxu0 %v4196
        %v4307 = vpop.f32.mrb[0].mxu0
        %v4308 = vadd.f32 %v3798, %v4307
        %v4309 = vpop.f32.mrb[0].mxu0
        %v4310 = vpop.f32.mrb[0].mxu0
        %v4311 = vadd.f32 %v3801, %v4310
        %v4312 = vpop.f32.mrb[0].mxu0
        %4313 = vmatprep.mubr.bf16.mxu0 0
        %4314 = vmatmul.mubr.bf16.gmra.mrb[0].mxu0 %v4199
        %v4315 = vpop.f32.mrb[0].mxu0
        %v4316 = vadd.f32 %v3806, %v4315
        %v4317 = vpop.f32.mrb[0].mxu0
        %v4318 = vpop.f32.mrb[0].mxu0
        %v4319 = vadd.f32 %v3809, %v4318
        %v4320 = vpop.f32.mrb[0].mxu0
        %4321 = vmatprep.mubr.bf16.mxu0 0
        %4322 = vmatmul.mubr.bf16.gmra.mrb[0].mxu0 %v4202
        %v4323 = vpop.f32.mrb[0].mxu0
        %v4324 = vadd.f32 %v3814, %v4323
        %v4325 = vpop.f32.mrb[0].mxu0
        %v4326 = vpop.f32.mrb[0].mxu0
        %v4327 = vadd.f32 %v3817, %v4326
        %v4328 = vpop.f32.mrb[0].mxu0
        %4329 = vmatprep.mubr.bf16.mxu0 0
        %4330 = vmatmul.mubr.bf16.gmra.mrb[0].mxu0 %v4205
        %v4331 = vpop.f32.mrb[0].mxu0
        %v4332 = vadd.f32 %v3822, %v4331
        %v4333 = vpop.f32.mrb[0].mxu0
        %v4334 = vpop.f32.mrb[0].mxu0
        %v4335 = vadd.f32 %v3825, %v4334
        %v4336 = vpop.f32.mrb[0].mxu0
        %4337 = vmatprep.mubr.bf16.mxu0 0
        %4338 = vmatmul.mubr.bf16.gmra.mrb[0].mxu0 %v4208
        %v4339 = vpop.f32.mrb[0].mxu0
        %v4340 = vadd.f32 %v3830, %v4339
        %v4341 = vpop.f32.mrb[0].mxu0
        %v4342 = vpop.f32.mrb[0].mxu0
        %v4343 = vadd.f32 %v3833, %v4342
        %v4344 = vpop.f32.mrb[0].mxu0
        %4345 = vmatprep.mubr.bf16.mxu0 0
        %4346 = vmatmul.mubr.bf16.gmra.mrb[0].mxu0 %v4211
        %v4347 = vpop.f32.mrb[0].mxu0
        %v4348 = vadd.f32 %v3838, %v4347
        %v4349 = vpop.f32.mrb[0].mxu0
        %v4350 = vpop.f32.mrb[0].mxu0
        %v4351 = vadd.f32 %v3841, %v4350
        %v4352 = vpop.f32.mrb[0].mxu0
        %4353 = vmatprep.mubr.bf16.mxu0 0
        %4354 = vmatmul.mubr.bf16.gmra.mrb[0].mxu0 %v4214
        %v4355 = vpop.f32.mrb[0].mxu0
        %v4356 = vadd.f32 %v3846, %v4355
        %v4357 = vpop.f32.mrb[0].mxu0
        %v4358 = vpop.f32.mrb[0].mxu0
        %v4359 = vadd.f32 %v3849, %v4358
        %v4360 = vpop.f32.mrb[0].mxu0
        %4361 = vmatprep.mubr.bf16.mxu0 0
        %4362 = vmatmul.mubr.bf16.gmra.mrb[0].mxu0 %v4217
        %v4363 = vpop.f32.mrb[0].mxu0
        %v4364 = vadd.f32 %v3854, %v4363
        %v4365 = vpop.f32.mrb[0].mxu0
        %v4366 = vpop.f32.mrb[0].mxu0
        %v4367 = vadd.f32 %v3857, %v4366
        %v4368 = vpop.f32.mrb[0].mxu0
        %4369 = vmatprep.mubr.bf16.mxu0 0
        %4370 = vmatmul.mubr.bf16.gmra.mrb[0].mxu0 %v4220
        %v4371 = vpop.f32.mrb[0].mxu0
        %v4372 = vadd.f32 %v3862, %v4371
        %v4373 = vpop.f32.mrb[0].mxu0
        %v4374 = vpop.f32.mrb[0].mxu0
        %v4375 = vadd.f32 %v3865, %v4374
        %v4376 = vpop.f32.mrb[0].mxu0
        %4377 = vmatprep.mubr.bf16.mxu0 0
        %4378 = vmatmul.mubr.bf16.gmra.mrb[0].mxu0 %v4223
        %v4379 = vpop.f32.mrb[0].mxu0
        %v4380 = vadd.f32 %v3870, %v4379
        %v4381 = vpop.f32.mrb[0].mxu0
        %v4382 = vpop.f32.mrb[0].mxu0
        %v4383 = vadd.f32 %v3873, %v4382
        %v4384 = vpop.f32.mrb[0].mxu0
        %4385 = vmatprep.mubr.bf16.mxu0 0
        %4386 = vmatmul.mubr.bf16.gmra.mrb[0].mxu0 %v4226
        %v4387 = vpop.f32.mrb[0].mxu0
        %v4388 = vadd.f32 %v3878, %v4387
        %v4389 = vpop.f32.mrb[0].mxu0
        %v4390 = vpop.f32.mrb[0].mxu0
        %v4391 = vadd.f32 %v3881, %v4390
        %v4392 = vpop.f32.mrb[0].mxu0
        %4393 = vmatprep.mubr.bf16.mxu0 0
        %4394 = vmatmul.mubr.bf16.gmra.mrb[0].mxu0 %v4229
        %v4395 = vpop.f32.mrb[0].mxu0
        %v4396 = vadd.f32 %v3886, %v4395
        %v4397 = vpop.f32.mrb[0].mxu0
        %v4398 = vpop.f32.mrb[0].mxu0
        %v4399 = vadd.f32 %v3889, %v4398
        %v4400 = vpop.f32.mrb[0].mxu0
        %4401 = vmatprep.mubr.bf16.mxu0 0
        %4402 = vmatmul.mubr.bf16.gmra.mrb[0].mxu0 %v4232
        %v4403 = vpop.f32.mrb[0].mxu0
        %v4404 = vadd.f32 %v3894, %v4403
        %v4405 = vpop.f32.mrb[0].mxu0
        %v4406 = vpop.f32.mrb[0].mxu0
        %v4407 = vadd.f32 %v3897, %v4406
        %v4408 = vpop.f32.mrb[0].mxu0
        %4409 = vmatprep.mubr.bf16.mxu0 0
        %4410 = vmatmul.mubr.bf16.gmra.mrb[0].mxu0 %v4235
        %v4411 = vpop.f32.mrb[0].mxu0
        %v4412 = vadd.f32 %v3902, %v4411
        %v4413 = vpop.f32.mrb[0].mxu0
        %v4414 = vpop.f32.mrb[0].mxu0
        %v4415 = vadd.f32 %v3905, %v4414
        %v4416 = vpop.f32.mrb[0].mxu0
        %4417 = vmatprep.mubr.bf16.mxu0 0
        %4418 = vmatmul.mubr.bf16.gmra.mrb[0].mxu0 %v4238
        %v4419 = vpop.f32.mrb[0].mxu0
        %v4420 = vadd.f32 %v3910, %v4419
        %v4421 = vpop.f32.mrb[0].mxu0
        %v4422 = vpop.f32.mrb[0].mxu0
        %v4423 = vadd.f32 %v3913, %v4422
        %v4424 = vpop.f32.mrb[0].mxu0
        %4425 = vmatprep.mubr.bf16.mxu0 0
        %4426 = vmatmul.mubr.bf16.gmra.mrb[0].mxu0 %v4241
        %v4427 = vpop.f32.mrb[0].mxu0
        %v4428 = vadd.f32 %v3918, %v4427
        %v4429 = vpop.f32.mrb[0].mxu0
        %v4430 = vpop.f32.mrb[0].mxu0
        %v4431 = vadd.f32 %v3921, %v4430
        %v4432 = vpop.f32.mrb[0].mxu0
        %4433 = vmatprep.mubr.bf16.mxu0 0
        %4434 = vmatmul.mubr.bf16.gmra.mrb[0].mxu0 %v4244
        %v4435 = vpop.f32.mrb[0].mxu0
        %v4436 = vadd.f32 %v3926, %v4435
        %v4437 = vpop.f32.mrb[0].mxu0
        %v4438 = vpop.f32.mrb[0].mxu0
        %v4439 = vadd.f32 %v3929, %v4438
        %v4440 = vpop.f32.mrb[0].mxu0
        %4441 = vmatprep.mubr.bf16.mxu0 0
        %4442 = vmatmul.mubr.bf16.gmra.mrb[0].mxu0 %v4247
        %v4443 = vpop.f32.mrb[0].mxu0
        %v4444 = vadd.f32 %v3934, %v4443
        %v4445 = vpop.f32.mrb[0].mxu0
        %v4446 = vpop.f32.mrb[0].mxu0
        %v4447 = vpop.f32.mrb[0].mxu0
        %4448 = vdwg.mxu0
        %v4449 = vld [vmem:[#allocation3 + $0x10] sm:$0xf]
        %v4450 = vld [vmem:[#allocation3 + $0x14] sm:$0xf]
        %v4451 = vld [vmem:[#allocation3 + $0x18] sm:$0xf]
        %v4452 = vld [vmem:[#allocation3 + $0x1c] sm:$0xf]
        %v4453 = vld [vmem:[#allocation3 + $0x20] sm:$0xf]
        %v4454 = vld [vmem:[#allocation3 + $0x24] sm:$0xf]
        %v4455 = vld [vmem:[#allocation3 + $0x28] sm:$0xf]
        %v4456 = vld [vmem:[#allocation3 + $0x2c] sm:$0xf]
        %v4457 = vld [vmem:[#allocation3 + $0x30] sm:$0xf]
        %v4458 = vld [vmem:[#allocation3 + $0x34] sm:$0xf]
        %v4459 = vld [vmem:[#allocation3 + $0x38] sm:$0xf]
        %v4460 = vld [vmem:[#allocation3 + $0x3c] sm:$0xf]
        %v4461 = vld [vmem:[#allocation3 + $0x40] sm:$0xf]
        %v4462 = vld [vmem:[#allocation3 + $0x44] sm:$0xf]
        %v4463 = vld [vmem:[#allocation3 + $0x48] sm:$0xf]
        %v4464 = vld [vmem:[#allocation3 + $0x4c] sm:$0xf]
        %v4465 = vld [vmem:[#allocation3 + $0x50] sm:$0xf]
        %v4466 = vld [vmem:[#allocation3 + $0x54] sm:$0xf]
        %v4467 = vld [vmem:[#allocation3 + $0x58] sm:$0xf]
        %v4468 = vld [vmem:[#allocation3 + $0x5c] sm:$0xf]
        %v4469 = vld [vmem:[#allocation3 + $0x60] sm:$0xf]
        %v4470 = vld [vmem:[#allocation3 + $0x64] sm:$0xf]
        %v4471 = vld [vmem:[#allocation3 + $0x68] sm:$0xf]
        %v4472 = vld [vmem:[#allocation3 + $0x6c] sm:$0xf]
        %v4473 = vld [vmem:[#allocation3 + $0x70] sm:$0xf]
        %v4474 = vld [vmem:[#allocation3 + $0x74] sm:$0xf]
        %v4475 = vld [vmem:[#allocation3 + $0x78] sm:$0xf]
        %v4476 = vld [vmem:[#allocation3 + $0x7c] sm:$0xf]
        %v4477 = vld [vmem:[#allocation3 + $0x80] sm:$0xf]
        %v4478 = vld [vmem:[#allocation3 + $0x84] sm:$0xf]
        %v4479 = vld [vmem:[#allocation3 + $0x88] sm:$0xf]
        %v4480 = vld [vmem:[#allocation3 + $0x8c] sm:$0xf]
        %v4481 = vld [vmem:[#allocation3 + $0x90] sm:$0xf]
        %v4482 = vld [vmem:[#allocation3 + $0x94] sm:$0xf]
        %v4483 = vld [vmem:[#allocation3 + $0x98] sm:$0xf]
        %v4484 = vld [vmem:[#allocation3 + $0x9c] sm:$0xf]
        %v4485 = vld [vmem:[#allocation3 + $0xa0] sm:$0xf]
        %v4486 = vld [vmem:[#allocation3 + $0xa4] sm:$0xf]
        %v4487 = vld [vmem:[#allocation3 + $0xa8] sm:$0xf]
        %v4488 = vld [vmem:[#allocation3 + $0xac] sm:$0xf]
        %v4489 = vld [vmem:[#allocation3 + $0xb0] sm:$0xf]
        %v4490 = vld [vmem:[#allocation3 + $0xb4] sm:$0x1]
        %s4491 = scalar_lea.vmem %s4, 96
        %v4492 = vld [vmem:[%s4491] sm:$0xf]
        %v4493 = vld [vmem:[%s4491 + $0x4] sm:$0xf]
        %v4494 = vld [vmem:[%s4491 + $0x8] sm:$0xf]
        %v4495 = vld [vmem:[%s4491 + $0xc] sm:$0xf]
        %v4496 = vld [vmem:[%s4491 + $0x10] sm:$0xf]
        %v4497 = vld [vmem:[%s4491 + $0x14] sm:$0xf]
        %v4498 = vld [vmem:[%s4491 + $0x18] sm:$0xf]
        %v4499 = vld [vmem:[%s4491 + $0x1c] sm:$0xf]
        %v4500 = vld [vmem:[%s4491 + $0x20] sm:$0xf]
        %v4501 = vld [vmem:[%s4491 + $0x24] sm:$0xf]
        %v4502 = vld [vmem:[%s4491 + $0x28] sm:$0xf]
        %v4503 = vld [vmem:[%s4491 + $0x2c] sm:$0xf]
        %v4546 = vunpack.c.l.b16 %v4449
        %v4547 = vunpack.c.l.b16 %v4450
        %v4548 = vunpack.c.l.b16 %v4451
        %v4549 = vunpack.c.l.b16 %v4452
        %v4550 = vunpack.c.l.b16 %v4453
        %v4551 = vunpack.c.l.b16 %v4454
        %v4552 = vunpack.c.l.b16 %v4455
        %v4553 = vunpack.c.l.b16 %v4456
        %v4554 = vunpack.c.l.b16 %v4457
        %v4555 = vunpack.c.l.b16 %v4458
        %v4556 = vunpack.c.l.b16 %v4459
        %v4557 = vunpack.c.l.b16 %v4460
        %v4558 = vunpack.c.l.b16 %v4461
        %v4559 = vunpack.c.l.b16 %v4462
        %v4560 = vunpack.c.l.b16 %v4463
        %v4561 = vunpack.c.l.b16 %v4464
        %v4562 = vunpack.c.l.b16 %v4465
        %v4563 = vunpack.c.l.b16 %v4466
        %v4564 = vunpack.c.l.b16 %v4467
        %v4565 = vunpack.c.l.b16 %v4468
        %v4566 = vunpack.c.l.b16 %v4469
        %v4567 = vunpack.c.l.b16 %v4470
        %v4568 = vunpack.c.l.b16 %v4471
        %v4569 = vunpack.c.l.b16 %v4472
        %v4570 = vunpack.c.l.b16 %v4473
        %v4571 = vunpack.c.l.b16 %v4474
        %v4572 = vunpack.c.l.b16 %v4475
        %v4573 = vunpack.c.l.b16 %v4476
        %v4574 = vunpack.c.l.b16 %v4477
        %v4575 = vunpack.c.l.b16 %v4478
        %v4576 = vunpack.c.l.b16 %v4479
        %v4577 = vunpack.c.l.b16 %v4480
        %v4578 = vunpack.c.l.b16 %v4481
        %v4579 = vunpack.c.l.b16 %v4482
        %v4580 = vunpack.c.l.b16 %v4483
        %v4581 = vunpack.c.l.b16 %v4484
        %v4582 = vunpack.c.l.b16 %v4485
        %v4583 = vunpack.c.l.b16 %v4486
        %v4584 = vunpack.c.l.b16 %v4487
        %v4585 = vunpack.c.l.b16 %v4488
        %v4586 = vunpack.c.l.b16 %v4489
        %v4587 = vunpack.c.l.b16 %v4490
        %v4588 = vpack.c.b16 %v4547, %v4546
        %v4589 = vpack.c.b16 %v4549, %v4548
        %v4590 = vpack.c.b16 %v4551, %v4550
        %v4591 = vpack.c.b16 %v4553, %v4552
        %v4592 = vpack.c.b16 %v4555, %v4554
        %v4593 = vpack.c.b16 %v4557, %v4556
        %v4594 = vpack.c.b16 %v4559, %v4558
        %v4595 = vpack.c.b16 %v4561, %v4560
        %v4596 = vpack.c.b16 %v4563, %v4562
        %v4597 = vpack.c.b16 %v4565, %v4564
        %v4598 = vpack.c.b16 %v4567, %v4566
        %v4599 = vpack.c.b16 %v4569, %v4568
        %v4600 = vpack.c.b16 %v4571, %v4570
        %v4601 = vpack.c.b16 %v4573, %v4572
        %v4602 = vpack.c.b16 %v4575, %v4574
        %v4603 = vpack.c.b16 %v4577, %v4576
        %v4604 = vpack.c.b16 %v4579, %v4578
        %v4605 = vpack.c.b16 %v4581, %v4580
        %v4606 = vpack.c.b16 %v4583, %v4582
        %v4607 = vpack.c.b16 %v4585, %v4584
        %v4608 = vpack.c.b16 %v4587, %v4586
        %v4610 = vshrl.u32 %v4588, 16
        %v4612 = vshll.u32 %v4588, 16
        %v4614 = vrot.slane %v4612, 1
        %v4615 = vor.u32 %v4610, %v4614
        %v4617 = vshll.u32 %v4589, 16
        %v4619 = vrot.slane %v4617, 1
        %v4620 = vsel %vm1573, %v4615, %v4619
        %v4621 = vshrl.u32 %v4589, 16
        %v4623 = vor.u32 %v4621, %v4619
        %v4625 = vshll.u32 %v4590, 16
        %v4627 = vrot.slane %v4625, 1
        %v4628 = vsel %vm1573, %v4623, %v4627
        %v4629 = vshrl.u32 %v4590, 16
        %v4631 = vor.u32 %v4629, %v4627
        %v4633 = vshll.u32 %v4591, 16
        %v4635 = vrot.slane %v4633, 1
        %v4636 = vsel %vm1573, %v4631, %v4635
        %v4637 = vshrl.u32 %v4591, 16
        %v4639 = vor.u32 %v4637, %v4635
        %v4641 = vshll.u32 %v4592, 16
        %v4643 = vrot.slane %v4641, 1
        %v4644 = vsel %vm1573, %v4639, %v4643
        %v4645 = vshrl.u32 %v4592, 16
        %v4647 = vor.u32 %v4645, %v4643
        %v4649 = vshll.u32 %v4593, 16
        %v4651 = vrot.slane %v4649, 1
        %v4652 = vsel %vm1573, %v4647, %v4651
        %v4653 = vshrl.u32 %v4593, 16
        %v4655 = vor.u32 %v4653, %v4651
        %v4657 = vshll.u32 %v4594, 16
        %v4659 = vrot.slane %v4657, 1
        %v4660 = vsel %vm1573, %v4655, %v4659
        %v4661 = vshrl.u32 %v4594, 16
        %v4663 = vor.u32 %v4661, %v4659
        %v4665 = vshll.u32 %v4595, 16
        %v4667 = vrot.slane %v4665, 1
        %v4668 = vsel %vm1573, %v4663, %v4667
        %v4669 = vshrl.u32 %v4595, 16
        %v4671 = vor.u32 %v4669, %v4667
        %v4673 = vshll.u32 %v4596, 16
        %v4675 = vrot.slane %v4673, 1
        %v4676 = vsel %vm1573, %v4671, %v4675
        %v4677 = vshrl.u32 %v4596, 16
        %v4679 = vor.u32 %v4677, %v4675
        %v4681 = vshll.u32 %v4597, 16
        %v4683 = vrot.slane %v4681, 1
        %v4684 = vsel %vm1573, %v4679, %v4683
        %v4685 = vshrl.u32 %v4597, 16
        %v4687 = vor.u32 %v4685, %v4683
        %v4689 = vshll.u32 %v4598, 16
        %v4691 = vrot.slane %v4689, 1
        %v4692 = vsel %vm1573, %v4687, %v4691
        %v4693 = vshrl.u32 %v4598, 16
        %v4695 = vor.u32 %v4693, %v4691
        %v4697 = vshll.u32 %v4599, 16
        %v4699 = vrot.slane %v4697, 1
        %v4700 = vsel %vm1573, %v4695, %v4699
        %v4701 = vshrl.u32 %v4599, 16
        %v4703 = vor.u32 %v4701, %v4699
        %v4705 = vshll.u32 %v4600, 16
        %v4707 = vrot.slane %v4705, 1
        %v4708 = vsel %vm1573, %v4703, %v4707
        %v4709 = vshrl.u32 %v4600, 16
        %v4711 = vor.u32 %v4709, %v4707
        %v4713 = vshll.u32 %v4601, 16
        %v4715 = vrot.slane %v4713, 1
        %v4716 = vsel %vm1573, %v4711, %v4715
        %v4717 = vshrl.u32 %v4601, 16
        %v4719 = vor.u32 %v4717, %v4715
        %v4721 = vshll.u32 %v4602, 16
        %v4723 = vrot.slane %v4721, 1
        %v4724 = vsel %vm1573, %v4719, %v4723
        %v4725 = vshrl.u32 %v4602, 16
        %v4727 = vor.u32 %v4725, %v4723
        %v4729 = vshll.u32 %v4603, 16
        %v4731 = vrot.slane %v4729, 1
        %v4732 = vsel %vm1573, %v4727, %v4731
        %v4733 = vshrl.u32 %v4603, 16
        %v4735 = vor.u32 %v4733, %v4731
        %v4737 = vshll.u32 %v4604, 16
        %v4739 = vrot.slane %v4737, 1
        %v4740 = vsel %vm1573, %v4735, %v4739
        %v4741 = vshrl.u32 %v4604, 16
        %v4743 = vor.u32 %v4741, %v4739
        %v4745 = vshll.u32 %v4605, 16
        %v4747 = vrot.slane %v4745, 1
        %v4748 = vsel %vm1573, %v4743, %v4747
        %v4749 = vshrl.u32 %v4605, 16
        %v4751 = vor.u32 %v4749, %v4747
        %v4753 = vshll.u32 %v4606, 16
        %v4755 = vrot.slane %v4753, 1
        %v4756 = vsel %vm1573, %v4751, %v4755
        %v4757 = vshrl.u32 %v4606, 16
        %v4759 = vor.u32 %v4757, %v4755
        %v4761 = vshll.u32 %v4607, 16
        %v4763 = vrot.slane %v4761, 1
        %v4764 = vsel %vm1573, %v4759, %v4763
        %v4765 = vshrl.u32 %v4607, 16
        %v4767 = vor.u32 %v4765, %v4763
        %v4769 = vshll.u32 %v4608, 16
        %v4771 = vrot.slane %v4769, 1
        %v4772 = vsel %vm1573, %v4767, %v4771
        %v4773 = vshrl.u32 %v4608, 16
        %v4775 = vor.u32 %v4773, %v4771
        %v4788 = vunpack.c.l.b16 %v4492
        %v4789 = vunpack.c.l.b16 %v4493
        %v4790 = vunpack.c.l.b16 %v4494
        %v4791 = vunpack.c.l.b16 %v4495
        %v4792 = vunpack.c.l.b16 %v4496
        %v4793 = vunpack.c.l.b16 %v4497
        %v4794 = vunpack.c.l.b16 %v4498
        %v4795 = vunpack.c.l.b16 %v4499
        %v4796 = vunpack.c.l.b16 %v4500
        %v4797 = vunpack.c.l.b16 %v4501
        %v4798 = vunpack.c.l.b16 %v4502
        %v4799 = vunpack.c.l.b16 %v4503
        %v4800 = vpack.c.b16 %v4789, %v4788
        %v4801 = vpack.c.b16 %v4791, %v4790
        %v4802 = vpack.c.b16 %v4793, %v4792
        %v4803 = vpack.c.b16 %v4795, %v4794
        %v4804 = vpack.c.b16 %v4797, %v4796
        %v4805 = vpack.c.b16 %v4799, %v4798
        %v4813 = vsel %vm3675, %v4620, 0
        %v4816 = vsel %vm3675, %v4628, 0
        %v4819 = vsel %vm3675, %v4636, 0
        %v4822 = vsel %vm3675, %v4644, 0
        %v4825 = vsel %vm3675, %v4652, 0
        %v4828 = vsel %vm3675, %v4660, 0
        %v4831 = vsel %vm3675, %v4668, 0
        %v4834 = vsel %vm3675, %v4676, 0
        %v4837 = vsel %vm3675, %v4684, 0
        %v4840 = vsel %vm3675, %v4692, 0
        %v4843 = vsel %vm3675, %v4700, 0
        %v4846 = vsel %vm3675, %v4708, 0
        %v4849 = vsel %vm3675, %v4716, 0
        %v4852 = vsel %vm3675, %v4724, 0
        %v4855 = vsel %vm3675, %v4732, 0
        %v4858 = vsel %vm3675, %v4740, 0
        %v4861 = vsel %vm3675, %v4748, 0
        %v4864 = vsel %vm3675, %v4756, 0
        %v4867 = vsel %vm3675, %v4764, 0
        %v4870 = vsel %vm3675, %v4772, 0
        %v4873 = vsel %vm3675, %v4775, 0
        %4875 = vmatprep.subr.bf16.mxu0 0
        %4876 = vmatpush1.bf16.msra.mxu0 %v4800
        %4877 = vmatprep.subr.bf16.mxu0 0
        %4878 = vmatpush1.bf16.msra.mxu0 %v4801
        %4879 = vmatprep.subr.bf16.mxu0 0
        %4880 = vmatpush1.bf16.msra.mxu0 %v4802
        %4881 = vmatprep.subr.bf16.mxu0 0
        %4882 = vmatpush1.bf16.msra.mxu0 %v4803
        %4883 = vmatprep.subr.bf16.mxu0 0
        %4884 = vmatpush1.bf16.msra.mxu0 %v4804
        %4885 = vmatprep.subr.bf16.mxu0 0
        %4886 = vmatpush1.bf16.msra.mxu0 %v4805
        %4887 = vmatprep.subr.bf16.mxu0 0
        %4888 = vmatpush1.bf16.msra.mxu0 0
        %4889 = vmatprep.subr.bf16.mxu0 0
        %4890 = vmatpush1.bf16.msra.mxu0 0
        %4891 = vmatprep.subr.bf16.mxu0 0
        %4892 = vmatpush1.bf16.msra.mxu0 0
        %4893 = vmatprep.subr.bf16.mxu0 0
        %4894 = vmatpush1.bf16.msra.mxu0 0
        %4895 = vmatprep.subr.bf16.mxu0 0
        %4896 = vmatpush1.bf16.msra.mxu0 0
        %4897 = vmatprep.subr.bf16.mxu0 0
        %4898 = vmatpush1.bf16.msra.mxu0 0
        %4899 = vmatprep.subr.bf16.mxu0 0
        %4900 = vmatpush1.bf16.msra.mxu0 0
        %4901 = vmatprep.subr.bf16.mxu0 0
        %4902 = vmatpush1.bf16.msra.mxu0 0
        %4903 = vmatprep.subr.bf16.mxu0 0
        %4904 = vmatpush1.bf16.msra.mxu0 0
        %4905 = vmatprep.subr.bf16.mxu0 0
        %4906 = vmatpush1.bf16.msra.mxu0 0
        %4907 = vmatprep.mubr.bf16.mxu0 0
        %4908 = vmatmul.mubr.bf16.gmra.mrb[0].mxu0 %v4813
        %v4909 = vpop.f32.mrb[0].mxu0
        %v4910 = vadd.f32 0.0, %v4909
        %v4911 = vpop.f32.mrb[0].mxu0
        %v4912 = vpop.f32.mrb[0].mxu0
        %v4913 = vadd.f32 0.0, %v4912
        %v4914 = vpop.f32.mrb[0].mxu0
        %4915 = vmatprep.mubr.bf16.mxu0 0
        %4916 = vmatmul.mubr.bf16.gmra.mrb[0].mxu0 %v4816
        %v4917 = vpop.f32.mrb[0].mxu0
        %v4918 = vadd.f32 0.0, %v4917
        %v4919 = vpop.f32.mrb[0].mxu0
        %v4920 = vpop.f32.mrb[0].mxu0
        %v4921 = vadd.f32 0.0, %v4920
        %v4922 = vpop.f32.mrb[0].mxu0
        %4923 = vmatprep.mubr.bf16.mxu0 0
        %4924 = vmatmul.mubr.bf16.gmra.mrb[0].mxu0 %v4819
        %v4925 = vpop.f32.mrb[0].mxu0
        %v4926 = vadd.f32 0.0, %v4925
        %v4927 = vpop.f32.mrb[0].mxu0
        %v4928 = vpop.f32.mrb[0].mxu0
        %v4929 = vadd.f32 0.0, %v4928
        %v4930 = vpop.f32.mrb[0].mxu0
        %4931 = vmatprep.mubr.bf16.mxu0 0
        %4932 = vmatmul.mubr.bf16.gmra.mrb[0].mxu0 %v4822
        %v4933 = vpop.f32.mrb[0].mxu0
        %v4934 = vadd.f32 0.0, %v4933
        %v4935 = vpop.f32.mrb[0].mxu0
        %v4936 = vpop.f32.mrb[0].mxu0
        %v4937 = vadd.f32 0.0, %v4936
        %v4938 = vpop.f32.mrb[0].mxu0
        %4939 = vmatprep.mubr.bf16.mxu0 0
        %4940 = vmatmul.mubr.bf16.gmra.mrb[0].mxu0 %v4825
        %v4941 = vpop.f32.mrb[0].mxu0
        %v4942 = vadd.f32 0.0, %v4941
        %v4943 = vpop.f32.mrb[0].mxu0
        %v4944 = vpop.f32.mrb[0].mxu0
        %v4945 = vadd.f32 0.0, %v4944
        %v4946 = vpop.f32.mrb[0].mxu0
        %4947 = vmatprep.mubr.bf16.mxu0 0
        %4948 = vmatmul.mubr.bf16.gmra.mrb[0].mxu0 %v4828
        %v4949 = vpop.f32.mrb[0].mxu0
        %v4950 = vadd.f32 0.0, %v4949
        %v4951 = vpop.f32.mrb[0].mxu0
        %v4952 = vpop.f32.mrb[0].mxu0
        %v4953 = vadd.f32 0.0, %v4952
        %v4954 = vpop.f32.mrb[0].mxu0
        %4955 = vmatprep.mubr.bf16.mxu0 0
        %4956 = vmatmul.mubr.bf16.gmra.mrb[0].mxu0 %v4831
        %v4957 = vpop.f32.mrb[0].mxu0
        %v4958 = vadd.f32 0.0, %v4957
        %v4959 = vpop.f32.mrb[0].mxu0
        %v4960 = vpop.f32.mrb[0].mxu0
        %v4961 = vadd.f32 0.0, %v4960
        %v4962 = vpop.f32.mrb[0].mxu0
        %4963 = vmatprep.mubr.bf16.mxu0 0
        %4964 = vmatmul.mubr.bf16.gmra.mrb[0].mxu0 %v4834
        %v4965 = vpop.f32.mrb[0].mxu0
        %v4966 = vadd.f32 0.0, %v4965
        %v4967 = vpop.f32.mrb[0].mxu0
        %v4968 = vpop.f32.mrb[0].mxu0
        %v4969 = vadd.f32 0.0, %v4968
        %v4970 = vpop.f32.mrb[0].mxu0
        %4971 = vmatprep.mubr.bf16.mxu0 0
        %4972 = vmatmul.mubr.bf16.gmra.mrb[0].mxu0 %v4837
        %v4973 = vpop.f32.mrb[0].mxu0
        %v4974 = vadd.f32 0.0, %v4973
        %v4975 = vpop.f32.mrb[0].mxu0
        %v4976 = vpop.f32.mrb[0].mxu0
        %v4977 = vadd.f32 0.0, %v4976
        %v4978 = vpop.f32.mrb[0].mxu0
        %4979 = vmatprep.mubr.bf16.mxu0 0
        %4980 = vmatmul.mubr.bf16.gmra.mrb[0].mxu0 %v4840
        %v4981 = vpop.f32.mrb[0].mxu0
        %v4982 = vadd.f32 0.0, %v4981
        %v4983 = vpop.f32.mrb[0].mxu0
        %v4984 = vpop.f32.mrb[0].mxu0
        %v4985 = vadd.f32 0.0, %v4984
        %v4986 = vpop.f32.mrb[0].mxu0
        %4987 = vmatprep.mubr.bf16.mxu0 0
        %4988 = vmatmul.mubr.bf16.gmra.mrb[0].mxu0 %v4843
        %v4989 = vpop.f32.mrb[0].mxu0
        %v4990 = vadd.f32 0.0, %v4989
        %v4991 = vpop.f32.mrb[0].mxu0
        %v4992 = vpop.f32.mrb[0].mxu0
        %v4993 = vadd.f32 0.0, %v4992
        %v4994 = vpop.f32.mrb[0].mxu0
        %4995 = vmatprep.mubr.bf16.mxu0 0
        %4996 = vmatmul.mubr.bf16.gmra.mrb[0].mxu0 %v4846
        %v4997 = vpop.f32.mrb[0].mxu0
        %v4998 = vadd.f32 0.0, %v4997
        %v4999 = vpop.f32.mrb[0].mxu0
        %v5000 = vpop.f32.mrb[0].mxu0
        %v5001 = vadd.f32 0.0, %v5000
        %v5002 = vpop.f32.mrb[0].mxu0
        %5003 = vmatprep.mubr.bf16.mxu0 0
        %5004 = vmatmul.mubr.bf16.gmra.mrb[0].mxu0 %v4849
        %v5005 = vpop.f32.mrb[0].mxu0
        %v5006 = vadd.f32 0.0, %v5005
        %v5007 = vpop.f32.mrb[0].mxu0
        %v5008 = vpop.f32.mrb[0].mxu0
        %v5009 = vadd.f32 0.0, %v5008
        %v5010 = vpop.f32.mrb[0].mxu0
        %5011 = vmatprep.mubr.bf16.mxu0 0
        %5012 = vmatmul.mubr.bf16.gmra.mrb[0].mxu0 %v4852
        %v5013 = vpop.f32.mrb[0].mxu0
        %v5014 = vadd.f32 0.0, %v5013
        %v5015 = vpop.f32.mrb[0].mxu0
        %v5016 = vpop.f32.mrb[0].mxu0
        %v5017 = vadd.f32 0.0, %v5016
        %v5018 = vpop.f32.mrb[0].mxu0
        %5019 = vmatprep.mubr.bf16.mxu0 0
        %5020 = vmatmul.mubr.bf16.gmra.mrb[0].mxu0 %v4855
        %v5021 = vpop.f32.mrb[0].mxu0
        %v5022 = vadd.f32 0.0, %v5021
        %v5023 = vpop.f32.mrb[0].mxu0
        %v5024 = vpop.f32.mrb[0].mxu0
        %v5025 = vadd.f32 0.0, %v5024
        %v5026 = vpop.f32.mrb[0].mxu0
        %5027 = vmatprep.mubr.bf16.mxu0 0
        %5028 = vmatmul.mubr.bf16.gmra.mrb[0].mxu0 %v4858
        %v5029 = vpop.f32.mrb[0].mxu0
        %v5030 = vadd.f32 0.0, %v5029
        %v5031 = vpop.f32.mrb[0].mxu0
        %v5032 = vpop.f32.mrb[0].mxu0
        %v5033 = vadd.f32 0.0, %v5032
        %v5034 = vpop.f32.mrb[0].mxu0
        %5035 = vmatprep.mubr.bf16.mxu0 0
        %5036 = vmatmul.mubr.bf16.gmra.mrb[0].mxu0 %v4861
        %v5037 = vpop.f32.mrb[0].mxu0
        %v5038 = vadd.f32 0.0, %v5037
        %v5039 = vpop.f32.mrb[0].mxu0
        %v5040 = vpop.f32.mrb[0].mxu0
        %v5041 = vadd.f32 0.0, %v5040
        %v5042 = vpop.f32.mrb[0].mxu0
        %5043 = vmatprep.mubr.bf16.mxu0 0
        %5044 = vmatmul.mubr.bf16.gmra.mrb[0].mxu0 %v4864
        %v5045 = vpop.f32.mrb[0].mxu0
        %v5046 = vadd.f32 0.0, %v5045
        %v5047 = vpop.f32.mrb[0].mxu0
        %v5048 = vpop.f32.mrb[0].mxu0
        %v5049 = vadd.f32 0.0, %v5048
        %v5050 = vpop.f32.mrb[0].mxu0
        %5051 = vmatprep.mubr.bf16.mxu0 0
        %5052 = vmatmul.mubr.bf16.gmra.mrb[0].mxu0 %v4867
        %v5053 = vpop.f32.mrb[0].mxu0
        %v5054 = vadd.f32 0.0, %v5053
        %v5055 = vpop.f32.mrb[0].mxu0
        %v5056 = vpop.f32.mrb[0].mxu0
        %v5057 = vadd.f32 0.0, %v5056
        %v5058 = vpop.f32.mrb[0].mxu0
        %5059 = vmatprep.mubr.bf16.mxu0 0
        %5060 = vmatmul.mubr.bf16.gmra.mrb[0].mxu0 %v4870
        %v5061 = vpop.f32.mrb[0].mxu0
        %v5062 = vadd.f32 0.0, %v5061
        %v5063 = vpop.f32.mrb[0].mxu0
        %v5064 = vpop.f32.mrb[0].mxu0
        %v5065 = vadd.f32 0.0, %v5064
        %v5066 = vpop.f32.mrb[0].mxu0
        %5067 = vmatprep.mubr.bf16.mxu0 0
        %5068 = vmatmul.mubr.bf16.gmra.mrb[0].mxu0 %v4873
        %v5069 = vpop.f32.mrb[0].mxu0
        %v5070 = vadd.f32 0.0, %v5069
        %v5071 = vpop.f32.mrb[0].mxu0
        %v5072 = vpop.f32.mrb[0].mxu0
        %v5073 = vpop.f32.mrb[0].mxu0
        %5074 = vdwg.mxu0
        %v5075 = vadd.f32 %v4284, %v4910
        %v5076 = vadd.f32 %v4287, %v4913
        %v5077 = vadd.f32 %v4292, %v4918
        %v5078 = vadd.f32 %v4295, %v4921
        %v5079 = vadd.f32 %v4300, %v4926
        %v5080 = vadd.f32 %v4303, %v4929
        %v5081 = vadd.f32 %v4308, %v4934
        %v5082 = vadd.f32 %v4311, %v4937
        %v5083 = vadd.f32 %v4316, %v4942
        %v5084 = vadd.f32 %v4319, %v4945
        %v5085 = vadd.f32 %v4324, %v4950
        %v5086 = vadd.f32 %v4327, %v4953
        %v5087 = vadd.f32 %v4332, %v4958
        %v5088 = vadd.f32 %v4335, %v4961
        %v5089 = vadd.f32 %v4340, %v4966
        %v5090 = vadd.f32 %v4343, %v4969
        %v5091 = vadd.f32 %v4348, %v4974
        %v5092 = vadd.f32 %v4351, %v4977
        %v5093 = vadd.f32 %v4356, %v4982
        %v5094 = vadd.f32 %v4359, %v4985
        %v5095 = vadd.f32 %v4364, %v4990
        %v5096 = vadd.f32 %v4367, %v4993
        %v5097 = vadd.f32 %v4372, %v4998
        %v5098 = vadd.f32 %v4375, %v5001
        %v5099 = vadd.f32 %v4380, %v5006
        %v5100 = vadd.f32 %v4383, %v5009
        %v5101 = vadd.f32 %v4388, %v5014
        %v5102 = vadd.f32 %v4391, %v5017
        %v5103 = vadd.f32 %v4396, %v5022
        %v5104 = vadd.f32 %v4399, %v5025
        %v5105 = vadd.f32 %v4404, %v5030
        %v5106 = vadd.f32 %v4407, %v5033
        %v5107 = vadd.f32 %v4412, %v5038
        %v5108 = vadd.f32 %v4415, %v5041
        %v5109 = vadd.f32 %v4420, %v5046
        %v5110 = vadd.f32 %v4423, %v5049
        %v5111 = vadd.f32 %v4428, %v5054
        %v5112 = vadd.f32 %v4431, %v5057
        %v5113 = vadd.f32 %v4436, %v5062
        %v5114 = vadd.f32 %v4439, %v5065
        %v5115 = vadd.f32 %v4444, %v5070
        %v5116 = vld [vmem:[%s5] sm:$0x1]
        %v5118 = vlaneseq
        %v5119 = vshrl.u32 %v5118, 7
        %v5120 = vsub.s32 0, %v5119
        %v5121 = vrot.slane %v5116, %v5120
        %v5123 = vadd.f32 %v5075, %v5121
        %v5124 = vadd.f32 %v5076, %v5121
        %v5125 = vadd.f32 %v5077, %v5121
        %v5126 = vadd.f32 %v5078, %v5121
        %v5127 = vadd.f32 %v5079, %v5121
        %v5128 = vadd.f32 %v5080, %v5121
        %v5129 = vadd.f32 %v5081, %v5121
        %v5130 = vadd.f32 %v5082, %v5121
        %v5131 = vadd.f32 %v5083, %v5121
        %v5132 = vadd.f32 %v5084, %v5121
        %v5133 = vadd.f32 %v5085, %v5121
        %v5134 = vadd.f32 %v5086, %v5121
        %v5135 = vadd.f32 %v5087, %v5121
        %v5136 = vadd.f32 %v5088, %v5121
        %v5137 = vadd.f32 %v5089, %v5121
        %v5138 = vadd.f32 %v5090, %v5121
        %v5139 = vadd.f32 %v5091, %v5121
        %v5140 = vadd.f32 %v5092, %v5121
        %v5141 = vadd.f32 %v5093, %v5121
        %v5142 = vadd.f32 %v5094, %v5121
        %v5143 = vadd.f32 %v5095, %v5121
        %v5144 = vadd.f32 %v5096, %v5121
        %v5145 = vadd.f32 %v5097, %v5121
        %v5146 = vadd.f32 %v5098, %v5121
        %v5147 = vadd.f32 %v5099, %v5121
        %v5148 = vadd.f32 %v5100, %v5121
        %v5149 = vadd.f32 %v5101, %v5121
        %v5150 = vadd.f32 %v5102, %v5121
        %v5151 = vadd.f32 %v5103, %v5121
        %v5152 = vadd.f32 %v5104, %v5121
        %v5153 = vadd.f32 %v5105, %v5121
        %v5154 = vadd.f32 %v5106, %v5121
        %v5155 = vadd.f32 %v5107, %v5121
        %v5156 = vadd.f32 %v5108, %v5121
        %v5157 = vadd.f32 %v5109, %v5121
        %v5158 = vadd.f32 %v5110, %v5121
        %v5159 = vadd.f32 %v5111, %v5121
        %v5160 = vadd.f32 %v5112, %v5121
        %v5161 = vadd.f32 %v5113, %v5121
        %v5162 = vadd.f32 %v5114, %v5121
        %v5163 = vadd.f32 %v5115, %v5121
        %v5164 = vmax.f32 %v5123, 0.0
        %v5165 = vmax.f32 %v5124, 0.0
        %v5166 = vmax.f32 %v5125, 0.0
        %v5167 = vmax.f32 %v5126, 0.0
        %v5168 = vmax.f32 %v5127, 0.0
        %v5169 = vmax.f32 %v5128, 0.0
        %v5170 = vmax.f32 %v5129, 0.0
        %v5171 = vmax.f32 %v5130, 0.0
        %v5172 = vmax.f32 %v5131, 0.0
        %v5173 = vmax.f32 %v5132, 0.0
        %v5174 = vmax.f32 %v5133, 0.0
        %v5175 = vmax.f32 %v5134, 0.0
        %v5176 = vmax.f32 %v5135, 0.0
        %v5177 = vmax.f32 %v5136, 0.0
        %v5178 = vmax.f32 %v5137, 0.0
        %v5179 = vmax.f32 %v5138, 0.0
        %v5180 = vmax.f32 %v5139, 0.0
        %v5181 = vmax.f32 %v5140, 0.0
        %v5182 = vmax.f32 %v5141, 0.0
        %v5183 = vmax.f32 %v5142, 0.0
        %v5184 = vmax.f32 %v5143, 0.0
        %v5185 = vmax.f32 %v5144, 0.0
        %v5186 = vmax.f32 %v5145, 0.0
        %v5187 = vmax.f32 %v5146, 0.0
        %v5188 = vmax.f32 %v5147, 0.0
        %v5189 = vmax.f32 %v5148, 0.0
        %v5190 = vmax.f32 %v5149, 0.0
        %v5191 = vmax.f32 %v5150, 0.0
        %v5192 = vmax.f32 %v5151, 0.0
        %v5193 = vmax.f32 %v5152, 0.0
        %v5194 = vmax.f32 %v5153, 0.0
        %v5195 = vmax.f32 %v5154, 0.0
        %v5196 = vmax.f32 %v5155, 0.0
        %v5197 = vmax.f32 %v5156, 0.0
        %v5198 = vmax.f32 %v5157, 0.0
        %v5199 = vmax.f32 %v5158, 0.0
        %v5200 = vmax.f32 %v5159, 0.0
        %v5201 = vmax.f32 %v5160, 0.0
        %v5202 = vmax.f32 %v5161, 0.0
        %v5203 = vmax.f32 %v5162, 0.0
        %v5204 = vmax.f32 %v5163, 0.0
        %v5205 = vpack.c.bf16 %v5165, %v5164
        %v5206 = vpack.c.bf16 %v5167, %v5166
        %v5207 = vpack.c.bf16 %v5169, %v5168
        %v5208 = vpack.c.bf16 %v5171, %v5170
        %v5209 = vpack.c.bf16 %v5173, %v5172
        %v5210 = vpack.c.bf16 %v5175, %v5174
        %v5211 = vpack.c.bf16 %v5177, %v5176
        %v5212 = vpack.c.bf16 %v5179, %v5178
        %v5213 = vpack.c.bf16 %v5181, %v5180
        %v5214 = vpack.c.bf16 %v5183, %v5182
        %v5215 = vpack.c.bf16 %v5185, %v5184
        %v5216 = vpack.c.bf16 %v5187, %v5186
        %v5217 = vpack.c.bf16 %v5189, %v5188
        %v5218 = vpack.c.bf16 %v5191, %v5190
        %v5219 = vpack.c.bf16 %v5193, %v5192
        %v5220 = vpack.c.bf16 %v5195, %v5194
        %v5221 = vpack.c.bf16 %v5197, %v5196
        %v5222 = vpack.c.bf16 %v5199, %v5198
        %v5223 = vpack.c.bf16 %v5201, %v5200
        %v5224 = vpack.c.bf16 %v5203, %v5202
        %v5225 = vpack.c.bf16 %v5204, %v5204
        %v5226 = vld [vmem:[%s6] sm:$0xf]
        %v5227 = vld [vmem:[%s6 + $0x4] sm:$0xf]
        %v5228 = vld [vmem:[%s7] sm:$0x1]
        %v5230 = vlaneseq
        %v5231 = vshrl.u32 %v5230, 7
        %v5232 = vsub.s32 0, %v5231
        %v5233 = vrot.slane %v5228, %v5232
        %v5237 = vunpack.c.l.b16 %v5226
        %v5238 = vunpack.c.l.b16 %v5227
        %v5239 = vpack.c.b16 %v5238, %v5237
        %vm5241 = vcmask 130048
        %v5243 = vsel %vm5241, %v5205, 0
        %v5246 = vsel %vm5241, %v5206, 0
        %v5249 = vsel %vm5241, %v5207, 0
        %v5252 = vsel %vm5241, %v5208, 0
        %v5255 = vsel %vm5241, %v5209, 0
        %v5258 = vsel %vm5241, %v5210, 0
        %v5261 = vsel %vm5241, %v5211, 0
        %v5264 = vsel %vm5241, %v5212, 0
        %v5267 = vsel %vm5241, %v5213, 0
        %v5270 = vsel %vm5241, %v5214, 0
        %v5273 = vsel %vm5241, %v5215, 0
        %v5276 = vsel %vm5241, %v5216, 0
        %v5279 = vsel %vm5241, %v5217, 0
        %v5282 = vsel %vm5241, %v5218, 0
        %v5285 = vsel %vm5241, %v5219, 0
        %v5288 = vsel %vm5241, %v5220, 0
        %v5291 = vsel %vm5241, %v5221, 0
        %v5294 = vsel %vm5241, %v5222, 0
        %v5297 = vsel %vm5241, %v5223, 0
        %v5300 = vsel %vm5241, %v5224, 0
        %v5303 = vsel %vm5241, %v5225, 0
        %5305 = vmatprep.subr.bf16.mxu0 0
        %5306 = vmatpush1.bf16.msra.mxu0 %v5239
        %5307 = vmatprep.subr.bf16.mxu0 0
        %5308 = vmatpush1.bf16.msra.mxu0 0
        %5309 = vmatprep.subr.bf16.mxu0 0
        %5310 = vmatpush1.bf16.msra.mxu0 0
        %5311 = vmatprep.subr.bf16.mxu0 0
        %5312 = vmatpush1.bf16.msra.mxu0 0
        %5313 = vmatprep.subr.bf16.mxu0 0
        %5314 = vmatpush1.bf16.msra.mxu0 0
        %5315 = vmatprep.subr.bf16.mxu0 0
        %5316 = vmatpush1.bf16.msra.mxu0 0
        %5317 = vmatprep.subr.bf16.mxu0 0
        %5318 = vmatpush1.bf16.msra.mxu0 0
        %5319 = vmatprep.subr.bf16.mxu0 0
        %5320 = vmatpush1.bf16.msra.mxu0 0
        %5321 = vmatprep.subr.bf16.mxu0 0
        %5322 = vmatpush1.bf16.msra.mxu0 0
        %5323 = vmatprep.subr.bf16.mxu0 0
        %5324 = vmatpush1.bf16.msra.mxu0 0
        %5325 = vmatprep.subr.bf16.mxu0 0
        %5326 = vmatpush1.bf16.msra.mxu0 0
        %5327 = vmatprep.subr.bf16.mxu0 0
        %5328 = vmatpush1.bf16.msra.mxu0 0
        %5329 = vmatprep.subr.bf16.mxu0 0
        %5330 = vmatpush1.bf16.msra.mxu0 0
        %5331 = vmatprep.subr.bf16.mxu0 0
        %5332 = vmatpush1.bf16.msra.mxu0 0
        %5333 = vmatprep.subr.bf16.mxu0 0
        %5334 = vmatpush1.bf16.msra.mxu0 0
        %5335 = vmatprep.subr.bf16.mxu0 0
        %5336 = vmatpush1.bf16.msra.mxu0 0
        %5337 = vmatprep.mubr.bf16.mxu0 0
        %5338 = vmatmul.mubr.bf16.gmra.mrb[0].mxu0 %v5243
        %v5339 = vpop.f32.mrb[0].mxu0
        %v5340 = vadd.f32 %v5233, %v5339
        %v5341 = vpop.f32.mrb[0].mxu0
        %v5342 = vpop.f32.mrb[0].mxu0
        %v5343 = vadd.f32 %v5233, %v5342
        %v5344 = vpop.f32.mrb[0].mxu0
        %5345 = vmatprep.mubr.bf16.mxu0 0
        %5346 = vmatmul.mubr.bf16.gmra.mrb[0].mxu0 %v5246
        %v5347 = vpop.f32.mrb[0].mxu0
        %v5348 = vadd.f32 %v5233, %v5347
        %v5349 = vpop.f32.mrb[0].mxu0
        %v5350 = vpop.f32.mrb[0].mxu0
        %v5351 = vadd.f32 %v5233, %v5350
        %v5352 = vpop.f32.mrb[0].mxu0
        %5353 = vmatprep.mubr.bf16.mxu0 0
        %5354 = vmatmul.mubr.bf16.gmra.mrb[0].mxu0 %v5249
        %v5355 = vpop.f32.mrb[0].mxu0
        %v5356 = vadd.f32 %v5233, %v5355
        %v5357 = vpop.f32.mrb[0].mxu0
        %v5358 = vpop.f32.mrb[0].mxu0
        %v5359 = vadd.f32 %v5233, %v5358
        %v5360 = vpop.f32.mrb[0].mxu0
        %5361 = vmatprep.mubr.bf16.mxu0 0
        %5362 = vmatmul.mubr.bf16.gmra.mrb[0].mxu0 %v5252
        %v5363 = vpop.f32.mrb[0].mxu0
        %v5364 = vadd.f32 %v5233, %v5363
        %v5365 = vpop.f32.mrb[0].mxu0
        %v5366 = vpop.f32.mrb[0].mxu0
        %v5367 = vadd.f32 %v5233, %v5366
        %v5368 = vpop.f32.mrb[0].mxu0
        %5369 = vmatprep.mubr.bf16.mxu0 0
        %5370 = vmatmul.mubr.bf16.gmra.mrb[0].mxu0 %v5255
        %v5371 = vpop.f32.mrb[0].mxu0
        %v5372 = vadd.f32 %v5233, %v5371
        %v5373 = vpop.f32.mrb[0].mxu0
        %v5374 = vpop.f32.mrb[0].mxu0
        %v5375 = vadd.f32 %v5233, %v5374
        %v5376 = vpop.f32.mrb[0].mxu0
        %5377 = vmatprep.mubr.bf16.mxu0 0
        %5378 = vmatmul.mubr.bf16.gmra.mrb[0].mxu0 %v5258
        %v5379 = vpop.f32.mrb[0].mxu0
        %v5380 = vadd.f32 %v5233, %v5379
        %v5381 = vpop.f32.mrb[0].mxu0
        %v5382 = vpop.f32.mrb[0].mxu0
        %v5383 = vadd.f32 %v5233, %v5382
        %v5384 = vpop.f32.mrb[0].mxu0
        %5385 = vmatprep.mubr.bf16.mxu0 0
        %5386 = vmatmul.mubr.bf16.gmra.mrb[0].mxu0 %v5261
        %v5387 = vpop.f32.mrb[0].mxu0
        %v5388 = vadd.f32 %v5233, %v5387
        %v5389 = vpop.f32.mrb[0].mxu0
        %v5390 = vpop.f32.mrb[0].mxu0
        %v5391 = vadd.f32 %v5233, %v5390
        %v5392 = vpop.f32.mrb[0].mxu0
        %5393 = vmatprep.mubr.bf16.mxu0 0
        %5394 = vmatmul.mubr.bf16.gmra.mrb[0].mxu0 %v5264
        %v5395 = vpop.f32.mrb[0].mxu0
        %v5396 = vadd.f32 %v5233, %v5395
        %v5397 = vpop.f32.mrb[0].mxu0
        %v5398 = vpop.f32.mrb[0].mxu0
        %v5399 = vadd.f32 %v5233, %v5398
        %v5400 = vpop.f32.mrb[0].mxu0
        %5401 = vmatprep.mubr.bf16.mxu0 0
        %5402 = vmatmul.mubr.bf16.gmra.mrb[0].mxu0 %v5267
        %v5403 = vpop.f32.mrb[0].mxu0
        %v5404 = vadd.f32 %v5233, %v5403
        %v5405 = vpop.f32.mrb[0].mxu0
        %v5406 = vpop.f32.mrb[0].mxu0
        %v5407 = vadd.f32 %v5233, %v5406
        %v5408 = vpop.f32.mrb[0].mxu0
        %5409 = vmatprep.mubr.bf16.mxu0 0
        %5410 = vmatmul.mubr.bf16.gmra.mrb[0].mxu0 %v5270
        %v5411 = vpop.f32.mrb[0].mxu0
        %v5412 = vadd.f32 %v5233, %v5411
        %v5413 = vpop.f32.mrb[0].mxu0
        %v5414 = vpop.f32.mrb[0].mxu0
        %v5415 = vadd.f32 %v5233, %v5414
        %v5416 = vpop.f32.mrb[0].mxu0
        %5417 = vmatprep.mubr.bf16.mxu0 0
        %5418 = vmatmul.mubr.bf16.gmra.mrb[0].mxu0 %v5273
        %v5419 = vpop.f32.mrb[0].mxu0
        %v5420 = vadd.f32 %v5233, %v5419
        %v5421 = vpop.f32.mrb[0].mxu0
        %v5422 = vpop.f32.mrb[0].mxu0
        %v5423 = vadd.f32 %v5233, %v5422
        %v5424 = vpop.f32.mrb[0].mxu0
        %5425 = vmatprep.mubr.bf16.mxu0 0
        %5426 = vmatmul.mubr.bf16.gmra.mrb[0].mxu0 %v5276
        %v5427 = vpop.f32.mrb[0].mxu0
        %v5428 = vadd.f32 %v5233, %v5427
        %v5429 = vpop.f32.mrb[0].mxu0
        %v5430 = vpop.f32.mrb[0].mxu0
        %v5431 = vadd.f32 %v5233, %v5430
        %v5432 = vpop.f32.mrb[0].mxu0
        %5433 = vmatprep.mubr.bf16.mxu0 0
        %5434 = vmatmul.mubr.bf16.gmra.mrb[0].mxu0 %v5279
        %v5435 = vpop.f32.mrb[0].mxu0
        %v5436 = vadd.f32 %v5233, %v5435
        %v5437 = vpop.f32.mrb[0].mxu0
        %v5438 = vpop.f32.mrb[0].mxu0
        %v5439 = vadd.f32 %v5233, %v5438
        %v5440 = vpop.f32.mrb[0].mxu0
        %5441 = vmatprep.mubr.bf16.mxu0 0
        %5442 = vmatmul.mubr.bf16.gmra.mrb[0].mxu0 %v5282
        %v5443 = vpop.f32.mrb[0].mxu0
        %v5444 = vadd.f32 %v5233, %v5443
        %v5445 = vpop.f32.mrb[0].mxu0
        %v5446 = vpop.f32.mrb[0].mxu0
        %v5447 = vadd.f32 %v5233, %v5446
        %v5448 = vpop.f32.mrb[0].mxu0
        %5449 = vmatprep.mubr.bf16.mxu0 0
        %5450 = vmatmul.mubr.bf16.gmra.mrb[0].mxu0 %v5285
        %v5451 = vpop.f32.mrb[0].mxu0
        %v5452 = vadd.f32 %v5233, %v5451
        %v5453 = vpop.f32.mrb[0].mxu0
        %v5454 = vpop.f32.mrb[0].mxu0
        %v5455 = vadd.f32 %v5233, %v5454
        %v5456 = vpop.f32.mrb[0].mxu0
        %5457 = vmatprep.mubr.bf16.mxu0 0
        %5458 = vmatmul.mubr.bf16.gmra.mrb[0].mxu0 %v5288
        %v5459 = vpop.f32.mrb[0].mxu0
        %v5460 = vadd.f32 %v5233, %v5459
        %v5461 = vpop.f32.mrb[0].mxu0
        %v5462 = vpop.f32.mrb[0].mxu0
        %v5463 = vadd.f32 %v5233, %v5462
        %v5464 = vpop.f32.mrb[0].mxu0
        %5465 = vmatprep.mubr.bf16.mxu0 0
        %5466 = vmatmul.mubr.bf16.gmra.mrb[0].mxu0 %v5291
        %v5467 = vpop.f32.mrb[0].mxu0
        %v5468 = vadd.f32 %v5233, %v5467
        %v5469 = vpop.f32.mrb[0].mxu0
        %v5470 = vpop.f32.mrb[0].mxu0
        %v5471 = vadd.f32 %v5233, %v5470
        %v5472 = vpop.f32.mrb[0].mxu0
        %5473 = vmatprep.mubr.bf16.mxu0 0
        %5474 = vmatmul.mubr.bf16.gmra.mrb[0].mxu0 %v5294
        %v5475 = vpop.f32.mrb[0].mxu0
        %v5476 = vadd.f32 %v5233, %v5475
        %v5477 = vpop.f32.mrb[0].mxu0
        %v5478 = vpop.f32.mrb[0].mxu0
        %v5479 = vadd.f32 %v5233, %v5478
        %v5480 = vpop.f32.mrb[0].mxu0
        %5481 = vmatprep.mubr.bf16.mxu0 0
        %5482 = vmatmul.mubr.bf16.gmra.mrb[0].mxu0 %v5297
        %v5483 = vpop.f32.mrb[0].mxu0
        %v5484 = vadd.f32 %v5233, %v5483
        %v5485 = vpop.f32.mrb[0].mxu0
        %v5486 = vpop.f32.mrb[0].mxu0
        %v5487 = vadd.f32 %v5233, %v5486
        %v5488 = vpop.f32.mrb[0].mxu0
        %5489 = vmatprep.mubr.bf16.mxu0 0
        %5490 = vmatmul.mubr.bf16.gmra.mrb[0].mxu0 %v5300
        %v5491 = vpop.f32.mrb[0].mxu0
        %v5492 = vadd.f32 %v5233, %v5491
        %v5493 = vpop.f32.mrb[0].mxu0
        %v5494 = vpop.f32.mrb[0].mxu0
        %v5495 = vadd.f32 %v5233, %v5494
        %v5496 = vpop.f32.mrb[0].mxu0
        %5497 = vmatprep.mubr.bf16.mxu0 0
        %5498 = vmatmul.mubr.bf16.gmra.mrb[0].mxu0 %v5303
        %v5499 = vpop.f32.mrb[0].mxu0
        %v5500 = vadd.f32 %v5233, %v5499
        %v5501 = vpop.f32.mrb[0].mxu0
        %v5502 = vpop.f32.mrb[0].mxu0
        %v5503 = vpop.f32.mrb[0].mxu0
        %5504 = vdwg.mxu0
        %v5505 = vld [vmem:[#allocation2 + $0x20] sm:$0xff]
        %v5506 = vld [vmem:[#allocation2 + $0x28] sm:$0xff]
        %v5507 = vld [vmem:[#allocation2 + $0x30] sm:$0xff]
        %v5508 = vld [vmem:[#allocation2 + $0x38] sm:$0xff]
        %v5509 = vld [vmem:[#allocation2 + $0x40] sm:$0xff]
        %v5510 = vld [vmem:[#allocation2 + $0x48] sm:$0xff]
        %v5511 = vld [vmem:[#allocation2 + $0x50] sm:$0xff]
        %v5512 = vld [vmem:[#allocation2 + $0x58] sm:$0xff]
        %v5513 = vld [vmem:[#allocation2 + $0x60] sm:$0xff]
        %v5514 = vld [vmem:[#allocation2 + $0x68] sm:$0xff]
        %v5515 = vld [vmem:[#allocation2 + $0x70] sm:$0xff]
        %v5516 = vld [vmem:[#allocation2 + $0x78] sm:$0xff]
        %v5517 = vld [vmem:[#allocation2 + $0x80] sm:$0xff]
        %v5518 = vld [vmem:[#allocation2 + $0x88] sm:$0xff]
        %v5519 = vld [vmem:[#allocation2 + $0x90] sm:$0xff]
        %v5520 = vld [vmem:[#allocation2 + $0x98] sm:$0xff]
        %v5521 = vld [vmem:[#allocation2 + $0xa0] sm:$0xff]
        %v5522 = vld [vmem:[#allocation2 + $0xa8] sm:$0xff]
        %v5523 = vld [vmem:[#allocation2 + $0xb0] sm:$0xff]
        %v5524 = vld [vmem:[#allocation2 + $0xb8] sm:$0xff]
        %v5525 = vld [vmem:[#allocation2 + $0xc0] sm:$0xff]
        %v5526 = vld [vmem:[#allocation2 + $0xc8] sm:$0xff]
        %v5527 = vld [vmem:[#allocation2 + $0xd0] sm:$0xff]
        %v5528 = vld [vmem:[#allocation2 + $0xd8] sm:$0xff]
        %v5529 = vld [vmem:[#allocation2 + $0xe0] sm:$0xff]
        %v5530 = vld [vmem:[#allocation2 + $0xe8] sm:$0xff]
        %v5531 = vld [vmem:[#allocation2 + $0xf0] sm:$0xff]
        %v5532 = vld [vmem:[#allocation2 + $0xf8] sm:$0xff]
        %v5533 = vld [vmem:[#allocation2 + $0x100] sm:$0xff]
        %v5534 = vld [vmem:[#allocation2 + $0x108] sm:$0xff]
        %v5535 = vld [vmem:[#allocation2 + $0x110] sm:$0xff]
        %v5536 = vld [vmem:[#allocation2 + $0x118] sm:$0xff]
        %v5537 = vld [vmem:[#allocation2 + $0x120] sm:$0xff]
        %v5538 = vld [vmem:[#allocation2 + $0x128] sm:$0xff]
        %v5539 = vld [vmem:[#allocation2 + $0x130] sm:$0xff]
        %v5540 = vld [vmem:[#allocation2 + $0x138] sm:$0xff]
        %v5541 = vld [vmem:[#allocation2 + $0x140] sm:$0xff]
        %v5542 = vld [vmem:[#allocation2 + $0x148] sm:$0xff]
        %v5543 = vld [vmem:[#allocation2 + $0x150] sm:$0xff]
        %v5544 = vld [vmem:[#allocation2 + $0x158] sm:$0xff]
        %v5545 = vld [vmem:[#allocation2 + $0x160] sm:$0xff]
        %v5546 = vadd.f32 %v5505, %v5340
        %v5547 = vadd.f32 %v5506, %v5343
        %v5548 = vadd.f32 %v5507, %v5348
        %v5549 = vadd.f32 %v5508, %v5351
        %v5550 = vadd.f32 %v5509, %v5356
        %v5551 = vadd.f32 %v5510, %v5359
        %v5552 = vadd.f32 %v5511, %v5364
        %v5553 = vadd.f32 %v5512, %v5367
        %v5554 = vadd.f32 %v5513, %v5372
        %v5555 = vadd.f32 %v5514, %v5375
        %v5556 = vadd.f32 %v5515, %v5380
        %v5557 = vadd.f32 %v5516, %v5383
        %v5558 = vadd.f32 %v5517, %v5388
        %v5559 = vadd.f32 %v5518, %v5391
        %v5560 = vadd.f32 %v5519, %v5396
        %v5561 = vadd.f32 %v5520, %v5399
        %v5562 = vadd.f32 %v5521, %v5404
        %v5563 = vadd.f32 %v5522, %v5407
        %v5564 = vadd.f32 %v5523, %v5412
        %v5565 = vadd.f32 %v5524, %v5415
        %v5566 = vadd.f32 %v5525, %v5420
        %v5567 = vadd.f32 %v5526, %v5423
        %v5568 = vadd.f32 %v5527, %v5428
        %v5569 = vadd.f32 %v5528, %v5431
        %v5570 = vadd.f32 %v5529, %v5436
        %v5571 = vadd.f32 %v5530, %v5439
        %v5572 = vadd.f32 %v5531, %v5444
        %v5573 = vadd.f32 %v5532, %v5447
        %v5574 = vadd.f32 %v5533, %v5452
        %v5575 = vadd.f32 %v5534, %v5455
        %v5576 = vadd.f32 %v5535, %v5460
        %v5577 = vadd.f32 %v5536, %v5463
        %v5578 = vadd.f32 %v5537, %v5468
        %v5579 = vadd.f32 %v5538, %v5471
        %v5580 = vadd.f32 %v5539, %v5476
        %v5581 = vadd.f32 %v5540, %v5479
        %v5582 = vadd.f32 %v5541, %v5484
        %v5583 = vadd.f32 %v5542, %v5487
        %v5584 = vadd.f32 %v5543, %v5492
        %v5585 = vadd.f32 %v5544, %v5495
        %v5586 = vadd.f32 %v5545, %v5500
        %v5587 = vmul.f32 %v5546, %v2104
        %v5588 = vmul.f32 %v5547, %v2109
        %v5589 = vmul.f32 %v5548, %v2114
        %v5590 = vmul.f32 %v5549, %v2119
        %v5591 = vmul.f32 %v5550, %v2124
        %v5592 = vmul.f32 %v5551, %v2129
        %v5593 = vmul.f32 %v5552, %v2134
        %v5594 = vmul.f32 %v5553, %v2139
        %v5595 = vmul.f32 %v5554, %v2144
        %v5596 = vmul.f32 %v5555, %v2149
        %v5597 = vmul.f32 %v5556, %v2154
        %v5598 = vmul.f32 %v5557, %v2159
        %v5599 = vmul.f32 %v5558, %v2164
        %v5600 = vmul.f32 %v5559, %v2169
        %v5601 = vmul.f32 %v5560, %v2174
        %v5602 = vmul.f32 %v5561, %v2179
        %v5603 = vmul.f32 %v5562, %v2184
        %v5604 = vmul.f32 %v5563, %v2189
        %v5605 = vmul.f32 %v5564, %v2194
        %v5606 = vmul.f32 %v5565, %v2199
        %v5607 = vmul.f32 %v5566, %v2204
        %v5608 = vmul.f32 %v5567, %v2209
        %v5609 = vmul.f32 %v5568, %v2214
        %v5610 = vmul.f32 %v5569, %v2219
        %v5611 = vmul.f32 %v5570, %v2224
        %v5612 = vmul.f32 %v5571, %v2229
        %v5613 = vmul.f32 %v5572, %v2234
        %v5614 = vmul.f32 %v5573, %v2239
        %v5615 = vmul.f32 %v5574, %v2244
        %v5616 = vmul.f32 %v5575, %v2249
        %v5617 = vmul.f32 %v5576, %v2254
        %v5618 = vmul.f32 %v5577, %v2259
        %v5619 = vmul.f32 %v5578, %v2264
        %v5620 = vmul.f32 %v5579, %v2269
        %v5621 = vmul.f32 %v5580, %v2274
        %v5622 = vmul.f32 %v5581, %v2279
        %v5623 = vmul.f32 %v5582, %v2284
        %v5624 = vmul.f32 %v5583, %v2289
        %v5625 = vmul.f32 %v5584, %v2294
        %v5626 = vmul.f32 %v5585, %v2299
        %v5627 = vmul.f32 %v5586, %v2304
        %5628 = vst.msk [vmem:[#allocation2 + $0x20] sm:$0xff] %vm467, %v5587
        %5629 = vst.msk [vmem:[#allocation2 + $0x28] sm:$0xff] %vm467, %v5588
        %5630 = vst.msk [vmem:[#allocation2 + $0x30] sm:$0xff] %vm467, %v5589
        %5631 = vst.msk [vmem:[#allocation2 + $0x38] sm:$0xff] %vm467, %v5590
        %5632 = vst.msk [vmem:[#allocation2 + $0x40] sm:$0xff] %vm467, %v5591
        %5633 = vst.msk [vmem:[#allocation2 + $0x48] sm:$0xff] %vm467, %v5592
        %5634 = vst.msk [vmem:[#allocation2 + $0x50] sm:$0xff] %vm467, %v5593
        %5635 = vst.msk [vmem:[#allocation2 + $0x58] sm:$0xff] %vm467, %v5594
        %5636 = vst.msk [vmem:[#allocation2 + $0x60] sm:$0xff] %vm467, %v5595
        %5637 = vst.msk [vmem:[#allocation2 + $0x68] sm:$0xff] %vm467, %v5596
        %5638 = vst.msk [vmem:[#allocation2 + $0x70] sm:$0xff] %vm467, %v5597
        %5639 = vst.msk [vmem:[#allocation2 + $0x78] sm:$0xff] %vm467, %v5598
        %5640 = vst.msk [vmem:[#allocation2 + $0x80] sm:$0xff] %vm467, %v5599
        %5641 = vst.msk [vmem:[#allocation2 + $0x88] sm:$0xff] %vm467, %v5600
        %5642 = vst.msk [vmem:[#allocation2 + $0x90] sm:$0xff] %vm467, %v5601
        %5643 = vst.msk [vmem:[#allocation2 + $0x98] sm:$0xff] %vm467, %v5602
        %5644 = vst.msk [vmem:[#allocation2 + $0xa0] sm:$0xff] %vm467, %v5603
        %5645 = vst.msk [vmem:[#allocation2 + $0xa8] sm:$0xff] %vm467, %v5604
        %5646 = vst.msk [vmem:[#allocation2 + $0xb0] sm:$0xff] %vm467, %v5605
        %5647 = vst.msk [vmem:[#allocation2 + $0xb8] sm:$0xff] %vm467, %v5606
        %5648 = vst.msk [vmem:[#allocation2 + $0xc0] sm:$0xff] %vm467, %v5607
        %5649 = vst.msk [vmem:[#allocation2 + $0xc8] sm:$0xff] %vm467, %v5608
        %5650 = vst.msk [vmem:[#allocation2 + $0xd0] sm:$0xff] %vm467, %v5609
        %5651 = vst.msk [vmem:[#allocation2 + $0xd8] sm:$0xff] %vm467, %v5610
        %5652 = vst.msk [vmem:[#allocation2 + $0xe0] sm:$0xff] %vm467, %v5611
        %5653 = vst.msk [vmem:[#allocation2 + $0xe8] sm:$0xff] %vm467, %v5612
        %5654 = vst.msk [vmem:[#allocation2 + $0xf0] sm:$0xff] %vm467, %v5613
        %5655 = vst.msk [vmem:[#allocation2 + $0xf8] sm:$0xff] %vm467, %v5614
        %5656 = vst.msk [vmem:[#allocation2 + $0x100] sm:$0xff] %vm467, %v5615
        %5657 = vst.msk [vmem:[#allocation2 + $0x108] sm:$0xff] %vm467, %v5616
        %5658 = vst.msk [vmem:[#allocation2 + $0x110] sm:$0xff] %vm467, %v5617
        %5659 = vst.msk [vmem:[#allocation2 + $0x118] sm:$0xff] %vm467, %v5618
        %5660 = vst.msk [vmem:[#allocation2 + $0x120] sm:$0xff] %vm467, %v5619
        %5661 = vst.msk [vmem:[#allocation2 + $0x128] sm:$0xff] %vm467, %v5620
        %5662 = vst.msk [vmem:[#allocation2 + $0x130] sm:$0xff] %vm467, %v5621
        %5663 = vst.msk [vmem:[#allocation2 + $0x138] sm:$0xff] %vm467, %v5622
        %5664 = vst.msk [vmem:[#allocation2 + $0x140] sm:$0xff] %vm467, %v5623
        %5665 = vst.msk [vmem:[#allocation2 + $0x148] sm:$0xff] %vm467, %v5624
        %5666 = vst.msk [vmem:[#allocation2 + $0x150] sm:$0xff] %vm467, %v5625
        %5667 = vst.msk [vmem:[#allocation2 + $0x158] sm:$0xff] %vm467, %v5626
        %5668 = vst.msk [vmem:[#allocation2 + $0x160] sm:$0xff] %vm467, %v5627
        %v5669 = vld [vmem:[#allocation2 + $0x6] sm:$0xff]
        %v5670 = vld [vmem:[#allocation2 + $0xe] sm:$0xff]
        %v5671 = vld [vmem:[#allocation2 + $0x16] sm:$0xff]
        %v5672 = vld [vmem:[#allocation2 + $0x1e] sm:$0xff]
        %v5673 = vld [vmem:[#allocation2 + $0x26] sm:$0xff]
        %v5674 = vld [vmem:[#allocation2 + $0x2e] sm:$0xff]
        %v5675 = vld [vmem:[#allocation2 + $0x36] sm:$0xff]
        %v5676 = vld [vmem:[#allocation2 + $0x3e] sm:$0xff]
        %v5677 = vld [vmem:[#allocation2 + $0x46] sm:$0xff]
        %v5678 = vld [vmem:[#allocation2 + $0x4e] sm:$0xff]
        %v5679 = vld [vmem:[#allocation2 + $0x56] sm:$0xff]
        %v5680 = vld [vmem:[#allocation2 + $0x5e] sm:$0xff]
        %v5681 = vld [vmem:[#allocation2 + $0x66] sm:$0xff]
        %v5682 = vld [vmem:[#allocation2 + $0x6e] sm:$0xff]
        %v5683 = vld [vmem:[#allocation2 + $0x76] sm:$0xff]
        %v5684 = vld [vmem:[#allocation2 + $0x7e] sm:$0xff]
        %v5685 = vld [vmem:[#allocation2 + $0x86] sm:$0xff]
        %v5686 = vld [vmem:[#allocation2 + $0x8e] sm:$0xff]
        %v5687 = vld [vmem:[#allocation2 + $0x96] sm:$0xff]
        %v5688 = vld [vmem:[#allocation2 + $0x9e] sm:$0xff]
        %v5689 = vld [vmem:[#allocation2 + $0xa6] sm:$0xff]
        %v5690 = vld [vmem:[#allocation2 + $0xae] sm:$0xff]
        %v5691 = vld [vmem:[#allocation2 + $0xb6] sm:$0xff]
        %v5692 = vld [vmem:[#allocation2 + $0xbe] sm:$0xff]
        %v5693 = vld [vmem:[#allocation2 + $0xc6] sm:$0xff]
        %v5694 = vld [vmem:[#allocation2 + $0xce] sm:$0xff]
        %v5695 = vld [vmem:[#allocation2 + $0xd6] sm:$0xff]
        %v5696 = vld [vmem:[#allocation2 + $0xde] sm:$0xff]
        %v5697 = vld [vmem:[#allocation2 + $0xe6] sm:$0xff]
        %v5698 = vld [vmem:[#allocation2 + $0xee] sm:$0xff]
        %v5699 = vld [vmem:[#allocation2 + $0xf6] sm:$0xff]
        %v5700 = vld [vmem:[#allocation2 + $0xfe] sm:$0xff]
        %v5701 = vld [vmem:[#allocation2 + $0x106] sm:$0xff]
        %v5702 = vld [vmem:[#allocation2 + $0x10e] sm:$0xff]
        %v5703 = vld [vmem:[#allocation2 + $0x116] sm:$0xff]
        %v5704 = vld [vmem:[#allocation2 + $0x11e] sm:$0xff]
        %v5705 = vld [vmem:[#allocation2 + $0x126] sm:$0xff]
        %v5706 = vld [vmem:[#allocation2 + $0x12e] sm:$0xff]
        %v5707 = vld [vmem:[#allocation2 + $0x136] sm:$0xff]
        %v5708 = vld [vmem:[#allocation2 + $0x13e] sm:$0xff]
        %v5709 = vld [vmem:[#allocation2 + $0x146] sm:$0xff]
        %v5710 = vld [vmem:[#allocation2 + $0x14e] sm:$0xff]
        %v5711 = vld [vmem:[#allocation2 + $0x156] sm:$0xff]
        %v5712 = vmax.f32 %v5669, 0.0
        %v5713 = vmax.f32 %v5670, 0.0
        %v5714 = vmax.f32 %v5671, 0.0
        %v5715 = vmax.f32 %v5672, 0.0
        %v5716 = vmax.f32 %v5673, 0.0
        %v5717 = vmax.f32 %v5674, 0.0
        %v5718 = vmax.f32 %v5675, 0.0
        %v5719 = vmax.f32 %v5676, 0.0
        %v5720 = vmax.f32 %v5677, 0.0
        %v5721 = vmax.f32 %v5678, 0.0
        %v5722 = vmax.f32 %v5679, 0.0
        %v5723 = vmax.f32 %v5680, 0.0
        %v5724 = vmax.f32 %v5681, 0.0
        %v5725 = vmax.f32 %v5682, 0.0
        %v5726 = vmax.f32 %v5683, 0.0
        %v5727 = vmax.f32 %v5684, 0.0
        %v5728 = vmax.f32 %v5685, 0.0
        %v5729 = vmax.f32 %v5686, 0.0
        %v5730 = vmax.f32 %v5687, 0.0
        %v5731 = vmax.f32 %v5688, 0.0
        %v5732 = vmax.f32 %v5689, 0.0
        %v5733 = vmax.f32 %v5690, 0.0
        %v5734 = vmax.f32 %v5691, 0.0
        %v5735 = vmax.f32 %v5692, 0.0
        %v5736 = vmax.f32 %v5693, 0.0
        %v5737 = vmax.f32 %v5694, 0.0
        %v5738 = vmax.f32 %v5695, 0.0
        %v5739 = vmax.f32 %v5696, 0.0
        %v5740 = vmax.f32 %v5697, 0.0
        %v5741 = vmax.f32 %v5698, 0.0
        %v5742 = vmax.f32 %v5699, 0.0
        %v5743 = vmax.f32 %v5700, 0.0
        %v5744 = vmax.f32 %v5701, 0.0
        %v5745 = vmax.f32 %v5702, 0.0
        %v5746 = vmax.f32 %v5703, 0.0
        %v5747 = vmax.f32 %v5704, 0.0
        %v5748 = vmax.f32 %v5705, 0.0
        %v5749 = vmax.f32 %v5706, 0.0
        %v5750 = vmax.f32 %v5707, 0.0
        %v5751 = vmax.f32 %v5708, 0.0
        %v5752 = vmax.f32 %v5709, 0.0
        %v5753 = vmax.f32 %v5710, 0.0
        %v5754 = vmax.f32 %v5711, 0.0
        %v5755 = vpack.c.bf16 %v5713, %v5712
        %v5756 = vpack.c.bf16 %v5715, %v5714
        %v5757 = vpack.c.bf16 %v5717, %v5716
        %v5758 = vpack.c.bf16 %v5719, %v5718
        %v5759 = vpack.c.bf16 %v5721, %v5720
        %v5760 = vpack.c.bf16 %v5723, %v5722
        %v5761 = vpack.c.bf16 %v5725, %v5724
        %v5762 = vpack.c.bf16 %v5727, %v5726
        %v5763 = vpack.c.bf16 %v5729, %v5728
        %v5764 = vpack.c.bf16 %v5731, %v5730
        %v5765 = vpack.c.bf16 %v5733, %v5732
        %v5766 = vpack.c.bf16 %v5735, %v5734
        %v5767 = vpack.c.bf16 %v5737, %v5736
        %v5768 = vpack.c.bf16 %v5739, %v5738
        %v5769 = vpack.c.bf16 %v5741, %v5740
        %v5770 = vpack.c.bf16 %v5743, %v5742
        %v5771 = vpack.c.bf16 %v5745, %v5744
        %v5772 = vpack.c.bf16 %v5747, %v5746
        %v5773 = vpack.c.bf16 %v5749, %v5748
        %v5774 = vpack.c.bf16 %v5751, %v5750
        %v5775 = vpack.c.bf16 %v5753, %v5752
        %v5776 = vpack.c.bf16 %v5754, %v5754
        %v5799 = vunpack.c.l.b16 %v5755
        %v5800 = vunpack.c.h.b16 %v5755
        %v5801 = vunpack.c.l.b16 %v5756
        %v5802 = vunpack.c.h.b16 %v5756
        %v5803 = vunpack.c.l.b16 %v5757
        %v5804 = vunpack.c.h.b16 %v5757
        %v5805 = vunpack.c.l.b16 %v5758
        %v5806 = vunpack.c.h.b16 %v5758
        %v5807 = vunpack.c.l.b16 %v5759
        %v5808 = vunpack.c.h.b16 %v5759
        %v5809 = vunpack.c.l.b16 %v5760
        %v5810 = vunpack.c.h.b16 %v5760
        %v5811 = vunpack.c.l.b16 %v5761
        %v5812 = vunpack.c.h.b16 %v5761
        %v5813 = vunpack.c.l.b16 %v5762
        %v5814 = vunpack.c.h.b16 %v5762
        %v5815 = vunpack.c.l.b16 %v5763
        %v5816 = vunpack.c.h.b16 %v5763
        %v5817 = vunpack.c.l.b16 %v5764
        %v5818 = vunpack.c.h.b16 %v5764
        %v5819 = vunpack.c.l.b16 %v5765
        %v5820 = vunpack.c.h.b16 %v5765
        %v5821 = vunpack.c.l.b16 %v5766
        %v5822 = vunpack.c.h.b16 %v5766
        %v5823 = vunpack.c.l.b16 %v5767
        %v5824 = vunpack.c.h.b16 %v5767
        %v5825 = vunpack.c.l.b16 %v5768
        %v5826 = vunpack.c.h.b16 %v5768
        %v5827 = vunpack.c.l.b16 %v5769
        %v5828 = vunpack.c.h.b16 %v5769
        %v5829 = vunpack.c.l.b16 %v5770
        %v5830 = vunpack.c.h.b16 %v5770
        %v5831 = vunpack.c.l.b16 %v5771
        %v5832 = vunpack.c.h.b16 %v5771
        %v5833 = vunpack.c.l.b16 %v5772
        %v5834 = vunpack.c.h.b16 %v5772
        %v5835 = vunpack.c.l.b16 %v5773
        %v5836 = vunpack.c.h.b16 %v5773
        %v5837 = vunpack.c.l.b16 %v5774
        %v5838 = vunpack.c.h.b16 %v5774
        %v5839 = vunpack.c.l.b16 %v5775
        %v5840 = vunpack.c.h.b16 %v5775
        %v5841 = vunpack.c.l.b16 %v5776
        %v5842 = vpack.c.b16 %v5799, %v5799
        %v5843 = vpack.c.b16 %v5800, %v5800
        %v5844 = vpack.c.b16 %v5801, %v5801
        %v5845 = vpack.c.b16 %v5802, %v5802
        %v5846 = vpack.c.b16 %v5803, %v5803
        %v5847 = vpack.c.b16 %v5804, %v5804
        %v5848 = vpack.c.b16 %v5805, %v5805
        %v5849 = vpack.c.b16 %v5806, %v5806
        %v5850 = vpack.c.b16 %v5807, %v5807
        %v5851 = vpack.c.b16 %v5808, %v5808
        %v5852 = vpack.c.b16 %v5809, %v5809
        %v5853 = vpack.c.b16 %v5810, %v5810
        %v5854 = vpack.c.b16 %v5811, %v5811
        %v5855 = vpack.c.b16 %v5812, %v5812
        %v5856 = vpack.c.b16 %v5813, %v5813
        %v5857 = vpack.c.b16 %v5814, %v5814
        %v5858 = vpack.c.b16 %v5815, %v5815
        %v5859 = vpack.c.b16 %v5816, %v5816
        %v5860 = vpack.c.b16 %v5817, %v5817
        %v5861 = vpack.c.b16 %v5818, %v5818
        %v5862 = vpack.c.b16 %v5819, %v5819
        %v5863 = vpack.c.b16 %v5820, %v5820
        %v5864 = vpack.c.b16 %v5821, %v5821
        %v5865 = vpack.c.b16 %v5822, %v5822
        %v5866 = vpack.c.b16 %v5823, %v5823
        %v5867 = vpack.c.b16 %v5824, %v5824
        %v5868 = vpack.c.b16 %v5825, %v5825
        %v5869 = vpack.c.b16 %v5826, %v5826
        %v5870 = vpack.c.b16 %v5827, %v5827
        %v5871 = vpack.c.b16 %v5828, %v5828
        %v5872 = vpack.c.b16 %v5829, %v5829
        %v5873 = vpack.c.b16 %v5830, %v5830
        %v5874 = vpack.c.b16 %v5831, %v5831
        %v5875 = vpack.c.b16 %v5832, %v5832
        %v5876 = vpack.c.b16 %v5833, %v5833
        %v5877 = vpack.c.b16 %v5834, %v5834
        %v5878 = vpack.c.b16 %v5835, %v5835
        %v5879 = vpack.c.b16 %v5836, %v5836
        %v5880 = vpack.c.b16 %v5837, %v5837
        %v5881 = vpack.c.b16 %v5838, %v5838
        %v5882 = vpack.c.b16 %v5839, %v5839
        %v5883 = vpack.c.b16 %v5840, %v5840
        %v5884 = vpack.c.b16 %v5841, %v5841
        %5928 = vst.msk [vmem:[#allocation3 + $0xc] sm:$0xf] %vm2647, %v5842
        %5929 = vst.msk [vmem:[#allocation3 + $0x10] sm:$0xf] %vm2647, %v5843
        %5930 = vst.msk [vmem:[#allocation3 + $0x14] sm:$0xf] %vm2647, %v5844
        %5931 = vst.msk [vmem:[#allocation3 + $0x18] sm:$0xf] %vm2647, %v5845
        %5932 = vst.msk [vmem:[#allocation3 + $0x1c] sm:$0xf] %vm2647, %v5846
        %5933 = vst.msk [vmem:[#allocation3 + $0x20] sm:$0xf] %vm2647, %v5847
        %5934 = vst.msk [vmem:[#allocation3 + $0x24] sm:$0xf] %vm2647, %v5848
        %5935 = vst.msk [vmem:[#allocation3 + $0x28] sm:$0xf] %vm2647, %v5849
        %5936 = vst.msk [vmem:[#allocation3 + $0x2c] sm:$0xf] %vm2647, %v5850
        %5937 = vst.msk [vmem:[#allocation3 + $0x30] sm:$0xf] %vm2647, %v5851
        %5938 = vst.msk [vmem:[#allocation3 + $0x34] sm:$0xf] %vm2647, %v5852
        %5939 = vst.msk [vmem:[#allocation3 + $0x38] sm:$0xf] %vm2647, %v5853
        %5940 = vst.msk [vmem:[#allocation3 + $0x3c] sm:$0xf] %vm2647, %v5854
        %5941 = vst.msk [vmem:[#allocation3 + $0x40] sm:$0xf] %vm2647, %v5855
        %5942 = vst.msk [vmem:[#allocation3 + $0x44] sm:$0xf] %vm2647, %v5856
        %5943 = vst.msk [vmem:[#allocation3 + $0x48] sm:$0xf] %vm2647, %v5857
        %5944 = vst.msk [vmem:[#allocation3 + $0x4c] sm:$0xf] %vm2647, %v5858
        %5945 = vst.msk [vmem:[#allocation3 + $0x50] sm:$0xf] %vm2647, %v5859
        %5946 = vst.msk [vmem:[#allocation3 + $0x54] sm:$0xf] %vm2647, %v5860
        %5947 = vst.msk [vmem:[#allocation3 + $0x58] sm:$0xf] %vm2647, %v5861
        %5948 = vst.msk [vmem:[#allocation3 + $0x5c] sm:$0xf] %vm2647, %v5862
        %5949 = vst.msk [vmem:[#allocation3 + $0x60] sm:$0xf] %vm2647, %v5863
        %5950 = vst.msk [vmem:[#allocation3 + $0x64] sm:$0xf] %vm2647, %v5864
        %5951 = vst.msk [vmem:[#allocation3 + $0x68] sm:$0xf] %vm2647, %v5865
        %5952 = vst.msk [vmem:[#allocation3 + $0x6c] sm:$0xf] %vm2647, %v5866
        %5953 = vst.msk [vmem:[#allocation3 + $0x70] sm:$0xf] %vm2647, %v5867
        %5954 = vst.msk [vmem:[#allocation3 + $0x74] sm:$0xf] %vm2647, %v5868
        %5955 = vst.msk [vmem:[#allocation3 + $0x78] sm:$0xf] %vm2647, %v5869
        %5956 = vst.msk [vmem:[#allocation3 + $0x7c] sm:$0xf] %vm2647, %v5870
        %5957 = vst.msk [vmem:[#allocation3 + $0x80] sm:$0xf] %vm2647, %v5871
        %5958 = vst.msk [vmem:[#allocation3 + $0x84] sm:$0xf] %vm2647, %v5872
        %5959 = vst.msk [vmem:[#allocation3 + $0x88] sm:$0xf] %vm2647, %v5873
        %5960 = vst.msk [vmem:[#allocation3 + $0x8c] sm:$0xf] %vm2647, %v5874
        %5961 = vst.msk [vmem:[#allocation3 + $0x90] sm:$0xf] %vm2647, %v5875
        %5962 = vst.msk [vmem:[#allocation3 + $0x94] sm:$0xf] %vm2647, %v5876
        %5963 = vst.msk [vmem:[#allocation3 + $0x98] sm:$0xf] %vm2647, %v5877
        %5964 = vst.msk [vmem:[#allocation3 + $0x9c] sm:$0xf] %vm2647, %v5878
        %5965 = vst.msk [vmem:[#allocation3 + $0xa0] sm:$0xf] %vm2647, %v5879
        %5966 = vst.msk [vmem:[#allocation3 + $0xa4] sm:$0xf] %vm2647, %v5880
        %5967 = vst.msk [vmem:[#allocation3 + $0xa8] sm:$0xf] %vm2647, %v5881
        %5968 = vst.msk [vmem:[#allocation3 + $0xac] sm:$0xf] %vm2647, %v5882
        %5969 = vst.msk [vmem:[#allocation3 + $0xb0] sm:$0xf] %vm2647, %v5883
        %5970 = vst.msk [vmem:[#allocation3 + $0xb4] sm:$0xf] %vm2647, %v5884
        %v5971 = vld [vmem:[#allocation2 + $0x18] sm:$0xff]
        %v5972 = vld [vmem:[#allocation2 + $0x20] sm:$0xff]
        %v5973 = vld [vmem:[#allocation2 + $0x28] sm:$0xff]
        %v5974 = vld [vmem:[#allocation2 + $0x30] sm:$0xff]
        %v5975 = vld [vmem:[#allocation2 + $0x38] sm:$0xff]
        %v5976 = vld [vmem:[#allocation2 + $0x40] sm:$0xff]
        %v5977 = vld [vmem:[#allocation2 + $0x48] sm:$0xff]
        %v5978 = vld [vmem:[#allocation2 + $0x50] sm:$0xff]
        %v5979 = vld [vmem:[#allocation2 + $0x58] sm:$0xff]
        %v5980 = vld [vmem:[#allocation2 + $0x60] sm:$0xff]
        %v5981 = vld [vmem:[#allocation2 + $0x68] sm:$0xff]
        %v5982 = vld [vmem:[#allocation2 + $0x70] sm:$0xff]
        %v5983 = vld [vmem:[#allocation2 + $0x78] sm:$0xff]
        %v5984 = vld [vmem:[#allocation2 + $0x80] sm:$0xff]
        %v5985 = vld [vmem:[#allocation2 + $0x88] sm:$0xff]
        %v5986 = vld [vmem:[#allocation2 + $0x90] sm:$0xff]
        %v5987 = vld [vmem:[#allocation2 + $0x98] sm:$0xff]
        %v5988 = vld [vmem:[#allocation2 + $0xa0] sm:$0xff]
        %v5989 = vld [vmem:[#allocation2 + $0xa8] sm:$0xff]
        %v5990 = vld [vmem:[#allocation2 + $0xb0] sm:$0xff]
        %v5991 = vld [vmem:[#allocation2 + $0xb8] sm:$0xff]
        %v5992 = vld [vmem:[#allocation2 + $0xc0] sm:$0xff]
        %v5993 = vld [vmem:[#allocation2 + $0xc8] sm:$0xff]
        %v5994 = vld [vmem:[#allocation2 + $0xd0] sm:$0xff]
        %v5995 = vld [vmem:[#allocation2 + $0xd8] sm:$0xff]
        %v5996 = vld [vmem:[#allocation2 + $0xe0] sm:$0xff]
        %v5997 = vld [vmem:[#allocation2 + $0xe8] sm:$0xff]
        %v5998 = vld [vmem:[#allocation2 + $0xf0] sm:$0xff]
        %v5999 = vld [vmem:[#allocation2 + $0xf8] sm:$0xff]
        %v6000 = vld [vmem:[#allocation2 + $0x100] sm:$0xff]
        %v6001 = vld [vmem:[#allocation2 + $0x108] sm:$0xff]
        %v6002 = vld [vmem:[#allocation2 + $0x110] sm:$0xff]
        %v6003 = vld [vmem:[#allocation2 + $0x118] sm:$0xff]
        %v6004 = vld [vmem:[#allocation2 + $0x120] sm:$0xff]
        %v6005 = vld [vmem:[#allocation2 + $0x128] sm:$0xff]
        %v6006 = vld [vmem:[#allocation2 + $0x130] sm:$0xff]
        %v6007 = vld [vmem:[#allocation2 + $0x138] sm:$0xff]
        %v6008 = vld [vmem:[#allocation2 + $0x140] sm:$0xff]
        %v6009 = vld [vmem:[#allocation2 + $0x148] sm:$0xff]
        %v6010 = vld [vmem:[#allocation2 + $0x150] sm:$0xff]
        %v6011 = vld [vmem:[#allocation2 + $0x158] sm:$0xff]
        %v6012 = vld [vmem:[#allocation2 + $0x160] sm:$0xff]
        %v6013 = vld [vmem:[#allocation2 + $0x168] sm:$0xff]
        %v6014 = vmax.f32 %v5971, 0.0
        %v6015 = vmax.f32 %v5972, 0.0
        %v6016 = vmax.f32 %v5973, 0.0
        %v6017 = vmax.f32 %v5974, 0.0
        %v6018 = vmax.f32 %v5975, 0.0
        %v6019 = vmax.f32 %v5976, 0.0
        %v6020 = vmax.f32 %v5977, 0.0
        %v6021 = vmax.f32 %v5978, 0.0
        %v6022 = vmax.f32 %v5979, 0.0
        %v6023 = vmax.f32 %v5980, 0.0
        %v6024 = vmax.f32 %v5981, 0.0
        %v6025 = vmax.f32 %v5982, 0.0
        %v6026 = vmax.f32 %v5983, 0.0
        %v6027 = vmax.f32 %v5984, 0.0
        %v6028 = vmax.f32 %v5985, 0.0
        %v6029 = vmax.f32 %v5986, 0.0
        %v6030 = vmax.f32 %v5987, 0.0
        %v6031 = vmax.f32 %v5988, 0.0
        %v6032 = vmax.f32 %v5989, 0.0
        %v6033 = vmax.f32 %v5990, 0.0
        %v6034 = vmax.f32 %v5991, 0.0
        %v6035 = vmax.f32 %v5992, 0.0
        %v6036 = vmax.f32 %v5993, 0.0
        %v6037 = vmax.f32 %v5994, 0.0
        %v6038 = vmax.f32 %v5995, 0.0
        %v6039 = vmax.f32 %v5996, 0.0
        %v6040 = vmax.f32 %v5997, 0.0
        %v6041 = vmax.f32 %v5998, 0.0
        %v6042 = vmax.f32 %v5999, 0.0
        %v6043 = vmax.f32 %v6000, 0.0
        %v6044 = vmax.f32 %v6001, 0.0
        %v6045 = vmax.f32 %v6002, 0.0
        %v6046 = vmax.f32 %v6003, 0.0
        %v6047 = vmax.f32 %v6004, 0.0
        %v6048 = vmax.f32 %v6005, 0.0
        %v6049 = vmax.f32 %v6006, 0.0
        %v6050 = vmax.f32 %v6007, 0.0
        %v6051 = vmax.f32 %v6008, 0.0
        %v6052 = vmax.f32 %v6009, 0.0
        %v6053 = vmax.f32 %v6010, 0.0
        %v6054 = vmax.f32 %v6011, 0.0
        %v6055 = vmax.f32 %v6012, 0.0
        %v6056 = vmax.f32 %v6013, 0.0
        %v6057 = vpack.c.bf16 %v6015, %v6014
        %v6058 = vpack.c.bf16 %v6017, %v6016
        %v6059 = vpack.c.bf16 %v6019, %v6018
        %v6060 = vpack.c.bf16 %v6021, %v6020
        %v6061 = vpack.c.bf16 %v6023, %v6022
        %v6062 = vpack.c.bf16 %v6025, %v6024
        %v6063 = vpack.c.bf16 %v6027, %v6026
        %v6064 = vpack.c.bf16 %v6029, %v6028
        %v6065 = vpack.c.bf16 %v6031, %v6030
        %v6066 = vpack.c.bf16 %v6033, %v6032
        %v6067 = vpack.c.bf16 %v6035, %v6034
        %v6068 = vpack.c.bf16 %v6037, %v6036
        %v6069 = vpack.c.bf16 %v6039, %v6038
        %v6070 = vpack.c.bf16 %v6041, %v6040
        %v6071 = vpack.c.bf16 %v6043, %v6042
        %v6072 = vpack.c.bf16 %v6045, %v6044
        %v6073 = vpack.c.bf16 %v6047, %v6046
        %v6074 = vpack.c.bf16 %v6049, %v6048
        %v6075 = vpack.c.bf16 %v6051, %v6050
        %v6076 = vpack.c.bf16 %v6053, %v6052
        %v6077 = vpack.c.bf16 %v6055, %v6054
        %v6078 = vpack.c.bf16 %v6056, %v6056
        %v6101 = vunpack.c.l.b16 %v6057
        %v6102 = vunpack.c.h.b16 %v6057
        %v6103 = vunpack.c.l.b16 %v6058
        %v6104 = vunpack.c.h.b16 %v6058
        %v6105 = vunpack.c.l.b16 %v6059
        %v6106 = vunpack.c.h.b16 %v6059
        %v6107 = vunpack.c.l.b16 %v6060
        %v6108 = vunpack.c.h.b16 %v6060
        %v6109 = vunpack.c.l.b16 %v6061
        %v6110 = vunpack.c.h.b16 %v6061
        %v6111 = vunpack.c.l.b16 %v6062
        %v6112 = vunpack.c.h.b16 %v6062
        %v6113 = vunpack.c.l.b16 %v6063
        %v6114 = vunpack.c.h.b16 %v6063
        %v6115 = vunpack.c.l.b16 %v6064
        %v6116 = vunpack.c.h.b16 %v6064
        %v6117 = vunpack.c.l.b16 %v6065
        %v6118 = vunpack.c.h.b16 %v6065
        %v6119 = vunpack.c.l.b16 %v6066
        %v6120 = vunpack.c.h.b16 %v6066
        %v6121 = vunpack.c.l.b16 %v6067
        %v6122 = vunpack.c.h.b16 %v6067
        %v6123 = vunpack.c.l.b16 %v6068
        %v6124 = vunpack.c.h.b16 %v6068
        %v6125 = vunpack.c.l.b16 %v6069
        %v6126 = vunpack.c.h.b16 %v6069
        %v6127 = vunpack.c.l.b16 %v6070
        %v6128 = vunpack.c.h.b16 %v6070
        %v6129 = vunpack.c.l.b16 %v6071
        %v6130 = vunpack.c.h.b16 %v6071
        %v6131 = vunpack.c.l.b16 %v6072
        %v6132 = vunpack.c.h.b16 %v6072
        %v6133 = vunpack.c.l.b16 %v6073
        %v6134 = vunpack.c.h.b16 %v6073
        %v6135 = vunpack.c.l.b16 %v6074
        %v6136 = vunpack.c.h.b16 %v6074
        %v6137 = vunpack.c.l.b16 %v6075
        %v6138 = vunpack.c.h.b16 %v6075
        %v6139 = vunpack.c.l.b16 %v6076
        %v6140 = vunpack.c.h.b16 %v6076
        %v6141 = vunpack.c.l.b16 %v6077
        %v6142 = vunpack.c.h.b16 %v6077
        %v6143 = vunpack.c.l.b16 %v6078
        %v6144 = vpack.c.b16 %v6101, %v6101
        %v6145 = vpack.c.b16 %v6102, %v6102
        %v6146 = vpack.c.b16 %v6103, %v6103
        %v6147 = vpack.c.b16 %v6104, %v6104
        %v6148 = vpack.c.b16 %v6105, %v6105
        %v6149 = vpack.c.b16 %v6106, %v6106
        %v6150 = vpack.c.b16 %v6107, %v6107
        %v6151 = vpack.c.b16 %v6108, %v6108
        %v6152 = vpack.c.b16 %v6109, %v6109
        %v6153 = vpack.c.b16 %v6110, %v6110
        %v6154 = vpack.c.b16 %v6111, %v6111
        %v6155 = vpack.c.b16 %v6112, %v6112
        %v6156 = vpack.c.b16 %v6113, %v6113
        %v6157 = vpack.c.b16 %v6114, %v6114
        %v6158 = vpack.c.b16 %v6115, %v6115
        %v6159 = vpack.c.b16 %v6116, %v6116
        %v6160 = vpack.c.b16 %v6117, %v6117
        %v6161 = vpack.c.b16 %v6118, %v6118
        %v6162 = vpack.c.b16 %v6119, %v6119
        %v6163 = vpack.c.b16 %v6120, %v6120
        %v6164 = vpack.c.b16 %v6121, %v6121
        %v6165 = vpack.c.b16 %v6122, %v6122
        %v6166 = vpack.c.b16 %v6123, %v6123
        %v6167 = vpack.c.b16 %v6124, %v6124
        %v6168 = vpack.c.b16 %v6125, %v6125
        %v6169 = vpack.c.b16 %v6126, %v6126
        %v6170 = vpack.c.b16 %v6127, %v6127
        %v6171 = vpack.c.b16 %v6128, %v6128
        %v6172 = vpack.c.b16 %v6129, %v6129
        %v6173 = vpack.c.b16 %v6130, %v6130
        %v6174 = vpack.c.b16 %v6131, %v6131
        %v6175 = vpack.c.b16 %v6132, %v6132
        %v6176 = vpack.c.b16 %v6133, %v6133
        %v6177 = vpack.c.b16 %v6134, %v6134
        %v6178 = vpack.c.b16 %v6135, %v6135
        %v6179 = vpack.c.b16 %v6136, %v6136
        %v6180 = vpack.c.b16 %v6137, %v6137
        %v6181 = vpack.c.b16 %v6138, %v6138
        %v6182 = vpack.c.b16 %v6139, %v6139
        %v6183 = vpack.c.b16 %v6140, %v6140
        %v6184 = vpack.c.b16 %v6141, %v6141
        %v6185 = vpack.c.b16 %v6142, %v6142
        %v6186 = vpack.c.b16 %v6143, %v6143
        %6187 = vrot.lane.b32.xlu0 %v6144, 32
        %v6188 = vpop.permute.xlu0 %6187
        %6189 = vrot.lane.b32.xlu0 %v6145, 32
        %v6190 = vpop.permute.xlu0 %6189
        %6191 = vrot.lane.b32.xlu0 %v6146, 32
        %v6192 = vpop.permute.xlu0 %6191
        %6193 = vrot.lane.b32.xlu0 %v6147, 32
        %v6194 = vpop.permute.xlu0 %6193
        %6195 = vrot.lane.b32.xlu0 %v6148, 32
        %v6196 = vpop.permute.xlu0 %6195
        %6197 = vrot.lane.b32.xlu0 %v6149, 32
        %v6198 = vpop.permute.xlu0 %6197
        %6199 = vrot.lane.b32.xlu0 %v6150, 32
        %v6200 = vpop.permute.xlu0 %6199
        %6201 = vrot.lane.b32.xlu0 %v6151, 32
        %v6202 = vpop.permute.xlu0 %6201
        %6203 = vrot.lane.b32.xlu0 %v6152, 32
        %v6204 = vpop.permute.xlu0 %6203
        %6205 = vrot.lane.b32.xlu0 %v6153, 32
        %v6206 = vpop.permute.xlu0 %6205
        %6207 = vrot.lane.b32.xlu0 %v6154, 32
        %v6208 = vpop.permute.xlu0 %6207
        %6209 = vrot.lane.b32.xlu0 %v6155, 32
        %v6210 = vpop.permute.xlu0 %6209
        %6211 = vrot.lane.b32.xlu0 %v6156, 32
        %v6212 = vpop.permute.xlu0 %6211
        %6213 = vrot.lane.b32.xlu0 %v6157, 32
        %v6214 = vpop.permute.xlu0 %6213
        %6215 = vrot.lane.b32.xlu0 %v6158, 32
        %v6216 = vpop.permute.xlu0 %6215
        %6217 = vrot.lane.b32.xlu0 %v6159, 32
        %v6218 = vpop.permute.xlu0 %6217
        %6219 = vrot.lane.b32.xlu0 %v6160, 32
        %v6220 = vpop.permute.xlu0 %6219
        %6221 = vrot.lane.b32.xlu0 %v6161, 32
        %v6222 = vpop.permute.xlu0 %6221
        %6223 = vrot.lane.b32.xlu0 %v6162, 32
        %v6224 = vpop.permute.xlu0 %6223
        %6225 = vrot.lane.b32.xlu0 %v6163, 32
        %v6226 = vpop.permute.xlu0 %6225
        %6227 = vrot.lane.b32.xlu0 %v6164, 32
        %v6228 = vpop.permute.xlu0 %6227
        %6229 = vrot.lane.b32.xlu0 %v6165, 32
        %v6230 = vpop.permute.xlu0 %6229
        %6231 = vrot.lane.b32.xlu0 %v6166, 32
        %v6232 = vpop.permute.xlu0 %6231
        %6233 = vrot.lane.b32.xlu0 %v6167, 32
        %v6234 = vpop.permute.xlu0 %6233
        %6235 = vrot.lane.b32.xlu0 %v6168, 32
        %v6236 = vpop.permute.xlu0 %6235
        %6237 = vrot.lane.b32.xlu0 %v6169, 32
        %v6238 = vpop.permute.xlu0 %6237
        %6239 = vrot.lane.b32.xlu0 %v6170, 32
        %v6240 = vpop.permute.xlu0 %6239
        %6241 = vrot.lane.b32.xlu0 %v6171, 32
        %v6242 = vpop.permute.xlu0 %6241
        %6243 = vrot.lane.b32.xlu0 %v6172, 32
        %v6244 = vpop.permute.xlu0 %6243
        %6245 = vrot.lane.b32.xlu0 %v6173, 32
        %v6246 = vpop.permute.xlu0 %6245
        %6247 = vrot.lane.b32.xlu0 %v6174, 32
        %v6248 = vpop.permute.xlu0 %6247
        %6249 = vrot.lane.b32.xlu0 %v6175, 32
        %v6250 = vpop.permute.xlu0 %6249
        %6251 = vrot.lane.b32.xlu0 %v6176, 32
        %v6252 = vpop.permute.xlu0 %6251
        %6253 = vrot.lane.b32.xlu0 %v6177, 32
        %v6254 = vpop.permute.xlu0 %6253
        %6255 = vrot.lane.b32.xlu0 %v6178, 32
        %v6256 = vpop.permute.xlu0 %6255
        %6257 = vrot.lane.b32.xlu0 %v6179, 32
        %v6258 = vpop.permute.xlu0 %6257
        %6259 = vrot.lane.b32.xlu0 %v6180, 32
        %v6260 = vpop.permute.xlu0 %6259
        %6261 = vrot.lane.b32.xlu0 %v6181, 32
        %v6262 = vpop.permute.xlu0 %6261
        %6263 = vrot.lane.b32.xlu0 %v6182, 32
        %v6264 = vpop.permute.xlu0 %6263
        %6265 = vrot.lane.b32.xlu0 %v6183, 32
        %v6266 = vpop.permute.xlu0 %6265
        %6267 = vrot.lane.b32.xlu0 %v6184, 32
        %v6268 = vpop.permute.xlu0 %6267
        %6269 = vrot.lane.b32.xlu0 %v6185, 32
        %v6270 = vpop.permute.xlu0 %6269
        %6271 = vrot.lane.b32.xlu0 %v6186, 32
        %v6272 = vpop.permute.xlu0 %6271
        %6316 = vst.msk [vmem:[#allocation3 + $0xc] sm:$0xf] %vm3036, %v6188
        %6317 = vst.msk [vmem:[#allocation3 + $0x10] sm:$0xf] %vm3036, %v6190
        %6318 = vst.msk [vmem:[#allocation3 + $0x14] sm:$0xf] %vm3036, %v6192
        %6319 = vst.msk [vmem:[#allocation3 + $0x18] sm:$0xf] %vm3036, %v6194
        %6320 = vst.msk [vmem:[#allocation3 + $0x1c] sm:$0xf] %vm3036, %v6196
        %6321 = vst.msk [vmem:[#allocation3 + $0x20] sm:$0xf] %vm3036, %v6198
        %6322 = vst.msk [vmem:[#allocation3 + $0x24] sm:$0xf] %vm3036, %v6200
        %6323 = vst.msk [vmem:[#allocation3 + $0x28] sm:$0xf] %vm3036, %v6202
        %6324 = vst.msk [vmem:[#allocation3 + $0x2c] sm:$0xf] %vm3036, %v6204
        %6325 = vst.msk [vmem:[#allocation3 + $0x30] sm:$0xf] %vm3036, %v6206
        %6326 = vst.msk [vmem:[#allocation3 + $0x34] sm:$0xf] %vm3036, %v6208
        %6327 = vst.msk [vmem:[#allocation3 + $0x38] sm:$0xf] %vm3036, %v6210
        %6328 = vst.msk [vmem:[#allocation3 + $0x3c] sm:$0xf] %vm3036, %v6212
        %6329 = vst.msk [vmem:[#allocation3 + $0x40] sm:$0xf] %vm3036, %v6214
        %6330 = vst.msk [vmem:[#allocation3 + $0x44] sm:$0xf] %vm3036, %v6216
        %6331 = vst.msk [vmem:[#allocation3 + $0x48] sm:$0xf] %vm3036, %v6218
        %6332 = vst.msk [vmem:[#allocation3 + $0x4c] sm:$0xf] %vm3036, %v6220
        %6333 = vst.msk [vmem:[#allocation3 + $0x50] sm:$0xf] %vm3036, %v6222
        %6334 = vst.msk [vmem:[#allocation3 + $0x54] sm:$0xf] %vm3036, %v6224
        %6335 = vst.msk [vmem:[#allocation3 + $0x58] sm:$0xf] %vm3036, %v6226
        %6336 = vst.msk [vmem:[#allocation3 + $0x5c] sm:$0xf] %vm3036, %v6228
        %6337 = vst.msk [vmem:[#allocation3 + $0x60] sm:$0xf] %vm3036, %v6230
        %6338 = vst.msk [vmem:[#allocation3 + $0x64] sm:$0xf] %vm3036, %v6232
        %6339 = vst.msk [vmem:[#allocation3 + $0x68] sm:$0xf] %vm3036, %v6234
        %6340 = vst.msk [vmem:[#allocation3 + $0x6c] sm:$0xf] %vm3036, %v6236
        %6341 = vst.msk [vmem:[#allocation3 + $0x70] sm:$0xf] %vm3036, %v6238
        %6342 = vst.msk [vmem:[#allocation3 + $0x74] sm:$0xf] %vm3036, %v6240
        %6343 = vst.msk [vmem:[#allocation3 + $0x78] sm:$0xf] %vm3036, %v6242
        %6344 = vst.msk [vmem:[#allocation3 + $0x7c] sm:$0xf] %vm3036, %v6244
        %6345 = vst.msk [vmem:[#allocation3 + $0x80] sm:$0xf] %vm3036, %v6246
        %6346 = vst.msk [vmem:[#allocation3 + $0x84] sm:$0xf] %vm3036, %v6248
        %6347 = vst.msk [vmem:[#allocation3 + $0x88] sm:$0xf] %vm3036, %v6250
        %6348 = vst.msk [vmem:[#allocation3 + $0x8c] sm:$0xf] %vm3036, %v6252
        %6349 = vst.msk [vmem:[#allocation3 + $0x90] sm:$0xf] %vm3036, %v6254
        %6350 = vst.msk [vmem:[#allocation3 + $0x94] sm:$0xf] %vm3036, %v6256
        %6351 = vst.msk [vmem:[#allocation3 + $0x98] sm:$0xf] %vm3036, %v6258
        %6352 = vst.msk [vmem:[#allocation3 + $0x9c] sm:$0xf] %vm3036, %v6260
        %6353 = vst.msk [vmem:[#allocation3 + $0xa0] sm:$0xf] %vm3036, %v6262
        %6354 = vst.msk [vmem:[#allocation3 + $0xa4] sm:$0xf] %vm3036, %v6264
        %6355 = vst.msk [vmem:[#allocation3 + $0xa8] sm:$0xf] %vm3036, %v6266
        %6356 = vst.msk [vmem:[#allocation3 + $0xac] sm:$0xf] %vm3036, %v6268
        %6357 = vst.msk [vmem:[#allocation3 + $0xb0] sm:$0xf] %vm3036, %v6270
        %6358 = vst.msk [vmem:[#allocation3 + $0xb4] sm:$0xf] %vm3036, %v6272
        %v6359 = vld [vmem:[#allocation2 + $0x2a] sm:$0xff]
        %v6360 = vld [vmem:[#allocation2 + $0x32] sm:$0xff]
        %v6361 = vld [vmem:[#allocation2 + $0x3a] sm:$0xff]
        %v6362 = vld [vmem:[#allocation2 + $0x42] sm:$0xff]
        %v6363 = vld [vmem:[#allocation2 + $0x4a] sm:$0xff]
        %v6364 = vld [vmem:[#allocation2 + $0x52] sm:$0xff]
        %v6365 = vld [vmem:[#allocation2 + $0x5a] sm:$0xff]
        %v6366 = vld [vmem:[#allocation2 + $0x62] sm:$0xff]
        %v6367 = vld [vmem:[#allocation2 + $0x6a] sm:$0xff]
        %v6368 = vld [vmem:[#allocation2 + $0x72] sm:$0xff]
        %v6369 = vld [vmem:[#allocation2 + $0x7a] sm:$0xff]
        %v6370 = vld [vmem:[#allocation2 + $0x82] sm:$0xff]
        %v6371 = vld [vmem:[#allocation2 + $0x8a] sm:$0xff]
        %v6372 = vld [vmem:[#allocation2 + $0x92] sm:$0xff]
        %v6373 = vld [vmem:[#allocation2 + $0x9a] sm:$0xff]
        %v6374 = vld [vmem:[#allocation2 + $0xa2] sm:$0xff]
        %v6375 = vld [vmem:[#allocation2 + $0xaa] sm:$0xff]
        %v6376 = vld [vmem:[#allocation2 + $0xb2] sm:$0xff]
        %v6377 = vld [vmem:[#allocation2 + $0xba] sm:$0xff]
        %v6378 = vld [vmem:[#allocation2 + $0xc2] sm:$0xff]
        %v6379 = vld [vmem:[#allocation2 + $0xca] sm:$0xff]
        %v6380 = vld [vmem:[#allocation2 + $0xd2] sm:$0xff]
        %v6381 = vld [vmem:[#allocation2 + $0xda] sm:$0xff]
        %v6382 = vld [vmem:[#allocation2 + $0xe2] sm:$0xff]
        %v6383 = vld [vmem:[#allocation2 + $0xea] sm:$0xff]
        %v6384 = vld [vmem:[#allocation2 + $0xf2] sm:$0xff]
        %v6385 = vld [vmem:[#allocation2 + $0xfa] sm:$0xff]
        %v6386 = vld [vmem:[#allocation2 + $0x102] sm:$0xff]
        %v6387 = vld [vmem:[#allocation2 + $0x10a] sm:$0xff]
        %v6388 = vld [vmem:[#allocation2 + $0x112] sm:$0xff]
        %v6389 = vld [vmem:[#allocation2 + $0x11a] sm:$0xff]
        %v6390 = vld [vmem:[#allocation2 + $0x122] sm:$0xff]
        %v6391 = vld [vmem:[#allocation2 + $0x12a] sm:$0xff]
        %v6392 = vld [vmem:[#allocation2 + $0x132] sm:$0xff]
        %v6393 = vld [vmem:[#allocation2 + $0x13a] sm:$0xff]
        %v6394 = vld [vmem:[#allocation2 + $0x142] sm:$0xff]
        %v6395 = vld [vmem:[#allocation2 + $0x14a] sm:$0xff]
        %v6396 = vld [vmem:[#allocation2 + $0x152] sm:$0xff]
        %v6397 = vld [vmem:[#allocation2 + $0x15a] sm:$0xff]
        %v6398 = vld [vmem:[#allocation2 + $0x162] sm:$0xff]
        %v6399 = vld [vmem:[#allocation2 + $0x16a] sm:$0xff]
        %v6400 = vld [vmem:[#allocation2 + $0x172] sm:$0xff]
        %v6401 = vld [vmem:[#allocation2 + $0x17a] sm:$0xff]
        %v6402 = vmax.f32 %v6359, 0.0
        %v6403 = vmax.f32 %v6360, 0.0
        %v6404 = vmax.f32 %v6361, 0.0
        %v6405 = vmax.f32 %v6362, 0.0
        %v6406 = vmax.f32 %v6363, 0.0
        %v6407 = vmax.f32 %v6364, 0.0
        %v6408 = vmax.f32 %v6365, 0.0
        %v6409 = vmax.f32 %v6366, 0.0
        %v6410 = vmax.f32 %v6367, 0.0
        %v6411 = vmax.f32 %v6368, 0.0
        %v6412 = vmax.f32 %v6369, 0.0
        %v6413 = vmax.f32 %v6370, 0.0
        %v6414 = vmax.f32 %v6371, 0.0
        %v6415 = vmax.f32 %v6372, 0.0
        %v6416 = vmax.f32 %v6373, 0.0
        %v6417 = vmax.f32 %v6374, 0.0
        %v6418 = vmax.f32 %v6375, 0.0
        %v6419 = vmax.f32 %v6376, 0.0
        %v6420 = vmax.f32 %v6377, 0.0
        %v6421 = vmax.f32 %v6378, 0.0
        %v6422 = vmax.f32 %v6379, 0.0
        %v6423 = vmax.f32 %v6380, 0.0
        %v6424 = vmax.f32 %v6381, 0.0
        %v6425 = vmax.f32 %v6382, 0.0
        %v6426 = vmax.f32 %v6383, 0.0
        %v6427 = vmax.f32 %v6384, 0.0
        %v6428 = vmax.f32 %v6385, 0.0
        %v6429 = vmax.f32 %v6386, 0.0
        %v6430 = vmax.f32 %v6387, 0.0
        %v6431 = vmax.f32 %v6388, 0.0
        %v6432 = vmax.f32 %v6389, 0.0
        %v6433 = vmax.f32 %v6390, 0.0
        %v6434 = vmax.f32 %v6391, 0.0
        %v6435 = vmax.f32 %v6392, 0.0
        %v6436 = vmax.f32 %v6393, 0.0
        %v6437 = vmax.f32 %v6394, 0.0
        %v6438 = vmax.f32 %v6395, 0.0
        %v6439 = vmax.f32 %v6396, 0.0
        %v6440 = vmax.f32 %v6397, 0.0
        %v6441 = vmax.f32 %v6398, 0.0
        %v6442 = vmax.f32 %v6399, 0.0
        %v6443 = vmax.f32 %v6400, 0.0
        %v6444 = vmax.f32 %v6401, 0.0
        %v6445 = vpack.c.bf16 %v6403, %v6402
        %v6446 = vpack.c.bf16 %v6405, %v6404
        %v6447 = vpack.c.bf16 %v6407, %v6406
        %v6448 = vpack.c.bf16 %v6409, %v6408
        %v6449 = vpack.c.bf16 %v6411, %v6410
        %v6450 = vpack.c.bf16 %v6413, %v6412
        %v6451 = vpack.c.bf16 %v6415, %v6414
        %v6452 = vpack.c.bf16 %v6417, %v6416
        %v6453 = vpack.c.bf16 %v6419, %v6418
        %v6454 = vpack.c.bf16 %v6421, %v6420
        %v6455 = vpack.c.bf16 %v6423, %v6422
        %v6456 = vpack.c.bf16 %v6425, %v6424
        %v6457 = vpack.c.bf16 %v6427, %v6426
        %v6458 = vpack.c.bf16 %v6429, %v6428
        %v6459 = vpack.c.bf16 %v6431, %v6430
        %v6460 = vpack.c.bf16 %v6433, %v6432
        %v6461 = vpack.c.bf16 %v6435, %v6434
        %v6462 = vpack.c.bf16 %v6437, %v6436
        %v6463 = vpack.c.bf16 %v6439, %v6438
        %v6464 = vpack.c.bf16 %v6441, %v6440
        %v6465 = vpack.c.bf16 %v6443, %v6442
        %v6466 = vpack.c.bf16 %v6444, %v6444
        %v6489 = vunpack.c.l.b16 %v6445
        %v6490 = vunpack.c.h.b16 %v6445
        %v6491 = vunpack.c.l.b16 %v6446
        %v6492 = vunpack.c.h.b16 %v6446
        %v6493 = vunpack.c.l.b16 %v6447
        %v6494 = vunpack.c.h.b16 %v6447
        %v6495 = vunpack.c.l.b16 %v6448
        %v6496 = vunpack.c.h.b16 %v6448
        %v6497 = vunpack.c.l.b16 %v6449
        %v6498 = vunpack.c.h.b16 %v6449
        %v6499 = vunpack.c.l.b16 %v6450
        %v6500 = vunpack.c.h.b16 %v6450
        %v6501 = vunpack.c.l.b16 %v6451
        %v6502 = vunpack.c.h.b16 %v6451
        %v6503 = vunpack.c.l.b16 %v6452
        %v6504 = vunpack.c.h.b16 %v6452
        %v6505 = vunpack.c.l.b16 %v6453
        %v6506 = vunpack.c.h.b16 %v6453
        %v6507 = vunpack.c.l.b16 %v6454
        %v6508 = vunpack.c.h.b16 %v6454
        %v6509 = vunpack.c.l.b16 %v6455
        %v6510 = vunpack.c.h.b16 %v6455
        %v6511 = vunpack.c.l.b16 %v6456
        %v6512 = vunpack.c.h.b16 %v6456
        %v6513 = vunpack.c.l.b16 %v6457
        %v6514 = vunpack.c.h.b16 %v6457
        %v6515 = vunpack.c.l.b16 %v6458
        %v6516 = vunpack.c.h.b16 %v6458
        %v6517 = vunpack.c.l.b16 %v6459
        %v6518 = vunpack.c.h.b16 %v6459
        %v6519 = vunpack.c.l.b16 %v6460
        %v6520 = vunpack.c.h.b16 %v6460
        %v6521 = vunpack.c.l.b16 %v6461
        %v6522 = vunpack.c.h.b16 %v6461
        %v6523 = vunpack.c.l.b16 %v6462
        %v6524 = vunpack.c.h.b16 %v6462
        %v6525 = vunpack.c.l.b16 %v6463
        %v6526 = vunpack.c.h.b16 %v6463
        %v6527 = vunpack.c.l.b16 %v6464
        %v6528 = vunpack.c.h.b16 %v6464
        %v6529 = vunpack.c.l.b16 %v6465
        %v6530 = vunpack.c.h.b16 %v6465
        %v6531 = vunpack.c.l.b16 %v6466
        %v6532 = vpack.c.b16 %v6489, %v6489
        %v6533 = vpack.c.b16 %v6490, %v6490
        %v6534 = vpack.c.b16 %v6491, %v6491
        %v6535 = vpack.c.b16 %v6492, %v6492
        %v6536 = vpack.c.b16 %v6493, %v6493
        %v6537 = vpack.c.b16 %v6494, %v6494
        %v6538 = vpack.c.b16 %v6495, %v6495
        %v6539 = vpack.c.b16 %v6496, %v6496
        %v6540 = vpack.c.b16 %v6497, %v6497
        %v6541 = vpack.c.b16 %v6498, %v6498
        %v6542 = vpack.c.b16 %v6499, %v6499
        %v6543 = vpack.c.b16 %v6500, %v6500
        %v6544 = vpack.c.b16 %v6501, %v6501
        %v6545 = vpack.c.b16 %v6502, %v6502
        %v6546 = vpack.c.b16 %v6503, %v6503
        %v6547 = vpack.c.b16 %v6504, %v6504
        %v6548 = vpack.c.b16 %v6505, %v6505
        %v6549 = vpack.c.b16 %v6506, %v6506
        %v6550 = vpack.c.b16 %v6507, %v6507
        %v6551 = vpack.c.b16 %v6508, %v6508
        %v6552 = vpack.c.b16 %v6509, %v6509
        %v6553 = vpack.c.b16 %v6510, %v6510
        %v6554 = vpack.c.b16 %v6511, %v6511
        %v6555 = vpack.c.b16 %v6512, %v6512
        %v6556 = vpack.c.b16 %v6513, %v6513
        %v6557 = vpack.c.b16 %v6514, %v6514
        %v6558 = vpack.c.b16 %v6515, %v6515
        %v6559 = vpack.c.b16 %v6516, %v6516
        %v6560 = vpack.c.b16 %v6517, %v6517
        %v6561 = vpack.c.b16 %v6518, %v6518
        %v6562 = vpack.c.b16 %v6519, %v6519
        %v6563 = vpack.c.b16 %v6520, %v6520
        %v6564 = vpack.c.b16 %v6521, %v6521
        %v6565 = vpack.c.b16 %v6522, %v6522
        %v6566 = vpack.c.b16 %v6523, %v6523
        %v6567 = vpack.c.b16 %v6524, %v6524
        %v6568 = vpack.c.b16 %v6525, %v6525
        %v6569 = vpack.c.b16 %v6526, %v6526
        %v6570 = vpack.c.b16 %v6527, %v6527
        %v6571 = vpack.c.b16 %v6528, %v6528
        %v6572 = vpack.c.b16 %v6529, %v6529
        %v6573 = vpack.c.b16 %v6530, %v6530
        %v6574 = vpack.c.b16 %v6531, %v6531
        %6575 = vrot.lane.b32.xlu0 %v6532, 64
        %v6576 = vpop.permute.xlu0 %6575
        %6577 = vrot.lane.b32.xlu0 %v6533, 64
        %v6578 = vpop.permute.xlu0 %6577
        %6579 = vrot.lane.b32.xlu0 %v6534, 64
        %v6580 = vpop.permute.xlu0 %6579
        %6581 = vrot.lane.b32.xlu0 %v6535, 64
        %v6582 = vpop.permute.xlu0 %6581
        %6583 = vrot.lane.b32.xlu0 %v6536, 64
        %v6584 = vpop.permute.xlu0 %6583
        %6585 = vrot.lane.b32.xlu0 %v6537, 64
        %v6586 = vpop.permute.xlu0 %6585
        %6587 = vrot.lane.b32.xlu0 %v6538, 64
        %v6588 = vpop.permute.xlu0 %6587
        %6589 = vrot.lane.b32.xlu0 %v6539, 64
        %v6590 = vpop.permute.xlu0 %6589
        %6591 = vrot.lane.b32.xlu0 %v6540, 64
        %v6592 = vpop.permute.xlu0 %6591
        %6593 = vrot.lane.b32.xlu0 %v6541, 64
        %v6594 = vpop.permute.xlu0 %6593
        %6595 = vrot.lane.b32.xlu0 %v6542, 64
        %v6596 = vpop.permute.xlu0 %6595
        %6597 = vrot.lane.b32.xlu0 %v6543, 64
        %v6598 = vpop.permute.xlu0 %6597
        %6599 = vrot.lane.b32.xlu0 %v6544, 64
        %v6600 = vpop.permute.xlu0 %6599
        %6601 = vrot.lane.b32.xlu0 %v6545, 64
        %v6602 = vpop.permute.xlu0 %6601
        %6603 = vrot.lane.b32.xlu0 %v6546, 64
        %v6604 = vpop.permute.xlu0 %6603
        %6605 = vrot.lane.b32.xlu0 %v6547, 64
        %v6606 = vpop.permute.xlu0 %6605
        %6607 = vrot.lane.b32.xlu0 %v6548, 64
        %v6608 = vpop.permute.xlu0 %6607
        %6609 = vrot.lane.b32.xlu0 %v6549, 64
        %v6610 = vpop.permute.xlu0 %6609
        %6611 = vrot.lane.b32.xlu0 %v6550, 64
        %v6612 = vpop.permute.xlu0 %6611
        %6613 = vrot.lane.b32.xlu0 %v6551, 64
        %v6614 = vpop.permute.xlu0 %6613
        %6615 = vrot.lane.b32.xlu0 %v6552, 64
        %v6616 = vpop.permute.xlu0 %6615
        %6617 = vrot.lane.b32.xlu0 %v6553, 64
        %v6618 = vpop.permute.xlu0 %6617
        %6619 = vrot.lane.b32.xlu0 %v6554, 64
        %v6620 = vpop.permute.xlu0 %6619
        %6621 = vrot.lane.b32.xlu0 %v6555, 64
        %v6622 = vpop.permute.xlu0 %6621
        %6623 = vrot.lane.b32.xlu0 %v6556, 64
        %v6624 = vpop.permute.xlu0 %6623
        %6625 = vrot.lane.b32.xlu0 %v6557, 64
        %v6626 = vpop.permute.xlu0 %6625
        %6627 = vrot.lane.b32.xlu0 %v6558, 64
        %v6628 = vpop.permute.xlu0 %6627
        %6629 = vrot.lane.b32.xlu0 %v6559, 64
        %v6630 = vpop.permute.xlu0 %6629
        %6631 = vrot.lane.b32.xlu0 %v6560, 64
        %v6632 = vpop.permute.xlu0 %6631
        %6633 = vrot.lane.b32.xlu0 %v6561, 64
        %v6634 = vpop.permute.xlu0 %6633
        %6635 = vrot.lane.b32.xlu0 %v6562, 64
        %v6636 = vpop.permute.xlu0 %6635
        %6637 = vrot.lane.b32.xlu0 %v6563, 64
        %v6638 = vpop.permute.xlu0 %6637
        %6639 = vrot.lane.b32.xlu0 %v6564, 64
        %v6640 = vpop.permute.xlu0 %6639
        %6641 = vrot.lane.b32.xlu0 %v6565, 64
        %v6642 = vpop.permute.xlu0 %6641
        %6643 = vrot.lane.b32.xlu0 %v6566, 64
        %v6644 = vpop.permute.xlu0 %6643
        %6645 = vrot.lane.b32.xlu0 %v6567, 64
        %v6646 = vpop.permute.xlu0 %6645
        %6647 = vrot.lane.b32.xlu0 %v6568, 64
        %v6648 = vpop.permute.xlu0 %6647
        %6649 = vrot.lane.b32.xlu0 %v6569, 64
        %v6650 = vpop.permute.xlu0 %6649
        %6651 = vrot.lane.b32.xlu0 %v6570, 64
        %v6652 = vpop.permute.xlu0 %6651
        %6653 = vrot.lane.b32.xlu0 %v6571, 64
        %v6654 = vpop.permute.xlu0 %6653
        %6655 = vrot.lane.b32.xlu0 %v6572, 64
        %v6656 = vpop.permute.xlu0 %6655
        %6657 = vrot.lane.b32.xlu0 %v6573, 64
        %v6658 = vpop.permute.xlu0 %6657
        %6659 = vrot.lane.b32.xlu0 %v6574, 64
        %v6660 = vpop.permute.xlu0 %6659
        %6704 = vst.msk [vmem:[#allocation3 + $0xc] sm:$0xf] %vm3425, %v6576
        %6705 = vst.msk [vmem:[#allocation3 + $0x10] sm:$0xf] %vm3425, %v6578
        %6706 = vst.msk [vmem:[#allocation3 + $0x14] sm:$0xf] %vm3425, %v6580
        %6707 = vst.msk [vmem:[#allocation3 + $0x18] sm:$0xf] %vm3425, %v6582
        %6708 = vst.msk [vmem:[#allocation3 + $0x1c] sm:$0xf] %vm3425, %v6584
        %6709 = vst.msk [vmem:[#allocation3 + $0x20] sm:$0xf] %vm3425, %v6586
        %6710 = vst.msk [vmem:[#allocation3 + $0x24] sm:$0xf] %vm3425, %v6588
        %6711 = vst.msk [vmem:[#allocation3 + $0x28] sm:$0xf] %vm3425, %v6590
        %6712 = vst.msk [vmem:[#allocation3 + $0x2c] sm:$0xf] %vm3425, %v6592
        %6713 = vst.msk [vmem:[#allocation3 + $0x30] sm:$0xf] %vm3425, %v6594
        %6714 = vst.msk [vmem:[#allocation3 + $0x34] sm:$0xf] %vm3425, %v6596
        %6715 = vst.msk [vmem:[#allocation3 + $0x38] sm:$0xf] %vm3425, %v6598
        %6716 = vst.msk [vmem:[#allocation3 + $0x3c] sm:$0xf] %vm3425, %v6600
        %6717 = vst.msk [vmem:[#allocation3 + $0x40] sm:$0xf] %vm3425, %v6602
        %6718 = vst.msk [vmem:[#allocation3 + $0x44] sm:$0xf] %vm3425, %v6604
        %6719 = vst.msk [vmem:[#allocation3 + $0x48] sm:$0xf] %vm3425, %v6606
        %6720 = vst.msk [vmem:[#allocation3 + $0x4c] sm:$0xf] %vm3425, %v6608
        %6721 = vst.msk [vmem:[#allocation3 + $0x50] sm:$0xf] %vm3425, %v6610
        %6722 = vst.msk [vmem:[#allocation3 + $0x54] sm:$0xf] %vm3425, %v6612
        %6723 = vst.msk [vmem:[#allocation3 + $0x58] sm:$0xf] %vm3425, %v6614
        %6724 = vst.msk [vmem:[#allocation3 + $0x5c] sm:$0xf] %vm3425, %v6616
        %6725 = vst.msk [vmem:[#allocation3 + $0x60] sm:$0xf] %vm3425, %v6618
        %6726 = vst.msk [vmem:[#allocation3 + $0x64] sm:$0xf] %vm3425, %v6620
        %6727 = vst.msk [vmem:[#allocation3 + $0x68] sm:$0xf] %vm3425, %v6622
        %6728 = vst.msk [vmem:[#allocation3 + $0x6c] sm:$0xf] %vm3425, %v6624
        %6729 = vst.msk [vmem:[#allocation3 + $0x70] sm:$0xf] %vm3425, %v6626
        %6730 = vst.msk [vmem:[#allocation3 + $0x74] sm:$0xf] %vm3425, %v6628
        %6731 = vst.msk [vmem:[#allocation3 + $0x78] sm:$0xf] %vm3425, %v6630
        %6732 = vst.msk [vmem:[#allocation3 + $0x7c] sm:$0xf] %vm3425, %v6632
        %6733 = vst.msk [vmem:[#allocation3 + $0x80] sm:$0xf] %vm3425, %v6634
        %6734 = vst.msk [vmem:[#allocation3 + $0x84] sm:$0xf] %vm3425, %v6636
        %6735 = vst.msk [vmem:[#allocation3 + $0x88] sm:$0xf] %vm3425, %v6638
        %6736 = vst.msk [vmem:[#allocation3 + $0x8c] sm:$0xf] %vm3425, %v6640
        %6737 = vst.msk [vmem:[#allocation3 + $0x90] sm:$0xf] %vm3425, %v6642
        %6738 = vst.msk [vmem:[#allocation3 + $0x94] sm:$0xf] %vm3425, %v6644
        %6739 = vst.msk [vmem:[#allocation3 + $0x98] sm:$0xf] %vm3425, %v6646
        %6740 = vst.msk [vmem:[#allocation3 + $0x9c] sm:$0xf] %vm3425, %v6648
        %6741 = vst.msk [vmem:[#allocation3 + $0xa0] sm:$0xf] %vm3425, %v6650
        %6742 = vst.msk [vmem:[#allocation3 + $0xa4] sm:$0xf] %vm3425, %v6652
        %6743 = vst.msk [vmem:[#allocation3 + $0xa8] sm:$0xf] %vm3425, %v6654
        %6744 = vst.msk [vmem:[#allocation3 + $0xac] sm:$0xf] %vm3425, %v6656
        %6745 = vst.msk [vmem:[#allocation3 + $0xb0] sm:$0xf] %vm3425, %v6658
        %6746 = vst.msk [vmem:[#allocation3 + $0xb4] sm:$0xf] %vm3425, %v6660
        %v6747 = vld [vmem:[#allocation3 + $0xc] sm:$0x8]
        %v6748 = vld [vmem:[#allocation3 + $0x10] sm:$0xf]
        %v6749 = vld [vmem:[#allocation3 + $0x14] sm:$0xf]
        %v6750 = vld [vmem:[#allocation3 + $0x18] sm:$0xf]
        %v6751 = vld [vmem:[#allocation3 + $0x1c] sm:$0xf]
        %v6752 = vld [vmem:[#allocation3 + $0x20] sm:$0xf]
        %v6753 = vld [vmem:[#allocation3 + $0x24] sm:$0xf]
        %v6754 = vld [vmem:[#allocation3 + $0x28] sm:$0xf]
        %v6755 = vld [vmem:[#allocation3 + $0x2c] sm:$0xf]
        %v6756 = vld [vmem:[#allocation3 + $0x30] sm:$0xf]
        %v6757 = vld [vmem:[#allocation3 + $0x34] sm:$0xf]
        %v6758 = vld [vmem:[#allocation3 + $0x38] sm:$0xf]
        %v6759 = vld [vmem:[#allocation3 + $0x3c] sm:$0xf]
        %v6760 = vld [vmem:[#allocation3 + $0x40] sm:$0xf]
        %v6761 = vld [vmem:[#allocation3 + $0x44] sm:$0xf]
        %v6762 = vld [vmem:[#allocation3 + $0x48] sm:$0xf]
        %v6763 = vld [vmem:[#allocation3 + $0x4c] sm:$0xf]
        %v6764 = vld [vmem:[#allocation3 + $0x50] sm:$0xf]
        %v6765 = vld [vmem:[#allocation3 + $0x54] sm:$0xf]
        %v6766 = vld [vmem:[#allocation3 + $0x58] sm:$0xf]
        %v6767 = vld [vmem:[#allocation3 + $0x5c] sm:$0xf]
        %v6768 = vld [vmem:[#allocation3 + $0x60] sm:$0xf]
        %v6769 = vld [vmem:[#allocation3 + $0x64] sm:$0xf]
        %v6770 = vld [vmem:[#allocation3 + $0x68] sm:$0xf]
        %v6771 = vld [vmem:[#allocation3 + $0x6c] sm:$0xf]
        %v6772 = vld [vmem:[#allocation3 + $0x70] sm:$0xf]
        %v6773 = vld [vmem:[#allocation3 + $0x74] sm:$0xf]
        %v6774 = vld [vmem:[#allocation3 + $0x78] sm:$0xf]
        %v6775 = vld [vmem:[#allocation3 + $0x7c] sm:$0xf]
        %v6776 = vld [vmem:[#allocation3 + $0x80] sm:$0xf]
        %v6777 = vld [vmem:[#allocation3 + $0x84] sm:$0xf]
        %v6778 = vld [vmem:[#allocation3 + $0x88] sm:$0xf]
        %v6779 = vld [vmem:[#allocation3 + $0x8c] sm:$0xf]
        %v6780 = vld [vmem:[#allocation3 + $0x90] sm:$0xf]
        %v6781 = vld [vmem:[#allocation3 + $0x94] sm:$0xf]
        %v6782 = vld [vmem:[#allocation3 + $0x98] sm:$0xf]
        %v6783 = vld [vmem:[#allocation3 + $0x9c] sm:$0xf]
        %v6784 = vld [vmem:[#allocation3 + $0xa0] sm:$0xf]
        %v6785 = vld [vmem:[#allocation3 + $0xa4] sm:$0xf]
        %v6786 = vld [vmem:[#allocation3 + $0xa8] sm:$0xf]
        %v6787 = vld [vmem:[#allocation3 + $0xac] sm:$0xf]
        %v6788 = vld [vmem:[#allocation3 + $0xb0] sm:$0xf]
        %v6789 = vld [vmem:[%s8] sm:$0xf]
        %v6790 = vld [vmem:[%s8 + $0x4] sm:$0xf]
        %v6791 = vld [vmem:[%s8 + $0x8] sm:$0xf]
        %v6792 = vld [vmem:[%s8 + $0xc] sm:$0xf]
        %v6793 = vld [vmem:[%s8 + $0x10] sm:$0xf]
        %v6794 = vld [vmem:[%s8 + $0x14] sm:$0xf]
        %v6795 = vld [vmem:[%s8 + $0x18] sm:$0xf]
        %v6796 = vld [vmem:[%s8 + $0x1c] sm:$0xf]
        %v6797 = vld [vmem:[%s8 + $0x20] sm:$0xf]
        %v6798 = vld [vmem:[%s8 + $0x24] sm:$0xf]
        %v6799 = vld [vmem:[%s8 + $0x28] sm:$0xf]
        %v6800 = vld [vmem:[%s8 + $0x2c] sm:$0xf]
        %s6801 = scalar_lea.vmem %s8, 48
        %v6802 = vld [vmem:[%s6801] sm:$0xf]
        %v6803 = vld [vmem:[%s6801 + $0x4] sm:$0xf]
        %v6804 = vld [vmem:[%s6801 + $0x8] sm:$0xf]
        %v6805 = vld [vmem:[%s6801 + $0xc] sm:$0xf]
        %v6806 = vld [vmem:[%s6801 + $0x10] sm:$0xf]
        %v6807 = vld [vmem:[%s6801 + $0x14] sm:$0xf]
        %v6808 = vld [vmem:[%s6801 + $0x18] sm:$0xf]
        %v6809 = vld [vmem:[%s6801 + $0x1c] sm:$0xf]
        %v6810 = vld [vmem:[%s6801 + $0x20] sm:$0xf]
        %v6811 = vld [vmem:[%s6801 + $0x24] sm:$0xf]
        %v6812 = vld [vmem:[%s6801 + $0x28] sm:$0xf]
        %v6813 = vld [vmem:[%s6801 + $0x2c] sm:$0xf]
        %v6855 = vunpack.c.l.b16 %v6748
        %v6856 = vunpack.c.l.b16 %v6749
        %v6857 = vunpack.c.l.b16 %v6750
        %v6858 = vunpack.c.l.b16 %v6751
        %v6859 = vunpack.c.l.b16 %v6752
        %v6860 = vunpack.c.l.b16 %v6753
        %v6861 = vunpack.c.l.b16 %v6754
        %v6862 = vunpack.c.l.b16 %v6755
        %v6863 = vunpack.c.l.b16 %v6756
        %v6864 = vunpack.c.l.b16 %v6757
        %v6865 = vunpack.c.l.b16 %v6758
        %v6866 = vunpack.c.l.b16 %v6759
        %v6867 = vunpack.c.l.b16 %v6760
        %v6868 = vunpack.c.l.b16 %v6761
        %v6869 = vunpack.c.l.b16 %v6762
        %v6870 = vunpack.c.l.b16 %v6763
        %v6871 = vunpack.c.l.b16 %v6764
        %v6872 = vunpack.c.l.b16 %v6765
        %v6873 = vunpack.c.l.b16 %v6766
        %v6874 = vunpack.c.l.b16 %v6767
        %v6875 = vunpack.c.l.b16 %v6768
        %v6876 = vunpack.c.l.b16 %v6769
        %v6877 = vunpack.c.l.b16 %v6770
        %v6878 = vunpack.c.l.b16 %v6771
        %v6879 = vunpack.c.l.b16 %v6772
        %v6880 = vunpack.c.l.b16 %v6773
        %v6881 = vunpack.c.l.b16 %v6774
        %v6882 = vunpack.c.l.b16 %v6775
        %v6883 = vunpack.c.l.b16 %v6776
        %v6884 = vunpack.c.l.b16 %v6777
        %v6885 = vunpack.c.l.b16 %v6778
        %v6886 = vunpack.c.l.b16 %v6779
        %v6887 = vunpack.c.l.b16 %v6780
        %v6888 = vunpack.c.l.b16 %v6781
        %v6889 = vunpack.c.l.b16 %v6782
        %v6890 = vunpack.c.l.b16 %v6783
        %v6891 = vunpack.c.l.b16 %v6784
        %v6892 = vunpack.c.l.b16 %v6785
        %v6893 = vunpack.c.l.b16 %v6786
        %v6894 = vunpack.c.l.b16 %v6787
        %v6895 = vunpack.c.l.b16 %v6788
        %v6896 = vpack.c.b16 %v6856, %v6855
        %v6897 = vpack.c.b16 %v6858, %v6857
        %v6898 = vpack.c.b16 %v6860, %v6859
        %v6899 = vpack.c.b16 %v6862, %v6861
        %v6900 = vpack.c.b16 %v6864, %v6863
        %v6901 = vpack.c.b16 %v6866, %v6865
        %v6902 = vpack.c.b16 %v6868, %v6867
        %v6903 = vpack.c.b16 %v6870, %v6869
        %v6904 = vpack.c.b16 %v6872, %v6871
        %v6905 = vpack.c.b16 %v6874, %v6873
        %v6906 = vpack.c.b16 %v6876, %v6875
        %v6907 = vpack.c.b16 %v6878, %v6877
        %v6908 = vpack.c.b16 %v6880, %v6879
        %v6909 = vpack.c.b16 %v6882, %v6881
        %v6910 = vpack.c.b16 %v6884, %v6883
        %v6911 = vpack.c.b16 %v6886, %v6885
        %v6912 = vpack.c.b16 %v6888, %v6887
        %v6913 = vpack.c.b16 %v6890, %v6889
        %v6914 = vpack.c.b16 %v6892, %v6891
        %v6915 = vpack.c.b16 %v6894, %v6893
        %v6916 = vpack.c.b16 %v6895, %v6895
        %v6929 = vunpack.c.l.b16 %v6802
        %v6930 = vunpack.c.l.b16 %v6803
        %v6931 = vunpack.c.l.b16 %v6804
        %v6932 = vunpack.c.l.b16 %v6805
        %v6933 = vunpack.c.l.b16 %v6806
        %v6934 = vunpack.c.l.b16 %v6807
        %v6935 = vunpack.c.l.b16 %v6808
        %v6936 = vunpack.c.l.b16 %v6809
        %v6937 = vunpack.c.l.b16 %v6810
        %v6938 = vunpack.c.l.b16 %v6811
        %v6939 = vunpack.c.l.b16 %v6812
        %v6940 = vunpack.c.l.b16 %v6813
        %v6941 = vpack.c.b16 %v6930, %v6929
        %v6942 = vpack.c.b16 %v6932, %v6931
        %v6943 = vpack.c.b16 %v6934, %v6933
        %v6944 = vpack.c.b16 %v6936, %v6935
        %v6945 = vpack.c.b16 %v6938, %v6937
        %v6946 = vpack.c.b16 %v6940, %v6939
        %v6954 = vsel %vm3675, %v6896, 0
        %v6957 = vsel %vm3675, %v6897, 0
        %v6960 = vsel %vm3675, %v6898, 0
        %v6963 = vsel %vm3675, %v6899, 0
        %v6966 = vsel %vm3675, %v6900, 0
        %v6969 = vsel %vm3675, %v6901, 0
        %v6972 = vsel %vm3675, %v6902, 0
        %v6975 = vsel %vm3675, %v6903, 0
        %v6978 = vsel %vm3675, %v6904, 0
        %v6981 = vsel %vm3675, %v6905, 0
        %v6984 = vsel %vm3675, %v6906, 0
        %v6987 = vsel %vm3675, %v6907, 0
        %v6990 = vsel %vm3675, %v6908, 0
        %v6993 = vsel %vm3675, %v6909, 0
        %v6996 = vsel %vm3675, %v6910, 0
        %v6999 = vsel %vm3675, %v6911, 0
        %v7002 = vsel %vm3675, %v6912, 0
        %v7005 = vsel %vm3675, %v6913, 0
        %v7008 = vsel %vm3675, %v6914, 0
        %v7011 = vsel %vm3675, %v6915, 0
        %v7014 = vsel %vm3675, %v6916, 0
        %7016 = vmatprep.subr.bf16.mxu0 0
        %7017 = vmatpush1.bf16.msra.mxu0 %v6941
        %7018 = vmatprep.subr.bf16.mxu0 0
        %7019 = vmatpush1.bf16.msra.mxu0 %v6942
        %7020 = vmatprep.subr.bf16.mxu0 0
        %7021 = vmatpush1.bf16.msra.mxu0 %v6943
        %7022 = vmatprep.subr.bf16.mxu0 0
        %7023 = vmatpush1.bf16.msra.mxu0 %v6944
        %7024 = vmatprep.subr.bf16.mxu0 0
        %7025 = vmatpush1.bf16.msra.mxu0 %v6945
        %7026 = vmatprep.subr.bf16.mxu0 0
        %7027 = vmatpush1.bf16.msra.mxu0 %v6946
        %7028 = vmatprep.subr.bf16.mxu0 0
        %7029 = vmatpush1.bf16.msra.mxu0 0
        %7030 = vmatprep.subr.bf16.mxu0 0
        %7031 = vmatpush1.bf16.msra.mxu0 0
        %7032 = vmatprep.subr.bf16.mxu0 0
        %7033 = vmatpush1.bf16.msra.mxu0 0
        %7034 = vmatprep.subr.bf16.mxu0 0
        %7035 = vmatpush1.bf16.msra.mxu0 0
        %7036 = vmatprep.subr.bf16.mxu0 0
        %7037 = vmatpush1.bf16.msra.mxu0 0
        %7038 = vmatprep.subr.bf16.mxu0 0
        %7039 = vmatpush1.bf16.msra.mxu0 0
        %7040 = vmatprep.subr.bf16.mxu0 0
        %7041 = vmatpush1.bf16.msra.mxu0 0
        %7042 = vmatprep.subr.bf16.mxu0 0
        %7043 = vmatpush1.bf16.msra.mxu0 0
        %7044 = vmatprep.subr.bf16.mxu0 0
        %7045 = vmatpush1.bf16.msra.mxu0 0
        %7046 = vmatprep.subr.bf16.mxu0 0
        %7047 = vmatpush1.bf16.msra.mxu0 0
        %7048 = vmatprep.mubr.bf16.mxu0 0
        %7049 = vmatmul.mubr.bf16.gmra.mrb[0].mxu0 %v6954
        %v7050 = vpop.f32.mrb[0].mxu0
        %v7051 = vadd.f32 0.0, %v7050
        %v7052 = vpop.f32.mrb[0].mxu0
        %v7053 = vpop.f32.mrb[0].mxu0
        %v7054 = vadd.f32 0.0, %v7053
        %v7055 = vpop.f32.mrb[0].mxu0
        %7056 = vmatprep.mubr.bf16.mxu0 0
        %7057 = vmatmul.mubr.bf16.gmra.mrb[0].mxu0 %v6957
        %v7058 = vpop.f32.mrb[0].mxu0
        %v7059 = vadd.f32 0.0, %v7058
        %v7060 = vpop.f32.mrb[0].mxu0
        %v7061 = vpop.f32.mrb[0].mxu0
        %v7062 = vadd.f32 0.0, %v7061
        %v7063 = vpop.f32.mrb[0].mxu0
        %7064 = vmatprep.mubr.bf16.mxu0 0
        %7065 = vmatmul.mubr.bf16.gmra.mrb[0].mxu0 %v6960
        %v7066 = vpop.f32.mrb[0].mxu0
        %v7067 = vadd.f32 0.0, %v7066
        %v7068 = vpop.f32.mrb[0].mxu0
        %v7069 = vpop.f32.mrb[0].mxu0
        %v7070 = vadd.f32 0.0, %v7069
        %v7071 = vpop.f32.mrb[0].mxu0
        %7072 = vmatprep.mubr.bf16.mxu0 0
        %7073 = vmatmul.mubr.bf16.gmra.mrb[0].mxu0 %v6963
        %v7074 = vpop.f32.mrb[0].mxu0
        %v7075 = vadd.f32 0.0, %v7074
        %v7076 = vpop.f32.mrb[0].mxu0
        %v7077 = vpop.f32.mrb[0].mxu0
        %v7078 = vadd.f32 0.0, %v7077
        %v7079 = vpop.f32.mrb[0].mxu0
        %7080 = vmatprep.mubr.bf16.mxu0 0
        %7081 = vmatmul.mubr.bf16.gmra.mrb[0].mxu0 %v6966
        %v7082 = vpop.f32.mrb[0].mxu0
        %v7083 = vadd.f32 0.0, %v7082
        %v7084 = vpop.f32.mrb[0].mxu0
        %v7085 = vpop.f32.mrb[0].mxu0
        %v7086 = vadd.f32 0.0, %v7085
        %v7087 = vpop.f32.mrb[0].mxu0
        %7088 = vmatprep.mubr.bf16.mxu0 0
        %7089 = vmatmul.mubr.bf16.gmra.mrb[0].mxu0 %v6969
        %v7090 = vpop.f32.mrb[0].mxu0
        %v7091 = vadd.f32 0.0, %v7090
        %v7092 = vpop.f32.mrb[0].mxu0
        %v7093 = vpop.f32.mrb[0].mxu0
        %v7094 = vadd.f32 0.0, %v7093
        %v7095 = vpop.f32.mrb[0].mxu0
        %7096 = vmatprep.mubr.bf16.mxu0 0
        %7097 = vmatmul.mubr.bf16.gmra.mrb[0].mxu0 %v6972
        %v7098 = vpop.f32.mrb[0].mxu0
        %v7099 = vadd.f32 0.0, %v7098
        %v7100 = vpop.f32.mrb[0].mxu0
        %v7101 = vpop.f32.mrb[0].mxu0
        %v7102 = vadd.f32 0.0, %v7101
        %v7103 = vpop.f32.mrb[0].mxu0
        %7104 = vmatprep.mubr.bf16.mxu0 0
        %7105 = vmatmul.mubr.bf16.gmra.mrb[0].mxu0 %v6975
        %v7106 = vpop.f32.mrb[0].mxu0
        %v7107 = vadd.f32 0.0, %v7106
        %v7108 = vpop.f32.mrb[0].mxu0
        %v7109 = vpop.f32.mrb[0].mxu0
        %v7110 = vadd.f32 0.0, %v7109
        %v7111 = vpop.f32.mrb[0].mxu0
        %7112 = vmatprep.mubr.bf16.mxu0 0
        %7113 = vmatmul.mubr.bf16.gmra.mrb[0].mxu0 %v6978
        %v7114 = vpop.f32.mrb[0].mxu0
        %v7115 = vadd.f32 0.0, %v7114
        %v7116 = vpop.f32.mrb[0].mxu0
        %v7117 = vpop.f32.mrb[0].mxu0
        %v7118 = vadd.f32 0.0, %v7117
        %v7119 = vpop.f32.mrb[0].mxu0
        %7120 = vmatprep.mubr.bf16.mxu0 0
        %7121 = vmatmul.mubr.bf16.gmra.mrb[0].mxu0 %v6981
        %v7122 = vpop.f32.mrb[0].mxu0
        %v7123 = vadd.f32 0.0, %v7122
        %v7124 = vpop.f32.mrb[0].mxu0
        %v7125 = vpop.f32.mrb[0].mxu0
        %v7126 = vadd.f32 0.0, %v7125
        %v7127 = vpop.f32.mrb[0].mxu0
        %7128 = vmatprep.mubr.bf16.mxu0 0
        %7129 = vmatmul.mubr.bf16.gmra.mrb[0].mxu0 %v6984
        %v7130 = vpop.f32.mrb[0].mxu0
        %v7131 = vadd.f32 0.0, %v7130
        %v7132 = vpop.f32.mrb[0].mxu0
        %v7133 = vpop.f32.mrb[0].mxu0
        %v7134 = vadd.f32 0.0, %v7133
        %v7135 = vpop.f32.mrb[0].mxu0
        %7136 = vmatprep.mubr.bf16.mxu0 0
        %7137 = vmatmul.mubr.bf16.gmra.mrb[0].mxu0 %v6987
        %v7138 = vpop.f32.mrb[0].mxu0
        %v7139 = vadd.f32 0.0, %v7138
        %v7140 = vpop.f32.mrb[0].mxu0
        %v7141 = vpop.f32.mrb[0].mxu0
        %v7142 = vadd.f32 0.0, %v7141
        %v7143 = vpop.f32.mrb[0].mxu0
        %7144 = vmatprep.mubr.bf16.mxu0 0
        %7145 = vmatmul.mubr.bf16.gmra.mrb[0].mxu0 %v6990
        %v7146 = vpop.f32.mrb[0].mxu0
        %v7147 = vadd.f32 0.0, %v7146
        %v7148 = vpop.f32.mrb[0].mxu0
        %v7149 = vpop.f32.mrb[0].mxu0
        %v7150 = vadd.f32 0.0, %v7149
        %v7151 = vpop.f32.mrb[0].mxu0
        %7152 = vmatprep.mubr.bf16.mxu0 0
        %7153 = vmatmul.mubr.bf16.gmra.mrb[0].mxu0 %v6993
        %v7154 = vpop.f32.mrb[0].mxu0
        %v7155 = vadd.f32 0.0, %v7154
        %v7156 = vpop.f32.mrb[0].mxu0
        %v7157 = vpop.f32.mrb[0].mxu0
        %v7158 = vadd.f32 0.0, %v7157
        %v7159 = vpop.f32.mrb[0].mxu0
        %7160 = vmatprep.mubr.bf16.mxu0 0
        %7161 = vmatmul.mubr.bf16.gmra.mrb[0].mxu0 %v6996
        %v7162 = vpop.f32.mrb[0].mxu0
        %v7163 = vadd.f32 0.0, %v7162
        %v7164 = vpop.f32.mrb[0].mxu0
        %v7165 = vpop.f32.mrb[0].mxu0
        %v7166 = vadd.f32 0.0, %v7165
        %v7167 = vpop.f32.mrb[0].mxu0
        %7168 = vmatprep.mubr.bf16.mxu0 0
        %7169 = vmatmul.mubr.bf16.gmra.mrb[0].mxu0 %v6999
        %v7170 = vpop.f32.mrb[0].mxu0
        %v7171 = vadd.f32 0.0, %v7170
        %v7172 = vpop.f32.mrb[0].mxu0
        %v7173 = vpop.f32.mrb[0].mxu0
        %v7174 = vadd.f32 0.0, %v7173
        %v7175 = vpop.f32.mrb[0].mxu0
        %7176 = vmatprep.mubr.bf16.mxu0 0
        %7177 = vmatmul.mubr.bf16.gmra.mrb[0].mxu0 %v7002
        %v7178 = vpop.f32.mrb[0].mxu0
        %v7179 = vadd.f32 0.0, %v7178
        %v7180 = vpop.f32.mrb[0].mxu0
        %v7181 = vpop.f32.mrb[0].mxu0
        %v7182 = vadd.f32 0.0, %v7181
        %v7183 = vpop.f32.mrb[0].mxu0
        %7184 = vmatprep.mubr.bf16.mxu0 0
        %7185 = vmatmul.mubr.bf16.gmra.mrb[0].mxu0 %v7005
        %v7186 = vpop.f32.mrb[0].mxu0
        %v7187 = vadd.f32 0.0, %v7186
        %v7188 = vpop.f32.mrb[0].mxu0
        %v7189 = vpop.f32.mrb[0].mxu0
        %v7190 = vadd.f32 0.0, %v7189
        %v7191 = vpop.f32.mrb[0].mxu0
        %7192 = vmatprep.mubr.bf16.mxu0 0
        %7193 = vmatmul.mubr.bf16.gmra.mrb[0].mxu0 %v7008
        %v7194 = vpop.f32.mrb[0].mxu0
        %v7195 = vadd.f32 0.0, %v7194
        %v7196 = vpop.f32.mrb[0].mxu0
        %v7197 = vpop.f32.mrb[0].mxu0
        %v7198 = vadd.f32 0.0, %v7197
        %v7199 = vpop.f32.mrb[0].mxu0
        %7200 = vmatprep.mubr.bf16.mxu0 0
        %7201 = vmatmul.mubr.bf16.gmra.mrb[0].mxu0 %v7011
        %v7202 = vpop.f32.mrb[0].mxu0
        %v7203 = vadd.f32 0.0, %v7202
        %v7204 = vpop.f32.mrb[0].mxu0
        %v7205 = vpop.f32.mrb[0].mxu0
        %v7206 = vadd.f32 0.0, %v7205
        %v7207 = vpop.f32.mrb[0].mxu0
        %7208 = vmatprep.mubr.bf16.mxu0 0
        %7209 = vmatmul.mubr.bf16.gmra.mrb[0].mxu0 %v7014
        %v7210 = vpop.f32.mrb[0].mxu0
        %v7211 = vadd.f32 0.0, %v7210
        %v7212 = vpop.f32.mrb[0].mxu0
        %v7213 = vpop.f32.mrb[0].mxu0
        %v7214 = vpop.f32.mrb[0].mxu0
        %7215 = vdwg.mxu0
        %v7217 = vunpack.c.l.b16 %v6747
        %v7218 = vpack.c.b16 %v6855, %v7217
        %v7219 = vpack.c.b16 %v6857, %v6856
        %v7220 = vpack.c.b16 %v6859, %v6858
        %v7221 = vpack.c.b16 %v6861, %v6860
        %v7222 = vpack.c.b16 %v6863, %v6862
        %v7223 = vpack.c.b16 %v6865, %v6864
        %v7224 = vpack.c.b16 %v6867, %v6866
        %v7225 = vpack.c.b16 %v6869, %v6868
        %v7226 = vpack.c.b16 %v6871, %v6870
        %v7227 = vpack.c.b16 %v6873, %v6872
        %v7228 = vpack.c.b16 %v6875, %v6874
        %v7229 = vpack.c.b16 %v6877, %v6876
        %v7230 = vpack.c.b16 %v6879, %v6878
        %v7231 = vpack.c.b16 %v6881, %v6880
        %v7232 = vpack.c.b16 %v6883, %v6882
        %v7233 = vpack.c.b16 %v6885, %v6884
        %v7234 = vpack.c.b16 %v6887, %v6886
        %v7235 = vpack.c.b16 %v6889, %v6888
        %v7236 = vpack.c.b16 %v6891, %v6890
        %v7237 = vpack.c.b16 %v6893, %v6892
        %v7238 = vpack.c.b16 %v6895, %v6894
        %v7240 = vshrl.u32 %v7218, 16
        %v7242 = vrot.slane %v7240, 3
        %v7243 = vshll.u32 %v7218, 16
        %v7245 = vrot.slane %v7243, 4
        %v7246 = vor.u32 %v7242, %v7245
        %v7248 = vshrl.u32 %v7219, 16
        %v7250 = vrot.slane %v7248, 3
        %v7251 = vshll.u32 %v7219, 16
        %v7253 = vrot.slane %v7251, 4
        %v7254 = vor.u32 %v7250, %v7253
        %v7255 = vsel %vm963, %v7246, %v7254
        %v7257 = vshrl.u32 %v7220, 16
        %v7259 = vrot.slane %v7257, 3
        %v7260 = vshll.u32 %v7220, 16
        %v7262 = vrot.slane %v7260, 4
        %v7263 = vor.u32 %v7259, %v7262
        %v7264 = vsel %vm963, %v7254, %v7263
        %v7266 = vshrl.u32 %v7221, 16
        %v7268 = vrot.slane %v7266, 3
        %v7269 = vshll.u32 %v7221, 16
        %v7271 = vrot.slane %v7269, 4
        %v7272 = vor.u32 %v7268, %v7271
        %v7273 = vsel %vm963, %v7263, %v7272
        %v7275 = vshrl.u32 %v7222, 16
        %v7277 = vrot.slane %v7275, 3
        %v7278 = vshll.u32 %v7222, 16
        %v7280 = vrot.slane %v7278, 4
        %v7281 = vor.u32 %v7277, %v7280
        %v7282 = vsel %vm963, %v7272, %v7281
        %v7284 = vshrl.u32 %v7223, 16
        %v7286 = vrot.slane %v7284, 3
        %v7287 = vshll.u32 %v7223, 16
        %v7289 = vrot.slane %v7287, 4
        %v7290 = vor.u32 %v7286, %v7289
        %v7291 = vsel %vm963, %v7281, %v7290
        %v7293 = vshrl.u32 %v7224, 16
        %v7295 = vrot.slane %v7293, 3
        %v7296 = vshll.u32 %v7224, 16
        %v7298 = vrot.slane %v7296, 4
        %v7299 = vor.u32 %v7295, %v7298
        %v7300 = vsel %vm963, %v7290, %v7299
        %v7302 = vshrl.u32 %v7225, 16
        %v7304 = vrot.slane %v7302, 3
        %v7305 = vshll.u32 %v7225, 16
        %v7307 = vrot.slane %v7305, 4
        %v7308 = vor.u32 %v7304, %v7307
        %v7309 = vsel %vm963, %v7299, %v7308
        %v7311 = vshrl.u32 %v7226, 16
        %v7313 = vrot.slane %v7311, 3
        %v7314 = vshll.u32 %v7226, 16
        %v7316 = vrot.slane %v7314, 4
        %v7317 = vor.u32 %v7313, %v7316
        %v7318 = vsel %vm963, %v7308, %v7317
        %v7320 = vshrl.u32 %v7227, 16
        %v7322 = vrot.slane %v7320, 3
        %v7323 = vshll.u32 %v7227, 16
        %v7325 = vrot.slane %v7323, 4
        %v7326 = vor.u32 %v7322, %v7325
        %v7327 = vsel %vm963, %v7317, %v7326
        %v7329 = vshrl.u32 %v7228, 16
        %v7331 = vrot.slane %v7329, 3
        %v7332 = vshll.u32 %v7228, 16
        %v7334 = vrot.slane %v7332, 4
        %v7335 = vor.u32 %v7331, %v7334
        %v7336 = vsel %vm963, %v7326, %v7335
        %v7338 = vshrl.u32 %v7229, 16
        %v7340 = vrot.slane %v7338, 3
        %v7341 = vshll.u32 %v7229, 16
        %v7343 = vrot.slane %v7341, 4
        %v7344 = vor.u32 %v7340, %v7343
        %v7345 = vsel %vm963, %v7335, %v7344
        %v7347 = vshrl.u32 %v7230, 16
        %v7349 = vrot.slane %v7347, 3
        %v7350 = vshll.u32 %v7230, 16
        %v7352 = vrot.slane %v7350, 4
        %v7353 = vor.u32 %v7349, %v7352
        %v7354 = vsel %vm963, %v7344, %v7353
        %v7356 = vshrl.u32 %v7231, 16
        %v7358 = vrot.slane %v7356, 3
        %v7359 = vshll.u32 %v7231, 16
        %v7361 = vrot.slane %v7359, 4
        %v7362 = vor.u32 %v7358, %v7361
        %v7363 = vsel %vm963, %v7353, %v7362
        %v7365 = vshrl.u32 %v7232, 16
        %v7367 = vrot.slane %v7365, 3
        %v7368 = vshll.u32 %v7232, 16
        %v7370 = vrot.slane %v7368, 4
        %v7371 = vor.u32 %v7367, %v7370
        %v7372 = vsel %vm963, %v7362, %v7371
        %v7374 = vshrl.u32 %v7233, 16
        %v7376 = vrot.slane %v7374, 3
        %v7377 = vshll.u32 %v7233, 16
        %v7379 = vrot.slane %v7377, 4
        %v7380 = vor.u32 %v7376, %v7379
        %v7381 = vsel %vm963, %v7371, %v7380
        %v7383 = vshrl.u32 %v7234, 16
        %v7385 = vrot.slane %v7383, 3
        %v7386 = vshll.u32 %v7234, 16
        %v7388 = vrot.slane %v7386, 4
        %v7389 = vor.u32 %v7385, %v7388
        %v7390 = vsel %vm963, %v7380, %v7389
        %v7392 = vshrl.u32 %v7235, 16
        %v7394 = vrot.slane %v7392, 3
        %v7395 = vshll.u32 %v7235, 16
        %v7397 = vrot.slane %v7395, 4
        %v7398 = vor.u32 %v7394, %v7397
        %v7399 = vsel %vm963, %v7389, %v7398
        %v7401 = vshrl.u32 %v7236, 16
        %v7403 = vrot.slane %v7401, 3
        %v7404 = vshll.u32 %v7236, 16
        %v7406 = vrot.slane %v7404, 4
        %v7407 = vor.u32 %v7403, %v7406
        %v7408 = vsel %vm963, %v7398, %v7407
        %v7410 = vshrl.u32 %v7237, 16
        %v7412 = vrot.slane %v7410, 3
        %v7413 = vshll.u32 %v7237, 16
        %v7415 = vrot.slane %v7413, 4
        %v7416 = vor.u32 %v7412, %v7415
        %v7417 = vsel %vm963, %v7407, %v7416
        %v7419 = vshrl.u32 %v7238, 16
        %v7421 = vrot.slane %v7419, 3
        %v7422 = vshll.u32 %v7238, 16
        %v7424 = vrot.slane %v7422, 4
        %v7425 = vor.u32 %v7421, %v7424
        %v7426 = vsel %vm963, %v7416, %v7425
        %v7439 = vunpack.c.l.b16 %v6789
        %v7440 = vunpack.c.l.b16 %v6790
        %v7441 = vunpack.c.l.b16 %v6791
        %v7442 = vunpack.c.l.b16 %v6792
        %v7443 = vunpack.c.l.b16 %v6793
        %v7444 = vunpack.c.l.b16 %v6794
        %v7445 = vunpack.c.l.b16 %v6795
        %v7446 = vunpack.c.l.b16 %v6796
        %v7447 = vunpack.c.l.b16 %v6797
        %v7448 = vunpack.c.l.b16 %v6798
        %v7449 = vunpack.c.l.b16 %v6799
        %v7450 = vunpack.c.l.b16 %v6800
        %v7451 = vpack.c.b16 %v7440, %v7439
        %v7452 = vpack.c.b16 %v7442, %v7441
        %v7453 = vpack.c.b16 %v7444, %v7443
        %v7454 = vpack.c.b16 %v7446, %v7445
        %v7455 = vpack.c.b16 %v7448, %v7447
        %v7456 = vpack.c.b16 %v7450, %v7449
        %v7464 = vsel %vm3675, %v7255, 0
        %v7467 = vsel %vm3675, %v7264, 0
        %v7470 = vsel %vm3675, %v7273, 0
        %v7473 = vsel %vm3675, %v7282, 0
        %v7476 = vsel %vm3675, %v7291, 0
        %v7479 = vsel %vm3675, %v7300, 0
        %v7482 = vsel %vm3675, %v7309, 0
        %v7485 = vsel %vm3675, %v7318, 0
        %v7488 = vsel %vm3675, %v7327, 0
        %v7491 = vsel %vm3675, %v7336, 0
        %v7494 = vsel %vm3675, %v7345, 0
        %v7497 = vsel %vm3675, %v7354, 0
        %v7500 = vsel %vm3675, %v7363, 0
        %v7503 = vsel %vm3675, %v7372, 0
        %v7506 = vsel %vm3675, %v7381, 0
        %v7509 = vsel %vm3675, %v7390, 0
        %v7512 = vsel %vm3675, %v7399, 0
        %v7515 = vsel %vm3675, %v7408, 0
        %v7518 = vsel %vm3675, %v7417, 0
        %v7521 = vsel %vm3675, %v7426, 0
        %v7524 = vsel %vm3675, %v7425, 0
        %7526 = vmatprep.subr.bf16.mxu0 0
        %7527 = vmatpush1.bf16.msra.mxu0 %v7451
        %7528 = vmatprep.subr.bf16.mxu0 0
        %7529 = vmatpush1.bf16.msra.mxu0 %v7452
        %7530 = vmatprep.subr.bf16.mxu0 0
        %7531 = vmatpush1.bf16.msra.mxu0 %v7453
        %7532 = vmatprep.subr.bf16.mxu0 0
        %7533 = vmatpush1.bf16.msra.mxu0 %v7454
        %7534 = vmatprep.subr.bf16.mxu0 0
        %7535 = vmatpush1.bf16.msra.mxu0 %v7455
        %7536 = vmatprep.subr.bf16.mxu0 0
        %7537 = vmatpush1.bf16.msra.mxu0 %v7456
        %7538 = vmatprep.subr.bf16.mxu0 0
        %7539 = vmatpush1.bf16.msra.mxu0 0
        %7540 = vmatprep.subr.bf16.mxu0 0
        %7541 = vmatpush1.bf16.msra.mxu0 0
        %7542 = vmatprep.subr.bf16.mxu0 0
        %7543 = vmatpush1.bf16.msra.mxu0 0
        %7544 = vmatprep.subr.bf16.mxu0 0
        %7545 = vmatpush1.bf16.msra.mxu0 0
        %7546 = vmatprep.subr.bf16.mxu0 0
        %7547 = vmatpush1.bf16.msra.mxu0 0
        %7548 = vmatprep.subr.bf16.mxu0 0
        %7549 = vmatpush1.bf16.msra.mxu0 0
        %7550 = vmatprep.subr.bf16.mxu0 0
        %7551 = vmatpush1.bf16.msra.mxu0 0
        %7552 = vmatprep.subr.bf16.mxu0 0
        %7553 = vmatpush1.bf16.msra.mxu0 0
        %7554 = vmatprep.subr.bf16.mxu0 0
        %7555 = vmatpush1.bf16.msra.mxu0 0
        %7556 = vmatprep.subr.bf16.mxu0 0
        %7557 = vmatpush1.bf16.msra.mxu0 0
        %7558 = vmatprep.mubr.bf16.mxu0 0
        %7559 = vmatmul.mubr.bf16.gmra.mrb[0].mxu0 %v7464
        %v7560 = vpop.f32.mrb[0].mxu0
        %v7561 = vadd.f32 %v7051, %v7560
        %v7562 = vpop.f32.mrb[0].mxu0
        %v7563 = vpop.f32.mrb[0].mxu0
        %v7564 = vadd.f32 %v7054, %v7563
        %v7565 = vpop.f32.mrb[0].mxu0
        %7566 = vmatprep.mubr.bf16.mxu0 0
        %7567 = vmatmul.mubr.bf16.gmra.mrb[0].mxu0 %v7467
        %v7568 = vpop.f32.mrb[0].mxu0
        %v7569 = vadd.f32 %v7059, %v7568
        %v7570 = vpop.f32.mrb[0].mxu0
        %v7571 = vpop.f32.mrb[0].mxu0
        %v7572 = vadd.f32 %v7062, %v7571
        %v7573 = vpop.f32.mrb[0].mxu0
        %7574 = vmatprep.mubr.bf16.mxu0 0
        %7575 = vmatmul.mubr.bf16.gmra.mrb[0].mxu0 %v7470
        %v7576 = vpop.f32.mrb[0].mxu0
        %v7577 = vadd.f32 %v7067, %v7576
        %v7578 = vpop.f32.mrb[0].mxu0
        %v7579 = vpop.f32.mrb[0].mxu0
        %v7580 = vadd.f32 %v7070, %v7579
        %v7581 = vpop.f32.mrb[0].mxu0
        %7582 = vmatprep.mubr.bf16.mxu0 0
        %7583 = vmatmul.mubr.bf16.gmra.mrb[0].mxu0 %v7473
        %v7584 = vpop.f32.mrb[0].mxu0
        %v7585 = vadd.f32 %v7075, %v7584
        %v7586 = vpop.f32.mrb[0].mxu0
        %v7587 = vpop.f32.mrb[0].mxu0
        %v7588 = vadd.f32 %v7078, %v7587
        %v7589 = vpop.f32.mrb[0].mxu0
        %7590 = vmatprep.mubr.bf16.mxu0 0
        %7591 = vmatmul.mubr.bf16.gmra.mrb[0].mxu0 %v7476
        %v7592 = vpop.f32.mrb[0].mxu0
        %v7593 = vadd.f32 %v7083, %v7592
        %v7594 = vpop.f32.mrb[0].mxu0
        %v7595 = vpop.f32.mrb[0].mxu0
        %v7596 = vadd.f32 %v7086, %v7595
        %v7597 = vpop.f32.mrb[0].mxu0
        %7598 = vmatprep.mubr.bf16.mxu0 0
        %7599 = vmatmul.mubr.bf16.gmra.mrb[0].mxu0 %v7479
        %v7600 = vpop.f32.mrb[0].mxu0
        %v7601 = vadd.f32 %v7091, %v7600
        %v7602 = vpop.f32.mrb[0].mxu0
        %v7603 = vpop.f32.mrb[0].mxu0
        %v7604 = vadd.f32 %v7094, %v7603
        %v7605 = vpop.f32.mrb[0].mxu0
        %7606 = vmatprep.mubr.bf16.mxu0 0
        %7607 = vmatmul.mubr.bf16.gmra.mrb[0].mxu0 %v7482
        %v7608 = vpop.f32.mrb[0].mxu0
        %v7609 = vadd.f32 %v7099, %v7608
        %v7610 = vpop.f32.mrb[0].mxu0
        %v7611 = vpop.f32.mrb[0].mxu0
        %v7612 = vadd.f32 %v7102, %v7611
        %v7613 = vpop.f32.mrb[0].mxu0
        %7614 = vmatprep.mubr.bf16.mxu0 0
        %7615 = vmatmul.mubr.bf16.gmra.mrb[0].mxu0 %v7485
        %v7616 = vpop.f32.mrb[0].mxu0
        %v7617 = vadd.f32 %v7107, %v7616
        %v7618 = vpop.f32.mrb[0].mxu0
        %v7619 = vpop.f32.mrb[0].mxu0
        %v7620 = vadd.f32 %v7110, %v7619
        %v7621 = vpop.f32.mrb[0].mxu0
        %7622 = vmatprep.mubr.bf16.mxu0 0
        %7623 = vmatmul.mubr.bf16.gmra.mrb[0].mxu0 %v7488
        %v7624 = vpop.f32.mrb[0].mxu0
        %v7625 = vadd.f32 %v7115, %v7624
        %v7626 = vpop.f32.mrb[0].mxu0
        %v7627 = vpop.f32.mrb[0].mxu0
        %v7628 = vadd.f32 %v7118, %v7627
        %v7629 = vpop.f32.mrb[0].mxu0
        %7630 = vmatprep.mubr.bf16.mxu0 0
        %7631 = vmatmul.mubr.bf16.gmra.mrb[0].mxu0 %v7491
        %v7632 = vpop.f32.mrb[0].mxu0
        %v7633 = vadd.f32 %v7123, %v7632
        %v7634 = vpop.f32.mrb[0].mxu0
        %v7635 = vpop.f32.mrb[0].mxu0
        %v7636 = vadd.f32 %v7126, %v7635
        %v7637 = vpop.f32.mrb[0].mxu0
        %7638 = vmatprep.mubr.bf16.mxu0 0
        %7639 = vmatmul.mubr.bf16.gmra.mrb[0].mxu0 %v7494
        %v7640 = vpop.f32.mrb[0].mxu0
        %v7641 = vadd.f32 %v7131, %v7640
        %v7642 = vpop.f32.mrb[0].mxu0
        %v7643 = vpop.f32.mrb[0].mxu0
        %v7644 = vadd.f32 %v7134, %v7643
        %v7645 = vpop.f32.mrb[0].mxu0
        %7646 = vmatprep.mubr.bf16.mxu0 0
        %7647 = vmatmul.mubr.bf16.gmra.mrb[0].mxu0 %v7497
        %v7648 = vpop.f32.mrb[0].mxu0
        %v7649 = vadd.f32 %v7139, %v7648
        %v7650 = vpop.f32.mrb[0].mxu0
        %v7651 = vpop.f32.mrb[0].mxu0
        %v7652 = vadd.f32 %v7142, %v7651
        %v7653 = vpop.f32.mrb[0].mxu0
        %7654 = vmatprep.mubr.bf16.mxu0 0
        %7655 = vmatmul.mubr.bf16.gmra.mrb[0].mxu0 %v7500
        %v7656 = vpop.f32.mrb[0].mxu0
        %v7657 = vadd.f32 %v7147, %v7656
        %v7658 = vpop.f32.mrb[0].mxu0
        %v7659 = vpop.f32.mrb[0].mxu0
        %v7660 = vadd.f32 %v7150, %v7659
        %v7661 = vpop.f32.mrb[0].mxu0
        %7662 = vmatprep.mubr.bf16.mxu0 0
        %7663 = vmatmul.mubr.bf16.gmra.mrb[0].mxu0 %v7503
        %v7664 = vpop.f32.mrb[0].mxu0
        %v7665 = vadd.f32 %v7155, %v7664
        %v7666 = vpop.f32.mrb[0].mxu0
        %v7667 = vpop.f32.mrb[0].mxu0
        %v7668 = vadd.f32 %v7158, %v7667
        %v7669 = vpop.f32.mrb[0].mxu0
        %7670 = vmatprep.mubr.bf16.mxu0 0
        %7671 = vmatmul.mubr.bf16.gmra.mrb[0].mxu0 %v7506
        %v7672 = vpop.f32.mrb[0].mxu0
        %v7673 = vadd.f32 %v7163, %v7672
        %v7674 = vpop.f32.mrb[0].mxu0
        %v7675 = vpop.f32.mrb[0].mxu0
        %v7676 = vadd.f32 %v7166, %v7675
        %v7677 = vpop.f32.mrb[0].mxu0
        %7678 = vmatprep.mubr.bf16.mxu0 0
        %7679 = vmatmul.mubr.bf16.gmra.mrb[0].mxu0 %v7509
        %v7680 = vpop.f32.mrb[0].mxu0
        %v7681 = vadd.f32 %v7171, %v7680
        %v7682 = vpop.f32.mrb[0].mxu0
        %v7683 = vpop.f32.mrb[0].mxu0
        %v7684 = vadd.f32 %v7174, %v7683
        %v7685 = vpop.f32.mrb[0].mxu0
        %7686 = vmatprep.mubr.bf16.mxu0 0
        %7687 = vmatmul.mubr.bf16.gmra.mrb[0].mxu0 %v7512
        %v7688 = vpop.f32.mrb[0].mxu0
        %v7689 = vadd.f32 %v7179, %v7688
        %v7690 = vpop.f32.mrb[0].mxu0
        %v7691 = vpop.f32.mrb[0].mxu0
        %v7692 = vadd.f32 %v7182, %v7691
        %v7693 = vpop.f32.mrb[0].mxu0
        %7694 = vmatprep.mubr.bf16.mxu0 0
        %7695 = vmatmul.mubr.bf16.gmra.mrb[0].mxu0 %v7515
        %v7696 = vpop.f32.mrb[0].mxu0
        %v7697 = vadd.f32 %v7187, %v7696
        %v7698 = vpop.f32.mrb[0].mxu0
        %v7699 = vpop.f32.mrb[0].mxu0
        %v7700 = vadd.f32 %v7190, %v7699
        %v7701 = vpop.f32.mrb[0].mxu0
        %7702 = vmatprep.mubr.bf16.mxu0 0
        %7703 = vmatmul.mubr.bf16.gmra.mrb[0].mxu0 %v7518
        %v7704 = vpop.f32.mrb[0].mxu0
        %v7705 = vadd.f32 %v7195, %v7704
        %v7706 = vpop.f32.mrb[0].mxu0
        %v7707 = vpop.f32.mrb[0].mxu0
        %v7708 = vadd.f32 %v7198, %v7707
        %v7709 = vpop.f32.mrb[0].mxu0
        %7710 = vmatprep.mubr.bf16.mxu0 0
        %7711 = vmatmul.mubr.bf16.gmra.mrb[0].mxu0 %v7521
        %v7712 = vpop.f32.mrb[0].mxu0
        %v7713 = vadd.f32 %v7203, %v7712
        %v7714 = vpop.f32.mrb[0].mxu0
        %v7715 = vpop.f32.mrb[0].mxu0
        %v7716 = vadd.f32 %v7206, %v7715
        %v7717 = vpop.f32.mrb[0].mxu0
        %7718 = vmatprep.mubr.bf16.mxu0 0
        %7719 = vmatmul.mubr.bf16.gmra.mrb[0].mxu0 %v7524
        %v7720 = vpop.f32.mrb[0].mxu0
        %v7721 = vadd.f32 %v7211, %v7720
        %v7722 = vpop.f32.mrb[0].mxu0
        %v7723 = vpop.f32.mrb[0].mxu0
        %v7724 = vpop.f32.mrb[0].mxu0
        %7725 = vdwg.mxu0
        %v7726 = vld [vmem:[#allocation3 + $0x10] sm:$0xf]
        %v7727 = vld [vmem:[#allocation3 + $0x14] sm:$0xf]
        %v7728 = vld [vmem:[#allocation3 + $0x18] sm:$0xf]
        %v7729 = vld [vmem:[#allocation3 + $0x1c] sm:$0xf]
        %v7730 = vld [vmem:[#allocation3 + $0x20] sm:$0xf]
        %v7731 = vld [vmem:[#allocation3 + $0x24] sm:$0xf]
        %v7732 = vld [vmem:[#allocation3 + $0x28] sm:$0xf]
        %v7733 = vld [vmem:[#allocation3 + $0x2c] sm:$0xf]
        %v7734 = vld [vmem:[#allocation3 + $0x30] sm:$0xf]
        %v7735 = vld [vmem:[#allocation3 + $0x34] sm:$0xf]
        %v7736 = vld [vmem:[#allocation3 + $0x38] sm:$0xf]
        %v7737 = vld [vmem:[#allocation3 + $0x3c] sm:$0xf]
        %v7738 = vld [vmem:[#allocation3 + $0x40] sm:$0xf]
        %v7739 = vld [vmem:[#allocation3 + $0x44] sm:$0xf]
        %v7740 = vld [vmem:[#allocation3 + $0x48] sm:$0xf]
        %v7741 = vld [vmem:[#allocation3 + $0x4c] sm:$0xf]
        %v7742 = vld [vmem:[#allocation3 + $0x50] sm:$0xf]
        %v7743 = vld [vmem:[#allocation3 + $0x54] sm:$0xf]
        %v7744 = vld [vmem:[#allocation3 + $0x58] sm:$0xf]
        %v7745 = vld [vmem:[#allocation3 + $0x5c] sm:$0xf]
        %v7746 = vld [vmem:[#allocation3 + $0x60] sm:$0xf]
        %v7747 = vld [vmem:[#allocation3 + $0x64] sm:$0xf]
        %v7748 = vld [vmem:[#allocation3 + $0x68] sm:$0xf]
        %v7749 = vld [vmem:[#allocation3 + $0x6c] sm:$0xf]
        %v7750 = vld [vmem:[#allocation3 + $0x70] sm:$0xf]
        %v7751 = vld [vmem:[#allocation3 + $0x74] sm:$0xf]
        %v7752 = vld [vmem:[#allocation3 + $0x78] sm:$0xf]
        %v7753 = vld [vmem:[#allocation3 + $0x7c] sm:$0xf]
        %v7754 = vld [vmem:[#allocation3 + $0x80] sm:$0xf]
        %v7755 = vld [vmem:[#allocation3 + $0x84] sm:$0xf]
        %v7756 = vld [vmem:[#allocation3 + $0x88] sm:$0xf]
        %v7757 = vld [vmem:[#allocation3 + $0x8c] sm:$0xf]
        %v7758 = vld [vmem:[#allocation3 + $0x90] sm:$0xf]
        %v7759 = vld [vmem:[#allocation3 + $0x94] sm:$0xf]
        %v7760 = vld [vmem:[#allocation3 + $0x98] sm:$0xf]
        %v7761 = vld [vmem:[#allocation3 + $0x9c] sm:$0xf]
        %v7762 = vld [vmem:[#allocation3 + $0xa0] sm:$0xf]
        %v7763 = vld [vmem:[#allocation3 + $0xa4] sm:$0xf]
        %v7764 = vld [vmem:[#allocation3 + $0xa8] sm:$0xf]
        %v7765 = vld [vmem:[#allocation3 + $0xac] sm:$0xf]
        %v7766 = vld [vmem:[#allocation3 + $0xb0] sm:$0xf]
        %v7767 = vld [vmem:[#allocation3 + $0xb4] sm:$0x1]
        %s7768 = scalar_lea.vmem %s8, 96
        %v7769 = vld [vmem:[%s7768] sm:$0xf]
        %v7770 = vld [vmem:[%s7768 + $0x4] sm:$0xf]
        %v7771 = vld [vmem:[%s7768 + $0x8] sm:$0xf]
        %v7772 = vld [vmem:[%s7768 + $0xc] sm:$0xf]
        %v7773 = vld [vmem:[%s7768 + $0x10] sm:$0xf]
        %v7774 = vld [vmem:[%s7768 + $0x14] sm:$0xf]
        %v7775 = vld [vmem:[%s7768 + $0x18] sm:$0xf]
        %v7776 = vld [vmem:[%s7768 + $0x1c] sm:$0xf]
        %v7777 = vld [vmem:[%s7768 + $0x20] sm:$0xf]
        %v7778 = vld [vmem:[%s7768 + $0x24] sm:$0xf]
        %v7779 = vld [vmem:[%s7768 + $0x28] sm:$0xf]
        %v7780 = vld [vmem:[%s7768 + $0x2c] sm:$0xf]
        %v7823 = vunpack.c.l.b16 %v7726
        %v7824 = vunpack.c.l.b16 %v7727
        %v7825 = vunpack.c.l.b16 %v7728
        %v7826 = vunpack.c.l.b16 %v7729
        %v7827 = vunpack.c.l.b16 %v7730
        %v7828 = vunpack.c.l.b16 %v7731
        %v7829 = vunpack.c.l.b16 %v7732
        %v7830 = vunpack.c.l.b16 %v7733
        %v7831 = vunpack.c.l.b16 %v7734
        %v7832 = vunpack.c.l.b16 %v7735
        %v7833 = vunpack.c.l.b16 %v7736
        %v7834 = vunpack.c.l.b16 %v7737
        %v7835 = vunpack.c.l.b16 %v7738
        %v7836 = vunpack.c.l.b16 %v7739
        %v7837 = vunpack.c.l.b16 %v7740
        %v7838 = vunpack.c.l.b16 %v7741
        %v7839 = vunpack.c.l.b16 %v7742
        %v7840 = vunpack.c.l.b16 %v7743
        %v7841 = vunpack.c.l.b16 %v7744
        %v7842 = vunpack.c.l.b16 %v7745
        %v7843 = vunpack.c.l.b16 %v7746
        %v7844 = vunpack.c.l.b16 %v7747
        %v7845 = vunpack.c.l.b16 %v7748
        %v7846 = vunpack.c.l.b16 %v7749
        %v7847 = vunpack.c.l.b16 %v7750
        %v7848 = vunpack.c.l.b16 %v7751
        %v7849 = vunpack.c.l.b16 %v7752
        %v7850 = vunpack.c.l.b16 %v7753
        %v7851 = vunpack.c.l.b16 %v7754
        %v7852 = vunpack.c.l.b16 %v7755
        %v7853 = vunpack.c.l.b16 %v7756
        %v7854 = vunpack.c.l.b16 %v7757
        %v7855 = vunpack.c.l.b16 %v7758
        %v7856 = vunpack.c.l.b16 %v7759
        %v7857 = vunpack.c.l.b16 %v7760
        %v7858 = vunpack.c.l.b16 %v7761
        %v7859 = vunpack.c.l.b16 %v7762
        %v7860 = vunpack.c.l.b16 %v7763
        %v7861 = vunpack.c.l.b16 %v7764
        %v7862 = vunpack.c.l.b16 %v7765
        %v7863 = vunpack.c.l.b16 %v7766
        %v7864 = vunpack.c.l.b16 %v7767
        %v7865 = vpack.c.b16 %v7824, %v7823
        %v7866 = vpack.c.b16 %v7826, %v7825
        %v7867 = vpack.c.b16 %v7828, %v7827
        %v7868 = vpack.c.b16 %v7830, %v7829
        %v7869 = vpack.c.b16 %v7832, %v7831
        %v7870 = vpack.c.b16 %v7834, %v7833
        %v7871 = vpack.c.b16 %v7836, %v7835
        %v7872 = vpack.c.b16 %v7838, %v7837
        %v7873 = vpack.c.b16 %v7840, %v7839
        %v7874 = vpack.c.b16 %v7842, %v7841
        %v7875 = vpack.c.b16 %v7844, %v7843
        %v7876 = vpack.c.b16 %v7846, %v7845
        %v7877 = vpack.c.b16 %v7848, %v7847
        %v7878 = vpack.c.b16 %v7850, %v7849
        %v7879 = vpack.c.b16 %v7852, %v7851
        %v7880 = vpack.c.b16 %v7854, %v7853
        %v7881 = vpack.c.b16 %v7856, %v7855
        %v7882 = vpack.c.b16 %v7858, %v7857
        %v7883 = vpack.c.b16 %v7860, %v7859
        %v7884 = vpack.c.b16 %v7862, %v7861
        %v7885 = vpack.c.b16 %v7864, %v7863
        %v7887 = vshrl.u32 %v7865, 16
        %v7889 = vshll.u32 %v7865, 16
        %v7891 = vrot.slane %v7889, 1
        %v7892 = vor.u32 %v7887, %v7891
        %v7894 = vshll.u32 %v7866, 16
        %v7896 = vrot.slane %v7894, 1
        %v7897 = vsel %vm1573, %v7892, %v7896
        %v7898 = vshrl.u32 %v7866, 16
        %v7900 = vor.u32 %v7898, %v7896
        %v7902 = vshll.u32 %v7867, 16
        %v7904 = vrot.slane %v7902, 1
        %v7905 = vsel %vm1573, %v7900, %v7904
        %v7906 = vshrl.u32 %v7867, 16
        %v7908 = vor.u32 %v7906, %v7904
        %v7910 = vshll.u32 %v7868, 16
        %v7912 = vrot.slane %v7910, 1
        %v7913 = vsel %vm1573, %v7908, %v7912
        %v7914 = vshrl.u32 %v7868, 16
        %v7916 = vor.u32 %v7914, %v7912
        %v7918 = vshll.u32 %v7869, 16
        %v7920 = vrot.slane %v7918, 1
        %v7921 = vsel %vm1573, %v7916, %v7920
        %v7922 = vshrl.u32 %v7869, 16
        %v7924 = vor.u32 %v7922, %v7920
        %v7926 = vshll.u32 %v7870, 16
        %v7928 = vrot.slane %v7926, 1
        %v7929 = vsel %vm1573, %v7924, %v7928
        %v7930 = vshrl.u32 %v7870, 16
        %v7932 = vor.u32 %v7930, %v7928
        %v7934 = vshll.u32 %v7871, 16
        %v7936 = vrot.slane %v7934, 1
        %v7937 = vsel %vm1573, %v7932, %v7936
        %v7938 = vshrl.u32 %v7871, 16
        %v7940 = vor.u32 %v7938, %v7936
        %v7942 = vshll.u32 %v7872, 16
        %v7944 = vrot.slane %v7942, 1
        %v7945 = vsel %vm1573, %v7940, %v7944
        %v7946 = vshrl.u32 %v7872, 16
        %v7948 = vor.u32 %v7946, %v7944
        %v7950 = vshll.u32 %v7873, 16
        %v7952 = vrot.slane %v7950, 1
        %v7953 = vsel %vm1573, %v7948, %v7952
        %v7954 = vshrl.u32 %v7873, 16
        %v7956 = vor.u32 %v7954, %v7952
        %v7958 = vshll.u32 %v7874, 16
        %v7960 = vrot.slane %v7958, 1
        %v7961 = vsel %vm1573, %v7956, %v7960
        %v7962 = vshrl.u32 %v7874, 16
        %v7964 = vor.u32 %v7962, %v7960
        %v7966 = vshll.u32 %v7875, 16
        %v7968 = vrot.slane %v7966, 1
        %v7969 = vsel %vm1573, %v7964, %v7968
        %v7970 = vshrl.u32 %v7875, 16
        %v7972 = vor.u32 %v7970, %v7968
        %v7974 = vshll.u32 %v7876, 16
        %v7976 = vrot.slane %v7974, 1
        %v7977 = vsel %vm1573, %v7972, %v7976
        %v7978 = vshrl.u32 %v7876, 16
        %v7980 = vor.u32 %v7978, %v7976
        %v7982 = vshll.u32 %v7877, 16
        %v7984 = vrot.slane %v7982, 1
        %v7985 = vsel %vm1573, %v7980, %v7984
        %v7986 = vshrl.u32 %v7877, 16
        %v7988 = vor.u32 %v7986, %v7984
        %v7990 = vshll.u32 %v7878, 16
        %v7992 = vrot.slane %v7990, 1
        %v7993 = vsel %vm1573, %v7988, %v7992
        %v7994 = vshrl.u32 %v7878, 16
        %v7996 = vor.u32 %v7994, %v7992
        %v7998 = vshll.u32 %v7879, 16
        %v8000 = vrot.slane %v7998, 1
        %v8001 = vsel %vm1573, %v7996, %v8000
        %v8002 = vshrl.u32 %v7879, 16
        %v8004 = vor.u32 %v8002, %v8000
        %v8006 = vshll.u32 %v7880, 16
        %v8008 = vrot.slane %v8006, 1
        %v8009 = vsel %vm1573, %v8004, %v8008
        %v8010 = vshrl.u32 %v7880, 16
        %v8012 = vor.u32 %v8010, %v8008
        %v8014 = vshll.u32 %v7881, 16
        %v8016 = vrot.slane %v8014, 1
        %v8017 = vsel %vm1573, %v8012, %v8016
        %v8018 = vshrl.u32 %v7881, 16
        %v8020 = vor.u32 %v8018, %v8016
        %v8022 = vshll.u32 %v7882, 16
        %v8024 = vrot.slane %v8022, 1
        %v8025 = vsel %vm1573, %v8020, %v8024
        %v8026 = vshrl.u32 %v7882, 16
        %v8028 = vor.u32 %v8026, %v8024
        %v8030 = vshll.u32 %v7883, 16
        %v8032 = vrot.slane %v8030, 1
        %v8033 = vsel %vm1573, %v8028, %v8032
        %v8034 = vshrl.u32 %v7883, 16
        %v8036 = vor.u32 %v8034, %v8032
        %v8038 = vshll.u32 %v7884, 16
        %v8040 = vrot.slane %v8038, 1
        %v8041 = vsel %vm1573, %v8036, %v8040
        %v8042 = vshrl.u32 %v7884, 16
        %v8044 = vor.u32 %v8042, %v8040
        %v8046 = vshll.u32 %v7885, 16
        %v8048 = vrot.slane %v8046, 1
        %v8049 = vsel %vm1573, %v8044, %v8048
        %v8050 = vshrl.u32 %v7885, 16
        %v8052 = vor.u32 %v8050, %v8048
        %v8065 = vunpack.c.l.b16 %v7769
        %v8066 = vunpack.c.l.b16 %v7770
        %v8067 = vunpack.c.l.b16 %v7771
        %v8068 = vunpack.c.l.b16 %v7772
        %v8069 = vunpack.c.l.b16 %v7773
        %v8070 = vunpack.c.l.b16 %v7774
        %v8071 = vunpack.c.l.b16 %v7775
        %v8072 = vunpack.c.l.b16 %v7776
        %v8073 = vunpack.c.l.b16 %v7777
        %v8074 = vunpack.c.l.b16 %v7778
        %v8075 = vunpack.c.l.b16 %v7779
        %v8076 = vunpack.c.l.b16 %v7780
        %v8077 = vpack.c.b16 %v8066, %v8065
        %v8078 = vpack.c.b16 %v8068, %v8067
        %v8079 = vpack.c.b16 %v8070, %v8069
        %v8080 = vpack.c.b16 %v8072, %v8071
        %v8081 = vpack.c.b16 %v8074, %v8073
        %v8082 = vpack.c.b16 %v8076, %v8075
        %v8090 = vsel %vm3675, %v7897, 0
        %v8093 = vsel %vm3675, %v7905, 0
        %v8096 = vsel %vm3675, %v7913, 0
        %v8099 = vsel %vm3675, %v7921, 0
        %v8102 = vsel %vm3675, %v7929, 0
        %v8105 = vsel %vm3675, %v7937, 0
        %v8108 = vsel %vm3675, %v7945, 0
        %v8111 = vsel %vm3675, %v7953, 0
        %v8114 = vsel %vm3675, %v7961, 0
        %v8117 = vsel %vm3675, %v7969, 0
        %v8120 = vsel %vm3675, %v7977, 0
        %v8123 = vsel %vm3675, %v7985, 0
        %v8126 = vsel %vm3675, %v7993, 0
        %v8129 = vsel %vm3675, %v8001, 0
        %v8132 = vsel %vm3675, %v8009, 0
        %v8135 = vsel %vm3675, %v8017, 0
        %v8138 = vsel %vm3675, %v8025, 0
        %v8141 = vsel %vm3675, %v8033, 0
        %v8144 = vsel %vm3675, %v8041, 0
        %v8147 = vsel %vm3675, %v8049, 0
        %v8150 = vsel %vm3675, %v8052, 0
        %8152 = vmatprep.subr.bf16.mxu0 0
        %8153 = vmatpush1.bf16.msra.mxu0 %v8077
        %8154 = vmatprep.subr.bf16.mxu0 0
        %8155 = vmatpush1.bf16.msra.mxu0 %v8078
        %8156 = vmatprep.subr.bf16.mxu0 0
        %8157 = vmatpush1.bf16.msra.mxu0 %v8079
        %8158 = vmatprep.subr.bf16.mxu0 0
        %8159 = vmatpush1.bf16.msra.mxu0 %v8080
        %8160 = vmatprep.subr.bf16.mxu0 0
        %8161 = vmatpush1.bf16.msra.mxu0 %v8081
        %8162 = vmatprep.subr.bf16.mxu0 0
        %8163 = vmatpush1.bf16.msra.mxu0 %v8082
        %8164 = vmatprep.subr.bf16.mxu0 0
        %8165 = vmatpush1.bf16.msra.mxu0 0
        %8166 = vmatprep.subr.bf16.mxu0 0
        %8167 = vmatpush1.bf16.msra.mxu0 0
        %8168 = vmatprep.subr.bf16.mxu0 0
        %8169 = vmatpush1.bf16.msra.mxu0 0
        %8170 = vmatprep.subr.bf16.mxu0 0
        %8171 = vmatpush1.bf16.msra.mxu0 0
        %8172 = vmatprep.subr.bf16.mxu0 0
        %8173 = vmatpush1.bf16.msra.mxu0 0
        %8174 = vmatprep.subr.bf16.mxu0 0
        %8175 = vmatpush1.bf16.msra.mxu0 0
        %8176 = vmatprep.subr.bf16.mxu0 0
        %8177 = vmatpush1.bf16.msra.mxu0 0
        %8178 = vmatprep.subr.bf16.mxu0 0
        %8179 = vmatpush1.bf16.msra.mxu0 0
        %8180 = vmatprep.subr.bf16.mxu0 0
        %8181 = vmatpush1.bf16.msra.mxu0 0
        %8182 = vmatprep.subr.bf16.mxu0 0
        %8183 = vmatpush1.bf16.msra.mxu0 0
        %8184 = vmatprep.mubr.bf16.mxu0 0
        %8185 = vmatmul.mubr.bf16.gmra.mrb[0].mxu0 %v8090
        %v8186 = vpop.f32.mrb[0].mxu0
        %v8187 = vadd.f32 0.0, %v8186
        %v8188 = vpop.f32.mrb[0].mxu0
        %v8189 = vpop.f32.mrb[0].mxu0
        %v8190 = vadd.f32 0.0, %v8189
        %v8191 = vpop.f32.mrb[0].mxu0
        %8192 = vmatprep.mubr.bf16.mxu0 0
        %8193 = vmatmul.mubr.bf16.gmra.mrb[0].mxu0 %v8093
        %v8194 = vpop.f32.mrb[0].mxu0
        %v8195 = vadd.f32 0.0, %v8194
        %v8196 = vpop.f32.mrb[0].mxu0
        %v8197 = vpop.f32.mrb[0].mxu0
        %v8198 = vadd.f32 0.0, %v8197
        %v8199 = vpop.f32.mrb[0].mxu0
        %8200 = vmatprep.mubr.bf16.mxu0 0
        %8201 = vmatmul.mubr.bf16.gmra.mrb[0].mxu0 %v8096
        %v8202 = vpop.f32.mrb[0].mxu0
        %v8203 = vadd.f32 0.0, %v8202
        %v8204 = vpop.f32.mrb[0].mxu0
        %v8205 = vpop.f32.mrb[0].mxu0
        %v8206 = vadd.f32 0.0, %v8205
        %v8207 = vpop.f32.mrb[0].mxu0
        %8208 = vmatprep.mubr.bf16.mxu0 0
        %8209 = vmatmul.mubr.bf16.gmra.mrb[0].mxu0 %v8099
        %v8210 = vpop.f32.mrb[0].mxu0
        %v8211 = vadd.f32 0.0, %v8210
        %v8212 = vpop.f32.mrb[0].mxu0
        %v8213 = vpop.f32.mrb[0].mxu0
        %v8214 = vadd.f32 0.0, %v8213
        %v8215 = vpop.f32.mrb[0].mxu0
        %8216 = vmatprep.mubr.bf16.mxu0 0
        %8217 = vmatmul.mubr.bf16.gmra.mrb[0].mxu0 %v8102
        %v8218 = vpop.f32.mrb[0].mxu0
        %v8219 = vadd.f32 0.0, %v8218
        %v8220 = vpop.f32.mrb[0].mxu0
        %v8221 = vpop.f32.mrb[0].mxu0
        %v8222 = vadd.f32 0.0, %v8221
        %v8223 = vpop.f32.mrb[0].mxu0
        %8224 = vmatprep.mubr.bf16.mxu0 0
        %8225 = vmatmul.mubr.bf16.gmra.mrb[0].mxu0 %v8105
        %v8226 = vpop.f32.mrb[0].mxu0
        %v8227 = vadd.f32 0.0, %v8226
        %v8228 = vpop.f32.mrb[0].mxu0
        %v8229 = vpop.f32.mrb[0].mxu0
        %v8230 = vadd.f32 0.0, %v8229
        %v8231 = vpop.f32.mrb[0].mxu0
        %8232 = vmatprep.mubr.bf16.mxu0 0
        %8233 = vmatmul.mubr.bf16.gmra.mrb[0].mxu0 %v8108
        %v8234 = vpop.f32.mrb[0].mxu0
        %v8235 = vadd.f32 0.0, %v8234
        %v8236 = vpop.f32.mrb[0].mxu0
        %v8237 = vpop.f32.mrb[0].mxu0
        %v8238 = vadd.f32 0.0, %v8237
        %v8239 = vpop.f32.mrb[0].mxu0
        %8240 = vmatprep.mubr.bf16.mxu0 0
        %8241 = vmatmul.mubr.bf16.gmra.mrb[0].mxu0 %v8111
        %v8242 = vpop.f32.mrb[0].mxu0
        %v8243 = vadd.f32 0.0, %v8242
        %v8244 = vpop.f32.mrb[0].mxu0
        %v8245 = vpop.f32.mrb[0].mxu0
        %v8246 = vadd.f32 0.0, %v8245
        %v8247 = vpop.f32.mrb[0].mxu0
        %8248 = vmatprep.mubr.bf16.mxu0 0
        %8249 = vmatmul.mubr.bf16.gmra.mrb[0].mxu0 %v8114
        %v8250 = vpop.f32.mrb[0].mxu0
        %v8251 = vadd.f32 0.0, %v8250
        %v8252 = vpop.f32.mrb[0].mxu0
        %v8253 = vpop.f32.mrb[0].mxu0
        %v8254 = vadd.f32 0.0, %v8253
        %v8255 = vpop.f32.mrb[0].mxu0
        %8256 = vmatprep.mubr.bf16.mxu0 0
        %8257 = vmatmul.mubr.bf16.gmra.mrb[0].mxu0 %v8117
        %v8258 = vpop.f32.mrb[0].mxu0
        %v8259 = vadd.f32 0.0, %v8258
        %v8260 = vpop.f32.mrb[0].mxu0
        %v8261 = vpop.f32.mrb[0].mxu0
        %v8262 = vadd.f32 0.0, %v8261
        %v8263 = vpop.f32.mrb[0].mxu0
        %8264 = vmatprep.mubr.bf16.mxu0 0
        %8265 = vmatmul.mubr.bf16.gmra.mrb[0].mxu0 %v8120
        %v8266 = vpop.f32.mrb[0].mxu0
        %v8267 = vadd.f32 0.0, %v8266
        %v8268 = vpop.f32.mrb[0].mxu0
        %v8269 = vpop.f32.mrb[0].mxu0
        %v8270 = vadd.f32 0.0, %v8269
        %v8271 = vpop.f32.mrb[0].mxu0
        %8272 = vmatprep.mubr.bf16.mxu0 0
        %8273 = vmatmul.mubr.bf16.gmra.mrb[0].mxu0 %v8123
        %v8274 = vpop.f32.mrb[0].mxu0
        %v8275 = vadd.f32 0.0, %v8274
        %v8276 = vpop.f32.mrb[0].mxu0
        %v8277 = vpop.f32.mrb[0].mxu0
        %v8278 = vadd.f32 0.0, %v8277
        %v8279 = vpop.f32.mrb[0].mxu0
        %8280 = vmatprep.mubr.bf16.mxu0 0
        %8281 = vmatmul.mubr.bf16.gmra.mrb[0].mxu0 %v8126
        %v8282 = vpop.f32.mrb[0].mxu0
        %v8283 = vadd.f32 0.0, %v8282
        %v8284 = vpop.f32.mrb[0].mxu0
        %v8285 = vpop.f32.mrb[0].mxu0
        %v8286 = vadd.f32 0.0, %v8285
        %v8287 = vpop.f32.mrb[0].mxu0
        %8288 = vmatprep.mubr.bf16.mxu0 0
        %8289 = vmatmul.mubr.bf16.gmra.mrb[0].mxu0 %v8129
        %v8290 = vpop.f32.mrb[0].mxu0
        %v8291 = vadd.f32 0.0, %v8290
        %v8292 = vpop.f32.mrb[0].mxu0
        %v8293 = vpop.f32.mrb[0].mxu0
        %v8294 = vadd.f32 0.0, %v8293
        %v8295 = vpop.f32.mrb[0].mxu0
        %8296 = vmatprep.mubr.bf16.mxu0 0
        %8297 = vmatmul.mubr.bf16.gmra.mrb[0].mxu0 %v8132
        %v8298 = vpop.f32.mrb[0].mxu0
        %v8299 = vadd.f32 0.0, %v8298
        %v8300 = vpop.f32.mrb[0].mxu0
        %v8301 = vpop.f32.mrb[0].mxu0
        %v8302 = vadd.f32 0.0, %v8301
        %v8303 = vpop.f32.mrb[0].mxu0
        %8304 = vmatprep.mubr.bf16.mxu0 0
        %8305 = vmatmul.mubr.bf16.gmra.mrb[0].mxu0 %v8135
        %v8306 = vpop.f32.mrb[0].mxu0
        %v8307 = vadd.f32 0.0, %v8306
        %v8308 = vpop.f32.mrb[0].mxu0
        %v8309 = vpop.f32.mrb[0].mxu0
        %v8310 = vadd.f32 0.0, %v8309
        %v8311 = vpop.f32.mrb[0].mxu0
        %8312 = vmatprep.mubr.bf16.mxu0 0
        %8313 = vmatmul.mubr.bf16.gmra.mrb[0].mxu0 %v8138
        %v8314 = vpop.f32.mrb[0].mxu0
        %v8315 = vadd.f32 0.0, %v8314
        %v8316 = vpop.f32.mrb[0].mxu0
        %v8317 = vpop.f32.mrb[0].mxu0
        %v8318 = vadd.f32 0.0, %v8317
        %v8319 = vpop.f32.mrb[0].mxu0
        %8320 = vmatprep.mubr.bf16.mxu0 0
        %8321 = vmatmul.mubr.bf16.gmra.mrb[0].mxu0 %v8141
        %v8322 = vpop.f32.mrb[0].mxu0
        %v8323 = vadd.f32 0.0, %v8322
        %v8324 = vpop.f32.mrb[0].mxu0
        %v8325 = vpop.f32.mrb[0].mxu0
        %v8326 = vadd.f32 0.0, %v8325
        %v8327 = vpop.f32.mrb[0].mxu0
        %8328 = vmatprep.mubr.bf16.mxu0 0
        %8329 = vmatmul.mubr.bf16.gmra.mrb[0].mxu0 %v8144
        %v8330 = vpop.f32.mrb[0].mxu0
        %v8331 = vadd.f32 0.0, %v8330
        %v8332 = vpop.f32.mrb[0].mxu0
        %v8333 = vpop.f32.mrb[0].mxu0
        %v8334 = vadd.f32 0.0, %v8333
        %v8335 = vpop.f32.mrb[0].mxu0
        %8336 = vmatprep.mubr.bf16.mxu0 0
        %8337 = vmatmul.mubr.bf16.gmra.mrb[0].mxu0 %v8147
        %v8338 = vpop.f32.mrb[0].mxu0
        %v8339 = vadd.f32 0.0, %v8338
        %v8340 = vpop.f32.mrb[0].mxu0
        %v8341 = vpop.f32.mrb[0].mxu0
        %v8342 = vadd.f32 0.0, %v8341
        %v8343 = vpop.f32.mrb[0].mxu0
        %8344 = vmatprep.mubr.bf16.mxu0 0
        %8345 = vmatmul.mubr.bf16.gmra.mrb[0].mxu0 %v8150
        %v8346 = vpop.f32.mrb[0].mxu0
        %v8347 = vadd.f32 0.0, %v8346
        %v8348 = vpop.f32.mrb[0].mxu0
        %v8349 = vpop.f32.mrb[0].mxu0
        %v8350 = vpop.f32.mrb[0].mxu0
        %8351 = vdwg.mxu0
        %v8352 = vadd.f32 %v7561, %v8187
        %v8353 = vadd.f32 %v7564, %v8190
        %v8354 = vadd.f32 %v7569, %v8195
        %v8355 = vadd.f32 %v7572, %v8198
        %v8356 = vadd.f32 %v7577, %v8203
        %v8357 = vadd.f32 %v7580, %v8206
        %v8358 = vadd.f32 %v7585, %v8211
        %v8359 = vadd.f32 %v7588, %v8214
        %v8360 = vadd.f32 %v7593, %v8219
        %v8361 = vadd.f32 %v7596, %v8222
        %v8362 = vadd.f32 %v7601, %v8227
        %v8363 = vadd.f32 %v7604, %v8230
        %v8364 = vadd.f32 %v7609, %v8235
        %v8365 = vadd.f32 %v7612, %v8238
        %v8366 = vadd.f32 %v7617, %v8243
        %v8367 = vadd.f32 %v7620, %v8246
        %v8368 = vadd.f32 %v7625, %v8251
        %v8369 = vadd.f32 %v7628, %v8254
        %v8370 = vadd.f32 %v7633, %v8259
        %v8371 = vadd.f32 %v7636, %v8262
        %v8372 = vadd.f32 %v7641, %v8267
        %v8373 = vadd.f32 %v7644, %v8270
        %v8374 = vadd.f32 %v7649, %v8275
        %v8375 = vadd.f32 %v7652, %v8278
        %v8376 = vadd.f32 %v7657, %v8283
        %v8377 = vadd.f32 %v7660, %v8286
        %v8378 = vadd.f32 %v7665, %v8291
        %v8379 = vadd.f32 %v7668, %v8294
        %v8380 = vadd.f32 %v7673, %v8299
        %v8381 = vadd.f32 %v7676, %v8302
        %v8382 = vadd.f32 %v7681, %v8307
        %v8383 = vadd.f32 %v7684, %v8310
        %v8384 = vadd.f32 %v7689, %v8315
        %v8385 = vadd.f32 %v7692, %v8318
        %v8386 = vadd.f32 %v7697, %v8323
        %v8387 = vadd.f32 %v7700, %v8326
        %v8388 = vadd.f32 %v7705, %v8331
        %v8389 = vadd.f32 %v7708, %v8334
        %v8390 = vadd.f32 %v7713, %v8339
        %v8391 = vadd.f32 %v7716, %v8342
        %v8392 = vadd.f32 %v7721, %v8347
        %v8393 = vld [vmem:[%s9] sm:$0x1]
        %v8395 = vlaneseq
        %v8396 = vshrl.u32 %v8395, 7
        %v8397 = vsub.s32 0, %v8396
        %v8398 = vrot.slane %v8393, %v8397
        %v8400 = vadd.f32 %v8352, %v8398
        %v8401 = vadd.f32 %v8353, %v8398
        %v8402 = vadd.f32 %v8354, %v8398
        %v8403 = vadd.f32 %v8355, %v8398
        %v8404 = vadd.f32 %v8356, %v8398
        %v8405 = vadd.f32 %v8357, %v8398
        %v8406 = vadd.f32 %v8358, %v8398
        %v8407 = vadd.f32 %v8359, %v8398
        %v8408 = vadd.f32 %v8360, %v8398
        %v8409 = vadd.f32 %v8361, %v8398
        %v8410 = vadd.f32 %v8362, %v8398
        %v8411 = vadd.f32 %v8363, %v8398
        %v8412 = vadd.f32 %v8364, %v8398
        %v8413 = vadd.f32 %v8365, %v8398
        %v8414 = vadd.f32 %v8366, %v8398
        %v8415 = vadd.f32 %v8367, %v8398
        %v8416 = vadd.f32 %v8368, %v8398
        %v8417 = vadd.f32 %v8369, %v8398
        %v8418 = vadd.f32 %v8370, %v8398
        %v8419 = vadd.f32 %v8371, %v8398
        %v8420 = vadd.f32 %v8372, %v8398
        %v8421 = vadd.f32 %v8373, %v8398
        %v8422 = vadd.f32 %v8374, %v8398
        %v8423 = vadd.f32 %v8375, %v8398
        %v8424 = vadd.f32 %v8376, %v8398
        %v8425 = vadd.f32 %v8377, %v8398
        %v8426 = vadd.f32 %v8378, %v8398
        %v8427 = vadd.f32 %v8379, %v8398
        %v8428 = vadd.f32 %v8380, %v8398
        %v8429 = vadd.f32 %v8381, %v8398
        %v8430 = vadd.f32 %v8382, %v8398
        %v8431 = vadd.f32 %v8383, %v8398
        %v8432 = vadd.f32 %v8384, %v8398
        %v8433 = vadd.f32 %v8385, %v8398
        %v8434 = vadd.f32 %v8386, %v8398
        %v8435 = vadd.f32 %v8387, %v8398
        %v8436 = vadd.f32 %v8388, %v8398
        %v8437 = vadd.f32 %v8389, %v8398
        %v8438 = vadd.f32 %v8390, %v8398
        %v8439 = vadd.f32 %v8391, %v8398
        %v8440 = vadd.f32 %v8392, %v8398
        %v8441 = vmax.f32 %v8400, 0.0
        %v8442 = vmax.f32 %v8401, 0.0
        %v8443 = vmax.f32 %v8402, 0.0
        %v8444 = vmax.f32 %v8403, 0.0
        %v8445 = vmax.f32 %v8404, 0.0
        %v8446 = vmax.f32 %v8405, 0.0
        %v8447 = vmax.f32 %v8406, 0.0
        %v8448 = vmax.f32 %v8407, 0.0
        %v8449 = vmax.f32 %v8408, 0.0
        %v8450 = vmax.f32 %v8409, 0.0
        %v8451 = vmax.f32 %v8410, 0.0
        %v8452 = vmax.f32 %v8411, 0.0
        %v8453 = vmax.f32 %v8412, 0.0
        %v8454 = vmax.f32 %v8413, 0.0
        %v8455 = vmax.f32 %v8414, 0.0
        %v8456 = vmax.f32 %v8415, 0.0
        %v8457 = vmax.f32 %v8416, 0.0
        %v8458 = vmax.f32 %v8417, 0.0
        %v8459 = vmax.f32 %v8418, 0.0
        %v8460 = vmax.f32 %v8419, 0.0
        %v8461 = vmax.f32 %v8420, 0.0
        %v8462 = vmax.f32 %v8421, 0.0
        %v8463 = vmax.f32 %v8422, 0.0
        %v8464 = vmax.f32 %v8423, 0.0
        %v8465 = vmax.f32 %v8424, 0.0
        %v8466 = vmax.f32 %v8425, 0.0
        %v8467 = vmax.f32 %v8426, 0.0
        %v8468 = vmax.f32 %v8427, 0.0
        %v8469 = vmax.f32 %v8428, 0.0
        %v8470 = vmax.f32 %v8429, 0.0
        %v8471 = vmax.f32 %v8430, 0.0
        %v8472 = vmax.f32 %v8431, 0.0
        %v8473 = vmax.f32 %v8432, 0.0
        %v8474 = vmax.f32 %v8433, 0.0
        %v8475 = vmax.f32 %v8434, 0.0
        %v8476 = vmax.f32 %v8435, 0.0
        %v8477 = vmax.f32 %v8436, 0.0
        %v8478 = vmax.f32 %v8437, 0.0
        %v8479 = vmax.f32 %v8438, 0.0
        %v8480 = vmax.f32 %v8439, 0.0
        %v8481 = vmax.f32 %v8440, 0.0
        %v8482 = vpack.c.bf16 %v8442, %v8441
        %v8483 = vpack.c.bf16 %v8444, %v8443
        %v8484 = vpack.c.bf16 %v8446, %v8445
        %v8485 = vpack.c.bf16 %v8448, %v8447
        %v8486 = vpack.c.bf16 %v8450, %v8449
        %v8487 = vpack.c.bf16 %v8452, %v8451
        %v8488 = vpack.c.bf16 %v8454, %v8453
        %v8489 = vpack.c.bf16 %v8456, %v8455
        %v8490 = vpack.c.bf16 %v8458, %v8457
        %v8491 = vpack.c.bf16 %v8460, %v8459
        %v8492 = vpack.c.bf16 %v8462, %v8461
        %v8493 = vpack.c.bf16 %v8464, %v8463
        %v8494 = vpack.c.bf16 %v8466, %v8465
        %v8495 = vpack.c.bf16 %v8468, %v8467
        %v8496 = vpack.c.bf16 %v8470, %v8469
        %v8497 = vpack.c.bf16 %v8472, %v8471
        %v8498 = vpack.c.bf16 %v8474, %v8473
        %v8499 = vpack.c.bf16 %v8476, %v8475
        %v8500 = vpack.c.bf16 %v8478, %v8477
        %v8501 = vpack.c.bf16 %v8480, %v8479
        %v8502 = vpack.c.bf16 %v8481, %v8481
        %v8503 = vld [vmem:[%s10] sm:$0xf]
        %v8504 = vld [vmem:[%s10 + $0x4] sm:$0xf]
        %v8505 = vld [vmem:[%s11] sm:$0x1]
        %v8507 = vlaneseq
        %v8508 = vshrl.u32 %v8507, 7
        %v8509 = vsub.s32 0, %v8508
        %v8510 = vrot.slane %v8505, %v8509
        %v8514 = vunpack.c.l.b16 %v8503
        %v8515 = vunpack.c.l.b16 %v8504
        %v8516 = vpack.c.b16 %v8515, %v8514
        %v8519 = vsel %vm5241, %v8482, 0
        %v8522 = vsel %vm5241, %v8483, 0
        %v8525 = vsel %vm5241, %v8484, 0
        %v8528 = vsel %vm5241, %v8485, 0
        %v8531 = vsel %vm5241, %v8486, 0
        %v8534 = vsel %vm5241, %v8487, 0
        %v8537 = vsel %vm5241, %v8488, 0
        %v8540 = vsel %vm5241, %v8489, 0
        %v8543 = vsel %vm5241, %v8490, 0
        %v8546 = vsel %vm5241, %v8491, 0
        %v8549 = vsel %vm5241, %v8492, 0
        %v8552 = vsel %vm5241, %v8493, 0
        %v8555 = vsel %vm5241, %v8494, 0
        %v8558 = vsel %vm5241, %v8495, 0
        %v8561 = vsel %vm5241, %v8496, 0
        %v8564 = vsel %vm5241, %v8497, 0
        %v8567 = vsel %vm5241, %v8498, 0
        %v8570 = vsel %vm5241, %v8499, 0
        %v8573 = vsel %vm5241, %v8500, 0
        %v8576 = vsel %vm5241, %v8501, 0
        %v8579 = vsel %vm5241, %v8502, 0
        %8581 = vmatprep.subr.bf16.mxu0 0
        %8582 = vmatpush1.bf16.msra.mxu0 %v8516
        %8583 = vmatprep.subr.bf16.mxu0 0
        %8584 = vmatpush1.bf16.msra.mxu0 0
        %8585 = vmatprep.subr.bf16.mxu0 0
        %8586 = vmatpush1.bf16.msra.mxu0 0
        %8587 = vmatprep.subr.bf16.mxu0 0
        %8588 = vmatpush1.bf16.msra.mxu0 0
        %8589 = vmatprep.subr.bf16.mxu0 0
        %8590 = vmatpush1.bf16.msra.mxu0 0
        %8591 = vmatprep.subr.bf16.mxu0 0
        %8592 = vmatpush1.bf16.msra.mxu0 0
        %8593 = vmatprep.subr.bf16.mxu0 0
        %8594 = vmatpush1.bf16.msra.mxu0 0
        %8595 = vmatprep.subr.bf16.mxu0 0
        %8596 = vmatpush1.bf16.msra.mxu0 0
        %8597 = vmatprep.subr.bf16.mxu0 0
        %8598 = vmatpush1.bf16.msra.mxu0 0
        %8599 = vmatprep.subr.bf16.mxu0 0
        %8600 = vmatpush1.bf16.msra.mxu0 0
        %8601 = vmatprep.subr.bf16.mxu0 0
        %8602 = vmatpush1.bf16.msra.mxu0 0
        %8603 = vmatprep.subr.bf16.mxu0 0
        %8604 = vmatpush1.bf16.msra.mxu0 0
        %8605 = vmatprep.subr.bf16.mxu0 0
        %8606 = vmatpush1.bf16.msra.mxu0 0
        %8607 = vmatprep.subr.bf16.mxu0 0
        %8608 = vmatpush1.bf16.msra.mxu0 0
        %8609 = vmatprep.subr.bf16.mxu0 0
        %8610 = vmatpush1.bf16.msra.mxu0 0
        %8611 = vmatprep.subr.bf16.mxu0 0
        %8612 = vmatpush1.bf16.msra.mxu0 0
        %8613 = vmatprep.mubr.bf16.mxu0 0
        %8614 = vmatmul.mubr.bf16.gmra.mrb[0].mxu0 %v8519
        %v8615 = vpop.f32.mrb[0].mxu0
        %v8616 = vadd.f32 %v8510, %v8615
        %v8617 = vpop.f32.mrb[0].mxu0
        %v8618 = vpop.f32.mrb[0].mxu0
        %v8619 = vadd.f32 %v8510, %v8618
        %v8620 = vpop.f32.mrb[0].mxu0
        %8621 = vmatprep.mubr.bf16.mxu0 0
        %8622 = vmatmul.mubr.bf16.gmra.mrb[0].mxu0 %v8522
        %v8623 = vpop.f32.mrb[0].mxu0
        %v8624 = vadd.f32 %v8510, %v8623
        %v8625 = vpop.f32.mrb[0].mxu0
        %v8626 = vpop.f32.mrb[0].mxu0
        %v8627 = vadd.f32 %v8510, %v8626
        %v8628 = vpop.f32.mrb[0].mxu0
        %8629 = vmatprep.mubr.bf16.mxu0 0
        %8630 = vmatmul.mubr.bf16.gmra.mrb[0].mxu0 %v8525
        %v8631 = vpop.f32.mrb[0].mxu0
        %v8632 = vadd.f32 %v8510, %v8631
        %v8633 = vpop.f32.mrb[0].mxu0
        %v8634 = vpop.f32.mrb[0].mxu0
        %v8635 = vadd.f32 %v8510, %v8634
        %v8636 = vpop.f32.mrb[0].mxu0
        %8637 = vmatprep.mubr.bf16.mxu0 0
        %8638 = vmatmul.mubr.bf16.gmra.mrb[0].mxu0 %v8528
        %v8639 = vpop.f32.mrb[0].mxu0
        %v8640 = vadd.f32 %v8510, %v8639
        %v8641 = vpop.f32.mrb[0].mxu0
        %v8642 = vpop.f32.mrb[0].mxu0
        %v8643 = vadd.f32 %v8510, %v8642
        %v8644 = vpop.f32.mrb[0].mxu0
        %8645 = vmatprep.mubr.bf16.mxu0 0
        %8646 = vmatmul.mubr.bf16.gmra.mrb[0].mxu0 %v8531
        %v8647 = vpop.f32.mrb[0].mxu0
        %v8648 = vadd.f32 %v8510, %v8647
        %v8649 = vpop.f32.mrb[0].mxu0
        %v8650 = vpop.f32.mrb[0].mxu0
        %v8651 = vadd.f32 %v8510, %v8650
        %v8652 = vpop.f32.mrb[0].mxu0
        %8653 = vmatprep.mubr.bf16.mxu0 0
        %8654 = vmatmul.mubr.bf16.gmra.mrb[0].mxu0 %v8534
        %v8655 = vpop.f32.mrb[0].mxu0
        %v8656 = vadd.f32 %v8510, %v8655
        %v8657 = vpop.f32.mrb[0].mxu0
        %v8658 = vpop.f32.mrb[0].mxu0
        %v8659 = vadd.f32 %v8510, %v8658
        %v8660 = vpop.f32.mrb[0].mxu0
        %8661 = vmatprep.mubr.bf16.mxu0 0
        %8662 = vmatmul.mubr.bf16.gmra.mrb[0].mxu0 %v8537
        %v8663 = vpop.f32.mrb[0].mxu0
        %v8664 = vadd.f32 %v8510, %v8663
        %v8665 = vpop.f32.mrb[0].mxu0
        %v8666 = vpop.f32.mrb[0].mxu0
        %v8667 = vadd.f32 %v8510, %v8666
        %v8668 = vpop.f32.mrb[0].mxu0
        %8669 = vmatprep.mubr.bf16.mxu0 0
        %8670 = vmatmul.mubr.bf16.gmra.mrb[0].mxu0 %v8540
        %v8671 = vpop.f32.mrb[0].mxu0
        %v8672 = vadd.f32 %v8510, %v8671
        %v8673 = vpop.f32.mrb[0].mxu0
        %v8674 = vpop.f32.mrb[0].mxu0
        %v8675 = vadd.f32 %v8510, %v8674
        %v8676 = vpop.f32.mrb[0].mxu0
        %8677 = vmatprep.mubr.bf16.mxu0 0
        %8678 = vmatmul.mubr.bf16.gmra.mrb[0].mxu0 %v8543
        %v8679 = vpop.f32.mrb[0].mxu0
        %v8680 = vadd.f32 %v8510, %v8679
        %v8681 = vpop.f32.mrb[0].mxu0
        %v8682 = vpop.f32.mrb[0].mxu0
        %v8683 = vadd.f32 %v8510, %v8682
        %v8684 = vpop.f32.mrb[0].mxu0
        %8685 = vmatprep.mubr.bf16.mxu0 0
        %8686 = vmatmul.mubr.bf16.gmra.mrb[0].mxu0 %v8546
        %v8687 = vpop.f32.mrb[0].mxu0
        %v8688 = vadd.f32 %v8510, %v8687
        %v8689 = vpop.f32.mrb[0].mxu0
        %v8690 = vpop.f32.mrb[0].mxu0
        %v8691 = vadd.f32 %v8510, %v8690
        %v8692 = vpop.f32.mrb[0].mxu0
        %8693 = vmatprep.mubr.bf16.mxu0 0
        %8694 = vmatmul.mubr.bf16.gmra.mrb[0].mxu0 %v8549
        %v8695 = vpop.f32.mrb[0].mxu0
        %v8696 = vadd.f32 %v8510, %v8695
        %v8697 = vpop.f32.mrb[0].mxu0
        %v8698 = vpop.f32.mrb[0].mxu0
        %v8699 = vadd.f32 %v8510, %v8698
        %v8700 = vpop.f32.mrb[0].mxu0
        %8701 = vmatprep.mubr.bf16.mxu0 0
        %8702 = vmatmul.mubr.bf16.gmra.mrb[0].mxu0 %v8552
        %v8703 = vpop.f32.mrb[0].mxu0
        %v8704 = vadd.f32 %v8510, %v8703
        %v8705 = vpop.f32.mrb[0].mxu0
        %v8706 = vpop.f32.mrb[0].mxu0
        %v8707 = vadd.f32 %v8510, %v8706
        %v8708 = vpop.f32.mrb[0].mxu0
        %8709 = vmatprep.mubr.bf16.mxu0 0
        %8710 = vmatmul.mubr.bf16.gmra.mrb[0].mxu0 %v8555
        %v8711 = vpop.f32.mrb[0].mxu0
        %v8712 = vadd.f32 %v8510, %v8711
        %v8713 = vpop.f32.mrb[0].mxu0
        %v8714 = vpop.f32.mrb[0].mxu0
        %v8715 = vadd.f32 %v8510, %v8714
        %v8716 = vpop.f32.mrb[0].mxu0
        %8717 = vmatprep.mubr.bf16.mxu0 0
        %8718 = vmatmul.mubr.bf16.gmra.mrb[0].mxu0 %v8558
        %v8719 = vpop.f32.mrb[0].mxu0
        %v8720 = vadd.f32 %v8510, %v8719
        %v8721 = vpop.f32.mrb[0].mxu0
        %v8722 = vpop.f32.mrb[0].mxu0
        %v8723 = vadd.f32 %v8510, %v8722
        %v8724 = vpop.f32.mrb[0].mxu0
        %8725 = vmatprep.mubr.bf16.mxu0 0
        %8726 = vmatmul.mubr.bf16.gmra.mrb[0].mxu0 %v8561
        %v8727 = vpop.f32.mrb[0].mxu0
        %v8728 = vadd.f32 %v8510, %v8727
        %v8729 = vpop.f32.mrb[0].mxu0
        %v8730 = vpop.f32.mrb[0].mxu0
        %v8731 = vadd.f32 %v8510, %v8730
        %v8732 = vpop.f32.mrb[0].mxu0
        %8733 = vmatprep.mubr.bf16.mxu0 0
        %8734 = vmatmul.mubr.bf16.gmra.mrb[0].mxu0 %v8564
        %v8735 = vpop.f32.mrb[0].mxu0
        %v8736 = vadd.f32 %v8510, %v8735
        %v8737 = vpop.f32.mrb[0].mxu0
        %v8738 = vpop.f32.mrb[0].mxu0
        %v8739 = vadd.f32 %v8510, %v8738
        %v8740 = vpop.f32.mrb[0].mxu0
        %8741 = vmatprep.mubr.bf16.mxu0 0
        %8742 = vmatmul.mubr.bf16.gmra.mrb[0].mxu0 %v8567
        %v8743 = vpop.f32.mrb[0].mxu0
        %v8744 = vadd.f32 %v8510, %v8743
        %v8745 = vpop.f32.mrb[0].mxu0
        %v8746 = vpop.f32.mrb[0].mxu0
        %v8747 = vadd.f32 %v8510, %v8746
        %v8748 = vpop.f32.mrb[0].mxu0
        %8749 = vmatprep.mubr.bf16.mxu0 0
        %8750 = vmatmul.mubr.bf16.gmra.mrb[0].mxu0 %v8570
        %v8751 = vpop.f32.mrb[0].mxu0
        %v8752 = vadd.f32 %v8510, %v8751
        %v8753 = vpop.f32.mrb[0].mxu0
        %v8754 = vpop.f32.mrb[0].mxu0
        %v8755 = vadd.f32 %v8510, %v8754
        %v8756 = vpop.f32.mrb[0].mxu0
        %8757 = vmatprep.mubr.bf16.mxu0 0
        %8758 = vmatmul.mubr.bf16.gmra.mrb[0].mxu0 %v8573
        %v8759 = vpop.f32.mrb[0].mxu0
        %v8760 = vadd.f32 %v8510, %v8759
        %v8761 = vpop.f32.mrb[0].mxu0
        %v8762 = vpop.f32.mrb[0].mxu0
        %v8763 = vadd.f32 %v8510, %v8762
        %v8764 = vpop.f32.mrb[0].mxu0
        %8765 = vmatprep.mubr.bf16.mxu0 0
        %8766 = vmatmul.mubr.bf16.gmra.mrb[0].mxu0 %v8576
        %v8767 = vpop.f32.mrb[0].mxu0
        %v8768 = vadd.f32 %v8510, %v8767
        %v8769 = vpop.f32.mrb[0].mxu0
        %v8770 = vpop.f32.mrb[0].mxu0
        %v8771 = vadd.f32 %v8510, %v8770
        %v8772 = vpop.f32.mrb[0].mxu0
        %8773 = vmatprep.mubr.bf16.mxu0 0
        %8774 = vmatmul.mubr.bf16.gmra.mrb[0].mxu0 %v8579
        %v8775 = vpop.f32.mrb[0].mxu0
        %v8776 = vadd.f32 %v8510, %v8775
        %v8777 = vpop.f32.mrb[0].mxu0
        %v8778 = vpop.f32.mrb[0].mxu0
        %v8779 = vpop.f32.mrb[0].mxu0
        %8780 = vdwg.mxu0
        %v8781 = vld [vmem:[#allocation2 + $0x20] sm:$0xff]
        %v8782 = vld [vmem:[#allocation2 + $0x28] sm:$0xff]
        %v8783 = vld [vmem:[#allocation2 + $0x30] sm:$0xff]
        %v8784 = vld [vmem:[#allocation2 + $0x38] sm:$0xff]
        %v8785 = vld [vmem:[#allocation2 + $0x40] sm:$0xff]
        %v8786 = vld [vmem:[#allocation2 + $0x48] sm:$0xff]
        %v8787 = vld [vmem:[#allocation2 + $0x50] sm:$0xff]
        %v8788 = vld [vmem:[#allocation2 + $0x58] sm:$0xff]
        %v8789 = vld [vmem:[#allocation2 + $0x60] sm:$0xff]
        %v8790 = vld [vmem:[#allocation2 + $0x68] sm:$0xff]
        %v8791 = vld [vmem:[#allocation2 + $0x70] sm:$0xff]
        %v8792 = vld [vmem:[#allocation2 + $0x78] sm:$0xff]
        %v8793 = vld [vmem:[#allocation2 + $0x80] sm:$0xff]
        %v8794 = vld [vmem:[#allocation2 + $0x88] sm:$0xff]
        %v8795 = vld [vmem:[#allocation2 + $0x90] sm:$0xff]
        %v8796 = vld [vmem:[#allocation2 + $0x98] sm:$0xff]
        %v8797 = vld [vmem:[#allocation2 + $0xa0] sm:$0xff]
        %v8798 = vld [vmem:[#allocation2 + $0xa8] sm:$0xff]
        %v8799 = vld [vmem:[#allocation2 + $0xb0] sm:$0xff]
        %v8800 = vld [vmem:[#allocation2 + $0xb8] sm:$0xff]
        %v8801 = vld [vmem:[#allocation2 + $0xc0] sm:$0xff]
        %v8802 = vld [vmem:[#allocation2 + $0xc8] sm:$0xff]
        %v8803 = vld [vmem:[#allocation2 + $0xd0] sm:$0xff]
        %v8804 = vld [vmem:[#allocation2 + $0xd8] sm:$0xff]
        %v8805 = vld [vmem:[#allocation2 + $0xe0] sm:$0xff]
        %v8806 = vld [vmem:[#allocation2 + $0xe8] sm:$0xff]
        %v8807 = vld [vmem:[#allocation2 + $0xf0] sm:$0xff]
        %v8808 = vld [vmem:[#allocation2 + $0xf8] sm:$0xff]
        %v8809 = vld [vmem:[#allocation2 + $0x100] sm:$0xff]
        %v8810 = vld [vmem:[#allocation2 + $0x108] sm:$0xff]
        %v8811 = vld [vmem:[#allocation2 + $0x110] sm:$0xff]
        %v8812 = vld [vmem:[#allocation2 + $0x118] sm:$0xff]
        %v8813 = vld [vmem:[#allocation2 + $0x120] sm:$0xff]
        %v8814 = vld [vmem:[#allocation2 + $0x128] sm:$0xff]
        %v8815 = vld [vmem:[#allocation2 + $0x130] sm:$0xff]
        %v8816 = vld [vmem:[#allocation2 + $0x138] sm:$0xff]
        %v8817 = vld [vmem:[#allocation2 + $0x140] sm:$0xff]
        %v8818 = vld [vmem:[#allocation2 + $0x148] sm:$0xff]
        %v8819 = vld [vmem:[#allocation2 + $0x150] sm:$0xff]
        %v8820 = vld [vmem:[#allocation2 + $0x158] sm:$0xff]
        %v8821 = vld [vmem:[#allocation2 + $0x160] sm:$0xff]
        %v8822 = vadd.f32 %v8781, %v8616
        %v8823 = vadd.f32 %v8782, %v8619
        %v8824 = vadd.f32 %v8783, %v8624
        %v8825 = vadd.f32 %v8784, %v8627
        %v8826 = vadd.f32 %v8785, %v8632
        %v8827 = vadd.f32 %v8786, %v8635
        %v8828 = vadd.f32 %v8787, %v8640
        %v8829 = vadd.f32 %v8788, %v8643
        %v8830 = vadd.f32 %v8789, %v8648
        %v8831 = vadd.f32 %v8790, %v8651
        %v8832 = vadd.f32 %v8791, %v8656
        %v8833 = vadd.f32 %v8792, %v8659
        %v8834 = vadd.f32 %v8793, %v8664
        %v8835 = vadd.f32 %v8794, %v8667
        %v8836 = vadd.f32 %v8795, %v8672
        %v8837 = vadd.f32 %v8796, %v8675
        %v8838 = vadd.f32 %v8797, %v8680
        %v8839 = vadd.f32 %v8798, %v8683
        %v8840 = vadd.f32 %v8799, %v8688
        %v8841 = vadd.f32 %v8800, %v8691
        %v8842 = vadd.f32 %v8801, %v8696
        %v8843 = vadd.f32 %v8802, %v8699
        %v8844 = vadd.f32 %v8803, %v8704
        %v8845 = vadd.f32 %v8804, %v8707
        %v8846 = vadd.f32 %v8805, %v8712
        %v8847 = vadd.f32 %v8806, %v8715
        %v8848 = vadd.f32 %v8807, %v8720
        %v8849 = vadd.f32 %v8808, %v8723
        %v8850 = vadd.f32 %v8809, %v8728
        %v8851 = vadd.f32 %v8810, %v8731
        %v8852 = vadd.f32 %v8811, %v8736
        %v8853 = vadd.f32 %v8812, %v8739
        %v8854 = vadd.f32 %v8813, %v8744
        %v8855 = vadd.f32 %v8814, %v8747
        %v8856 = vadd.f32 %v8815, %v8752
        %v8857 = vadd.f32 %v8816, %v8755
        %v8858 = vadd.f32 %v8817, %v8760
        %v8859 = vadd.f32 %v8818, %v8763
        %v8860 = vadd.f32 %v8819, %v8768
        %v8861 = vadd.f32 %v8820, %v8771
        %v8862 = vadd.f32 %v8821, %v8776
        %v8863 = vmul.f32 %v8822, %v2104
        %v8864 = vmul.f32 %v8823, %v2109
        %v8865 = vmul.f32 %v8824, %v2114
        %v8866 = vmul.f32 %v8825, %v2119
        %v8867 = vmul.f32 %v8826, %v2124
        %v8868 = vmul.f32 %v8827, %v2129
        %v8869 = vmul.f32 %v8828, %v2134
        %v8870 = vmul.f32 %v8829, %v2139
        %v8871 = vmul.f32 %v8830, %v2144
        %v8872 = vmul.f32 %v8831, %v2149
        %v8873 = vmul.f32 %v8832, %v2154
        %v8874 = vmul.f32 %v8833, %v2159
        %v8875 = vmul.f32 %v8834, %v2164
        %v8876 = vmul.f32 %v8835, %v2169
        %v8877 = vmul.f32 %v8836, %v2174
        %v8878 = vmul.f32 %v8837, %v2179
        %v8879 = vmul.f32 %v8838, %v2184
        %v8880 = vmul.f32 %v8839, %v2189
        %v8881 = vmul.f32 %v8840, %v2194
        %v8882 = vmul.f32 %v8841, %v2199
        %v8883 = vmul.f32 %v8842, %v2204
        %v8884 = vmul.f32 %v8843, %v2209
        %v8885 = vmul.f32 %v8844, %v2214
        %v8886 = vmul.f32 %v8845, %v2219
        %v8887 = vmul.f32 %v8846, %v2224
        %v8888 = vmul.f32 %v8847, %v2229
        %v8889 = vmul.f32 %v8848, %v2234
        %v8890 = vmul.f32 %v8849, %v2239
        %v8891 = vmul.f32 %v8850, %v2244
        %v8892 = vmul.f32 %v8851, %v2249
        %v8893 = vmul.f32 %v8852, %v2254
        %v8894 = vmul.f32 %v8853, %v2259
        %v8895 = vmul.f32 %v8854, %v2264
        %v8896 = vmul.f32 %v8855, %v2269
        %v8897 = vmul.f32 %v8856, %v2274
        %v8898 = vmul.f32 %v8857, %v2279
        %v8899 = vmul.f32 %v8858, %v2284
        %v8900 = vmul.f32 %v8859, %v2289
        %v8901 = vmul.f32 %v8860, %v2294
        %v8902 = vmul.f32 %v8861, %v2299
        %v8903 = vmul.f32 %v8862, %v2304
        %8904 = vst.msk [vmem:[#allocation2 + $0x20] sm:$0xff] %vm467, %v8863
        %8905 = vst.msk [vmem:[#allocation2 + $0x28] sm:$0xff] %vm467, %v8864
        %8906 = vst.msk [vmem:[#allocation2 + $0x30] sm:$0xff] %vm467, %v8865
        %8907 = vst.msk [vmem:[#allocation2 + $0x38] sm:$0xff] %vm467, %v8866
        %8908 = vst.msk [vmem:[#allocation2 + $0x40] sm:$0xff] %vm467, %v8867
        %8909 = vst.msk [vmem:[#allocation2 + $0x48] sm:$0xff] %vm467, %v8868
        %8910 = vst.msk [vmem:[#allocation2 + $0x50] sm:$0xff] %vm467, %v8869
        %8911 = vst.msk [vmem:[#allocation2 + $0x58] sm:$0xff] %vm467, %v8870
        %8912 = vst.msk [vmem:[#allocation2 + $0x60] sm:$0xff] %vm467, %v8871
        %8913 = vst.msk [vmem:[#allocation2 + $0x68] sm:$0xff] %vm467, %v8872
        %8914 = vst.msk [vmem:[#allocation2 + $0x70] sm:$0xff] %vm467, %v8873
        %8915 = vst.msk [vmem:[#allocation2 + $0x78] sm:$0xff] %vm467, %v8874
        %8916 = vst.msk [vmem:[#allocation2 + $0x80] sm:$0xff] %vm467, %v8875
        %8917 = vst.msk [vmem:[#allocation2 + $0x88] sm:$0xff] %vm467, %v8876
        %8918 = vst.msk [vmem:[#allocation2 + $0x90] sm:$0xff] %vm467, %v8877
        %8919 = vst.msk [vmem:[#allocation2 + $0x98] sm:$0xff] %vm467, %v8878
        %8920 = vst.msk [vmem:[#allocation2 + $0xa0] sm:$0xff] %vm467, %v8879
        %8921 = vst.msk [vmem:[#allocation2 + $0xa8] sm:$0xff] %vm467, %v8880
        %8922 = vst.msk [vmem:[#allocation2 + $0xb0] sm:$0xff] %vm467, %v8881
        %8923 = vst.msk [vmem:[#allocation2 + $0xb8] sm:$0xff] %vm467, %v8882
        %8924 = vst.msk [vmem:[#allocation2 + $0xc0] sm:$0xff] %vm467, %v8883
        %8925 = vst.msk [vmem:[#allocation2 + $0xc8] sm:$0xff] %vm467, %v8884
        %8926 = vst.msk [vmem:[#allocation2 + $0xd0] sm:$0xff] %vm467, %v8885
        %8927 = vst.msk [vmem:[#allocation2 + $0xd8] sm:$0xff] %vm467, %v8886
        %8928 = vst.msk [vmem:[#allocation2 + $0xe0] sm:$0xff] %vm467, %v8887
        %8929 = vst.msk [vmem:[#allocation2 + $0xe8] sm:$0xff] %vm467, %v8888
        %8930 = vst.msk [vmem:[#allocation2 + $0xf0] sm:$0xff] %vm467, %v8889
        %8931 = vst.msk [vmem:[#allocation2 + $0xf8] sm:$0xff] %vm467, %v8890
        %8932 = vst.msk [vmem:[#allocation2 + $0x100] sm:$0xff] %vm467, %v8891
        %8933 = vst.msk [vmem:[#allocation2 + $0x108] sm:$0xff] %vm467, %v8892
        %8934 = vst.msk [vmem:[#allocation2 + $0x110] sm:$0xff] %vm467, %v8893
        %8935 = vst.msk [vmem:[#allocation2 + $0x118] sm:$0xff] %vm467, %v8894
        %8936 = vst.msk [vmem:[#allocation2 + $0x120] sm:$0xff] %vm467, %v8895
        %8937 = vst.msk [vmem:[#allocation2 + $0x128] sm:$0xff] %vm467, %v8896
        %8938 = vst.msk [vmem:[#allocation2 + $0x130] sm:$0xff] %vm467, %v8897
        %8939 = vst.msk [vmem:[#allocation2 + $0x138] sm:$0xff] %vm467, %v8898
        %8940 = vst.msk [vmem:[#allocation2 + $0x140] sm:$0xff] %vm467, %v8899
        %8941 = vst.msk [vmem:[#allocation2 + $0x148] sm:$0xff] %vm467, %v8900
        %8942 = vst.msk [vmem:[#allocation2 + $0x150] sm:$0xff] %vm467, %v8901
        %8943 = vst.msk [vmem:[#allocation2 + $0x158] sm:$0xff] %vm467, %v8902
        %8944 = vst.msk [vmem:[#allocation2 + $0x160] sm:$0xff] %vm467, %v8903
        %v8945 = vld [vmem:[#allocation2 + $0x6] sm:$0xff]
        %v8946 = vld [vmem:[#allocation2 + $0xe] sm:$0xff]
        %v8947 = vld [vmem:[#allocation2 + $0x16] sm:$0xff]
        %v8948 = vld [vmem:[#allocation2 + $0x1e] sm:$0xff]
        %v8949 = vld [vmem:[#allocation2 + $0x26] sm:$0xff]
        %v8950 = vld [vmem:[#allocation2 + $0x2e] sm:$0xff]
        %v8951 = vld [vmem:[#allocation2 + $0x36] sm:$0xff]
        %v8952 = vld [vmem:[#allocation2 + $0x3e] sm:$0xff]
        %v8953 = vld [vmem:[#allocation2 + $0x46] sm:$0xff]
        %v8954 = vld [vmem:[#allocation2 + $0x4e] sm:$0xff]
        %v8955 = vld [vmem:[#allocation2 + $0x56] sm:$0xff]
        %v8956 = vld [vmem:[#allocation2 + $0x5e] sm:$0xff]
        %v8957 = vld [vmem:[#allocation2 + $0x66] sm:$0xff]
        %v8958 = vld [vmem:[#allocation2 + $0x6e] sm:$0xff]
        %v8959 = vld [vmem:[#allocation2 + $0x76] sm:$0xff]
        %v8960 = vld [vmem:[#allocation2 + $0x7e] sm:$0xff]
        %v8961 = vld [vmem:[#allocation2 + $0x86] sm:$0xff]
        %v8962 = vld [vmem:[#allocation2 + $0x8e] sm:$0xff]
        %v8963 = vld [vmem:[#allocation2 + $0x96] sm:$0xff]
        %v8964 = vld [vmem:[#allocation2 + $0x9e] sm:$0xff]
        %v8965 = vld [vmem:[#allocation2 + $0xa6] sm:$0xff]
        %v8966 = vld [vmem:[#allocation2 + $0xae] sm:$0xff]
        %v8967 = vld [vmem:[#allocation2 + $0xb6] sm:$0xff]
        %v8968 = vld [vmem:[#allocation2 + $0xbe] sm:$0xff]
        %v8969 = vld [vmem:[#allocation2 + $0xc6] sm:$0xff]
        %v8970 = vld [vmem:[#allocation2 + $0xce] sm:$0xff]
        %v8971 = vld [vmem:[#allocation2 + $0xd6] sm:$0xff]
        %v8972 = vld [vmem:[#allocation2 + $0xde] sm:$0xff]
        %v8973 = vld [vmem:[#allocation2 + $0xe6] sm:$0xff]
        %v8974 = vld [vmem:[#allocation2 + $0xee] sm:$0xff]
        %v8975 = vld [vmem:[#allocation2 + $0xf6] sm:$0xff]
        %v8976 = vld [vmem:[#allocation2 + $0xfe] sm:$0xff]
        %v8977 = vld [vmem:[#allocation2 + $0x106] sm:$0xff]
        %v8978 = vld [vmem:[#allocation2 + $0x10e] sm:$0xff]
        %v8979 = vld [vmem:[#allocation2 + $0x116] sm:$0xff]
        %v8980 = vld [vmem:[#allocation2 + $0x11e] sm:$0xff]
        %v8981 = vld [vmem:[#allocation2 + $0x126] sm:$0xff]
        %v8982 = vld [vmem:[#allocation2 + $0x12e] sm:$0xff]
        %v8983 = vld [vmem:[#allocation2 + $0x136] sm:$0xff]
        %v8984 = vld [vmem:[#allocation2 + $0x13e] sm:$0xff]
        %v8985 = vld [vmem:[#allocation2 + $0x146] sm:$0xff]
        %v8986 = vld [vmem:[#allocation2 + $0x14e] sm:$0xff]
        %v8987 = vld [vmem:[#allocation2 + $0x156] sm:$0xff]
        %v8988 = vmax.f32 %v8945, 0.0
        %v8989 = vmax.f32 %v8946, 0.0
        %v8990 = vmax.f32 %v8947, 0.0
        %v8991 = vmax.f32 %v8948, 0.0
        %v8992 = vmax.f32 %v8949, 0.0
        %v8993 = vmax.f32 %v8950, 0.0
        %v8994 = vmax.f32 %v8951, 0.0
        %v8995 = vmax.f32 %v8952, 0.0
        %v8996 = vmax.f32 %v8953, 0.0
        %v8997 = vmax.f32 %v8954, 0.0
        %v8998 = vmax.f32 %v8955, 0.0
        %v8999 = vmax.f32 %v8956, 0.0
        %v9000 = vmax.f32 %v8957, 0.0
        %v9001 = vmax.f32 %v8958, 0.0
        %v9002 = vmax.f32 %v8959, 0.0
        %v9003 = vmax.f32 %v8960, 0.0
        %v9004 = vmax.f32 %v8961, 0.0
        %v9005 = vmax.f32 %v8962, 0.0
        %v9006 = vmax.f32 %v8963, 0.0
        %v9007 = vmax.f32 %v8964, 0.0
        %v9008 = vmax.f32 %v8965, 0.0
        %v9009 = vmax.f32 %v8966, 0.0
        %v9010 = vmax.f32 %v8967, 0.0
        %v9011 = vmax.f32 %v8968, 0.0
        %v9012 = vmax.f32 %v8969, 0.0
        %v9013 = vmax.f32 %v8970, 0.0
        %v9014 = vmax.f32 %v8971, 0.0
        %v9015 = vmax.f32 %v8972, 0.0
        %v9016 = vmax.f32 %v8973, 0.0
        %v9017 = vmax.f32 %v8974, 0.0
        %v9018 = vmax.f32 %v8975, 0.0
        %v9019 = vmax.f32 %v8976, 0.0
        %v9020 = vmax.f32 %v8977, 0.0
        %v9021 = vmax.f32 %v8978, 0.0
        %v9022 = vmax.f32 %v8979, 0.0
        %v9023 = vmax.f32 %v8980, 0.0
        %v9024 = vmax.f32 %v8981, 0.0
        %v9025 = vmax.f32 %v8982, 0.0
        %v9026 = vmax.f32 %v8983, 0.0
        %v9027 = vmax.f32 %v8984, 0.0
        %v9028 = vmax.f32 %v8985, 0.0
        %v9029 = vmax.f32 %v8986, 0.0
        %v9030 = vmax.f32 %v8987, 0.0
        %v9031 = vpack.c.bf16 %v8989, %v8988
        %v9032 = vpack.c.bf16 %v8991, %v8990
        %v9033 = vpack.c.bf16 %v8993, %v8992
        %v9034 = vpack.c.bf16 %v8995, %v8994
        %v9035 = vpack.c.bf16 %v8997, %v8996
        %v9036 = vpack.c.bf16 %v8999, %v8998
        %v9037 = vpack.c.bf16 %v9001, %v9000
        %v9038 = vpack.c.bf16 %v9003, %v9002
        %v9039 = vpack.c.bf16 %v9005, %v9004
        %v9040 = vpack.c.bf16 %v9007, %v9006
        %v9041 = vpack.c.bf16 %v9009, %v9008
        %v9042 = vpack.c.bf16 %v9011, %v9010
        %v9043 = vpack.c.bf16 %v9013, %v9012
        %v9044 = vpack.c.bf16 %v9015, %v9014
        %v9045 = vpack.c.bf16 %v9017, %v9016
        %v9046 = vpack.c.bf16 %v9019, %v9018
        %v9047 = vpack.c.bf16 %v9021, %v9020
        %v9048 = vpack.c.bf16 %v9023, %v9022
        %v9049 = vpack.c.bf16 %v9025, %v9024
        %v9050 = vpack.c.bf16 %v9027, %v9026
        %v9051 = vpack.c.bf16 %v9029, %v9028
        %v9052 = vpack.c.bf16 %v9030, %v9030
        %v9075 = vunpack.c.l.b16 %v9031
        %v9076 = vunpack.c.h.b16 %v9031
        %v9077 = vunpack.c.l.b16 %v9032
        %v9078 = vunpack.c.h.b16 %v9032
        %v9079 = vunpack.c.l.b16 %v9033
        %v9080 = vunpack.c.h.b16 %v9033
        %v9081 = vunpack.c.l.b16 %v9034
        %v9082 = vunpack.c.h.b16 %v9034
        %v9083 = vunpack.c.l.b16 %v9035
        %v9084 = vunpack.c.h.b16 %v9035
        %v9085 = vunpack.c.l.b16 %v9036
        %v9086 = vunpack.c.h.b16 %v9036
        %v9087 = vunpack.c.l.b16 %v9037
        %v9088 = vunpack.c.h.b16 %v9037
        %v9089 = vunpack.c.l.b16 %v9038
        %v9090 = vunpack.c.h.b16 %v9038
        %v9091 = vunpack.c.l.b16 %v9039
        %v9092 = vunpack.c.h.b16 %v9039
        %v9093 = vunpack.c.l.b16 %v9040
        %v9094 = vunpack.c.h.b16 %v9040
        %v9095 = vunpack.c.l.b16 %v9041
        %v9096 = vunpack.c.h.b16 %v9041
        %v9097 = vunpack.c.l.b16 %v9042
        %v9098 = vunpack.c.h.b16 %v9042
        %v9099 = vunpack.c.l.b16 %v9043
        %v9100 = vunpack.c.h.b16 %v9043
        %v9101 = vunpack.c.l.b16 %v9044
        %v9102 = vunpack.c.h.b16 %v9044
        %v9103 = vunpack.c.l.b16 %v9045
        %v9104 = vunpack.c.h.b16 %v9045
        %v9105 = vunpack.c.l.b16 %v9046
        %v9106 = vunpack.c.h.b16 %v9046
        %v9107 = vunpack.c.l.b16 %v9047
        %v9108 = vunpack.c.h.b16 %v9047
        %v9109 = vunpack.c.l.b16 %v9048
        %v9110 = vunpack.c.h.b16 %v9048
        %v9111 = vunpack.c.l.b16 %v9049
        %v9112 = vunpack.c.h.b16 %v9049
        %v9113 = vunpack.c.l.b16 %v9050
        %v9114 = vunpack.c.h.b16 %v9050
        %v9115 = vunpack.c.l.b16 %v9051
        %v9116 = vunpack.c.h.b16 %v9051
        %v9117 = vunpack.c.l.b16 %v9052
        %v9118 = vpack.c.b16 %v9075, %v9075
        %v9119 = vpack.c.b16 %v9076, %v9076
        %v9120 = vpack.c.b16 %v9077, %v9077
        %v9121 = vpack.c.b16 %v9078, %v9078
        %v9122 = vpack.c.b16 %v9079, %v9079
        %v9123 = vpack.c.b16 %v9080, %v9080
        %v9124 = vpack.c.b16 %v9081, %v9081
        %v9125 = vpack.c.b16 %v9082, %v9082
        %v9126 = vpack.c.b16 %v9083, %v9083
        %v9127 = vpack.c.b16 %v9084, %v9084
        %v9128 = vpack.c.b16 %v9085, %v9085
        %v9129 = vpack.c.b16 %v9086, %v9086
        %v9130 = vpack.c.b16 %v9087, %v9087
        %v9131 = vpack.c.b16 %v9088, %v9088
        %v9132 = vpack.c.b16 %v9089, %v9089
        %v9133 = vpack.c.b16 %v9090, %v9090
        %v9134 = vpack.c.b16 %v9091, %v9091
        %v9135 = vpack.c.b16 %v9092, %v9092
        %v9136 = vpack.c.b16 %v9093, %v9093
        %v9137 = vpack.c.b16 %v9094, %v9094
        %v9138 = vpack.c.b16 %v9095, %v9095
        %v9139 = vpack.c.b16 %v9096, %v9096
        %v9140 = vpack.c.b16 %v9097, %v9097
        %v9141 = vpack.c.b16 %v9098, %v9098
        %v9142 = vpack.c.b16 %v9099, %v9099
        %v9143 = vpack.c.b16 %v9100, %v9100
        %v9144 = vpack.c.b16 %v9101, %v9101
        %v9145 = vpack.c.b16 %v9102, %v9102
        %v9146 = vpack.c.b16 %v9103, %v9103
        %v9147 = vpack.c.b16 %v9104, %v9104
        %v9148 = vpack.c.b16 %v9105, %v9105
        %v9149 = vpack.c.b16 %v9106, %v9106
        %v9150 = vpack.c.b16 %v9107, %v9107
        %v9151 = vpack.c.b16 %v9108, %v9108
        %v9152 = vpack.c.b16 %v9109, %v9109
        %v9153 = vpack.c.b16 %v9110, %v9110
        %v9154 = vpack.c.b16 %v9111, %v9111
        %v9155 = vpack.c.b16 %v9112, %v9112
        %v9156 = vpack.c.b16 %v9113, %v9113
        %v9157 = vpack.c.b16 %v9114, %v9114
        %v9158 = vpack.c.b16 %v9115, %v9115
        %v9159 = vpack.c.b16 %v9116, %v9116
        %v9160 = vpack.c.b16 %v9117, %v9117
        %9204 = vst.msk [vmem:[#allocation3 + $0xc] sm:$0xf] %vm2647, %v9118
        %9205 = vst.msk [vmem:[#allocation3 + $0x10] sm:$0xf] %vm2647, %v9119
        %9206 = vst.msk [vmem:[#allocation3 + $0x14] sm:$0xf] %vm2647, %v9120
        %9207 = vst.msk [vmem:[#allocation3 + $0x18] sm:$0xf] %vm2647, %v9121
        %9208 = vst.msk [vmem:[#allocation3 + $0x1c] sm:$0xf] %vm2647, %v9122
        %9209 = vst.msk [vmem:[#allocation3 + $0x20] sm:$0xf] %vm2647, %v9123
        %9210 = vst.msk [vmem:[#allocation3 + $0x24] sm:$0xf] %vm2647, %v9124
        %9211 = vst.msk [vmem:[#allocation3 + $0x28] sm:$0xf] %vm2647, %v9125
        %9212 = vst.msk [vmem:[#allocation3 + $0x2c] sm:$0xf] %vm2647, %v9126
        %9213 = vst.msk [vmem:[#allocation3 + $0x30] sm:$0xf] %vm2647, %v9127
        %9214 = vst.msk [vmem:[#allocation3 + $0x34] sm:$0xf] %vm2647, %v9128
        %9215 = vst.msk [vmem:[#allocation3 + $0x38] sm:$0xf] %vm2647, %v9129
        %9216 = vst.msk [vmem:[#allocation3 + $0x3c] sm:$0xf] %vm2647, %v9130
        %9217 = vst.msk [vmem:[#allocation3 + $0x40] sm:$0xf] %vm2647, %v9131
        %9218 = vst.msk [vmem:[#allocation3 + $0x44] sm:$0xf] %vm2647, %v9132
        %9219 = vst.msk [vmem:[#allocation3 + $0x48] sm:$0xf] %vm2647, %v9133
        %9220 = vst.msk [vmem:[#allocation3 + $0x4c] sm:$0xf] %vm2647, %v9134
        %9221 = vst.msk [vmem:[#allocation3 + $0x50] sm:$0xf] %vm2647, %v9135
        %9222 = vst.msk [vmem:[#allocation3 + $0x54] sm:$0xf] %vm2647, %v9136
        %9223 = vst.msk [vmem:[#allocation3 + $0x58] sm:$0xf] %vm2647, %v9137
        %9224 = vst.msk [vmem:[#allocation3 + $0x5c] sm:$0xf] %vm2647, %v9138
        %9225 = vst.msk [vmem:[#allocation3 + $0x60] sm:$0xf] %vm2647, %v9139
        %9226 = vst.msk [vmem:[#allocation3 + $0x64] sm:$0xf] %vm2647, %v9140
        %9227 = vst.msk [vmem:[#allocation3 + $0x68] sm:$0xf] %vm2647, %v9141
        %9228 = vst.msk [vmem:[#allocation3 + $0x6c] sm:$0xf] %vm2647, %v9142
        %9229 = vst.msk [vmem:[#allocation3 + $0x70] sm:$0xf] %vm2647, %v9143
        %9230 = vst.msk [vmem:[#allocation3 + $0x74] sm:$0xf] %vm2647, %v9144
        %9231 = vst.msk [vmem:[#allocation3 + $0x78] sm:$0xf] %vm2647, %v9145
        %9232 = vst.msk [vmem:[#allocation3 + $0x7c] sm:$0xf] %vm2647, %v9146
        %9233 = vst.msk [vmem:[#allocation3 + $0x80] sm:$0xf] %vm2647, %v9147
        %9234 = vst.msk [vmem:[#allocation3 + $0x84] sm:$0xf] %vm2647, %v9148
        %9235 = vst.msk [vmem:[#allocation3 + $0x88] sm:$0xf] %vm2647, %v9149
        %9236 = vst.msk [vmem:[#allocation3 + $0x8c] sm:$0xf] %vm2647, %v9150
        %9237 = vst.msk [vmem:[#allocation3 + $0x90] sm:$0xf] %vm2647, %v9151
        %9238 = vst.msk [vmem:[#allocation3 + $0x94] sm:$0xf] %vm2647, %v9152
        %9239 = vst.msk [vmem:[#allocation3 + $0x98] sm:$0xf] %vm2647, %v9153
        %9240 = vst.msk [vmem:[#allocation3 + $0x9c] sm:$0xf] %vm2647, %v9154
        %9241 = vst.msk [vmem:[#allocation3 + $0xa0] sm:$0xf] %vm2647, %v9155
        %9242 = vst.msk [vmem:[#allocation3 + $0xa4] sm:$0xf] %vm2647, %v9156
        %9243 = vst.msk [vmem:[#allocation3 + $0xa8] sm:$0xf] %vm2647, %v9157
        %9244 = vst.msk [vmem:[#allocation3 + $0xac] sm:$0xf] %vm2647, %v9158
        %9245 = vst.msk [vmem:[#allocation3 + $0xb0] sm:$0xf] %vm2647, %v9159
        %9246 = vst.msk [vmem:[#allocation3 + $0xb4] sm:$0xf] %vm2647, %v9160
        %v9247 = vld [vmem:[#allocation2 + $0x18] sm:$0xff]
        %v9248 = vld [vmem:[#allocation2 + $0x20] sm:$0xff]
        %v9249 = vld [vmem:[#allocation2 + $0x28] sm:$0xff]
        %v9250 = vld [vmem:[#allocation2 + $0x30] sm:$0xff]
        %v9251 = vld [vmem:[#allocation2 + $0x38] sm:$0xff]
        %v9252 = vld [vmem:[#allocation2 + $0x40] sm:$0xff]
        %v9253 = vld [vmem:[#allocation2 + $0x48] sm:$0xff]
        %v9254 = vld [vmem:[#allocation2 + $0x50] sm:$0xff]
        %v9255 = vld [vmem:[#allocation2 + $0x58] sm:$0xff]
        %v9256 = vld [vmem:[#allocation2 + $0x60] sm:$0xff]
        %v9257 = vld [vmem:[#allocation2 + $0x68] sm:$0xff]
        %v9258 = vld [vmem:[#allocation2 + $0x70] sm:$0xff]
        %v9259 = vld [vmem:[#allocation2 + $0x78] sm:$0xff]
        %v9260 = vld [vmem:[#allocation2 + $0x80] sm:$0xff]
        %v9261 = vld [vmem:[#allocation2 + $0x88] sm:$0xff]
        %v9262 = vld [vmem:[#allocation2 + $0x90] sm:$0xff]
        %v9263 = vld [vmem:[#allocation2 + $0x98] sm:$0xff]
        %v9264 = vld [vmem:[#allocation2 + $0xa0] sm:$0xff]
        %v9265 = vld [vmem:[#allocation2 + $0xa8] sm:$0xff]
        %v9266 = vld [vmem:[#allocation2 + $0xb0] sm:$0xff]
        %v9267 = vld [vmem:[#allocation2 + $0xb8] sm:$0xff]
        %v9268 = vld [vmem:[#allocation2 + $0xc0] sm:$0xff]
        %v9269 = vld [vmem:[#allocation2 + $0xc8] sm:$0xff]
        %v9270 = vld [vmem:[#allocation2 + $0xd0] sm:$0xff]
        %v9271 = vld [vmem:[#allocation2 + $0xd8] sm:$0xff]
        %v9272 = vld [vmem:[#allocation2 + $0xe0] sm:$0xff]
        %v9273 = vld [vmem:[#allocation2 + $0xe8] sm:$0xff]
        %v9274 = vld [vmem:[#allocation2 + $0xf0] sm:$0xff]
        %v9275 = vld [vmem:[#allocation2 + $0xf8] sm:$0xff]
        %v9276 = vld [vmem:[#allocation2 + $0x100] sm:$0xff]
        %v9277 = vld [vmem:[#allocation2 + $0x108] sm:$0xff]
        %v9278 = vld [vmem:[#allocation2 + $0x110] sm:$0xff]
        %v9279 = vld [vmem:[#allocation2 + $0x118] sm:$0xff]
        %v9280 = vld [vmem:[#allocation2 + $0x120] sm:$0xff]
        %v9281 = vld [vmem:[#allocation2 + $0x128] sm:$0xff]
        %v9282 = vld [vmem:[#allocation2 + $0x130] sm:$0xff]
        %v9283 = vld [vmem:[#allocation2 + $0x138] sm:$0xff]
        %v9284 = vld [vmem:[#allocation2 + $0x140] sm:$0xff]
        %v9285 = vld [vmem:[#allocation2 + $0x148] sm:$0xff]
        %v9286 = vld [vmem:[#allocation2 + $0x150] sm:$0xff]
        %v9287 = vld [vmem:[#allocation2 + $0x158] sm:$0xff]
        %v9288 = vld [vmem:[#allocation2 + $0x160] sm:$0xff]
        %v9289 = vld [vmem:[#allocation2 + $0x168] sm:$0xff]
        %v9290 = vmax.f32 %v9247, 0.0
        %v9291 = vmax.f32 %v9248, 0.0
        %v9292 = vmax.f32 %v9249, 0.0
        %v9293 = vmax.f32 %v9250, 0.0
        %v9294 = vmax.f32 %v9251, 0.0
        %v9295 = vmax.f32 %v9252, 0.0
        %v9296 = vmax.f32 %v9253, 0.0
        %v9297 = vmax.f32 %v9254, 0.0
        %v9298 = vmax.f32 %v9255, 0.0
        %v9299 = vmax.f32 %v9256, 0.0
        %v9300 = vmax.f32 %v9257, 0.0
        %v9301 = vmax.f32 %v9258, 0.0
        %v9302 = vmax.f32 %v9259, 0.0
        %v9303 = vmax.f32 %v9260, 0.0
        %v9304 = vmax.f32 %v9261, 0.0
        %v9305 = vmax.f32 %v9262, 0.0
        %v9306 = vmax.f32 %v9263, 0.0
        %v9307 = vmax.f32 %v9264, 0.0
        %v9308 = vmax.f32 %v9265, 0.0
        %v9309 = vmax.f32 %v9266, 0.0
        %v9310 = vmax.f32 %v9267, 0.0
        %v9311 = vmax.f32 %v9268, 0.0
        %v9312 = vmax.f32 %v9269, 0.0
        %v9313 = vmax.f32 %v9270, 0.0
        %v9314 = vmax.f32 %v9271, 0.0
        %v9315 = vmax.f32 %v9272, 0.0
        %v9316 = vmax.f32 %v9273, 0.0
        %v9317 = vmax.f32 %v9274, 0.0
        %v9318 = vmax.f32 %v9275, 0.0
        %v9319 = vmax.f32 %v9276, 0.0
        %v9320 = vmax.f32 %v9277, 0.0
        %v9321 = vmax.f32 %v9278, 0.0
        %v9322 = vmax.f32 %v9279, 0.0
        %v9323 = vmax.f32 %v9280, 0.0
        %v9324 = vmax.f32 %v9281, 0.0
        %v9325 = vmax.f32 %v9282, 0.0
        %v9326 = vmax.f32 %v9283, 0.0
        %v9327 = vmax.f32 %v9284, 0.0
        %v9328 = vmax.f32 %v9285, 0.0
        %v9329 = vmax.f32 %v9286, 0.0
        %v9330 = vmax.f32 %v9287, 0.0
        %v9331 = vmax.f32 %v9288, 0.0
        %v9332 = vmax.f32 %v9289, 0.0
        %v9333 = vpack.c.bf16 %v9291, %v9290
        %v9334 = vpack.c.bf16 %v9293, %v9292
        %v9335 = vpack.c.bf16 %v9295, %v9294
        %v9336 = vpack.c.bf16 %v9297, %v9296
        %v9337 = vpack.c.bf16 %v9299, %v9298
        %v9338 = vpack.c.bf16 %v9301, %v9300
        %v9339 = vpack.c.bf16 %v9303, %v9302
        %v9340 = vpack.c.bf16 %v9305, %v9304
        %v9341 = vpack.c.bf16 %v9307, %v9306
        %v9342 = vpack.c.bf16 %v9309, %v9308
        %v9343 = vpack.c.bf16 %v9311, %v9310
        %v9344 = vpack.c.bf16 %v9313, %v9312
        %v9345 = vpack.c.bf16 %v9315, %v9314
        %v9346 = vpack.c.bf16 %v9317, %v9316
        %v9347 = vpack.c.bf16 %v9319, %v9318
        %v9348 = vpack.c.bf16 %v9321, %v9320
        %v9349 = vpack.c.bf16 %v9323, %v9322
        %v9350 = vpack.c.bf16 %v9325, %v9324
        %v9351 = vpack.c.bf16 %v9327, %v9326
        %v9352 = vpack.c.bf16 %v9329, %v9328
        %v9353 = vpack.c.bf16 %v9331, %v9330
        %v9354 = vpack.c.bf16 %v9332, %v9332
        %v9377 = vunpack.c.l.b16 %v9333
        %v9378 = vunpack.c.h.b16 %v9333
        %v9379 = vunpack.c.l.b16 %v9334
        %v9380 = vunpack.c.h.b16 %v9334
        %v9381 = vunpack.c.l.b16 %v9335
        %v9382 = vunpack.c.h.b16 %v9335
        %v9383 = vunpack.c.l.b16 %v9336
        %v9384 = vunpack.c.h.b16 %v9336
        %v9385 = vunpack.c.l.b16 %v9337
        %v9386 = vunpack.c.h.b16 %v9337
        %v9387 = vunpack.c.l.b16 %v9338
        %v9388 = vunpack.c.h.b16 %v9338
        %v9389 = vunpack.c.l.b16 %v9339
        %v9390 = vunpack.c.h.b16 %v9339
        %v9391 = vunpack.c.l.b16 %v9340
        %v9392 = vunpack.c.h.b16 %v9340
        %v9393 = vunpack.c.l.b16 %v9341
        %v9394 = vunpack.c.h.b16 %v9341
        %v9395 = vunpack.c.l.b16 %v9342
        %v9396 = vunpack.c.h.b16 %v9342
        %v9397 = vunpack.c.l.b16 %v9343
        %v9398 = vunpack.c.h.b16 %v9343
        %v9399 = vunpack.c.l.b16 %v9344
        %v9400 = vunpack.c.h.b16 %v9344
        %v9401 = vunpack.c.l.b16 %v9345
        %v9402 = vunpack.c.h.b16 %v9345
        %v9403 = vunpack.c.l.b16 %v9346
        %v9404 = vunpack.c.h.b16 %v9346
        %v9405 = vunpack.c.l.b16 %v9347
        %v9406 = vunpack.c.h.b16 %v9347
        %v9407 = vunpack.c.l.b16 %v9348
        %v9408 = vunpack.c.h.b16 %v9348
        %v9409 = vunpack.c.l.b16 %v9349
        %v9410 = vunpack.c.h.b16 %v9349
        %v9411 = vunpack.c.l.b16 %v9350
        %v9412 = vunpack.c.h.b16 %v9350
        %v9413 = vunpack.c.l.b16 %v9351
        %v9414 = vunpack.c.h.b16 %v9351
        %v9415 = vunpack.c.l.b16 %v9352
        %v9416 = vunpack.c.h.b16 %v9352
        %v9417 = vunpack.c.l.b16 %v9353
        %v9418 = vunpack.c.h.b16 %v9353
        %v9419 = vunpack.c.l.b16 %v9354
        %v9420 = vpack.c.b16 %v9377, %v9377
        %v9421 = vpack.c.b16 %v9378, %v9378
        %v9422 = vpack.c.b16 %v9379, %v9379
        %v9423 = vpack.c.b16 %v9380, %v9380
        %v9424 = vpack.c.b16 %v9381, %v9381
        %v9425 = vpack.c.b16 %v9382, %v9382
        %v9426 = vpack.c.b16 %v9383, %v9383
        %v9427 = vpack.c.b16 %v9384, %v9384
        %v9428 = vpack.c.b16 %v9385, %v9385
        %v9429 = vpack.c.b16 %v9386, %v9386
        %v9430 = vpack.c.b16 %v9387, %v9387
        %v9431 = vpack.c.b16 %v9388, %v9388
        %v9432 = vpack.c.b16 %v9389, %v9389
        %v9433 = vpack.c.b16 %v9390, %v9390
        %v9434 = vpack.c.b16 %v9391, %v9391
        %v9435 = vpack.c.b16 %v9392, %v9392
        %v9436 = vpack.c.b16 %v9393, %v9393
        %v9437 = vpack.c.b16 %v9394, %v9394
        %v9438 = vpack.c.b16 %v9395, %v9395
        %v9439 = vpack.c.b16 %v9396, %v9396
        %v9440 = vpack.c.b16 %v9397, %v9397
        %v9441 = vpack.c.b16 %v9398, %v9398
        %v9442 = vpack.c.b16 %v9399, %v9399
        %v9443 = vpack.c.b16 %v9400, %v9400
        %v9444 = vpack.c.b16 %v9401, %v9401
        %v9445 = vpack.c.b16 %v9402, %v9402
        %v9446 = vpack.c.b16 %v9403, %v9403
        %v9447 = vpack.c.b16 %v9404, %v9404
        %v9448 = vpack.c.b16 %v9405, %v9405
        %v9449 = vpack.c.b16 %v9406, %v9406
        %v9450 = vpack.c.b16 %v9407, %v9407
        %v9451 = vpack.c.b16 %v9408, %v9408
        %v9452 = vpack.c.b16 %v9409, %v9409
        %v9453 = vpack.c.b16 %v9410, %v9410
        %v9454 = vpack.c.b16 %v9411, %v9411
        %v9455 = vpack.c.b16 %v9412, %v9412
        %v9456 = vpack.c.b16 %v9413, %v9413
        %v9457 = vpack.c.b16 %v9414, %v9414
        %v9458 = vpack.c.b16 %v9415, %v9415
        %v9459 = vpack.c.b16 %v9416, %v9416
        %v9460 = vpack.c.b16 %v9417, %v9417
        %v9461 = vpack.c.b16 %v9418, %v9418
        %v9462 = vpack.c.b16 %v9419, %v9419
        %9463 = vrot.lane.b32.xlu0 %v9420, 32
        %v9464 = vpop.permute.xlu0 %9463
        %9465 = vrot.lane.b32.xlu0 %v9421, 32
        %v9466 = vpop.permute.xlu0 %9465
        %9467 = vrot.lane.b32.xlu0 %v9422, 32
        %v9468 = vpop.permute.xlu0 %9467
        %9469 = vrot.lane.b32.xlu0 %v9423, 32
        %v9470 = vpop.permute.xlu0 %9469
        %9471 = vrot.lane.b32.xlu0 %v9424, 32
        %v9472 = vpop.permute.xlu0 %9471
        %9473 = vrot.lane.b32.xlu0 %v9425, 32
        %v9474 = vpop.permute.xlu0 %9473
        %9475 = vrot.lane.b32.xlu0 %v9426, 32
        %v9476 = vpop.permute.xlu0 %9475
        %9477 = vrot.lane.b32.xlu0 %v9427, 32
        %v9478 = vpop.permute.xlu0 %9477
        %9479 = vrot.lane.b32.xlu0 %v9428, 32
        %v9480 = vpop.permute.xlu0 %9479
        %9481 = vrot.lane.b32.xlu0 %v9429, 32
        %v9482 = vpop.permute.xlu0 %9481
        %9483 = vrot.lane.b32.xlu0 %v9430, 32
        %v9484 = vpop.permute.xlu0 %9483
        %9485 = vrot.lane.b32.xlu0 %v9431, 32
        %v9486 = vpop.permute.xlu0 %9485
        %9487 = vrot.lane.b32.xlu0 %v9432, 32
        %v9488 = vpop.permute.xlu0 %9487
        %9489 = vrot.lane.b32.xlu0 %v9433, 32
        %v9490 = vpop.permute.xlu0 %9489
        %9491 = vrot.lane.b32.xlu0 %v9434, 32
        %v9492 = vpop.permute.xlu0 %9491
        %9493 = vrot.lane.b32.xlu0 %v9435, 32
        %v9494 = vpop.permute.xlu0 %9493
        %9495 = vrot.lane.b32.xlu0 %v9436, 32
        %v9496 = vpop.permute.xlu0 %9495
        %9497 = vrot.lane.b32.xlu0 %v9437, 32
        %v9498 = vpop.permute.xlu0 %9497
        %9499 = vrot.lane.b32.xlu0 %v9438, 32
        %v9500 = vpop.permute.xlu0 %9499
        %9501 = vrot.lane.b32.xlu0 %v9439, 32
        %v9502 = vpop.permute.xlu0 %9501
        %9503 = vrot.lane.b32.xlu0 %v9440, 32
        %v9504 = vpop.permute.xlu0 %9503
        %9505 = vrot.lane.b32.xlu0 %v9441, 32
        %v9506 = vpop.permute.xlu0 %9505
        %9507 = vrot.lane.b32.xlu0 %v9442, 32
        %v9508 = vpop.permute.xlu0 %9507
        %9509 = vrot.lane.b32.xlu0 %v9443, 32
        %v9510 = vpop.permute.xlu0 %9509
        %9511 = vrot.lane.b32.xlu0 %v9444, 32
        %v9512 = vpop.permute.xlu0 %9511
        %9513 = vrot.lane.b32.xlu0 %v9445, 32
        %v9514 = vpop.permute.xlu0 %9513
        %9515 = vrot.lane.b32.xlu0 %v9446, 32
        %v9516 = vpop.permute.xlu0 %9515
        %9517 = vrot.lane.b32.xlu0 %v9447, 32
        %v9518 = vpop.permute.xlu0 %9517
        %9519 = vrot.lane.b32.xlu0 %v9448, 32
        %v9520 = vpop.permute.xlu0 %9519
        %9521 = vrot.lane.b32.xlu0 %v9449, 32
        %v9522 = vpop.permute.xlu0 %9521
        %9523 = vrot.lane.b32.xlu0 %v9450, 32
        %v9524 = vpop.permute.xlu0 %9523
        %9525 = vrot.lane.b32.xlu0 %v9451, 32
        %v9526 = vpop.permute.xlu0 %9525
        %9527 = vrot.lane.b32.xlu0 %v9452, 32
        %v9528 = vpop.permute.xlu0 %9527
        %9529 = vrot.lane.b32.xlu0 %v9453, 32
        %v9530 = vpop.permute.xlu0 %9529
        %9531 = vrot.lane.b32.xlu0 %v9454, 32
        %v9532 = vpop.permute.xlu0 %9531
        %9533 = vrot.lane.b32.xlu0 %v9455, 32
        %v9534 = vpop.permute.xlu0 %9533
        %9535 = vrot.lane.b32.xlu0 %v9456, 32
        %v9536 = vpop.permute.xlu0 %9535
        %9537 = vrot.lane.b32.xlu0 %v9457, 32
        %v9538 = vpop.permute.xlu0 %9537
        %9539 = vrot.lane.b32.xlu0 %v9458, 32
        %v9540 = vpop.permute.xlu0 %9539
        %9541 = vrot.lane.b32.xlu0 %v9459, 32
        %v9542 = vpop.permute.xlu0 %9541
        %9543 = vrot.lane.b32.xlu0 %v9460, 32
        %v9544 = vpop.permute.xlu0 %9543
        %9545 = vrot.lane.b32.xlu0 %v9461, 32
        %v9546 = vpop.permute.xlu0 %9545
        %9547 = vrot.lane.b32.xlu0 %v9462, 32
        %v9548 = vpop.permute.xlu0 %9547
        %9592 = vst.msk [vmem:[#allocation3 + $0xc] sm:$0xf] %vm3036, %v9464
        %9593 = vst.msk [vmem:[#allocation3 + $0x10] sm:$0xf] %vm3036, %v9466
        %9594 = vst.msk [vmem:[#allocation3 + $0x14] sm:$0xf] %vm3036, %v9468
        %9595 = vst.msk [vmem:[#allocation3 + $0x18] sm:$0xf] %vm3036, %v9470
        %9596 = vst.msk [vmem:[#allocation3 + $0x1c] sm:$0xf] %vm3036, %v9472
        %9597 = vst.msk [vmem:[#allocation3 + $0x20] sm:$0xf] %vm3036, %v9474
        %9598 = vst.msk [vmem:[#allocation3 + $0x24] sm:$0xf] %vm3036, %v9476
        %9599 = vst.msk [vmem:[#allocation3 + $0x28] sm:$0xf] %vm3036, %v9478
        %9600 = vst.msk [vmem:[#allocation3 + $0x2c] sm:$0xf] %vm3036, %v9480
        %9601 = vst.msk [vmem:[#allocation3 + $0x30] sm:$0xf] %vm3036, %v9482
        %9602 = vst.msk [vmem:[#allocation3 + $0x34] sm:$0xf] %vm3036, %v9484
        %9603 = vst.msk [vmem:[#allocation3 + $0x38] sm:$0xf] %vm3036, %v9486
        %9604 = vst.msk [vmem:[#allocation3 + $0x3c] sm:$0xf] %vm3036, %v9488
        %9605 = vst.msk [vmem:[#allocation3 + $0x40] sm:$0xf] %vm3036, %v9490
        %9606 = vst.msk [vmem:[#allocation3 + $0x44] sm:$0xf] %vm3036, %v9492
        %9607 = vst.msk [vmem:[#allocation3 + $0x48] sm:$0xf] %vm3036, %v9494
        %9608 = vst.msk [vmem:[#allocation3 + $0x4c] sm:$0xf] %vm3036, %v9496
        %9609 = vst.msk [vmem:[#allocation3 + $0x50] sm:$0xf] %vm3036, %v9498
        %9610 = vst.msk [vmem:[#allocation3 + $0x54] sm:$0xf] %vm3036, %v9500
        %9611 = vst.msk [vmem:[#allocation3 + $0x58] sm:$0xf] %vm3036, %v9502
        %9612 = vst.msk [vmem:[#allocation3 + $0x5c] sm:$0xf] %vm3036, %v9504
        %9613 = vst.msk [vmem:[#allocation3 + $0x60] sm:$0xf] %vm3036, %v9506
        %9614 = vst.msk [vmem:[#allocation3 + $0x64] sm:$0xf] %vm3036, %v9508
        %9615 = vst.msk [vmem:[#allocation3 + $0x68] sm:$0xf] %vm3036, %v9510
        %9616 = vst.msk [vmem:[#allocation3 + $0x6c] sm:$0xf] %vm3036, %v9512
        %9617 = vst.msk [vmem:[#allocation3 + $0x70] sm:$0xf] %vm3036, %v9514
        %9618 = vst.msk [vmem:[#allocation3 + $0x74] sm:$0xf] %vm3036, %v9516
        %9619 = vst.msk [vmem:[#allocation3 + $0x78] sm:$0xf] %vm3036, %v9518
        %9620 = vst.msk [vmem:[#allocation3 + $0x7c] sm:$0xf] %vm3036, %v9520
        %9621 = vst.msk [vmem:[#allocation3 + $0x80] sm:$0xf] %vm3036, %v9522
        %9622 = vst.msk [vmem:[#allocation3 + $0x84] sm:$0xf] %vm3036, %v9524
        %9623 = vst.msk [vmem:[#allocation3 + $0x88] sm:$0xf] %vm3036, %v9526
        %9624 = vst.msk [vmem:[#allocation3 + $0x8c] sm:$0xf] %vm3036, %v9528
        %9625 = vst.msk [vmem:[#allocation3 + $0x90] sm:$0xf] %vm3036, %v9530
        %9626 = vst.msk [vmem:[#allocation3 + $0x94] sm:$0xf] %vm3036, %v9532
        %9627 = vst.msk [vmem:[#allocation3 + $0x98] sm:$0xf] %vm3036, %v9534
        %9628 = vst.msk [vmem:[#allocation3 + $0x9c] sm:$0xf] %vm3036, %v9536
        %9629 = vst.msk [vmem:[#allocation3 + $0xa0] sm:$0xf] %vm3036, %v9538
        %9630 = vst.msk [vmem:[#allocation3 + $0xa4] sm:$0xf] %vm3036, %v9540
        %9631 = vst.msk [vmem:[#allocation3 + $0xa8] sm:$0xf] %vm3036, %v9542
        %9632 = vst.msk [vmem:[#allocation3 + $0xac] sm:$0xf] %vm3036, %v9544
        %9633 = vst.msk [vmem:[#allocation3 + $0xb0] sm:$0xf] %vm3036, %v9546
        %9634 = vst.msk [vmem:[#allocation3 + $0xb4] sm:$0xf] %vm3036, %v9548
        %v9635 = vld [vmem:[#allocation2 + $0x2a] sm:$0xff]
        %v9636 = vld [vmem:[#allocation2 + $0x32] sm:$0xff]
        %v9637 = vld [vmem:[#allocation2 + $0x3a] sm:$0xff]
        %v9638 = vld [vmem:[#allocation2 + $0x42] sm:$0xff]
        %v9639 = vld [vmem:[#allocation2 + $0x4a] sm:$0xff]
        %v9640 = vld [vmem:[#allocation2 + $0x52] sm:$0xff]
        %v9641 = vld [vmem:[#allocation2 + $0x5a] sm:$0xff]
        %v9642 = vld [vmem:[#allocation2 + $0x62] sm:$0xff]
        %v9643 = vld [vmem:[#allocation2 + $0x6a] sm:$0xff]
        %v9644 = vld [vmem:[#allocation2 + $0x72] sm:$0xff]
        %v9645 = vld [vmem:[#allocation2 + $0x7a] sm:$0xff]
        %v9646 = vld [vmem:[#allocation2 + $0x82] sm:$0xff]
        %v9647 = vld [vmem:[#allocation2 + $0x8a] sm:$0xff]
        %v9648 = vld [vmem:[#allocation2 + $0x92] sm:$0xff]
        %v9649 = vld [vmem:[#allocation2 + $0x9a] sm:$0xff]
        %v9650 = vld [vmem:[#allocation2 + $0xa2] sm:$0xff]
        %v9651 = vld [vmem:[#allocation2 + $0xaa] sm:$0xff]
        %v9652 = vld [vmem:[#allocation2 + $0xb2] sm:$0xff]
        %v9653 = vld [vmem:[#allocation2 + $0xba] sm:$0xff]
        %v9654 = vld [vmem:[#allocation2 + $0xc2] sm:$0xff]
        %v9655 = vld [vmem:[#allocation2 + $0xca] sm:$0xff]
        %v9656 = vld [vmem:[#allocation2 + $0xd2] sm:$0xff]
        %v9657 = vld [vmem:[#allocation2 + $0xda] sm:$0xff]
        %v9658 = vld [vmem:[#allocation2 + $0xe2] sm:$0xff]
        %v9659 = vld [vmem:[#allocation2 + $0xea] sm:$0xff]
        %v9660 = vld [vmem:[#allocation2 + $0xf2] sm:$0xff]
        %v9661 = vld [vmem:[#allocation2 + $0xfa] sm:$0xff]
        %v9662 = vld [vmem:[#allocation2 + $0x102] sm:$0xff]
        %v9663 = vld [vmem:[#allocation2 + $0x10a] sm:$0xff]
        %v9664 = vld [vmem:[#allocation2 + $0x112] sm:$0xff]
        %v9665 = vld [vmem:[#allocation2 + $0x11a] sm:$0xff]
        %v9666 = vld [vmem:[#allocation2 + $0x122] sm:$0xff]
        %v9667 = vld [vmem:[#allocation2 + $0x12a] sm:$0xff]
        %v9668 = vld [vmem:[#allocation2 + $0x132] sm:$0xff]
        %v9669 = vld [vmem:[#allocation2 + $0x13a] sm:$0xff]
        %v9670 = vld [vmem:[#allocation2 + $0x142] sm:$0xff]
        %v9671 = vld [vmem:[#allocation2 + $0x14a] sm:$0xff]
        %v9672 = vld [vmem:[#allocation2 + $0x152] sm:$0xff]
        %v9673 = vld [vmem:[#allocation2 + $0x15a] sm:$0xff]
        %v9674 = vld [vmem:[#allocation2 + $0x162] sm:$0xff]
        %v9675 = vld [vmem:[#allocation2 + $0x16a] sm:$0xff]
        %v9676 = vld [vmem:[#allocation2 + $0x172] sm:$0xff]
        %v9677 = vld [vmem:[#allocation2 + $0x17a] sm:$0xff]
        %v9678 = vmax.f32 %v9635, 0.0
        %v9679 = vmax.f32 %v9636, 0.0
        %v9680 = vmax.f32 %v9637, 0.0
        %v9681 = vmax.f32 %v9638, 0.0
        %v9682 = vmax.f32 %v9639, 0.0
        %v9683 = vmax.f32 %v9640, 0.0
        %v9684 = vmax.f32 %v9641, 0.0
        %v9685 = vmax.f32 %v9642, 0.0
        %v9686 = vmax.f32 %v9643, 0.0
        %v9687 = vmax.f32 %v9644, 0.0
        %v9688 = vmax.f32 %v9645, 0.0
        %v9689 = vmax.f32 %v9646, 0.0
        %v9690 = vmax.f32 %v9647, 0.0
        %v9691 = vmax.f32 %v9648, 0.0
        %v9692 = vmax.f32 %v9649, 0.0
        %v9693 = vmax.f32 %v9650, 0.0
        %v9694 = vmax.f32 %v9651, 0.0
        %v9695 = vmax.f32 %v9652, 0.0
        %v9696 = vmax.f32 %v9653, 0.0
        %v9697 = vmax.f32 %v9654, 0.0
        %v9698 = vmax.f32 %v9655, 0.0
        %v9699 = vmax.f32 %v9656, 0.0
        %v9700 = vmax.f32 %v9657, 0.0
        %v9701 = vmax.f32 %v9658, 0.0
        %v9702 = vmax.f32 %v9659, 0.0
        %v9703 = vmax.f32 %v9660, 0.0
        %v9704 = vmax.f32 %v9661, 0.0
        %v9705 = vmax.f32 %v9662, 0.0
        %v9706 = vmax.f32 %v9663, 0.0
        %v9707 = vmax.f32 %v9664, 0.0
        %v9708 = vmax.f32 %v9665, 0.0
        %v9709 = vmax.f32 %v9666, 0.0
        %v9710 = vmax.f32 %v9667, 0.0
        %v9711 = vmax.f32 %v9668, 0.0
        %v9712 = vmax.f32 %v9669, 0.0
        %v9713 = vmax.f32 %v9670, 0.0
        %v9714 = vmax.f32 %v9671, 0.0
        %v9715 = vmax.f32 %v9672, 0.0
        %v9716 = vmax.f32 %v9673, 0.0
        %v9717 = vmax.f32 %v9674, 0.0
        %v9718 = vmax.f32 %v9675, 0.0
        %v9719 = vmax.f32 %v9676, 0.0
        %v9720 = vmax.f32 %v9677, 0.0
        %v9721 = vpack.c.bf16 %v9679, %v9678
        %v9722 = vpack.c.bf16 %v9681, %v9680
        %v9723 = vpack.c.bf16 %v9683, %v9682
        %v9724 = vpack.c.bf16 %v9685, %v9684
        %v9725 = vpack.c.bf16 %v9687, %v9686
        %v9726 = vpack.c.bf16 %v9689, %v9688
        %v9727 = vpack.c.bf16 %v9691, %v9690
        %v9728 = vpack.c.bf16 %v9693, %v9692
        %v9729 = vpack.c.bf16 %v9695, %v9694
        %v9730 = vpack.c.bf16 %v9697, %v9696
        %v9731 = vpack.c.bf16 %v9699, %v9698
        %v9732 = vpack.c.bf16 %v9701, %v9700
        %v9733 = vpack.c.bf16 %v9703, %v9702
        %v9734 = vpack.c.bf16 %v9705, %v9704
        %v9735 = vpack.c.bf16 %v9707, %v9706
        %v9736 = vpack.c.bf16 %v9709, %v9708
        %v9737 = vpack.c.bf16 %v9711, %v9710
        %v9738 = vpack.c.bf16 %v9713, %v9712
        %v9739 = vpack.c.bf16 %v9715, %v9714
        %v9740 = vpack.c.bf16 %v9717, %v9716
        %v9741 = vpack.c.bf16 %v9719, %v9718
        %v9742 = vpack.c.bf16 %v9720, %v9720
        %v9765 = vunpack.c.l.b16 %v9721
        %v9766 = vunpack.c.h.b16 %v9721
        %v9767 = vunpack.c.l.b16 %v9722
        %v9768 = vunpack.c.h.b16 %v9722
        %v9769 = vunpack.c.l.b16 %v9723
        %v9770 = vunpack.c.h.b16 %v9723
        %v9771 = vunpack.c.l.b16 %v9724
        %v9772 = vunpack.c.h.b16 %v9724
        %v9773 = vunpack.c.l.b16 %v9725
        %v9774 = vunpack.c.h.b16 %v9725
        %v9775 = vunpack.c.l.b16 %v9726
        %v9776 = vunpack.c.h.b16 %v9726
        %v9777 = vunpack.c.l.b16 %v9727
        %v9778 = vunpack.c.h.b16 %v9727
        %v9779 = vunpack.c.l.b16 %v9728
        %v9780 = vunpack.c.h.b16 %v9728
        %v9781 = vunpack.c.l.b16 %v9729
        %v9782 = vunpack.c.h.b16 %v9729
        %v9783 = vunpack.c.l.b16 %v9730
        %v9784 = vunpack.c.h.b16 %v9730
        %v9785 = vunpack.c.l.b16 %v9731
        %v9786 = vunpack.c.h.b16 %v9731
        %v9787 = vunpack.c.l.b16 %v9732
        %v9788 = vunpack.c.h.b16 %v9732
        %v9789 = vunpack.c.l.b16 %v9733
        %v9790 = vunpack.c.h.b16 %v9733
        %v9791 = vunpack.c.l.b16 %v9734
        %v9792 = vunpack.c.h.b16 %v9734
        %v9793 = vunpack.c.l.b16 %v9735
        %v9794 = vunpack.c.h.b16 %v9735
        %v9795 = vunpack.c.l.b16 %v9736
        %v9796 = vunpack.c.h.b16 %v9736
        %v9797 = vunpack.c.l.b16 %v9737
        %v9798 = vunpack.c.h.b16 %v9737
        %v9799 = vunpack.c.l.b16 %v9738
        %v9800 = vunpack.c.h.b16 %v9738
        %v9801 = vunpack.c.l.b16 %v9739
        %v9802 = vunpack.c.h.b16 %v9739
        %v9803 = vunpack.c.l.b16 %v9740
        %v9804 = vunpack.c.h.b16 %v9740
        %v9805 = vunpack.c.l.b16 %v9741
        %v9806 = vunpack.c.h.b16 %v9741
        %v9807 = vunpack.c.l.b16 %v9742
        %v9808 = vpack.c.b16 %v9765, %v9765
        %v9809 = vpack.c.b16 %v9766, %v9766
        %v9810 = vpack.c.b16 %v9767, %v9767
        %v9811 = vpack.c.b16 %v9768, %v9768
        %v9812 = vpack.c.b16 %v9769, %v9769
        %v9813 = vpack.c.b16 %v9770, %v9770
        %v9814 = vpack.c.b16 %v9771, %v9771
        %v9815 = vpack.c.b16 %v9772, %v9772
        %v9816 = vpack.c.b16 %v9773, %v9773
        %v9817 = vpack.c.b16 %v9774, %v9774
        %v9818 = vpack.c.b16 %v9775, %v9775
        %v9819 = vpack.c.b16 %v9776, %v9776
        %v9820 = vpack.c.b16 %v9777, %v9777
        %v9821 = vpack.c.b16 %v9778, %v9778
        %v9822 = vpack.c.b16 %v9779, %v9779
        %v9823 = vpack.c.b16 %v9780, %v9780
        %v9824 = vpack.c.b16 %v9781, %v9781
        %v9825 = vpack.c.b16 %v9782, %v9782
        %v9826 = vpack.c.b16 %v9783, %v9783
        %v9827 = vpack.c.b16 %v9784, %v9784
        %v9828 = vpack.c.b16 %v9785, %v9785
        %v9829 = vpack.c.b16 %v9786, %v9786
        %v9830 = vpack.c.b16 %v9787, %v9787
        %v9831 = vpack.c.b16 %v9788, %v9788
        %v9832 = vpack.c.b16 %v9789, %v9789
        %v9833 = vpack.c.b16 %v9790, %v9790
        %v9834 = vpack.c.b16 %v9791, %v9791
        %v9835 = vpack.c.b16 %v9792, %v9792
        %v9836 = vpack.c.b16 %v9793, %v9793
        %v9837 = vpack.c.b16 %v9794, %v9794
        %v9838 = vpack.c.b16 %v9795, %v9795
        %v9839 = vpack.c.b16 %v9796, %v9796
        %v9840 = vpack.c.b16 %v9797, %v9797
        %v9841 = vpack.c.b16 %v9798, %v9798
        %v9842 = vpack.c.b16 %v9799, %v9799
        %v9843 = vpack.c.b16 %v9800, %v9800
        %v9844 = vpack.c.b16 %v9801, %v9801
        %v9845 = vpack.c.b16 %v9802, %v9802
        %v9846 = vpack.c.b16 %v9803, %v9803
        %v9847 = vpack.c.b16 %v9804, %v9804
        %v9848 = vpack.c.b16 %v9805, %v9805
        %v9849 = vpack.c.b16 %v9806, %v9806
        %v9850 = vpack.c.b16 %v9807, %v9807
        %9851 = vrot.lane.b32.xlu0 %v9808, 64
        %v9852 = vpop.permute.xlu0 %9851
        %9853 = vrot.lane.b32.xlu0 %v9809, 64
        %v9854 = vpop.permute.xlu0 %9853
        %9855 = vrot.lane.b32.xlu0 %v9810, 64
        %v9856 = vpop.permute.xlu0 %9855
        %9857 = vrot.lane.b32.xlu0 %v9811, 64
        %v9858 = vpop.permute.xlu0 %9857
        %9859 = vrot.lane.b32.xlu0 %v9812, 64
        %v9860 = vpop.permute.xlu0 %9859
        %9861 = vrot.lane.b32.xlu0 %v9813, 64
        %v9862 = vpop.permute.xlu0 %9861
        %9863 = vrot.lane.b32.xlu0 %v9814, 64
        %v9864 = vpop.permute.xlu0 %9863
        %9865 = vrot.lane.b32.xlu0 %v9815, 64
        %v9866 = vpop.permute.xlu0 %9865
        %9867 = vrot.lane.b32.xlu0 %v9816, 64
        %v9868 = vpop.permute.xlu0 %9867
        %9869 = vrot.lane.b32.xlu0 %v9817, 64
        %v9870 = vpop.permute.xlu0 %9869
        %9871 = vrot.lane.b32.xlu0 %v9818, 64
        %v9872 = vpop.permute.xlu0 %9871
        %9873 = vrot.lane.b32.xlu0 %v9819, 64
        %v9874 = vpop.permute.xlu0 %9873
        %9875 = vrot.lane.b32.xlu0 %v9820, 64
        %v9876 = vpop.permute.xlu0 %9875
        %9877 = vrot.lane.b32.xlu0 %v9821, 64
        %v9878 = vpop.permute.xlu0 %9877
        %9879 = vrot.lane.b32.xlu0 %v9822, 64
        %v9880 = vpop.permute.xlu0 %9879
        %9881 = vrot.lane.b32.xlu0 %v9823, 64
        %v9882 = vpop.permute.xlu0 %9881
        %9883 = vrot.lane.b32.xlu0 %v9824, 64
        %v9884 = vpop.permute.xlu0 %9883
        %9885 = vrot.lane.b32.xlu0 %v9825, 64
        %v9886 = vpop.permute.xlu0 %9885
        %9887 = vrot.lane.b32.xlu0 %v9826, 64
        %v9888 = vpop.permute.xlu0 %9887
        %9889 = vrot.lane.b32.xlu0 %v9827, 64
        %v9890 = vpop.permute.xlu0 %9889
        %9891 = vrot.lane.b32.xlu0 %v9828, 64
        %v9892 = vpop.permute.xlu0 %9891
        %9893 = vrot.lane.b32.xlu0 %v9829, 64
        %v9894 = vpop.permute.xlu0 %9893
        %9895 = vrot.lane.b32.xlu0 %v9830, 64
        %v9896 = vpop.permute.xlu0 %9895
        %9897 = vrot.lane.b32.xlu0 %v9831, 64
        %v9898 = vpop.permute.xlu0 %9897
        %9899 = vrot.lane.b32.xlu0 %v9832, 64
        %v9900 = vpop.permute.xlu0 %9899
        %9901 = vrot.lane.b32.xlu0 %v9833, 64
        %v9902 = vpop.permute.xlu0 %9901
        %9903 = vrot.lane.b32.xlu0 %v9834, 64
        %v9904 = vpop.permute.xlu0 %9903
        %9905 = vrot.lane.b32.xlu0 %v9835, 64
        %v9906 = vpop.permute.xlu0 %9905
        %9907 = vrot.lane.b32.xlu0 %v9836, 64
        %v9908 = vpop.permute.xlu0 %9907
        %9909 = vrot.lane.b32.xlu0 %v9837, 64
        %v9910 = vpop.permute.xlu0 %9909
        %9911 = vrot.lane.b32.xlu0 %v9838, 64
        %v9912 = vpop.permute.xlu0 %9911
        %9913 = vrot.lane.b32.xlu0 %v9839, 64
        %v9914 = vpop.permute.xlu0 %9913
        %9915 = vrot.lane.b32.xlu0 %v9840, 64
        %v9916 = vpop.permute.xlu0 %9915
        %9917 = vrot.lane.b32.xlu0 %v9841, 64
        %v9918 = vpop.permute.xlu0 %9917
        %9919 = vrot.lane.b32.xlu0 %v9842, 64
        %v9920 = vpop.permute.xlu0 %9919
        %9921 = vrot.lane.b32.xlu0 %v9843, 64
        %v9922 = vpop.permute.xlu0 %9921
        %9923 = vrot.lane.b32.xlu0 %v9844, 64
        %v9924 = vpop.permute.xlu0 %9923
        %9925 = vrot.lane.b32.xlu0 %v9845, 64
        %v9926 = vpop.permute.xlu0 %9925
        %9927 = vrot.lane.b32.xlu0 %v9846, 64
        %v9928 = vpop.permute.xlu0 %9927
        %9929 = vrot.lane.b32.xlu0 %v9847, 64
        %v9930 = vpop.permute.xlu0 %9929
        %9931 = vrot.lane.b32.xlu0 %v9848, 64
        %v9932 = vpop.permute.xlu0 %9931
        %9933 = vrot.lane.b32.xlu0 %v9849, 64
        %v9934 = vpop.permute.xlu0 %9933
        %9935 = vrot.lane.b32.xlu0 %v9850, 64
        %v9936 = vpop.permute.xlu0 %9935
        %9980 = vst.msk [vmem:[#allocation3 + $0xc] sm:$0xf] %vm3425, %v9852
        %9981 = vst.msk [vmem:[#allocation3 + $0x10] sm:$0xf] %vm3425, %v9854
        %9982 = vst.msk [vmem:[#allocation3 + $0x14] sm:$0xf] %vm3425, %v9856
        %9983 = vst.msk [vmem:[#allocation3 + $0x18] sm:$0xf] %vm3425, %v9858
        %9984 = vst.msk [vmem:[#allocation3 + $0x1c] sm:$0xf] %vm3425, %v9860
        %9985 = vst.msk [vmem:[#allocation3 + $0x20] sm:$0xf] %vm3425, %v9862
        %9986 = vst.msk [vmem:[#allocation3 + $0x24] sm:$0xf] %vm3425, %v9864
        %9987 = vst.msk [vmem:[#allocation3 + $0x28] sm:$0xf] %vm3425, %v9866
        %9988 = vst.msk [vmem:[#allocation3 + $0x2c] sm:$0xf] %vm3425, %v9868
        %9989 = vst.msk [vmem:[#allocation3 + $0x30] sm:$0xf] %vm3425, %v9870
        %9990 = vst.msk [vmem:[#allocation3 + $0x34] sm:$0xf] %vm3425, %v9872
        %9991 = vst.msk [vmem:[#allocation3 + $0x38] sm:$0xf] %vm3425, %v9874
        %9992 = vst.msk [vmem:[#allocation3 + $0x3c] sm:$0xf] %vm3425, %v9876
        %9993 = vst.msk [vmem:[#allocation3 + $0x40] sm:$0xf] %vm3425, %v9878
        %9994 = vst.msk [vmem:[#allocation3 + $0x44] sm:$0xf] %vm3425, %v9880
        %9995 = vst.msk [vmem:[#allocation3 + $0x48] sm:$0xf] %vm3425, %v9882
        %9996 = vst.msk [vmem:[#allocation3 + $0x4c] sm:$0xf] %vm3425, %v9884
        %9997 = vst.msk [vmem:[#allocation3 + $0x50] sm:$0xf] %vm3425, %v9886
        %9998 = vst.msk [vmem:[#allocation3 + $0x54] sm:$0xf] %vm3425, %v9888
        %9999 = vst.msk [vmem:[#allocation3 + $0x58] sm:$0xf] %vm3425, %v9890
        %10000 = vst.msk [vmem:[#allocation3 + $0x5c] sm:$0xf] %vm3425, %v9892
        %10001 = vst.msk [vmem:[#allocation3 + $0x60] sm:$0xf] %vm3425, %v9894
        %10002 = vst.msk [vmem:[#allocation3 + $0x64] sm:$0xf] %vm3425, %v9896
        %10003 = vst.msk [vmem:[#allocation3 + $0x68] sm:$0xf] %vm3425, %v9898
        %10004 = vst.msk [vmem:[#allocation3 + $0x6c] sm:$0xf] %vm3425, %v9900
        %10005 = vst.msk [vmem:[#allocation3 + $0x70] sm:$0xf] %vm3425, %v9902
        %10006 = vst.msk [vmem:[#allocation3 + $0x74] sm:$0xf] %vm3425, %v9904
        %10007 = vst.msk [vmem:[#allocation3 + $0x78] sm:$0xf] %vm3425, %v9906
        %10008 = vst.msk [vmem:[#allocation3 + $0x7c] sm:$0xf] %vm3425, %v9908
        %10009 = vst.msk [vmem:[#allocation3 + $0x80] sm:$0xf] %vm3425, %v9910
        %10010 = vst.msk [vmem:[#allocation3 + $0x84] sm:$0xf] %vm3425, %v9912
        %10011 = vst.msk [vmem:[#allocation3 + $0x88] sm:$0xf] %vm3425, %v9914
        %10012 = vst.msk [vmem:[#allocation3 + $0x8c] sm:$0xf] %vm3425, %v9916
        %10013 = vst.msk [vmem:[#allocation3 + $0x90] sm:$0xf] %vm3425, %v9918
        %10014 = vst.msk [vmem:[#allocation3 + $0x94] sm:$0xf] %vm3425, %v9920
        %10015 = vst.msk [vmem:[#allocation3 + $0x98] sm:$0xf] %vm3425, %v9922
        %10016 = vst.msk [vmem:[#allocation3 + $0x9c] sm:$0xf] %vm3425, %v9924
        %10017 = vst.msk [vmem:[#allocation3 + $0xa0] sm:$0xf] %vm3425, %v9926
        %10018 = vst.msk [vmem:[#allocation3 + $0xa4] sm:$0xf] %vm3425, %v9928
        %10019 = vst.msk [vmem:[#allocation3 + $0xa8] sm:$0xf] %vm3425, %v9930
        %10020 = vst.msk [vmem:[#allocation3 + $0xac] sm:$0xf] %vm3425, %v9932
        %10021 = vst.msk [vmem:[#allocation3 + $0xb0] sm:$0xf] %vm3425, %v9934
        %10022 = vst.msk [vmem:[#allocation3 + $0xb4] sm:$0xf] %vm3425, %v9936
        %v10023 = vld [vmem:[#allocation3 + $0xc] sm:$0x8]
        %v10024 = vld [vmem:[#allocation3 + $0x10] sm:$0xf]
        %v10025 = vld [vmem:[#allocation3 + $0x14] sm:$0xf]
        %v10026 = vld [vmem:[#allocation3 + $0x18] sm:$0xf]
        %v10027 = vld [vmem:[#allocation3 + $0x1c] sm:$0xf]
        %v10028 = vld [vmem:[#allocation3 + $0x20] sm:$0xf]
        %v10029 = vld [vmem:[#allocation3 + $0x24] sm:$0xf]
        %v10030 = vld [vmem:[#allocation3 + $0x28] sm:$0xf]
        %v10031 = vld [vmem:[#allocation3 + $0x2c] sm:$0xf]
        %v10032 = vld [vmem:[#allocation3 + $0x30] sm:$0xf]
        %v10033 = vld [vmem:[#allocation3 + $0x34] sm:$0xf]
        %v10034 = vld [vmem:[#allocation3 + $0x38] sm:$0xf]
        %v10035 = vld [vmem:[#allocation3 + $0x3c] sm:$0xf]
        %v10036 = vld [vmem:[#allocation3 + $0x40] sm:$0xf]
        %v10037 = vld [vmem:[#allocation3 + $0x44] sm:$0xf]
        %v10038 = vld [vmem:[#allocation3 + $0x48] sm:$0xf]
        %v10039 = vld [vmem:[#allocation3 + $0x4c] sm:$0xf]
        %v10040 = vld [vmem:[#allocation3 + $0x50] sm:$0xf]
        %v10041 = vld [vmem:[#allocation3 + $0x54] sm:$0xf]
        %v10042 = vld [vmem:[#allocation3 + $0x58] sm:$0xf]
        %v10043 = vld [vmem:[#allocation3 + $0x5c] sm:$0xf]
        %v10044 = vld [vmem:[#allocation3 + $0x60] sm:$0xf]
        %v10045 = vld [vmem:[#allocation3 + $0x64] sm:$0xf]
        %v10046 = vld [vmem:[#allocation3 + $0x68] sm:$0xf]
        %v10047 = vld [vmem:[#allocation3 + $0x6c] sm:$0xf]
        %v10048 = vld [vmem:[#allocation3 + $0x70] sm:$0xf]
        %v10049 = vld [vmem:[#allocation3 + $0x74] sm:$0xf]
        %v10050 = vld [vmem:[#allocation3 + $0x78] sm:$0xf]
        %v10051 = vld [vmem:[#allocation3 + $0x7c] sm:$0xf]
        %v10052 = vld [vmem:[#allocation3 + $0x80] sm:$0xf]
        %v10053 = vld [vmem:[#allocation3 + $0x84] sm:$0xf]
        %v10054 = vld [vmem:[#allocation3 + $0x88] sm:$0xf]
        %v10055 = vld [vmem:[#allocation3 + $0x8c] sm:$0xf]
        %v10056 = vld [vmem:[#allocation3 + $0x90] sm:$0xf]
        %v10057 = vld [vmem:[#allocation3 + $0x94] sm:$0xf]
        %v10058 = vld [vmem:[#allocation3 + $0x98] sm:$0xf]
        %v10059 = vld [vmem:[#allocation3 + $0x9c] sm:$0xf]
        %v10060 = vld [vmem:[#allocation3 + $0xa0] sm:$0xf]
        %v10061 = vld [vmem:[#allocation3 + $0xa4] sm:$0xf]
        %v10062 = vld [vmem:[#allocation3 + $0xa8] sm:$0xf]
        %v10063 = vld [vmem:[#allocation3 + $0xac] sm:$0xf]
        %v10064 = vld [vmem:[#allocation3 + $0xb0] sm:$0xf]
        %v10065 = vld [vmem:[%s12] sm:$0xf]
        %v10066 = vld [vmem:[%s12 + $0x4] sm:$0xf]
        %v10067 = vld [vmem:[%s12 + $0x8] sm:$0xf]
        %v10068 = vld [vmem:[%s12 + $0xc] sm:$0xf]
        %v10069 = vld [vmem:[%s12 + $0x10] sm:$0xf]
        %v10070 = vld [vmem:[%s12 + $0x14] sm:$0xf]
        %v10071 = vld [vmem:[%s12 + $0x18] sm:$0xf]
        %v10072 = vld [vmem:[%s12 + $0x1c] sm:$0xf]
        %v10073 = vld [vmem:[%s12 + $0x20] sm:$0xf]
        %v10074 = vld [vmem:[%s12 + $0x24] sm:$0xf]
        %v10075 = vld [vmem:[%s12 + $0x28] sm:$0xf]
        %v10076 = vld [vmem:[%s12 + $0x2c] sm:$0xf]
        %s10077 = scalar_lea.vmem %s12, 48
        %v10078 = vld [vmem:[%s10077] sm:$0xf]
        %v10079 = vld [vmem:[%s10077 + $0x4] sm:$0xf]
        %v10080 = vld [vmem:[%s10077 + $0x8] sm:$0xf]
        %v10081 = vld [vmem:[%s10077 + $0xc] sm:$0xf]
        %v10082 = vld [vmem:[%s10077 + $0x10] sm:$0xf]
        %v10083 = vld [vmem:[%s10077 + $0x14] sm:$0xf]
        %v10084 = vld [vmem:[%s10077 + $0x18] sm:$0xf]
        %v10085 = vld [vmem:[%s10077 + $0x1c] sm:$0xf]
        %v10086 = vld [vmem:[%s10077 + $0x20] sm:$0xf]
        %v10087 = vld [vmem:[%s10077 + $0x24] sm:$0xf]
        %v10088 = vld [vmem:[%s10077 + $0x28] sm:$0xf]
        %v10089 = vld [vmem:[%s10077 + $0x2c] sm:$0xf]
        %v10131 = vunpack.c.l.b16 %v10024
        %v10132 = vunpack.c.l.b16 %v10025
        %v10133 = vunpack.c.l.b16 %v10026
        %v10134 = vunpack.c.l.b16 %v10027
        %v10135 = vunpack.c.l.b16 %v10028
        %v10136 = vunpack.c.l.b16 %v10029
        %v10137 = vunpack.c.l.b16 %v10030
        %v10138 = vunpack.c.l.b16 %v10031
        %v10139 = vunpack.c.l.b16 %v10032
        %v10140 = vunpack.c.l.b16 %v10033
        %v10141 = vunpack.c.l.b16 %v10034
        %v10142 = vunpack.c.l.b16 %v10035
        %v10143 = vunpack.c.l.b16 %v10036
        %v10144 = vunpack.c.l.b16 %v10037
        %v10145 = vunpack.c.l.b16 %v10038
        %v10146 = vunpack.c.l.b16 %v10039
        %v10147 = vunpack.c.l.b16 %v10040
        %v10148 = vunpack.c.l.b16 %v10041
        %v10149 = vunpack.c.l.b16 %v10042
        %v10150 = vunpack.c.l.b16 %v10043
        %v10151 = vunpack.c.l.b16 %v10044
        %v10152 = vunpack.c.l.b16 %v10045
        %v10153 = vunpack.c.l.b16 %v10046
        %v10154 = vunpack.c.l.b16 %v10047
        %v10155 = vunpack.c.l.b16 %v10048
        %v10156 = vunpack.c.l.b16 %v10049
        %v10157 = vunpack.c.l.b16 %v10050
        %v10158 = vunpack.c.l.b16 %v10051
        %v10159 = vunpack.c.l.b16 %v10052
        %v10160 = vunpack.c.l.b16 %v10053
        %v10161 = vunpack.c.l.b16 %v10054
        %v10162 = vunpack.c.l.b16 %v10055
        %v10163 = vunpack.c.l.b16 %v10056
        %v10164 = vunpack.c.l.b16 %v10057
        %v10165 = vunpack.c.l.b16 %v10058
        %v10166 = vunpack.c.l.b16 %v10059
        %v10167 = vunpack.c.l.b16 %v10060
        %v10168 = vunpack.c.l.b16 %v10061
        %v10169 = vunpack.c.l.b16 %v10062
        %v10170 = vunpack.c.l.b16 %v10063
        %v10171 = vunpack.c.l.b16 %v10064
        %v10172 = vpack.c.b16 %v10132, %v10131
        %v10173 = vpack.c.b16 %v10134, %v10133
        %v10174 = vpack.c.b16 %v10136, %v10135
        %v10175 = vpack.c.b16 %v10138, %v10137
        %v10176 = vpack.c.b16 %v10140, %v10139
        %v10177 = vpack.c.b16 %v10142, %v10141
        %v10178 = vpack.c.b16 %v10144, %v10143
        %v10179 = vpack.c.b16 %v10146, %v10145
        %v10180 = vpack.c.b16 %v10148, %v10147
        %v10181 = vpack.c.b16 %v10150, %v10149
        %v10182 = vpack.c.b16 %v10152, %v10151
        %v10183 = vpack.c.b16 %v10154, %v10153
        %v10184 = vpack.c.b16 %v10156, %v10155
        %v10185 = vpack.c.b16 %v10158, %v10157
        %v10186 = vpack.c.b16 %v10160, %v10159
        %v10187 = vpack.c.b16 %v10162, %v10161
        %v10188 = vpack.c.b16 %v10164, %v10163
        %v10189 = vpack.c.b16 %v10166, %v10165
        %v10190 = vpack.c.b16 %v10168, %v10167
        %v10191 = vpack.c.b16 %v10170, %v10169
        %v10192 = vpack.c.b16 %v10171, %v10171
        %v10205 = vunpack.c.l.b16 %v10078
        %v10206 = vunpack.c.l.b16 %v10079
        %v10207 = vunpack.c.l.b16 %v10080
        %v10208 = vunpack.c.l.b16 %v10081
        %v10209 = vunpack.c.l.b16 %v10082
        %v10210 = vunpack.c.l.b16 %v10083
        %v10211 = vunpack.c.l.b16 %v10084
        %v10212 = vunpack.c.l.b16 %v10085
        %v10213 = vunpack.c.l.b16 %v10086
        %v10214 = vunpack.c.l.b16 %v10087
        %v10215 = vunpack.c.l.b16 %v10088
        %v10216 = vunpack.c.l.b16 %v10089
        %v10217 = vpack.c.b16 %v10206, %v10205
        %v10218 = vpack.c.b16 %v10208, %v10207
        %v10219 = vpack.c.b16 %v10210, %v10209
        %v10220 = vpack.c.b16 %v10212, %v10211
        %v10221 = vpack.c.b16 %v10214, %v10213
        %v10222 = vpack.c.b16 %v10216, %v10215
        %v10230 = vsel %vm3675, %v10172, 0
        %v10233 = vsel %vm3675, %v10173, 0
        %v10236 = vsel %vm3675, %v10174, 0
        %v10239 = vsel %vm3675, %v10175, 0
        %v10242 = vsel %vm3675, %v10176, 0
        %v10245 = vsel %vm3675, %v10177, 0
        %v10248 = vsel %vm3675, %v10178, 0
        %v10251 = vsel %vm3675, %v10179, 0
        %v10254 = vsel %vm3675, %v10180, 0
        %v10257 = vsel %vm3675, %v10181, 0
        %v10260 = vsel %vm3675, %v10182, 0
        %v10263 = vsel %vm3675, %v10183, 0
        %v10266 = vsel %vm3675, %v10184, 0
        %v10269 = vsel %vm3675, %v10185, 0
        %v10272 = vsel %vm3675, %v10186, 0
        %v10275 = vsel %vm3675, %v10187, 0
        %v10278 = vsel %vm3675, %v10188, 0
        %v10281 = vsel %vm3675, %v10189, 0
        %v10284 = vsel %vm3675, %v10190, 0
        %v10287 = vsel %vm3675, %v10191, 0
        %v10290 = vsel %vm3675, %v10192, 0
        %10292 = vmatprep.subr.bf16.mxu0 0
        %10293 = vmatpush1.bf16.msra.mxu0 %v10217
        %10294 = vmatprep.subr.bf16.mxu0 0
        %10295 = vmatpush1.bf16.msra.mxu0 %v10218
        %10296 = vmatprep.subr.bf16.mxu0 0
        %10297 = vmatpush1.bf16.msra.mxu0 %v10219
        %10298 = vmatprep.subr.bf16.mxu0 0
        %10299 = vmatpush1.bf16.msra.mxu0 %v10220
        %10300 = vmatprep.subr.bf16.mxu0 0
        %10301 = vmatpush1.bf16.msra.mxu0 %v10221
        %10302 = vmatprep.subr.bf16.mxu0 0
        %10303 = vmatpush1.bf16.msra.mxu0 %v10222
        %10304 = vmatprep.subr.bf16.mxu0 0
        %10305 = vmatpush1.bf16.msra.mxu0 0
        %10306 = vmatprep.subr.bf16.mxu0 0
        %10307 = vmatpush1.bf16.msra.mxu0 0
        %10308 = vmatprep.subr.bf16.mxu0 0
        %10309 = vmatpush1.bf16.msra.mxu0 0
        %10310 = vmatprep.subr.bf16.mxu0 0
        %10311 = vmatpush1.bf16.msra.mxu0 0
        %10312 = vmatprep.subr.bf16.mxu0 0
        %10313 = vmatpush1.bf16.msra.mxu0 0
        %10314 = vmatprep.subr.bf16.mxu0 0
        %10315 = vmatpush1.bf16.msra.mxu0 0
        %10316 = vmatprep.subr.bf16.mxu0 0
        %10317 = vmatpush1.bf16.msra.mxu0 0
        %10318 = vmatprep.subr.bf16.mxu0 0
        %10319 = vmatpush1.bf16.msra.mxu0 0
        %10320 = vmatprep.subr.bf16.mxu0 0
        %10321 = vmatpush1.bf16.msra.mxu0 0
        %10322 = vmatprep.subr.bf16.mxu0 0
        %10323 = vmatpush1.bf16.msra.mxu0 0
        %10324 = vmatprep.mubr.bf16.mxu0 0
        %10325 = vmatmul.mubr.bf16.gmra.mrb[0].mxu0 %v10230
        %v10326 = vpop.f32.mrb[0].mxu0
        %v10327 = vadd.f32 0.0, %v10326
        %v10328 = vpop.f32.mrb[0].mxu0
        %v10329 = vpop.f32.mrb[0].mxu0
        %v10330 = vadd.f32 0.0, %v10329
        %v10331 = vpop.f32.mrb[0].mxu0
        %10332 = vmatprep.mubr.bf16.mxu0 0
        %10333 = vmatmul.mubr.bf16.gmra.mrb[0].mxu0 %v10233
        %v10334 = vpop.f32.mrb[0].mxu0
        %v10335 = vadd.f32 0.0, %v10334
        %v10336 = vpop.f32.mrb[0].mxu0
        %v10337 = vpop.f32.mrb[0].mxu0
        %v10338 = vadd.f32 0.0, %v10337
        %v10339 = vpop.f32.mrb[0].mxu0
        %10340 = vmatprep.mubr.bf16.mxu0 0
        %10341 = vmatmul.mubr.bf16.gmra.mrb[0].mxu0 %v10236
        %v10342 = vpop.f32.mrb[0].mxu0
        %v10343 = vadd.f32 0.0, %v10342
        %v10344 = vpop.f32.mrb[0].mxu0
        %v10345 = vpop.f32.mrb[0].mxu0
        %v10346 = vadd.f32 0.0, %v10345
        %v10347 = vpop.f32.mrb[0].mxu0
        %10348 = vmatprep.mubr.bf16.mxu0 0
        %10349 = vmatmul.mubr.bf16.gmra.mrb[0].mxu0 %v10239
        %v10350 = vpop.f32.mrb[0].mxu0
        %v10351 = vadd.f32 0.0, %v10350
        %v10352 = vpop.f32.mrb[0].mxu0
        %v10353 = vpop.f32.mrb[0].mxu0
        %v10354 = vadd.f32 0.0, %v10353
        %v10355 = vpop.f32.mrb[0].mxu0
        %10356 = vmatprep.mubr.bf16.mxu0 0
        %10357 = vmatmul.mubr.bf16.gmra.mrb[0].mxu0 %v10242
        %v10358 = vpop.f32.mrb[0].mxu0
        %v10359 = vadd.f32 0.0, %v10358
        %v10360 = vpop.f32.mrb[0].mxu0
        %v10361 = vpop.f32.mrb[0].mxu0
        %v10362 = vadd.f32 0.0, %v10361
        %v10363 = vpop.f32.mrb[0].mxu0
        %10364 = vmatprep.mubr.bf16.mxu0 0
        %10365 = vmatmul.mubr.bf16.gmra.mrb[0].mxu0 %v10245
        %v10366 = vpop.f32.mrb[0].mxu0
        %v10367 = vadd.f32 0.0, %v10366
        %v10368 = vpop.f32.mrb[0].mxu0
        %v10369 = vpop.f32.mrb[0].mxu0
        %v10370 = vadd.f32 0.0, %v10369
        %v10371 = vpop.f32.mrb[0].mxu0
        %10372 = vmatprep.mubr.bf16.mxu0 0
        %10373 = vmatmul.mubr.bf16.gmra.mrb[0].mxu0 %v10248
        %v10374 = vpop.f32.mrb[0].mxu0
        %v10375 = vadd.f32 0.0, %v10374
        %v10376 = vpop.f32.mrb[0].mxu0
        %v10377 = vpop.f32.mrb[0].mxu0
        %v10378 = vadd.f32 0.0, %v10377
        %v10379 = vpop.f32.mrb[0].mxu0
        %10380 = vmatprep.mubr.bf16.mxu0 0
        %10381 = vmatmul.mubr.bf16.gmra.mrb[0].mxu0 %v10251
        %v10382 = vpop.f32.mrb[0].mxu0
        %v10383 = vadd.f32 0.0, %v10382
        %v10384 = vpop.f32.mrb[0].mxu0
        %v10385 = vpop.f32.mrb[0].mxu0
        %v10386 = vadd.f32 0.0, %v10385
        %v10387 = vpop.f32.mrb[0].mxu0
        %10388 = vmatprep.mubr.bf16.mxu0 0
        %10389 = vmatmul.mubr.bf16.gmra.mrb[0].mxu0 %v10254
        %v10390 = vpop.f32.mrb[0].mxu0
        %v10391 = vadd.f32 0.0, %v10390
        %v10392 = vpop.f32.mrb[0].mxu0
        %v10393 = vpop.f32.mrb[0].mxu0
        %v10394 = vadd.f32 0.0, %v10393
        %v10395 = vpop.f32.mrb[0].mxu0
        %10396 = vmatprep.mubr.bf16.mxu0 0
        %10397 = vmatmul.mubr.bf16.gmra.mrb[0].mxu0 %v10257
        %v10398 = vpop.f32.mrb[0].mxu0
        %v10399 = vadd.f32 0.0, %v10398
        %v10400 = vpop.f32.mrb[0].mxu0
        %v10401 = vpop.f32.mrb[0].mxu0
        %v10402 = vadd.f32 0.0, %v10401
        %v10403 = vpop.f32.mrb[0].mxu0
        %10404 = vmatprep.mubr.bf16.mxu0 0
        %10405 = vmatmul.mubr.bf16.gmra.mrb[0].mxu0 %v10260
        %v10406 = vpop.f32.mrb[0].mxu0
        %v10407 = vadd.f32 0.0, %v10406
        %v10408 = vpop.f32.mrb[0].mxu0
        %v10409 = vpop.f32.mrb[0].mxu0
        %v10410 = vadd.f32 0.0, %v10409
        %v10411 = vpop.f32.mrb[0].mxu0
        %10412 = vmatprep.mubr.bf16.mxu0 0
        %10413 = vmatmul.mubr.bf16.gmra.mrb[0].mxu0 %v10263
        %v10414 = vpop.f32.mrb[0].mxu0
        %v10415 = vadd.f32 0.0, %v10414
        %v10416 = vpop.f32.mrb[0].mxu0
        %v10417 = vpop.f32.mrb[0].mxu0
        %v10418 = vadd.f32 0.0, %v10417
        %v10419 = vpop.f32.mrb[0].mxu0
        %10420 = vmatprep.mubr.bf16.mxu0 0
        %10421 = vmatmul.mubr.bf16.gmra.mrb[0].mxu0 %v10266
        %v10422 = vpop.f32.mrb[0].mxu0
        %v10423 = vadd.f32 0.0, %v10422
        %v10424 = vpop.f32.mrb[0].mxu0
        %v10425 = vpop.f32.mrb[0].mxu0
        %v10426 = vadd.f32 0.0, %v10425
        %v10427 = vpop.f32.mrb[0].mxu0
        %10428 = vmatprep.mubr.bf16.mxu0 0
        %10429 = vmatmul.mubr.bf16.gmra.mrb[0].mxu0 %v10269
        %v10430 = vpop.f32.mrb[0].mxu0
        %v10431 = vadd.f32 0.0, %v10430
        %v10432 = vpop.f32.mrb[0].mxu0
        %v10433 = vpop.f32.mrb[0].mxu0
        %v10434 = vadd.f32 0.0, %v10433
        %v10435 = vpop.f32.mrb[0].mxu0
        %10436 = vmatprep.mubr.bf16.mxu0 0
        %10437 = vmatmul.mubr.bf16.gmra.mrb[0].mxu0 %v10272
        %v10438 = vpop.f32.mrb[0].mxu0
        %v10439 = vadd.f32 0.0, %v10438
        %v10440 = vpop.f32.mrb[0].mxu0
        %v10441 = vpop.f32.mrb[0].mxu0
        %v10442 = vadd.f32 0.0, %v10441
        %v10443 = vpop.f32.mrb[0].mxu0
        %10444 = vmatprep.mubr.bf16.mxu0 0
        %10445 = vmatmul.mubr.bf16.gmra.mrb[0].mxu0 %v10275
        %v10446 = vpop.f32.mrb[0].mxu0
        %v10447 = vadd.f32 0.0, %v10446
        %v10448 = vpop.f32.mrb[0].mxu0
        %v10449 = vpop.f32.mrb[0].mxu0
        %v10450 = vadd.f32 0.0, %v10449
        %v10451 = vpop.f32.mrb[0].mxu0
        %10452 = vmatprep.mubr.bf16.mxu0 0
        %10453 = vmatmul.mubr.bf16.gmra.mrb[0].mxu0 %v10278
        %v10454 = vpop.f32.mrb[0].mxu0
        %v10455 = vadd.f32 0.0, %v10454
        %v10456 = vpop.f32.mrb[0].mxu0
        %v10457 = vpop.f32.mrb[0].mxu0
        %v10458 = vadd.f32 0.0, %v10457
        %v10459 = vpop.f32.mrb[0].mxu0
        %10460 = vmatprep.mubr.bf16.mxu0 0
        %10461 = vmatmul.mubr.bf16.gmra.mrb[0].mxu0 %v10281
        %v10462 = vpop.f32.mrb[0].mxu0
        %v10463 = vadd.f32 0.0, %v10462
        %v10464 = vpop.f32.mrb[0].mxu0
        %v10465 = vpop.f32.mrb[0].mxu0
        %v10466 = vadd.f32 0.0, %v10465
        %v10467 = vpop.f32.mrb[0].mxu0
        %10468 = vmatprep.mubr.bf16.mxu0 0
        %10469 = vmatmul.mubr.bf16.gmra.mrb[0].mxu0 %v10284
        %v10470 = vpop.f32.mrb[0].mxu0
        %v10471 = vadd.f32 0.0, %v10470
        %v10472 = vpop.f32.mrb[0].mxu0
        %v10473 = vpop.f32.mrb[0].mxu0
        %v10474 = vadd.f32 0.0, %v10473
        %v10475 = vpop.f32.mrb[0].mxu0
        %10476 = vmatprep.mubr.bf16.mxu0 0
        %10477 = vmatmul.mubr.bf16.gmra.mrb[0].mxu0 %v10287
        %v10478 = vpop.f32.mrb[0].mxu0
        %v10479 = vadd.f32 0.0, %v10478
        %v10480 = vpop.f32.mrb[0].mxu0
        %v10481 = vpop.f32.mrb[0].mxu0
        %v10482 = vadd.f32 0.0, %v10481
        %v10483 = vpop.f32.mrb[0].mxu0
        %10484 = vmatprep.mubr.bf16.mxu0 0
        %10485 = vmatmul.mubr.bf16.gmra.mrb[0].mxu0 %v10290
        %v10486 = vpop.f32.mrb[0].mxu0
        %v10487 = vadd.f32 0.0, %v10486
        %v10488 = vpop.f32.mrb[0].mxu0
        %v10489 = vpop.f32.mrb[0].mxu0
        %v10490 = vpop.f32.mrb[0].mxu0
        %10491 = vdwg.mxu0
        %v10493 = vunpack.c.l.b16 %v10023
        %v10494 = vpack.c.b16 %v10131, %v10493
        %v10495 = vpack.c.b16 %v10133, %v10132
        %v10496 = vpack.c.b16 %v10135, %v10134
        %v10497 = vpack.c.b16 %v10137, %v10136
        %v10498 = vpack.c.b16 %v10139, %v10138
        %v10499 = vpack.c.b16 %v10141, %v10140
        %v10500 = vpack.c.b16 %v10143, %v10142
        %v10501 = vpack.c.b16 %v10145, %v10144
        %v10502 = vpack.c.b16 %v10147, %v10146
        %v10503 = vpack.c.b16 %v10149, %v10148
        %v10504 = vpack.c.b16 %v10151, %v10150
        %v10505 = vpack.c.b16 %v10153, %v10152
        %v10506 = vpack.c.b16 %v10155, %v10154
        %v10507 = vpack.c.b16 %v10157, %v10156
        %v10508 = vpack.c.b16 %v10159, %v10158
        %v10509 = vpack.c.b16 %v10161, %v10160
        %v10510 = vpack.c.b16 %v10163, %v10162
        %v10511 = vpack.c.b16 %v10165, %v10164
        %v10512 = vpack.c.b16 %v10167, %v10166
        %v10513 = vpack.c.b16 %v10169, %v10168
        %v10514 = vpack.c.b16 %v10171, %v10170
        %v10516 = vshrl.u32 %v10494, 16
        %v10518 = vrot.slane %v10516, 3
        %v10519 = vshll.u32 %v10494, 16
        %v10521 = vrot.slane %v10519, 4
        %v10522 = vor.u32 %v10518, %v10521
        %v10524 = vshrl.u32 %v10495, 16
        %v10526 = vrot.slane %v10524, 3
        %v10527 = vshll.u32 %v10495, 16
        %v10529 = vrot.slane %v10527, 4
        %v10530 = vor.u32 %v10526, %v10529
        %v10531 = vsel %vm963, %v10522, %v10530
        %v10533 = vshrl.u32 %v10496, 16
        %v10535 = vrot.slane %v10533, 3
        %v10536 = vshll.u32 %v10496, 16
        %v10538 = vrot.slane %v10536, 4
        %v10539 = vor.u32 %v10535, %v10538
        %v10540 = vsel %vm963, %v10530, %v10539
        %v10542 = vshrl.u32 %v10497, 16
        %v10544 = vrot.slane %v10542, 3
        %v10545 = vshll.u32 %v10497, 16
        %v10547 = vrot.slane %v10545, 4
        %v10548 = vor.u32 %v10544, %v10547
        %v10549 = vsel %vm963, %v10539, %v10548
        %v10551 = vshrl.u32 %v10498, 16
        %v10553 = vrot.slane %v10551, 3
        %v10554 = vshll.u32 %v10498, 16
        %v10556 = vrot.slane %v10554, 4
        %v10557 = vor.u32 %v10553, %v10556
        %v10558 = vsel %vm963, %v10548, %v10557
        %v10560 = vshrl.u32 %v10499, 16
        %v10562 = vrot.slane %v10560, 3
        %v10563 = vshll.u32 %v10499, 16
        %v10565 = vrot.slane %v10563, 4
        %v10566 = vor.u32 %v10562, %v10565
        %v10567 = vsel %vm963, %v10557, %v10566
        %v10569 = vshrl.u32 %v10500, 16
        %v10571 = vrot.slane %v10569, 3
        %v10572 = vshll.u32 %v10500, 16
        %v10574 = vrot.slane %v10572, 4
        %v10575 = vor.u32 %v10571, %v10574
        %v10576 = vsel %vm963, %v10566, %v10575
        %v10578 = vshrl.u32 %v10501, 16
        %v10580 = vrot.slane %v10578, 3
        %v10581 = vshll.u32 %v10501, 16
        %v10583 = vrot.slane %v10581, 4
        %v10584 = vor.u32 %v10580, %v10583
        %v10585 = vsel %vm963, %v10575, %v10584
        %v10587 = vshrl.u32 %v10502, 16
        %v10589 = vrot.slane %v10587, 3
        %v10590 = vshll.u32 %v10502, 16
        %v10592 = vrot.slane %v10590, 4
        %v10593 = vor.u32 %v10589, %v10592
        %v10594 = vsel %vm963, %v10584, %v10593
        %v10596 = vshrl.u32 %v10503, 16
        %v10598 = vrot.slane %v10596, 3
        %v10599 = vshll.u32 %v10503, 16
        %v10601 = vrot.slane %v10599, 4
        %v10602 = vor.u32 %v10598, %v10601
        %v10603 = vsel %vm963, %v10593, %v10602
        %v10605 = vshrl.u32 %v10504, 16
        %v10607 = vrot.slane %v10605, 3
        %v10608 = vshll.u32 %v10504, 16
        %v10610 = vrot.slane %v10608, 4
        %v10611 = vor.u32 %v10607, %v10610
        %v10612 = vsel %vm963, %v10602, %v10611
        %v10614 = vshrl.u32 %v10505, 16
        %v10616 = vrot.slane %v10614, 3
        %v10617 = vshll.u32 %v10505, 16
        %v10619 = vrot.slane %v10617, 4
        %v10620 = vor.u32 %v10616, %v10619
        %v10621 = vsel %vm963, %v10611, %v10620
        %v10623 = vshrl.u32 %v10506, 16
        %v10625 = vrot.slane %v10623, 3
        %v10626 = vshll.u32 %v10506, 16
        %v10628 = vrot.slane %v10626, 4
        %v10629 = vor.u32 %v10625, %v10628
        %v10630 = vsel %vm963, %v10620, %v10629
        %v10632 = vshrl.u32 %v10507, 16
        %v10634 = vrot.slane %v10632, 3
        %v10635 = vshll.u32 %v10507, 16
        %v10637 = vrot.slane %v10635, 4
        %v10638 = vor.u32 %v10634, %v10637
        %v10639 = vsel %vm963, %v10629, %v10638
        %v10641 = vshrl.u32 %v10508, 16
        %v10643 = vrot.slane %v10641, 3
        %v10644 = vshll.u32 %v10508, 16
        %v10646 = vrot.slane %v10644, 4
        %v10647 = vor.u32 %v10643, %v10646
        %v10648 = vsel %vm963, %v10638, %v10647
        %v10650 = vshrl.u32 %v10509, 16
        %v10652 = vrot.slane %v10650, 3
        %v10653 = vshll.u32 %v10509, 16
        %v10655 = vrot.slane %v10653, 4
        %v10656 = vor.u32 %v10652, %v10655
        %v10657 = vsel %vm963, %v10647, %v10656
        %v10659 = vshrl.u32 %v10510, 16
        %v10661 = vrot.slane %v10659, 3
        %v10662 = vshll.u32 %v10510, 16
        %v10664 = vrot.slane %v10662, 4
        %v10665 = vor.u32 %v10661, %v10664
        %v10666 = vsel %vm963, %v10656, %v10665
        %v10668 = vshrl.u32 %v10511, 16
        %v10670 = vrot.slane %v10668, 3
        %v10671 = vshll.u32 %v10511, 16
        %v10673 = vrot.slane %v10671, 4
        %v10674 = vor.u32 %v10670, %v10673
        %v10675 = vsel %vm963, %v10665, %v10674
        %v10677 = vshrl.u32 %v10512, 16
        %v10679 = vrot.slane %v10677, 3
        %v10680 = vshll.u32 %v10512, 16
        %v10682 = vrot.slane %v10680, 4
        %v10683 = vor.u32 %v10679, %v10682
        %v10684 = vsel %vm963, %v10674, %v10683
        %v10686 = vshrl.u32 %v10513, 16
        %v10688 = vrot.slane %v10686, 3
        %v10689 = vshll.u32 %v10513, 16
        %v10691 = vrot.slane %v10689, 4
        %v10692 = vor.u32 %v10688, %v10691
        %v10693 = vsel %vm963, %v10683, %v10692
        %v10695 = vshrl.u32 %v10514, 16
        %v10697 = vrot.slane %v10695, 3
        %v10698 = vshll.u32 %v10514, 16
        %v10700 = vrot.slane %v10698, 4
        %v10701 = vor.u32 %v10697, %v10700
        %v10702 = vsel %vm963, %v10692, %v10701
        %v10715 = vunpack.c.l.b16 %v10065
        %v10716 = vunpack.c.l.b16 %v10066
        %v10717 = vunpack.c.l.b16 %v10067
        %v10718 = vunpack.c.l.b16 %v10068
        %v10719 = vunpack.c.l.b16 %v10069
        %v10720 = vunpack.c.l.b16 %v10070
        %v10721 = vunpack.c.l.b16 %v10071
        %v10722 = vunpack.c.l.b16 %v10072
        %v10723 = vunpack.c.l.b16 %v10073
        %v10724 = vunpack.c.l.b16 %v10074
        %v10725 = vunpack.c.l.b16 %v10075
        %v10726 = vunpack.c.l.b16 %v10076
        %v10727 = vpack.c.b16 %v10716, %v10715
        %v10728 = vpack.c.b16 %v10718, %v10717
        %v10729 = vpack.c.b16 %v10720, %v10719
        %v10730 = vpack.c.b16 %v10722, %v10721
        %v10731 = vpack.c.b16 %v10724, %v10723
        %v10732 = vpack.c.b16 %v10726, %v10725
        %v10740 = vsel %vm3675, %v10531, 0
        %v10743 = vsel %vm3675, %v10540, 0
        %v10746 = vsel %vm3675, %v10549, 0
        %v10749 = vsel %vm3675, %v10558, 0
        %v10752 = vsel %vm3675, %v10567, 0
        %v10755 = vsel %vm3675, %v10576, 0
        %v10758 = vsel %vm3675, %v10585, 0
        %v10761 = vsel %vm3675, %v10594, 0
        %v10764 = vsel %vm3675, %v10603, 0
        %v10767 = vsel %vm3675, %v10612, 0
        %v10770 = vsel %vm3675, %v10621, 0
        %v10773 = vsel %vm3675, %v10630, 0
        %v10776 = vsel %vm3675, %v10639, 0
        %v10779 = vsel %vm3675, %v10648, 0
        %v10782 = vsel %vm3675, %v10657, 0
        %v10785 = vsel %vm3675, %v10666, 0
        %v10788 = vsel %vm3675, %v10675, 0
        %v10791 = vsel %vm3675, %v10684, 0
        %v10794 = vsel %vm3675, %v10693, 0
        %v10797 = vsel %vm3675, %v10702, 0
        %v10800 = vsel %vm3675, %v10701, 0
        %10802 = vmatprep.subr.bf16.mxu0 0
        %10803 = vmatpush1.bf16.msra.mxu0 %v10727
        %10804 = vmatprep.subr.bf16.mxu0 0
        %10805 = vmatpush1.bf16.msra.mxu0 %v10728
        %10806 = vmatprep.subr.bf16.mxu0 0
        %10807 = vmatpush1.bf16.msra.mxu0 %v10729
        %10808 = vmatprep.subr.bf16.mxu0 0
        %10809 = vmatpush1.bf16.msra.mxu0 %v10730
        %10810 = vmatprep.subr.bf16.mxu0 0
        %10811 = vmatpush1.bf16.msra.mxu0 %v10731
        %10812 = vmatprep.subr.bf16.mxu0 0
        %10813 = vmatpush1.bf16.msra.mxu0 %v10732
        %10814 = vmatprep.subr.bf16.mxu0 0
        %10815 = vmatpush1.bf16.msra.mxu0 0
        %10816 = vmatprep.subr.bf16.mxu0 0
        %10817 = vmatpush1.bf16.msra.mxu0 0
        %10818 = vmatprep.subr.bf16.mxu0 0
        %10819 = vmatpush1.bf16.msra.mxu0 0
        %10820 = vmatprep.subr.bf16.mxu0 0
        %10821 = vmatpush1.bf16.msra.mxu0 0
        %10822 = vmatprep.subr.bf16.mxu0 0
        %10823 = vmatpush1.bf16.msra.mxu0 0
        %10824 = vmatprep.subr.bf16.mxu0 0
        %10825 = vmatpush1.bf16.msra.mxu0 0
        %10826 = vmatprep.subr.bf16.mxu0 0
        %10827 = vmatpush1.bf16.msra.mxu0 0
        %10828 = vmatprep.subr.bf16.mxu0 0
        %10829 = vmatpush1.bf16.msra.mxu0 0
        %10830 = vmatprep.subr.bf16.mxu0 0
        %10831 = vmatpush1.bf16.msra.mxu0 0
        %10832 = vmatprep.subr.bf16.mxu0 0
        %10833 = vmatpush1.bf16.msra.mxu0 0
        %10834 = vmatprep.mubr.bf16.mxu0 0
        %10835 = vmatmul.mubr.bf16.gmra.mrb[0].mxu0 %v10740
        %v10836 = vpop.f32.mrb[0].mxu0
        %v10837 = vadd.f32 %v10327, %v10836
        %v10838 = vpop.f32.mrb[0].mxu0
        %v10839 = vpop.f32.mrb[0].mxu0
        %v10840 = vadd.f32 %v10330, %v10839
        %v10841 = vpop.f32.mrb[0].mxu0
        %10842 = vmatprep.mubr.bf16.mxu0 0
        %10843 = vmatmul.mubr.bf16.gmra.mrb[0].mxu0 %v10743
        %v10844 = vpop.f32.mrb[0].mxu0
        %v10845 = vadd.f32 %v10335, %v10844
        %v10846 = vpop.f32.mrb[0].mxu0
        %v10847 = vpop.f32.mrb[0].mxu0
        %v10848 = vadd.f32 %v10338, %v10847
        %v10849 = vpop.f32.mrb[0].mxu0
        %10850 = vmatprep.mubr.bf16.mxu0 0
        %10851 = vmatmul.mubr.bf16.gmra.mrb[0].mxu0 %v10746
        %v10852 = vpop.f32.mrb[0].mxu0
        %v10853 = vadd.f32 %v10343, %v10852
        %v10854 = vpop.f32.mrb[0].mxu0
        %v10855 = vpop.f32.mrb[0].mxu0
        %v10856 = vadd.f32 %v10346, %v10855
        %v10857 = vpop.f32.mrb[0].mxu0
        %10858 = vmatprep.mubr.bf16.mxu0 0
        %10859 = vmatmul.mubr.bf16.gmra.mrb[0].mxu0 %v10749
        %v10860 = vpop.f32.mrb[0].mxu0
        %v10861 = vadd.f32 %v10351, %v10860
        %v10862 = vpop.f32.mrb[0].mxu0
        %v10863 = vpop.f32.mrb[0].mxu0
        %v10864 = vadd.f32 %v10354, %v10863
        %v10865 = vpop.f32.mrb[0].mxu0
        %10866 = vmatprep.mubr.bf16.mxu0 0
        %10867 = vmatmul.mubr.bf16.gmra.mrb[0].mxu0 %v10752
        %v10868 = vpop.f32.mrb[0].mxu0
        %v10869 = vadd.f32 %v10359, %v10868
        %v10870 = vpop.f32.mrb[0].mxu0
        %v10871 = vpop.f32.mrb[0].mxu0
        %v10872 = vadd.f32 %v10362, %v10871
        %v10873 = vpop.f32.mrb[0].mxu0
        %10874 = vmatprep.mubr.bf16.mxu0 0
        %10875 = vmatmul.mubr.bf16.gmra.mrb[0].mxu0 %v10755
        %v10876 = vpop.f32.mrb[0].mxu0
        %v10877 = vadd.f32 %v10367, %v10876
        %v10878 = vpop.f32.mrb[0].mxu0
        %v10879 = vpop.f32.mrb[0].mxu0
        %v10880 = vadd.f32 %v10370, %v10879
        %v10881 = vpop.f32.mrb[0].mxu0
        %10882 = vmatprep.mubr.bf16.mxu0 0
        %10883 = vmatmul.mubr.bf16.gmra.mrb[0].mxu0 %v10758
        %v10884 = vpop.f32.mrb[0].mxu0
        %v10885 = vadd.f32 %v10375, %v10884
        %v10886 = vpop.f32.mrb[0].mxu0
        %v10887 = vpop.f32.mrb[0].mxu0
        %v10888 = vadd.f32 %v10378, %v10887
        %v10889 = vpop.f32.mrb[0].mxu0
        %10890 = vmatprep.mubr.bf16.mxu0 0
        %10891 = vmatmul.mubr.bf16.gmra.mrb[0].mxu0 %v10761
        %v10892 = vpop.f32.mrb[0].mxu0
        %v10893 = vadd.f32 %v10383, %v10892
        %v10894 = vpop.f32.mrb[0].mxu0
        %v10895 = vpop.f32.mrb[0].mxu0
        %v10896 = vadd.f32 %v10386, %v10895
        %v10897 = vpop.f32.mrb[0].mxu0
        %10898 = vmatprep.mubr.bf16.mxu0 0
        %10899 = vmatmul.mubr.bf16.gmra.mrb[0].mxu0 %v10764
        %v10900 = vpop.f32.mrb[0].mxu0
        %v10901 = vadd.f32 %v10391, %v10900
        %v10902 = vpop.f32.mrb[0].mxu0
        %v10903 = vpop.f32.mrb[0].mxu0
        %v10904 = vadd.f32 %v10394, %v10903
        %v10905 = vpop.f32.mrb[0].mxu0
        %10906 = vmatprep.mubr.bf16.mxu0 0
        %10907 = vmatmul.mubr.bf16.gmra.mrb[0].mxu0 %v10767
        %v10908 = vpop.f32.mrb[0].mxu0
        %v10909 = vadd.f32 %v10399, %v10908
        %v10910 = vpop.f32.mrb[0].mxu0
        %v10911 = vpop.f32.mrb[0].mxu0
        %v10912 = vadd.f32 %v10402, %v10911
        %v10913 = vpop.f32.mrb[0].mxu0
        %10914 = vmatprep.mubr.bf16.mxu0 0
        %10915 = vmatmul.mubr.bf16.gmra.mrb[0].mxu0 %v10770
        %v10916 = vpop.f32.mrb[0].mxu0
        %v10917 = vadd.f32 %v10407, %v10916
        %v10918 = vpop.f32.mrb[0].mxu0
        %v10919 = vpop.f32.mrb[0].mxu0
        %v10920 = vadd.f32 %v10410, %v10919
        %v10921 = vpop.f32.mrb[0].mxu0
        %10922 = vmatprep.mubr.bf16.mxu0 0
        %10923 = vmatmul.mubr.bf16.gmra.mrb[0].mxu0 %v10773
        %v10924 = vpop.f32.mrb[0].mxu0
        %v10925 = vadd.f32 %v10415, %v10924
        %v10926 = vpop.f32.mrb[0].mxu0
        %v10927 = vpop.f32.mrb[0].mxu0
        %v10928 = vadd.f32 %v10418, %v10927
        %v10929 = vpop.f32.mrb[0].mxu0
        %10930 = vmatprep.mubr.bf16.mxu0 0
        %10931 = vmatmul.mubr.bf16.gmra.mrb[0].mxu0 %v10776
        %v10932 = vpop.f32.mrb[0].mxu0
        %v10933 = vadd.f32 %v10423, %v10932
        %v10934 = vpop.f32.mrb[0].mxu0
        %v10935 = vpop.f32.mrb[0].mxu0
        %v10936 = vadd.f32 %v10426, %v10935
        %v10937 = vpop.f32.mrb[0].mxu0
        %10938 = vmatprep.mubr.bf16.mxu0 0
        %10939 = vmatmul.mubr.bf16.gmra.mrb[0].mxu0 %v10779
        %v10940 = vpop.f32.mrb[0].mxu0
        %v10941 = vadd.f32 %v10431, %v10940
        %v10942 = vpop.f32.mrb[0].mxu0
        %v10943 = vpop.f32.mrb[0].mxu0
        %v10944 = vadd.f32 %v10434, %v10943
        %v10945 = vpop.f32.mrb[0].mxu0
        %10946 = vmatprep.mubr.bf16.mxu0 0
        %10947 = vmatmul.mubr.bf16.gmra.mrb[0].mxu0 %v10782
        %v10948 = vpop.f32.mrb[0].mxu0
        %v10949 = vadd.f32 %v10439, %v10948
        %v10950 = vpop.f32.mrb[0].mxu0
        %v10951 = vpop.f32.mrb[0].mxu0
        %v10952 = vadd.f32 %v10442, %v10951
        %v10953 = vpop.f32.mrb[0].mxu0
        %10954 = vmatprep.mubr.bf16.mxu0 0
        %10955 = vmatmul.mubr.bf16.gmra.mrb[0].mxu0 %v10785
        %v10956 = vpop.f32.mrb[0].mxu0
        %v10957 = vadd.f32 %v10447, %v10956
        %v10958 = vpop.f32.mrb[0].mxu0
        %v10959 = vpop.f32.mrb[0].mxu0
        %v10960 = vadd.f32 %v10450, %v10959
        %v10961 = vpop.f32.mrb[0].mxu0
        %10962 = vmatprep.mubr.bf16.mxu0 0
        %10963 = vmatmul.mubr.bf16.gmra.mrb[0].mxu0 %v10788
        %v10964 = vpop.f32.mrb[0].mxu0
        %v10965 = vadd.f32 %v10455, %v10964
        %v10966 = vpop.f32.mrb[0].mxu0
        %v10967 = vpop.f32.mrb[0].mxu0
        %v10968 = vadd.f32 %v10458, %v10967
        %v10969 = vpop.f32.mrb[0].mxu0
        %10970 = vmatprep.mubr.bf16.mxu0 0
        %10971 = vmatmul.mubr.bf16.gmra.mrb[0].mxu0 %v10791
        %v10972 = vpop.f32.mrb[0].mxu0
        %v10973 = vadd.f32 %v10463, %v10972
        %v10974 = vpop.f32.mrb[0].mxu0
        %v10975 = vpop.f32.mrb[0].mxu0
        %v10976 = vadd.f32 %v10466, %v10975
        %v10977 = vpop.f32.mrb[0].mxu0
        %10978 = vmatprep.mubr.bf16.mxu0 0
        %10979 = vmatmul.mubr.bf16.gmra.mrb[0].mxu0 %v10794
        %v10980 = vpop.f32.mrb[0].mxu0
        %v10981 = vadd.f32 %v10471, %v10980
        %v10982 = vpop.f32.mrb[0].mxu0
        %v10983 = vpop.f32.mrb[0].mxu0
        %v10984 = vadd.f32 %v10474, %v10983
        %v10985 = vpop.f32.mrb[0].mxu0
        %10986 = vmatprep.mubr.bf16.mxu0 0
        %10987 = vmatmul.mubr.bf16.gmra.mrb[0].mxu0 %v10797
        %v10988 = vpop.f32.mrb[0].mxu0
        %v10989 = vadd.f32 %v10479, %v10988
        %v10990 = vpop.f32.mrb[0].mxu0
        %v10991 = vpop.f32.mrb[0].mxu0
        %v10992 = vadd.f32 %v10482, %v10991
        %v10993 = vpop.f32.mrb[0].mxu0
        %10994 = vmatprep.mubr.bf16.mxu0 0
        %10995 = vmatmul.mubr.bf16.gmra.mrb[0].mxu0 %v10800
        %v10996 = vpop.f32.mrb[0].mxu0
        %v10997 = vadd.f32 %v10487, %v10996
        %v10998 = vpop.f32.mrb[0].mxu0
        %v10999 = vpop.f32.mrb[0].mxu0
        %v11000 = vpop.f32.mrb[0].mxu0
        %11001 = vdwg.mxu0
        %v11002 = vld [vmem:[#allocation3 + $0x10] sm:$0xf]
        %v11003 = vld [vmem:[#allocation3 + $0x14] sm:$0xf]
        %v11004 = vld [vmem:[#allocation3 + $0x18] sm:$0xf]
        %v11005 = vld [vmem:[#allocation3 + $0x1c] sm:$0xf]
        %v11006 = vld [vmem:[#allocation3 + $0x20] sm:$0xf]
        %v11007 = vld [vmem:[#allocation3 + $0x24] sm:$0xf]
        %v11008 = vld [vmem:[#allocation3 + $0x28] sm:$0xf]
        %v11009 = vld [vmem:[#allocation3 + $0x2c] sm:$0xf]
        %v11010 = vld [vmem:[#allocation3 + $0x30] sm:$0xf]
        %v11011 = vld [vmem:[#allocation3 + $0x34] sm:$0xf]
        %v11012 = vld [vmem:[#allocation3 + $0x38] sm:$0xf]
        %v11013 = vld [vmem:[#allocation3 + $0x3c] sm:$0xf]
        %v11014 = vld [vmem:[#allocation3 + $0x40] sm:$0xf]
        %v11015 = vld [vmem:[#allocation3 + $0x44] sm:$0xf]
        %v11016 = vld [vmem:[#allocation3 + $0x48] sm:$0xf]
        %v11017 = vld [vmem:[#allocation3 + $0x4c] sm:$0xf]
        %v11018 = vld [vmem:[#allocation3 + $0x50] sm:$0xf]
        %v11019 = vld [vmem:[#allocation3 + $0x54] sm:$0xf]
        %v11020 = vld [vmem:[#allocation3 + $0x58] sm:$0xf]
        %v11021 = vld [vmem:[#allocation3 + $0x5c] sm:$0xf]
        %v11022 = vld [vmem:[#allocation3 + $0x60] sm:$0xf]
        %v11023 = vld [vmem:[#allocation3 + $0x64] sm:$0xf]
        %v11024 = vld [vmem:[#allocation3 + $0x68] sm:$0xf]
        %v11025 = vld [vmem:[#allocation3 + $0x6c] sm:$0xf]
        %v11026 = vld [vmem:[#allocation3 + $0x70] sm:$0xf]
        %v11027 = vld [vmem:[#allocation3 + $0x74] sm:$0xf]
        %v11028 = vld [vmem:[#allocation3 + $0x78] sm:$0xf]
        %v11029 = vld [vmem:[#allocation3 + $0x7c] sm:$0xf]
        %v11030 = vld [vmem:[#allocation3 + $0x80] sm:$0xf]
        %v11031 = vld [vmem:[#allocation3 + $0x84] sm:$0xf]
        %v11032 = vld [vmem:[#allocation3 + $0x88] sm:$0xf]
        %v11033 = vld [vmem:[#allocation3 + $0x8c] sm:$0xf]
        %v11034 = vld [vmem:[#allocation3 + $0x90] sm:$0xf]
        %v11035 = vld [vmem:[#allocation3 + $0x94] sm:$0xf]
        %v11036 = vld [vmem:[#allocation3 + $0x98] sm:$0xf]
        %v11037 = vld [vmem:[#allocation3 + $0x9c] sm:$0xf]
        %v11038 = vld [vmem:[#allocation3 + $0xa0] sm:$0xf]
        %v11039 = vld [vmem:[#allocation3 + $0xa4] sm:$0xf]
        %v11040 = vld [vmem:[#allocation3 + $0xa8] sm:$0xf]
        %v11041 = vld [vmem:[#allocation3 + $0xac] sm:$0xf]
        %v11042 = vld [vmem:[#allocation3 + $0xb0] sm:$0xf]
        %v11043 = vld [vmem:[#allocation3 + $0xb4] sm:$0x1]
        %s11044 = scalar_lea.vmem %s12, 96
        %v11045 = vld [vmem:[%s11044] sm:$0xf]
        %v11046 = vld [vmem:[%s11044 + $0x4] sm:$0xf]
        %v11047 = vld [vmem:[%s11044 + $0x8] sm:$0xf]
        %v11048 = vld [vmem:[%s11044 + $0xc] sm:$0xf]
        %v11049 = vld [vmem:[%s11044 + $0x10] sm:$0xf]
        %v11050 = vld [vmem:[%s11044 + $0x14] sm:$0xf]
        %v11051 = vld [vmem:[%s11044 + $0x18] sm:$0xf]
        %v11052 = vld [vmem:[%s11044 + $0x1c] sm:$0xf]
        %v11053 = vld [vmem:[%s11044 + $0x20] sm:$0xf]
        %v11054 = vld [vmem:[%s11044 + $0x24] sm:$0xf]
        %v11055 = vld [vmem:[%s11044 + $0x28] sm:$0xf]
        %v11056 = vld [vmem:[%s11044 + $0x2c] sm:$0xf]
        %v11099 = vunpack.c.l.b16 %v11002
        %v11100 = vunpack.c.l.b16 %v11003
        %v11101 = vunpack.c.l.b16 %v11004
        %v11102 = vunpack.c.l.b16 %v11005
        %v11103 = vunpack.c.l.b16 %v11006
        %v11104 = vunpack.c.l.b16 %v11007
        %v11105 = vunpack.c.l.b16 %v11008
        %v11106 = vunpack.c.l.b16 %v11009
        %v11107 = vunpack.c.l.b16 %v11010
        %v11108 = vunpack.c.l.b16 %v11011
        %v11109 = vunpack.c.l.b16 %v11012
        %v11110 = vunpack.c.l.b16 %v11013
        %v11111 = vunpack.c.l.b16 %v11014
        %v11112 = vunpack.c.l.b16 %v11015
        %v11113 = vunpack.c.l.b16 %v11016
        %v11114 = vunpack.c.l.b16 %v11017
        %v11115 = vunpack.c.l.b16 %v11018
        %v11116 = vunpack.c.l.b16 %v11019
        %v11117 = vunpack.c.l.b16 %v11020
        %v11118 = vunpack.c.l.b16 %v11021
        %v11119 = vunpack.c.l.b16 %v11022
        %v11120 = vunpack.c.l.b16 %v11023
        %v11121 = vunpack.c.l.b16 %v11024
        %v11122 = vunpack.c.l.b16 %v11025
        %v11123 = vunpack.c.l.b16 %v11026
        %v11124 = vunpack.c.l.b16 %v11027
        %v11125 = vunpack.c.l.b16 %v11028
        %v11126 = vunpack.c.l.b16 %v11029
        %v11127 = vunpack.c.l.b16 %v11030
        %v11128 = vunpack.c.l.b16 %v11031
        %v11129 = vunpack.c.l.b16 %v11032
        %v11130 = vunpack.c.l.b16 %v11033
        %v11131 = vunpack.c.l.b16 %v11034
        %v11132 = vunpack.c.l.b16 %v11035
        %v11133 = vunpack.c.l.b16 %v11036
        %v11134 = vunpack.c.l.b16 %v11037
        %v11135 = vunpack.c.l.b16 %v11038
        %v11136 = vunpack.c.l.b16 %v11039
        %v11137 = vunpack.c.l.b16 %v11040
        %v11138 = vunpack.c.l.b16 %v11041
        %v11139 = vunpack.c.l.b16 %v11042
        %v11140 = vunpack.c.l.b16 %v11043
        %v11141 = vpack.c.b16 %v11100, %v11099
        %v11142 = vpack.c.b16 %v11102, %v11101
        %v11143 = vpack.c.b16 %v11104, %v11103
        %v11144 = vpack.c.b16 %v11106, %v11105
        %v11145 = vpack.c.b16 %v11108, %v11107
        %v11146 = vpack.c.b16 %v11110, %v11109
        %v11147 = vpack.c.b16 %v11112, %v11111
        %v11148 = vpack.c.b16 %v11114, %v11113
        %v11149 = vpack.c.b16 %v11116, %v11115
        %v11150 = vpack.c.b16 %v11118, %v11117
        %v11151 = vpack.c.b16 %v11120, %v11119
        %v11152 = vpack.c.b16 %v11122, %v11121
        %v11153 = vpack.c.b16 %v11124, %v11123
        %v11154 = vpack.c.b16 %v11126, %v11125
        %v11155 = vpack.c.b16 %v11128, %v11127
        %v11156 = vpack.c.b16 %v11130, %v11129
        %v11157 = vpack.c.b16 %v11132, %v11131
        %v11158 = vpack.c.b16 %v11134, %v11133
        %v11159 = vpack.c.b16 %v11136, %v11135
        %v11160 = vpack.c.b16 %v11138, %v11137
        %v11161 = vpack.c.b16 %v11140, %v11139
        %v11163 = vshrl.u32 %v11141, 16
        %v11165 = vshll.u32 %v11141, 16
        %v11167 = vrot.slane %v11165, 1
        %v11168 = vor.u32 %v11163, %v11167
        %v11170 = vshll.u32 %v11142, 16
        %v11172 = vrot.slane %v11170, 1
        %v11173 = vsel %vm1573, %v11168, %v11172
        %v11174 = vshrl.u32 %v11142, 16
        %v11176 = vor.u32 %v11174, %v11172
        %v11178 = vshll.u32 %v11143, 16
        %v11180 = vrot.slane %v11178, 1
        %v11181 = vsel %vm1573, %v11176, %v11180
        %v11182 = vshrl.u32 %v11143, 16
        %v11184 = vor.u32 %v11182, %v11180
        %v11186 = vshll.u32 %v11144, 16
        %v11188 = vrot.slane %v11186, 1
        %v11189 = vsel %vm1573, %v11184, %v11188
        %v11190 = vshrl.u32 %v11144, 16
        %v11192 = vor.u32 %v11190, %v11188
        %v11194 = vshll.u32 %v11145, 16
        %v11196 = vrot.slane %v11194, 1
        %v11197 = vsel %vm1573, %v11192, %v11196
        %v11198 = vshrl.u32 %v11145, 16
        %v11200 = vor.u32 %v11198, %v11196
        %v11202 = vshll.u32 %v11146, 16
        %v11204 = vrot.slane %v11202, 1
        %v11205 = vsel %vm1573, %v11200, %v11204
        %v11206 = vshrl.u32 %v11146, 16
        %v11208 = vor.u32 %v11206, %v11204
        %v11210 = vshll.u32 %v11147, 16
        %v11212 = vrot.slane %v11210, 1
        %v11213 = vsel %vm1573, %v11208, %v11212
        %v11214 = vshrl.u32 %v11147, 16
        %v11216 = vor.u32 %v11214, %v11212
        %v11218 = vshll.u32 %v11148, 16
        %v11220 = vrot.slane %v11218, 1
        %v11221 = vsel %vm1573, %v11216, %v11220
        %v11222 = vshrl.u32 %v11148, 16
        %v11224 = vor.u32 %v11222, %v11220
        %v11226 = vshll.u32 %v11149, 16
        %v11228 = vrot.slane %v11226, 1
        %v11229 = vsel %vm1573, %v11224, %v11228
        %v11230 = vshrl.u32 %v11149, 16
        %v11232 = vor.u32 %v11230, %v11228
        %v11234 = vshll.u32 %v11150, 16
        %v11236 = vrot.slane %v11234, 1
        %v11237 = vsel %vm1573, %v11232, %v11236
        %v11238 = vshrl.u32 %v11150, 16
        %v11240 = vor.u32 %v11238, %v11236
        %v11242 = vshll.u32 %v11151, 16
        %v11244 = vrot.slane %v11242, 1
        %v11245 = vsel %vm1573, %v11240, %v11244
        %v11246 = vshrl.u32 %v11151, 16
        %v11248 = vor.u32 %v11246, %v11244
        %v11250 = vshll.u32 %v11152, 16
        %v11252 = vrot.slane %v11250, 1
        %v11253 = vsel %vm1573, %v11248, %v11252
        %v11254 = vshrl.u32 %v11152, 16
        %v11256 = vor.u32 %v11254, %v11252
        %v11258 = vshll.u32 %v11153, 16
        %v11260 = vrot.slane %v11258, 1
        %v11261 = vsel %vm1573, %v11256, %v11260
        %v11262 = vshrl.u32 %v11153, 16
        %v11264 = vor.u32 %v11262, %v11260
        %v11266 = vshll.u32 %v11154, 16
        %v11268 = vrot.slane %v11266, 1
        %v11269 = vsel %vm1573, %v11264, %v11268
        %v11270 = vshrl.u32 %v11154, 16
        %v11272 = vor.u32 %v11270, %v11268
        %v11274 = vshll.u32 %v11155, 16
        %v11276 = vrot.slane %v11274, 1
        %v11277 = vsel %vm1573, %v11272, %v11276
        %v11278 = vshrl.u32 %v11155, 16
        %v11280 = vor.u32 %v11278, %v11276
        %v11282 = vshll.u32 %v11156, 16
        %v11284 = vrot.slane %v11282, 1
        %v11285 = vsel %vm1573, %v11280, %v11284
        %v11286 = vshrl.u32 %v11156, 16
        %v11288 = vor.u32 %v11286, %v11284
        %v11290 = vshll.u32 %v11157, 16
        %v11292 = vrot.slane %v11290, 1
        %v11293 = vsel %vm1573, %v11288, %v11292
        %v11294 = vshrl.u32 %v11157, 16
        %v11296 = vor.u32 %v11294, %v11292
        %v11298 = vshll.u32 %v11158, 16
        %v11300 = vrot.slane %v11298, 1
        %v11301 = vsel %vm1573, %v11296, %v11300
        %v11302 = vshrl.u32 %v11158, 16
        %v11304 = vor.u32 %v11302, %v11300
        %v11306 = vshll.u32 %v11159, 16
        %v11308 = vrot.slane %v11306, 1
        %v11309 = vsel %vm1573, %v11304, %v11308
        %v11310 = vshrl.u32 %v11159, 16
        %v11312 = vor.u32 %v11310, %v11308
        %v11314 = vshll.u32 %v11160, 16
        %v11316 = vrot.slane %v11314, 1
        %v11317 = vsel %vm1573, %v11312, %v11316
        %v11318 = vshrl.u32 %v11160, 16
        %v11320 = vor.u32 %v11318, %v11316
        %v11322 = vshll.u32 %v11161, 16
        %v11324 = vrot.slane %v11322, 1
        %v11325 = vsel %vm1573, %v11320, %v11324
        %v11326 = vshrl.u32 %v11161, 16
        %v11328 = vor.u32 %v11326, %v11324
        %v11341 = vunpack.c.l.b16 %v11045
        %v11342 = vunpack.c.l.b16 %v11046
        %v11343 = vunpack.c.l.b16 %v11047
        %v11344 = vunpack.c.l.b16 %v11048
        %v11345 = vunpack.c.l.b16 %v11049
        %v11346 = vunpack.c.l.b16 %v11050
        %v11347 = vunpack.c.l.b16 %v11051
        %v11348 = vunpack.c.l.b16 %v11052
        %v11349 = vunpack.c.l.b16 %v11053
        %v11350 = vunpack.c.l.b16 %v11054
        %v11351 = vunpack.c.l.b16 %v11055
        %v11352 = vunpack.c.l.b16 %v11056
        %v11353 = vpack.c.b16 %v11342, %v11341
        %v11354 = vpack.c.b16 %v11344, %v11343
        %v11355 = vpack.c.b16 %v11346, %v11345
        %v11356 = vpack.c.b16 %v11348, %v11347
        %v11357 = vpack.c.b16 %v11350, %v11349
        %v11358 = vpack.c.b16 %v11352, %v11351
        %v11366 = vsel %vm3675, %v11173, 0
        %v11369 = vsel %vm3675, %v11181, 0
        %v11372 = vsel %vm3675, %v11189, 0
        %v11375 = vsel %vm3675, %v11197, 0
        %v11378 = vsel %vm3675, %v11205, 0
        %v11381 = vsel %vm3675, %v11213, 0
        %v11384 = vsel %vm3675, %v11221, 0
        %v11387 = vsel %vm3675, %v11229, 0
        %v11390 = vsel %vm3675, %v11237, 0
        %v11393 = vsel %vm3675, %v11245, 0
        %v11396 = vsel %vm3675, %v11253, 0
        %v11399 = vsel %vm3675, %v11261, 0
        %v11402 = vsel %vm3675, %v11269, 0
        %v11405 = vsel %vm3675, %v11277, 0
        %v11408 = vsel %vm3675, %v11285, 0
        %v11411 = vsel %vm3675, %v11293, 0
        %v11414 = vsel %vm3675, %v11301, 0
        %v11417 = vsel %vm3675, %v11309, 0
        %v11420 = vsel %vm3675, %v11317, 0
        %v11423 = vsel %vm3675, %v11325, 0
        %v11426 = vsel %vm3675, %v11328, 0
        %11428 = vmatprep.subr.bf16.mxu0 0
        %11429 = vmatpush1.bf16.msra.mxu0 %v11353
        %11430 = vmatprep.subr.bf16.mxu0 0
        %11431 = vmatpush1.bf16.msra.mxu0 %v11354
        %11432 = vmatprep.subr.bf16.mxu0 0
        %11433 = vmatpush1.bf16.msra.mxu0 %v11355
        %11434 = vmatprep.subr.bf16.mxu0 0
        %11435 = vmatpush1.bf16.msra.mxu0 %v11356
        %11436 = vmatprep.subr.bf16.mxu0 0
        %11437 = vmatpush1.bf16.msra.mxu0 %v11357
        %11438 = vmatprep.subr.bf16.mxu0 0
        %11439 = vmatpush1.bf16.msra.mxu0 %v11358
        %11440 = vmatprep.subr.bf16.mxu0 0
        %11441 = vmatpush1.bf16.msra.mxu0 0
        %11442 = vmatprep.subr.bf16.mxu0 0
        %11443 = vmatpush1.bf16.msra.mxu0 0
        %11444 = vmatprep.subr.bf16.mxu0 0
        %11445 = vmatpush1.bf16.msra.mxu0 0
        %11446 = vmatprep.subr.bf16.mxu0 0
        %11447 = vmatpush1.bf16.msra.mxu0 0
        %11448 = vmatprep.subr.bf16.mxu0 0
        %11449 = vmatpush1.bf16.msra.mxu0 0
        %11450 = vmatprep.subr.bf16.mxu0 0
        %11451 = vmatpush1.bf16.msra.mxu0 0
        %11452 = vmatprep.subr.bf16.mxu0 0
        %11453 = vmatpush1.bf16.msra.mxu0 0
        %11454 = vmatprep.subr.bf16.mxu0 0
        %11455 = vmatpush1.bf16.msra.mxu0 0
        %11456 = vmatprep.subr.bf16.mxu0 0
        %11457 = vmatpush1.bf16.msra.mxu0 0
        %11458 = vmatprep.subr.bf16.mxu0 0
        %11459 = vmatpush1.bf16.msra.mxu0 0
        %11460 = vmatprep.mubr.bf16.mxu0 0
        %11461 = vmatmul.mubr.bf16.gmra.mrb[0].mxu0 %v11366
        %v11462 = vpop.f32.mrb[0].mxu0
        %v11463 = vadd.f32 0.0, %v11462
        %v11464 = vpop.f32.mrb[0].mxu0
        %v11465 = vpop.f32.mrb[0].mxu0
        %v11466 = vadd.f32 0.0, %v11465
        %v11467 = vpop.f32.mrb[0].mxu0
        %11468 = vmatprep.mubr.bf16.mxu0 0
        %11469 = vmatmul.mubr.bf16.gmra.mrb[0].mxu0 %v11369
        %v11470 = vpop.f32.mrb[0].mxu0
        %v11471 = vadd.f32 0.0, %v11470
        %v11472 = vpop.f32.mrb[0].mxu0
        %v11473 = vpop.f32.mrb[0].mxu0
        %v11474 = vadd.f32 0.0, %v11473
        %v11475 = vpop.f32.mrb[0].mxu0
        %11476 = vmatprep.mubr.bf16.mxu0 0
        %11477 = vmatmul.mubr.bf16.gmra.mrb[0].mxu0 %v11372
        %v11478 = vpop.f32.mrb[0].mxu0
        %v11479 = vadd.f32 0.0, %v11478
        %v11480 = vpop.f32.mrb[0].mxu0
        %v11481 = vpop.f32.mrb[0].mxu0
        %v11482 = vadd.f32 0.0, %v11481
        %v11483 = vpop.f32.mrb[0].mxu0
        %11484 = vmatprep.mubr.bf16.mxu0 0
        %11485 = vmatmul.mubr.bf16.gmra.mrb[0].mxu0 %v11375
        %v11486 = vpop.f32.mrb[0].mxu0
        %v11487 = vadd.f32 0.0, %v11486
        %v11488 = vpop.f32.mrb[0].mxu0
        %v11489 = vpop.f32.mrb[0].mxu0
        %v11490 = vadd.f32 0.0, %v11489
        %v11491 = vpop.f32.mrb[0].mxu0
        %11492 = vmatprep.mubr.bf16.mxu0 0
        %11493 = vmatmul.mubr.bf16.gmra.mrb[0].mxu0 %v11378
        %v11494 = vpop.f32.mrb[0].mxu0
        %v11495 = vadd.f32 0.0, %v11494
        %v11496 = vpop.f32.mrb[0].mxu0
        %v11497 = vpop.f32.mrb[0].mxu0
        %v11498 = vadd.f32 0.0, %v11497
        %v11499 = vpop.f32.mrb[0].mxu0
        %11500 = vmatprep.mubr.bf16.mxu0 0
        %11501 = vmatmul.mubr.bf16.gmra.mrb[0].mxu0 %v11381
        %v11502 = vpop.f32.mrb[0].mxu0
        %v11503 = vadd.f32 0.0, %v11502
        %v11504 = vpop.f32.mrb[0].mxu0
        %v11505 = vpop.f32.mrb[0].mxu0
        %v11506 = vadd.f32 0.0, %v11505
        %v11507 = vpop.f32.mrb[0].mxu0
        %11508 = vmatprep.mubr.bf16.mxu0 0
        %11509 = vmatmul.mubr.bf16.gmra.mrb[0].mxu0 %v11384
        %v11510 = vpop.f32.mrb[0].mxu0
        %v11511 = vadd.f32 0.0, %v11510
        %v11512 = vpop.f32.mrb[0].mxu0
        %v11513 = vpop.f32.mrb[0].mxu0
        %v11514 = vadd.f32 0.0, %v11513
        %v11515 = vpop.f32.mrb[0].mxu0
        %11516 = vmatprep.mubr.bf16.mxu0 0
        %11517 = vmatmul.mubr.bf16.gmra.mrb[0].mxu0 %v11387
        %v11518 = vpop.f32.mrb[0].mxu0
        %v11519 = vadd.f32 0.0, %v11518
        %v11520 = vpop.f32.mrb[0].mxu0
        %v11521 = vpop.f32.mrb[0].mxu0
        %v11522 = vadd.f32 0.0, %v11521
        %v11523 = vpop.f32.mrb[0].mxu0
        %11524 = vmatprep.mubr.bf16.mxu0 0
        %11525 = vmatmul.mubr.bf16.gmra.mrb[0].mxu0 %v11390
        %v11526 = vpop.f32.mrb[0].mxu0
        %v11527 = vadd.f32 0.0, %v11526
        %v11528 = vpop.f32.mrb[0].mxu0
        %v11529 = vpop.f32.mrb[0].mxu0
        %v11530 = vadd.f32 0.0, %v11529
        %v11531 = vpop.f32.mrb[0].mxu0
        %11532 = vmatprep.mubr.bf16.mxu0 0
        %11533 = vmatmul.mubr.bf16.gmra.mrb[0].mxu0 %v11393
        %v11534 = vpop.f32.mrb[0].mxu0
        %v11535 = vadd.f32 0.0, %v11534
        %v11536 = vpop.f32.mrb[0].mxu0
        %v11537 = vpop.f32.mrb[0].mxu0
        %v11538 = vadd.f32 0.0, %v11537
        %v11539 = vpop.f32.mrb[0].mxu0
        %11540 = vmatprep.mubr.bf16.mxu0 0
        %11541 = vmatmul.mubr.bf16.gmra.mrb[0].mxu0 %v11396
        %v11542 = vpop.f32.mrb[0].mxu0
        %v11543 = vadd.f32 0.0, %v11542
        %v11544 = vpop.f32.mrb[0].mxu0
        %v11545 = vpop.f32.mrb[0].mxu0
        %v11546 = vadd.f32 0.0, %v11545
        %v11547 = vpop.f32.mrb[0].mxu0
        %11548 = vmatprep.mubr.bf16.mxu0 0
        %11549 = vmatmul.mubr.bf16.gmra.mrb[0].mxu0 %v11399
        %v11550 = vpop.f32.mrb[0].mxu0
        %v11551 = vadd.f32 0.0, %v11550
        %v11552 = vpop.f32.mrb[0].mxu0
        %v11553 = vpop.f32.mrb[0].mxu0
        %v11554 = vadd.f32 0.0, %v11553
        %v11555 = vpop.f32.mrb[0].mxu0
        %11556 = vmatprep.mubr.bf16.mxu0 0
        %11557 = vmatmul.mubr.bf16.gmra.mrb[0].mxu0 %v11402
        %v11558 = vpop.f32.mrb[0].mxu0
        %v11559 = vadd.f32 0.0, %v11558
        %v11560 = vpop.f32.mrb[0].mxu0
        %v11561 = vpop.f32.mrb[0].mxu0
        %v11562 = vadd.f32 0.0, %v11561
        %v11563 = vpop.f32.mrb[0].mxu0
        %11564 = vmatprep.mubr.bf16.mxu0 0
        %11565 = vmatmul.mubr.bf16.gmra.mrb[0].mxu0 %v11405
        %v11566 = vpop.f32.mrb[0].mxu0
        %v11567 = vadd.f32 0.0, %v11566
        %v11568 = vpop.f32.mrb[0].mxu0
        %v11569 = vpop.f32.mrb[0].mxu0
        %v11570 = vadd.f32 0.0, %v11569
        %v11571 = vpop.f32.mrb[0].mxu0
        %11572 = vmatprep.mubr.bf16.mxu0 0
        %11573 = vmatmul.mubr.bf16.gmra.mrb[0].mxu0 %v11408
        %v11574 = vpop.f32.mrb[0].mxu0
        %v11575 = vadd.f32 0.0, %v11574
        %v11576 = vpop.f32.mrb[0].mxu0
        %v11577 = vpop.f32.mrb[0].mxu0
        %v11578 = vadd.f32 0.0, %v11577
        %v11579 = vpop.f32.mrb[0].mxu0
        %11580 = vmatprep.mubr.bf16.mxu0 0
        %11581 = vmatmul.mubr.bf16.gmra.mrb[0].mxu0 %v11411
        %v11582 = vpop.f32.mrb[0].mxu0
        %v11583 = vadd.f32 0.0, %v11582
        %v11584 = vpop.f32.mrb[0].mxu0
        %v11585 = vpop.f32.mrb[0].mxu0
        %v11586 = vadd.f32 0.0, %v11585
        %v11587 = vpop.f32.mrb[0].mxu0
        %11588 = vmatprep.mubr.bf16.mxu0 0
        %11589 = vmatmul.mubr.bf16.gmra.mrb[0].mxu0 %v11414
        %v11590 = vpop.f32.mrb[0].mxu0
        %v11591 = vadd.f32 0.0, %v11590
        %v11592 = vpop.f32.mrb[0].mxu0
        %v11593 = vpop.f32.mrb[0].mxu0
        %v11594 = vadd.f32 0.0, %v11593
        %v11595 = vpop.f32.mrb[0].mxu0
        %11596 = vmatprep.mubr.bf16.mxu0 0
        %11597 = vmatmul.mubr.bf16.gmra.mrb[0].mxu0 %v11417
        %v11598 = vpop.f32.mrb[0].mxu0
        %v11599 = vadd.f32 0.0, %v11598
        %v11600 = vpop.f32.mrb[0].mxu0
        %v11601 = vpop.f32.mrb[0].mxu0
        %v11602 = vadd.f32 0.0, %v11601
        %v11603 = vpop.f32.mrb[0].mxu0
        %11604 = vmatprep.mubr.bf16.mxu0 0
        %11605 = vmatmul.mubr.bf16.gmra.mrb[0].mxu0 %v11420
        %v11606 = vpop.f32.mrb[0].mxu0
        %v11607 = vadd.f32 0.0, %v11606
        %v11608 = vpop.f32.mrb[0].mxu0
        %v11609 = vpop.f32.mrb[0].mxu0
        %v11610 = vadd.f32 0.0, %v11609
        %v11611 = vpop.f32.mrb[0].mxu0
        %11612 = vmatprep.mubr.bf16.mxu0 0
        %11613 = vmatmul.mubr.bf16.gmra.mrb[0].mxu0 %v11423
        %v11614 = vpop.f32.mrb[0].mxu0
        %v11615 = vadd.f32 0.0, %v11614
        %v11616 = vpop.f32.mrb[0].mxu0
        %v11617 = vpop.f32.mrb[0].mxu0
        %v11618 = vadd.f32 0.0, %v11617
        %v11619 = vpop.f32.mrb[0].mxu0
        %11620 = vmatprep.mubr.bf16.mxu0 0
        %11621 = vmatmul.mubr.bf16.gmra.mrb[0].mxu0 %v11426
        %v11622 = vpop.f32.mrb[0].mxu0
        %v11623 = vadd.f32 0.0, %v11622
        %v11624 = vpop.f32.mrb[0].mxu0
        %v11625 = vpop.f32.mrb[0].mxu0
        %v11626 = vpop.f32.mrb[0].mxu0
        %11627 = vdwg.mxu0
        %v11628 = vadd.f32 %v10837, %v11463
        %v11629 = vadd.f32 %v10840, %v11466
        %v11630 = vadd.f32 %v10845, %v11471
        %v11631 = vadd.f32 %v10848, %v11474
        %v11632 = vadd.f32 %v10853, %v11479
        %v11633 = vadd.f32 %v10856, %v11482
        %v11634 = vadd.f32 %v10861, %v11487
        %v11635 = vadd.f32 %v10864, %v11490
        %v11636 = vadd.f32 %v10869, %v11495
        %v11637 = vadd.f32 %v10872, %v11498
        %v11638 = vadd.f32 %v10877, %v11503
        %v11639 = vadd.f32 %v10880, %v11506
        %v11640 = vadd.f32 %v10885, %v11511
        %v11641 = vadd.f32 %v10888, %v11514
        %v11642 = vadd.f32 %v10893, %v11519
        %v11643 = vadd.f32 %v10896, %v11522
        %v11644 = vadd.f32 %v10901, %v11527
        %v11645 = vadd.f32 %v10904, %v11530
        %v11646 = vadd.f32 %v10909, %v11535
        %v11647 = vadd.f32 %v10912, %v11538
        %v11648 = vadd.f32 %v10917, %v11543
        %v11649 = vadd.f32 %v10920, %v11546
        %v11650 = vadd.f32 %v10925, %v11551
        %v11651 = vadd.f32 %v10928, %v11554
        %v11652 = vadd.f32 %v10933, %v11559
        %v11653 = vadd.f32 %v10936, %v11562
        %v11654 = vadd.f32 %v10941, %v11567
        %v11655 = vadd.f32 %v10944, %v11570
        %v11656 = vadd.f32 %v10949, %v11575
        %v11657 = vadd.f32 %v10952, %v11578
        %v11658 = vadd.f32 %v10957, %v11583
        %v11659 = vadd.f32 %v10960, %v11586
        %v11660 = vadd.f32 %v10965, %v11591
        %v11661 = vadd.f32 %v10968, %v11594
        %v11662 = vadd.f32 %v10973, %v11599
        %v11663 = vadd.f32 %v10976, %v11602
        %v11664 = vadd.f32 %v10981, %v11607
        %v11665 = vadd.f32 %v10984, %v11610
        %v11666 = vadd.f32 %v10989, %v11615
        %v11667 = vadd.f32 %v10992, %v11618
        %v11668 = vadd.f32 %v10997, %v11623
        %v11669 = vld [vmem:[%s13] sm:$0x1]
        %v11671 = vlaneseq
        %v11672 = vshrl.u32 %v11671, 7
        %v11673 = vsub.s32 0, %v11672
        %v11674 = vrot.slane %v11669, %v11673
        %v11676 = vadd.f32 %v11628, %v11674
        %v11677 = vadd.f32 %v11629, %v11674
        %v11678 = vadd.f32 %v11630, %v11674
        %v11679 = vadd.f32 %v11631, %v11674
        %v11680 = vadd.f32 %v11632, %v11674
        %v11681 = vadd.f32 %v11633, %v11674
        %v11682 = vadd.f32 %v11634, %v11674
        %v11683 = vadd.f32 %v11635, %v11674
        %v11684 = vadd.f32 %v11636, %v11674
        %v11685 = vadd.f32 %v11637, %v11674
        %v11686 = vadd.f32 %v11638, %v11674
        %v11687 = vadd.f32 %v11639, %v11674
        %v11688 = vadd.f32 %v11640, %v11674
        %v11689 = vadd.f32 %v11641, %v11674
        %v11690 = vadd.f32 %v11642, %v11674
        %v11691 = vadd.f32 %v11643, %v11674
        %v11692 = vadd.f32 %v11644, %v11674
        %v11693 = vadd.f32 %v11645, %v11674
        %v11694 = vadd.f32 %v11646, %v11674
        %v11695 = vadd.f32 %v11647, %v11674
        %v11696 = vadd.f32 %v11648, %v11674
        %v11697 = vadd.f32 %v11649, %v11674
        %v11698 = vadd.f32 %v11650, %v11674
        %v11699 = vadd.f32 %v11651, %v11674
        %v11700 = vadd.f32 %v11652, %v11674
        %v11701 = vadd.f32 %v11653, %v11674
        %v11702 = vadd.f32 %v11654, %v11674
        %v11703 = vadd.f32 %v11655, %v11674
        %v11704 = vadd.f32 %v11656, %v11674
        %v11705 = vadd.f32 %v11657, %v11674
        %v11706 = vadd.f32 %v11658, %v11674
        %v11707 = vadd.f32 %v11659, %v11674
        %v11708 = vadd.f32 %v11660, %v11674
        %v11709 = vadd.f32 %v11661, %v11674
        %v11710 = vadd.f32 %v11662, %v11674
        %v11711 = vadd.f32 %v11663, %v11674
        %v11712 = vadd.f32 %v11664, %v11674
        %v11713 = vadd.f32 %v11665, %v11674
        %v11714 = vadd.f32 %v11666, %v11674
        %v11715 = vadd.f32 %v11667, %v11674
        %v11716 = vadd.f32 %v11668, %v11674
        %11717 = vst [vmem:[%s460] sm:$0xff] %v11676
        %11718 = vst [vmem:[%s460 + $0x8] sm:$0xff] %v11677
        %11719 = vst [vmem:[%s460 + $0x10] sm:$0xff] %v11678
        %11720 = vst [vmem:[%s460 + $0x18] sm:$0xff] %v11679
        %11721 = vst [vmem:[%s460 + $0x20] sm:$0xff] %v11680
        %11722 = vst [vmem:[%s460 + $0x28] sm:$0xff] %v11681
        %11723 = vst [vmem:[%s460 + $0x30] sm:$0xff] %v11682
        %11724 = vst [vmem:[%s460 + $0x38] sm:$0xff] %v11683
        %11725 = vst [vmem:[%s460 + $0x40] sm:$0xff] %v11684
        %11726 = vst [vmem:[%s460 + $0x48] sm:$0xff] %v11685
        %11727 = vst [vmem:[%s460 + $0x50] sm:$0xff] %v11686
        %11728 = vst [vmem:[%s460 + $0x58] sm:$0xff] %v11687
        %11729 = vst [vmem:[%s460 + $0x60] sm:$0xff] %v11688
        %11730 = vst [vmem:[%s460 + $0x68] sm:$0xff] %v11689
        %11731 = vst [vmem:[%s460 + $0x70] sm:$0xff] %v11690
        %11732 = vst [vmem:[%s460 + $0x78] sm:$0xff] %v11691
        %11733 = vst [vmem:[%s460 + $0x80] sm:$0xff] %v11692
        %11734 = vst [vmem:[%s460 + $0x88] sm:$0xff] %v11693
        %11735 = vst [vmem:[%s460 + $0x90] sm:$0xff] %v11694
        %11736 = vst [vmem:[%s460 + $0x98] sm:$0xff] %v11695
        %11737 = vst [vmem:[%s460 + $0xa0] sm:$0xff] %v11696
        %11738 = vst [vmem:[%s460 + $0xa8] sm:$0xff] %v11697
        %11739 = vst [vmem:[%s460 + $0xb0] sm:$0xff] %v11698
        %11740 = vst [vmem:[%s460 + $0xb8] sm:$0xff] %v11699
        %11741 = vst [vmem:[%s460 + $0xc0] sm:$0xff] %v11700
        %11742 = vst [vmem:[%s460 + $0xc8] sm:$0xff] %v11701
        %11743 = vst [vmem:[%s460 + $0xd0] sm:$0xff] %v11702
        %11744 = vst [vmem:[%s460 + $0xd8] sm:$0xff] %v11703
        %11745 = vst [vmem:[%s460 + $0xe0] sm:$0xff] %v11704
        %11746 = vst [vmem:[%s460 + $0xe8] sm:$0xff] %v11705
        %11747 = vst [vmem:[%s460 + $0xf0] sm:$0xff] %v11706
        %11748 = vst [vmem:[%s460 + $0xf8] sm:$0xff] %v11707
        %11749 = vst [vmem:[%s460 + $0x100] sm:$0xff] %v11708
        %11750 = vst [vmem:[%s460 + $0x108] sm:$0xff] %v11709
        %11751 = vst [vmem:[%s460 + $0x110] sm:$0xff] %v11710
        %11752 = vst [vmem:[%s460 + $0x118] sm:$0xff] %v11711
        %11753 = vst [vmem:[%s460 + $0x120] sm:$0xff] %v11712
        %11754 = vst [vmem:[%s460 + $0x128] sm:$0xff] %v11713
        %11755 = vst [vmem:[%s460 + $0x130] sm:$0xff] %v11714
        %11756 = vst [vmem:[%s460 + $0x138] sm:$0xff] %v11715
        %11757 = vst [vmem:[%s460 + $0x140] sm:$0xff] %v11716
        %s11758 = sand.u32 %s335, 1
        %s11759 = scalar_lea.sflag [#allocation5], %s11758
        %s11760 = sand.u32 %s335, 1
        %s11761 = smul.addr %s11760, 328
        %s11762 = scalar_lea.vmem [#allocation4], %s11761
        // Predicated region
        $region77: #{tpu_custom_call.1} parent=75 // pred_check
          %p11763 = pneg %p345
        $region78: #{tpu_custom_call.1} parent=75 // pred_check_branch
          %11765 = sbr.rel (%p11763) target = $region80
        $region79: #{tpu_custom_call.1} parent=75 // pred_region
          %s11767 = ssub.s32 5248, 5248
          %11768 = vsyncadd %s11759, %s11767
          %s11769 = smul.addr %s28, 41
          %s11770 = smul.addr %s11769, 128
          %s11771 = scalar_lea.hbm %s14, %s11770
          %s11772 = sshll.u32 %s11762, 4
          %s11773 = int_to_ptr.vmem [resolvable:$true] %s11772
          %11778 = dma.vmem_to_hbm [thread:$0]  %s11773, 5248, %s11771, %s11759, 128, 128, 8
        $region80: #{tpu_custom_call.1} parent=75 // pred_fallthru
          _
      $region76: #{tpu_custom_call.1} parent=5 // pred_fallthru
        _
      %p11779 = scmp.le.s32.totalorder 2, %s23
      // Predicated region
      $region81: #{tpu_custom_call.1} parent=5 // pred_check
        %p11780 = pneg %p11779
      $region82: #{tpu_custom_call.1} parent=5 // pred_check_branch
        %11782 = sbr.rel (%p11780) target = $region84
      $region83: #{tpu_custom_call.1} parent=5 // pred_region
        %s11783 = ssub.s32 %s23, 2
        // Predicated region
        $region85: #{tpu_custom_call.1} parent=83 // pred_check
          %p11784 = pneg %p351
        $region86: #{tpu_custom_call.1} parent=83 // pred_check_branch
          %11786 = sbr.rel (%p11784) target = $region88
        $region87: #{tpu_custom_call.1} parent=83 // pred_region
          %s11787 = sand.u32 %s336, 1
          %s11788 = scalar_lea.sflag [#allocation5], %s11787
          %s11789 = sand.u32 %s336, 1
          %s11790 = smul.addr %s11789, 328
          %s11791 = scalar_lea.vmem [#allocation4], %s11790
          %11792 = dma.done %s11788, 5248
        $region88: #{tpu_custom_call.1} parent=83 // pred_fallthru
          _
      $region84: #{tpu_custom_call.1} parent=5 // pred_fallthru
        _
    $region6: #{tpu_custom_call.1} parent=1 // loop_footer
      %s27 = sadd.s32 1, %s23
    $region7: #{tpu_custom_call.1} parent=1 // loop_footer_branch
      %22 = sbr.rel target = $region3
    $region8: #{tpu_custom_call.1} parent=1 // loop_exit
      _
    %11793 = vsyncpa [#allocation5], 1
    %s11794 = scalar_lea.sflag [#allocation5], 1
    %11795 = vsyncpa %s11794, 1

</llo_original>
